<compile_context>
chip_gen: v7x
topology: tpu7x:2x2x1
jax: 0.10.0
libtpu: 0.0.40
codegen_flags: <defaults>
</compile_context>

<pallas_src>
import jax
import jax.numpy as jnp
from jax import lax
from jax.experimental import pallas as pl
from jax.experimental.pallas import tpu as pltpu


def _silu(a):
    return a * jax.nn.sigmoid(a)


# --------------------------------------------------------------------------
# Pallas implementation
# --------------------------------------------------------------------------
def res_attn_block_pallas(x_nchw, t, params, eps=1e-5):
    N, Cin, H, W = x_nchw.shape
    HW = H * W
    Cout = params["conv1_w"].shape[0]
    inv_sqrt_c = 1.0 / (Cout ** 0.5)
    f32, bf16 = jnp.float32, jnp.bfloat16

    # ---- samples per grid step: widen the lane axis, keep >=2 grid steps ----
    cap = max(1, min(N, max(1, 2048 // HW)))
    NB = 1
    for cand in range(1, cap + 1):
        if N % cand != 0:
            continue
        if (cand * HW) % 128 != 0 and cand != N:
            continue
        if N // cand >= 2 or N == 1:
            NB = cand
    G = N // NB
    L = NB * HW
    QB = 128 if HW % 128 == 0 else HW          # query-block rows for softmax
    n_qb = HW // QB

    # ---------------- wrapper-side layout / weight transforms ----------------
    # NCHW -> (C, N*HW): channels on sublanes, sample-major spatial on lanes.
    x2 = x_nchw.reshape(N, Cin, HW).transpose(1, 0, 2).reshape(Cin, N * HW)
    x2 = x2.astype(f32)

    # hoisted time embedding, conv1 bias folded in, broadcast over HW lanes
    temb = (jnp.einsum("nk,ck->nc", _silu(t), params["time_w"],
                       precision=lax.Precision.HIGHEST)
            + params["time_b"] + params["conv1_b"])                # (N, Cout)
    temb_wide = jnp.broadcast_to(temb.T[:, :, None], (Cout, N, HW))
    temb_wide = temb_wide.reshape(Cout, N * HW).astype(f32)

    # 3x3 tap validity masks hoisted out of the kernel: (9, L)
    lane = jnp.arange(HW, dtype=jnp.int32)
    row, col = lane // W, lane % W
    mrows = []
    for dy in (-1, 0, 1):
        for dx in (-1, 0, 1):
            m = jnp.ones((HW,), f32)
            if dy == -1:
                m = m * (row >= 1)
            if dy == 1:
                m = m * (row <= H - 2)
            if dx == -1:
                m = m * (col >= 1)
            if dx == 1:
                m = m * (col <= W - 2)
            mrows.append(m)
    masks = jnp.tile(jnp.stack(mrows, 0), (1, NB)).astype(f32)     # (9, L)

    # per-sample segment matrix: selT[s, l] = 1 iff lane l belongs to sample s
    seg = jnp.repeat(jnp.arange(NB, dtype=jnp.int32), HW)
    selT = (seg[None, :] == jnp.arange(NB, dtype=jnp.int32)[:, None]).astype(f32)

    def ln_tile(g):                    # (C, H, W) -> (C, L), repeated per sample
        return jnp.tile(g.reshape(g.shape[0], HW), (1, NB)).astype(f32)

    def conv3_w(w):                    # (Co, Ci, 3, 3) -> (9, Co, Ci) bf16
        return (jnp.transpose(w, (2, 3, 0, 1))
                .reshape(9, w.shape[0], w.shape[1]).astype(bf16))

    def conv1_w(w, scale=1.0):         # (Co, Ci, 1, 1) -> (Co, Ci) bf16
        return (w[:, :, 0, 0] * scale).astype(bf16)

    def vec(b, scale=1.0):             # (C,) -> (C, 1) f32
        return (b * scale).reshape(-1, 1).astype(f32)

    ins = [
        x2, temb_wide, masks, selT,
        ln_tile(params["ln1_g"]), ln_tile(params["ln1_b"]),
        conv3_w(params["conv1_w"]),
        ln_tile(params["ln2_g"]), ln_tile(params["ln2_b"]),
        conv3_w(params["conv2_w"]), vec(params["conv2_b"]),
        conv1_w(params["res_w"]), vec(params["res_b"]),
        ln_tile(params["lnA_g"]), ln_tile(params["lnA_b"]),
        conv1_w(params["q_w"], inv_sqrt_c), vec(params["q_b"], inv_sqrt_c),
        conv1_w(params["k_w"]), vec(params["k_b"]),
        conv1_w(params["v_w"]), vec(params["v_b"]),
        conv1_w(params["o_w"]), vec(params["o_b"]),
    ]

    TAPS = tuple((dy, dx) for dy in (-1, 0, 1) for dx in (-1, 0, 1))
    inv_n_in = 1.0 / (Cin * HW)
    inv_n_out = 1.0 / (Cout * HW)

    def kernel(x_ref, temb_ref, mask_ref, selT_ref,
               ln1g, ln1b, w1, ln2g, ln2b, w2, b2, rw, rbias,
               lnAg, lnAb, qw, qbias, kw, kbias, vw, vbias, ow, obias,
               out_ref):
        selT_v = selT_ref[...]                                     # (NB, L)

        def layernorm(a, g, b, inv_n):
            # two-pass per-sample LayerNorm over each sample's (C, HW) slab
            if NB == 1:
                mean = jnp.sum(a) * inv_n
                d = a - mean
                var = jnp.sum(d * d) * inv_n
                return d * lax.rsqrt(var + eps) * g + b
            c1 = jnp.sum(a, axis=0, keepdims=True)                 # (1, L)
            s1 = lax.dot_general(c1, selT_v, (((1,), (1,)), ((), ())),
                                 preferred_element_type=jnp.float32)  # (1, NB)
            mean_l = jnp.dot(s1 * inv_n, selT_v,
                             preferred_element_type=jnp.float32)   # (1, L)
            d = a - mean_l
            c2 = jnp.sum(d * d, axis=0, keepdims=True)
            s2 = lax.dot_general(c2, selT_v, (((1,), (1,)), ((), ())),
                                 preferred_element_type=jnp.float32)
            rstd_l = jnp.dot(lax.rsqrt(s2 * inv_n + eps), selT_v,
                             preferred_element_type=jnp.float32)   # (1, L)
            return d * rstd_l * g + b

        def conv3x3(hf, w_ref):
            # hf (C, L) f32 -> (Cout, L) f32 (no bias): 9 lane-rolled taps,
            # border-masked, cast to bf16 and accumulated straight on the MXU.
            acc = None
            for ti, (dy, dx) in enumerate(TAPS):
                off = dy * W + dx
                sh = hf if off == 0 else pltpu.roll(hf, shift=(-off) % L, axis=1)
                if ti != 4:                        # center tap needs no mask
                    sh = sh * mask_ref[ti:ti + 1, :]
                part = jnp.dot(w_ref[ti], sh.astype(jnp.bfloat16),
                               preferred_element_type=jnp.float32)
                acc = part if acc is None else acc + part
            return acc

        x = x_ref[...]                                             # (Cin, L)

        # ------------------------------ ResBlock ------------------------------
        h = _silu(layernorm(x, ln1g[...], ln1b[...], inv_n_in))
        h = conv3x3(h, w1) + temb_ref[...]          # conv1 bias folded into temb
        h = _silu(layernorm(h, ln2g[...], ln2b[...], inv_n_out))
        h = conv3x3(h, w2) + b2[...]
        h = h + (jnp.dot(rw[...], x.astype(jnp.bfloat16),
                         preferred_element_type=jnp.float32) + rbias[...])

        # ------------------------- SelfAttentionBlock -------------------------
        nx = layernorm(h, lnAg[...], lnAb[...], inv_n_out).astype(jnp.bfloat16)
        q = (jnp.dot(qw[...], nx, preferred_element_type=jnp.float32)
             + qbias[...]).astype(jnp.bfloat16)     # 1/sqrt(C) folded in qw/qb
        k = (jnp.dot(kw[...], nx, preferred_element_type=jnp.float32)
             + kbias[...]).astype(jnp.bfloat16)
        v = (jnp.dot(vw[...], nx, preferred_element_type=jnp.float32)
             + vbias[...]).astype(jnp.bfloat16)
        ow_v = ow[...]

        # attention is per sample; queries processed in QB-row blocks so the
        # (QB, HW) softmax intermediates stay (mostly) register resident.
        for s in range(NB):
            ks = k[:, s * HW:(s + 1) * HW]                         # (Cout, HW)
            vs = v[:, s * HW:(s + 1) * HW]
            for blk in range(n_qb):
                lo = s * HW + blk * QB
                qb_ = q[:, lo:lo + QB]                             # (Cout, QB)
                sc = lax.dot_general(qb_, ks, (((0,), (0,)), ((), ())),
                                     preferred_element_type=jnp.float32)  # (QB, HW)
                sc = sc - jnp.max(sc, axis=-1, keepdims=True)
                e = jnp.exp(sc)
                inv = pl.reciprocal(jnp.sum(e, axis=-1, keepdims=True),
                                    approx=True)
                p = (e * inv).astype(jnp.bfloat16)                 # (QB, HW)
                av = lax.dot_general(vs, p, (((1,), (1,)), ((), ())),
                                     preferred_element_type=jnp.float32)  # (Cout, QB)
                o = jnp.dot(ow_v, av.astype(jnp.bfloat16),
                            preferred_element_type=jnp.float32) + obias[...]
                out_ref[:, lo:lo + QB] = h[:, lo:lo + QB] + o      # aligned store

    def full_spec(a):
        nd = a.ndim
        return pl.BlockSpec(a.shape, lambda n, _nd=nd: (0,) * _nd)

    in_specs = ([pl.BlockSpec((Cin, L), lambda n: (0, n)),
                 pl.BlockSpec((Cout, L), lambda n: (0, n))]
                + [full_spec(a) for a in ins[2:]])

    out = pl.pallas_call(
        kernel,
        out_shape=jax.ShapeDtypeStruct((Cout, N * HW), jnp.float32),
        grid=(G,),
        in_specs=in_specs,
        out_specs=pl.BlockSpec((Cout, L), lambda n: (0, n)),
        compiler_params=pltpu.CompilerParams(
            dimension_semantics=("parallel",)),
    )(*ins)

    return out.reshape(Cout, N, HW).transpose(1, 0, 2).reshape(N, Cout, H, W)


# --------------------------------------------------------------------------
# Deterministic parameter init (shapes exactly as the PyTorch module)
# --------------------------------------------------------------------------
def init_params(key, Cin, Cout, H, W, TC):
    ks = jax.random.split(key, 24)

    def nrm(i, shape, scale=0.1):
        return scale * jax.random.normal(ks[i], shape, jnp.float32)

    p = {}
    p["ln1_g"] = 1.0 + nrm(0, (Cin, H, W), 0.05)
    p["ln1_b"] = nrm(1, (Cin, H, W), 0.05)
    p["conv1_w"] = nrm(2, (Cout, Cin, 3, 3))
    p["conv1_b"] = nrm(3, (Cout,), 0.02)
    p["time_w"] = nrm(4, (Cout, TC))
    p["time_b"] = nrm(5, (Cout,), 0.02)
    p["ln2_g"] = 1.0 + nrm(6, (Cout, H, W), 0.05)
    p["ln2_b"] = nrm(7, (Cout, H, W), 0.05)
    p["conv2_w"] = nrm(8, (Cout, Cout, 3, 3))
    p["conv2_b"] = nrm(9, (Cout,), 0.02)
    p["res_w"] = nrm(10, (Cout, Cin, 1, 1))   # in_c != out_c -> 1x1 residual conv
    p["res_b"] = nrm(11, (Cout,), 0.02)
    p["lnA_g"] = 1.0 + nrm(12, (Cout, H, W), 0.05)
    p["lnA_b"] = nrm(13, (Cout, H, W), 0.05)
    for i, name in enumerate(("q", "k", "v", "o")):
        p[f"{name}_w"] = nrm(14 + 2 * i, (Cout, Cout, 1, 1))
        p[f"{name}_b"] = nrm(15 + 2 * i, (Cout,), 0.02)
    return p


# --------------------------------------------------------------------------
# Pure-JAX reference (mirrors PyTorch NCHW semantics) for verification
# --------------------------------------------------------------------------
def ref_forward(x, t, p, eps=1e-5):
    HP = lax.Precision.HIGHEST

    def ln(a, g, b):
        m = jnp.mean(a, axis=(1, 2, 3), keepdims=True)
        v = jnp.mean((a - m) ** 2, axis=(1, 2, 3), keepdims=True)
        return (a - m) / jnp.sqrt(v + eps) * g[None] + b[None]

    def conv(a, w, b, pad):
        y = lax.conv_general_dilated(a, w, (1, 1), [(pad, pad), (pad, pad)],
                                     dimension_numbers=("NCHW", "OIHW", "NCHW"),
                                     precision=HP)
        return y + b[None, :, None, None]

    out = _silu(ln(x, p["ln1_g"], p["ln1_b"]))
    out = conv(out, p["conv1_w"], p["conv1_b"], 1)
    tt = jnp.einsum("nk,ck->nc", _silu(t), p["time_w"], precision=HP) + p["time_b"]
    out = out + tt[:, :, None, None]
    out = _silu(ln(out, p["ln2_g"], p["ln2_b"]))
    out = conv(out, p["conv2_w"], p["conv2_b"], 1)
    out = out + conv(x, p["res_w"], p["res_b"], 0)

    n, c, h, w = out.shape
    nx = ln(out, p["lnA_g"], p["lnA_b"])
    q = conv(nx, p["q_w"], p["q_b"], 0).reshape(n, c, h * w)
    k = conv(nx, p["k_w"], p["k_b"], 0).reshape(n, c, h * w)
    v = conv(nx, p["v_w"], p["v_b"], 0).reshape(n, c, h * w)
    qk = jnp.einsum("nci,ncj->nij", q, k, precision=HP) / (c ** 0.5)
    attn = jax.nn.softmax(qk, axis=-1)
    res = jnp.einsum("ncj,nij->nci", v, attn, precision=HP).reshape(n, c, h, w)
    res = conv(res, p["o_w"], p["o_b"], 0)
    return out + res


if __name__ == "__main__":
    N, Cin, Cout, H, W, TC = 4, 4, 8, 16, 16, 8
    key = jax.random.PRNGKey(0)
    kx, kt, kp = jax.random.split(key, 3)
    x = jax.random.normal(kx, (N, Cin, H, W), jnp.float32)
    t = jax.random.normal(kt, (N, TC), jnp.float32)
    params = init_params(kp, Cin, Cout, H, W, TC)

    fwd = jax.jit(res_attn_block_pallas)
    y = jax.block_until_ready(fwd(x, t, params))

    y_ref = ref_forward(x, t, params)
    assert y.shape == (N, Cout, H, W)
    err = float(jnp.max(jnp.abs(y - y_ref)))
    assert err < 5e-2, f"max abs err {err}"
    print("KERNEL_OK")
</pallas_src>

<mosaic_0001>
module attributes {stable_mosaic.version = 11 : i64} {
  func.func @kernel(%arg0: i32, %arg1: memref<4x512xf32, #tpu.memory_space<vmem>>, %arg2: memref<8x512xf32, #tpu.memory_space<vmem>>, %arg3: memref<9x512xf32, #tpu.memory_space<vmem>>, %arg4: memref<2x512xf32, #tpu.memory_space<vmem>>, %arg5: memref<4x512xf32, #tpu.memory_space<vmem>>, %arg6: memref<4x512xf32, #tpu.memory_space<vmem>>, %arg7: memref<9x8x4xbf16, #tpu.memory_space<vmem>>, %arg8: memref<8x512xf32, #tpu.memory_space<vmem>>, %arg9: memref<8x512xf32, #tpu.memory_space<vmem>>, %arg10: memref<9x8x8xbf16, #tpu.memory_space<vmem>>, %arg11: memref<8x1xf32, #tpu.memory_space<vmem>>, %arg12: memref<8x4xbf16, #tpu.memory_space<vmem>>, %arg13: memref<8x1xf32, #tpu.memory_space<vmem>>, %arg14: memref<8x512xf32, #tpu.memory_space<vmem>>, %arg15: memref<8x512xf32, #tpu.memory_space<vmem>>, %arg16: memref<8x8xbf16, #tpu.memory_space<vmem>>, %arg17: memref<8x1xf32, #tpu.memory_space<vmem>>, %arg18: memref<8x8xbf16, #tpu.memory_space<vmem>>, %arg19: memref<8x1xf32, #tpu.memory_space<vmem>>, %arg20: memref<8x8xbf16, #tpu.memory_space<vmem>>, %arg21: memref<8x1xf32, #tpu.memory_space<vmem>>, %arg22: memref<8x8xbf16, #tpu.memory_space<vmem>>, %arg23: memref<8x1xf32, #tpu.memory_space<vmem>>, %arg24: memref<8x512xf32, #tpu.memory_space<vmem>>) attributes {dimension_semantics = [#tpu.dimension_semantics<parallel>], iteration_bounds = array<i64: 2>, scalar_prefetch = 0 : i64, scratch_operands = 0 : i64, tpu.core_type = #tpu.core_type<tc>, window_params = [{transform_indices = @transform_0, window_bounds = array<i64: 4, 512>}, {transform_indices = @transform_1, window_bounds = array<i64: 8, 512>}, {pipeline_mode = #tpu.pipeline_mode<synchronous>, transform_indices = @transform_2, window_bounds = array<i64: 9, 512>}, {pipeline_mode = #tpu.pipeline_mode<synchronous>, transform_indices = @transform_3, window_bounds = array<i64: 2, 512>}, {pipeline_mode = #tpu.pipeline_mode<synchronous>, transform_indices = @transform_4, window_bounds = array<i64: 4, 512>}, {pipeline_mode = #tpu.pipeline_mode<synchronous>, transform_indices = @transform_5, window_bounds = array<i64: 4, 512>}, {pipeline_mode = #tpu.pipeline_mode<synchronous>, transform_indices = @transform_6, window_bounds = array<i64: 9, 8, 4>}, {pipeline_mode = #tpu.pipeline_mode<synchronous>, transform_indices = @transform_7, window_bounds = array<i64: 8, 512>}, {pipeline_mode = #tpu.pipeline_mode<synchronous>, transform_indices = @transform_8, window_bounds = array<i64: 8, 512>}, {pipeline_mode = #tpu.pipeline_mode<synchronous>, transform_indices = @transform_9, window_bounds = array<i64: 9, 8, 8>}, {pipeline_mode = #tpu.pipeline_mode<synchronous>, transform_indices = @transform_10, window_bounds = array<i64: 8, 1>}, {pipeline_mode = #tpu.pipeline_mode<synchronous>, transform_indices = @transform_11, window_bounds = array<i64: 8, 4>}, {pipeline_mode = #tpu.pipeline_mode<synchronous>, transform_indices = @transform_12, window_bounds = array<i64: 8, 1>}, {pipeline_mode = #tpu.pipeline_mode<synchronous>, transform_indices = @transform_13, window_bounds = array<i64: 8, 512>}, {pipeline_mode = #tpu.pipeline_mode<synchronous>, transform_indices = @transform_14, window_bounds = array<i64: 8, 512>}, {pipeline_mode = #tpu.pipeline_mode<synchronous>, transform_indices = @transform_15, window_bounds = array<i64: 8, 8>}, {pipeline_mode = #tpu.pipeline_mode<synchronous>, transform_indices = @transform_16, window_bounds = array<i64: 8, 1>}, {pipeline_mode = #tpu.pipeline_mode<synchronous>, transform_indices = @transform_17, window_bounds = array<i64: 8, 8>}, {pipeline_mode = #tpu.pipeline_mode<synchronous>, transform_indices = @transform_18, window_bounds = array<i64: 8, 1>}, {pipeline_mode = #tpu.pipeline_mode<synchronous>, transform_indices = @transform_19, window_bounds = array<i64: 8, 8>}, {pipeline_mode = #tpu.pipeline_mode<synchronous>, transform_indices = @transform_20, window_bounds = array<i64: 8, 1>}, {pipeline_mode = #tpu.pipeline_mode<synchronous>, transform_indices = @transform_21, window_bounds = array<i64: 8, 8>}, {pipeline_mode = #tpu.pipeline_mode<synchronous>, transform_indices = @transform_22, window_bounds = array<i64: 8, 1>}, {transform_indices = @transform_23, window_bounds = array<i64: 8, 512>}]} {
    %c0 = arith.constant 0 : index
    %c0_0 = arith.constant 0 : index
    %0 = vector.load %arg4[%c0, %c0_0] : memref<2x512xf32, #tpu.memory_space<vmem>>, vector<2x512xf32>
    %c0_1 = arith.constant 0 : index
    %c0_2 = arith.constant 0 : index
    %1 = vector.load %arg1[%c0_1, %c0_2] : memref<4x512xf32, #tpu.memory_space<vmem>>, vector<4x512xf32>
    %c0_3 = arith.constant 0 : index
    %c0_4 = arith.constant 0 : index
    %2 = vector.load %arg5[%c0_3, %c0_4] : memref<4x512xf32, #tpu.memory_space<vmem>>, vector<4x512xf32>
    %c0_5 = arith.constant 0 : index
    %c0_6 = arith.constant 0 : index
    %3 = vector.load %arg6[%c0_5, %c0_6] : memref<4x512xf32, #tpu.memory_space<vmem>>, vector<4x512xf32>
    %cst = arith.constant dense<0.000000e+00> : vector<512xf32>
    %4 = vector.multi_reduction <add>, %1, %cst [0] : vector<4x512xf32> to vector<512xf32>
    %5 = vector.shape_cast %4 : vector<512xf32> to vector<1x512xf32>
    %cst_7 = arith.constant dense<0.000000e+00> : vector<1x2xf32>
    %6 = tpu.matmul %5, %0, %cst_7 {dimension_numbers = #tpu.dot_dimension_numbers<[1], [1], [0], [0], [0, 0, 1, 0], [], []>} : vector<1x512xf32>, vector<2x512xf32>, vector<1x2xf32> -> vector<1x2xf32>
    %cst_8 = arith.constant 9.765625E-4 : f32
    %7 = vector.broadcast %cst_8 : f32 to vector<1x2xf32>
    %8 = arith.mulf %6, %7 : vector<1x2xf32>
    %cst_9 = arith.constant dense<0.000000e+00> : vector<1x512xf32>
    %9 = tpu.matmul %8, %0, %cst_9 {dimension_numbers = #tpu.dot_dimension_numbers<[1], [0], [0], [1], [0, 0, 1, 1], [], []>} : vector<1x2xf32>, vector<2x512xf32>, vector<1x512xf32> -> vector<1x512xf32>
    %10 = vector.broadcast %9 : vector<1x512xf32> to vector<4x512xf32>
    %11 = arith.subf %1, %10 : vector<4x512xf32>
    %12 = arith.mulf %11, %11 : vector<4x512xf32>
    %cst_10 = arith.constant dense<0.000000e+00> : vector<512xf32>
    %13 = vector.multi_reduction <add>, %12, %cst_10 [0] : vector<4x512xf32> to vector<512xf32>
    %14 = vector.shape_cast %13 : vector<512xf32> to vector<1x512xf32>
    %cst_11 = arith.constant dense<0.000000e+00> : vector<1x2xf32>
    %15 = tpu.matmul %14, %0, %cst_11 {dimension_numbers = #tpu.dot_dimension_numbers<[1], [1], [0], [0], [0, 0, 1, 0], [], []>} : vector<1x512xf32>, vector<2x512xf32>, vector<1x2xf32> -> vector<1x2xf32>
    %cst_12 = arith.constant 9.765625E-4 : f32
    %16 = vector.broadcast %cst_12 : f32 to vector<1x2xf32>
    %17 = arith.mulf %15, %16 : vector<1x2xf32>
    %cst_13 = arith.constant 9.99999974E-6 : f32
    %18 = vector.broadcast %cst_13 : f32 to vector<1x2xf32>
    %19 = arith.addf %17, %18 : vector<1x2xf32>
    %20 = math.rsqrt %19 : vector<1x2xf32>
    %cst_14 = arith.constant dense<0.000000e+00> : vector<1x512xf32>
    %21 = tpu.matmul %20, %0, %cst_14 {dimension_numbers = #tpu.dot_dimension_numbers<[1], [0], [0], [1], [0, 0, 1, 1], [], []>} : vector<1x2xf32>, vector<2x512xf32>, vector<1x512xf32> -> vector<1x512xf32>
    %22 = vector.broadcast %21 : vector<1x512xf32> to vector<4x512xf32>
    %23 = arith.mulf %11, %22 : vector<4x512xf32>
    %24 = arith.mulf %23, %2 : vector<4x512xf32>
    %25 = arith.addf %24, %3 : vector<4x512xf32>
    %26 = arith.negf %25 : vector<4x512xf32>
    %27 = math.exp %26 : vector<4x512xf32>
    %cst_15 = arith.constant 1.000000e+00 : f32
    %28 = vector.broadcast %cst_15 : f32 to vector<4x512xf32>
    %29 = arith.addf %28, %27 : vector<4x512xf32>
    %30 = arith.divf %28, %29 : vector<4x512xf32>
    %31 = arith.mulf %25, %30 : vector<4x512xf32>
    %c17_i32 = arith.constant 17 : i32
    %32 = tpu.dynamic_rotate %31 by %c17_i32 dim 1 : vector<4x512xf32>, i32 -> vector<4x512xf32>
    %c0_16 = arith.constant 0 : index
    %c0_17 = arith.constant 0 : index
    %33 = vector.load %arg3[%c0_16, %c0_17] : memref<9x512xf32, #tpu.memory_space<vmem>>, vector<1x512xf32>
    %34 = vector.broadcast %33 : vector<1x512xf32> to vector<4x512xf32>
    %35 = arith.mulf %32, %34 : vector<4x512xf32>
    %c0_18 = arith.constant 0 : index
    %c0_19 = arith.constant 0 : index
    %c0_20 = arith.constant 0 : index
    %36 = vector.load %arg7[%c0_18, %c0_19, %c0_20] : memref<9x8x4xbf16, #tpu.memory_space<vmem>>, vector<1x8x4xbf16>
    %37 = vector.shape_cast %36 : vector<1x8x4xbf16> to vector<8x4xbf16>
    %38 = arith.truncf %35 : vector<4x512xf32> to vector<4x512xbf16>
    %cst_21 = arith.constant dense<0.000000e+00> : vector<8x512xf32>
    %39 = tpu.matmul %37, %38, %cst_21 {dimension_numbers = #tpu.dot_dimension_numbers<[1], [0], [0], [1], [0, 0, 1, 1], [], []>} : vector<8x4xbf16>, vector<4x512xbf16>, vector<8x512xf32> -> vector<8x512xf32>
    %c16_i32 = arith.constant 16 : i32
    %40 = tpu.dynamic_rotate %31 by %c16_i32 dim 1 : vector<4x512xf32>, i32 -> vector<4x512xf32>
    %c1 = arith.constant 1 : index
    %c0_22 = arith.constant 0 : index
    %41 = vector.load %arg3[%c1, %c0_22] : memref<9x512xf32, #tpu.memory_space<vmem>>, vector<1x512xf32>
    %42 = vector.broadcast %41 : vector<1x512xf32> to vector<4x512xf32>
    %43 = arith.mulf %40, %42 : vector<4x512xf32>
    %c1_23 = arith.constant 1 : index
    %c0_24 = arith.constant 0 : index
    %c0_25 = arith.constant 0 : index
    %44 = vector.load %arg7[%c1_23, %c0_24, %c0_25] : memref<9x8x4xbf16, #tpu.memory_space<vmem>>, vector<1x8x4xbf16>
    %45 = vector.shape_cast %44 : vector<1x8x4xbf16> to vector<8x4xbf16>
    %46 = arith.truncf %43 : vector<4x512xf32> to vector<4x512xbf16>
    %cst_26 = arith.constant dense<0.000000e+00> : vector<8x512xf32>
    %47 = tpu.matmul %45, %46, %cst_26 {dimension_numbers = #tpu.dot_dimension_numbers<[1], [0], [0], [1], [0, 0, 1, 1], [], []>} : vector<8x4xbf16>, vector<4x512xbf16>, vector<8x512xf32> -> vector<8x512xf32>
    %48 = arith.addf %39, %47 : vector<8x512xf32>
    %c15_i32 = arith.constant 15 : i32
    %49 = tpu.dynamic_rotate %31 by %c15_i32 dim 1 : vector<4x512xf32>, i32 -> vector<4x512xf32>
    %c2 = arith.constant 2 : index
    %c0_27 = arith.constant 0 : index
    %50 = vector.load %arg3[%c2, %c0_27] : memref<9x512xf32, #tpu.memory_space<vmem>>, vector<1x512xf32>
    %51 = vector.broadcast %50 : vector<1x512xf32> to vector<4x512xf32>
    %52 = arith.mulf %49, %51 : vector<4x512xf32>
    %c2_28 = arith.constant 2 : index
    %c0_29 = arith.constant 0 : index
    %c0_30 = arith.constant 0 : index
    %53 = vector.load %arg7[%c2_28, %c0_29, %c0_30] : memref<9x8x4xbf16, #tpu.memory_space<vmem>>, vector<1x8x4xbf16>
    %54 = vector.shape_cast %53 : vector<1x8x4xbf16> to vector<8x4xbf16>
    %55 = arith.truncf %52 : vector<4x512xf32> to vector<4x512xbf16>
    %cst_31 = arith.constant dense<0.000000e+00> : vector<8x512xf32>
    %56 = tpu.matmul %54, %55, %cst_31 {dimension_numbers = #tpu.dot_dimension_numbers<[1], [0], [0], [1], [0, 0, 1, 1], [], []>} : vector<8x4xbf16>, vector<4x512xbf16>, vector<8x512xf32> -> vector<8x512xf32>
    %57 = arith.addf %48, %56 : vector<8x512xf32>
    %c1_i32 = arith.constant 1 : i32
    %58 = tpu.dynamic_rotate %31 by %c1_i32 dim 1 : vector<4x512xf32>, i32 -> vector<4x512xf32>
    %c3 = arith.constant 3 : index
    %c0_32 = arith.constant 0 : index
    %59 = vector.load %arg3[%c3, %c0_32] : memref<9x512xf32, #tpu.memory_space<vmem>>, vector<1x512xf32>
    %60 = vector.broadcast %59 : vector<1x512xf32> to vector<4x512xf32>
    %61 = arith.mulf %58, %60 : vector<4x512xf32>
    %c3_33 = arith.constant 3 : index
    %c0_34 = arith.constant 0 : index
    %c0_35 = arith.constant 0 : index
    %62 = vector.load %arg7[%c3_33, %c0_34, %c0_35] : memref<9x8x4xbf16, #tpu.memory_space<vmem>>, vector<1x8x4xbf16>
    %63 = vector.shape_cast %62 : vector<1x8x4xbf16> to vector<8x4xbf16>
    %64 = arith.truncf %61 : vector<4x512xf32> to vector<4x512xbf16>
    %cst_36 = arith.constant dense<0.000000e+00> : vector<8x512xf32>
    %65 = tpu.matmul %63, %64, %cst_36 {dimension_numbers = #tpu.dot_dimension_numbers<[1], [0], [0], [1], [0, 0, 1, 1], [], []>} : vector<8x4xbf16>, vector<4x512xbf16>, vector<8x512xf32> -> vector<8x512xf32>
    %66 = arith.addf %57, %65 : vector<8x512xf32>
    %c4 = arith.constant 4 : index
    %c0_37 = arith.constant 0 : index
    %c0_38 = arith.constant 0 : index
    %67 = vector.load %arg7[%c4, %c0_37, %c0_38] : memref<9x8x4xbf16, #tpu.memory_space<vmem>>, vector<1x8x4xbf16>
    %68 = vector.shape_cast %67 : vector<1x8x4xbf16> to vector<8x4xbf16>
    %69 = arith.truncf %31 : vector<4x512xf32> to vector<4x512xbf16>
    %cst_39 = arith.constant dense<0.000000e+00> : vector<8x512xf32>
    %70 = tpu.matmul %68, %69, %cst_39 {dimension_numbers = #tpu.dot_dimension_numbers<[1], [0], [0], [1], [0, 0, 1, 1], [], []>} : vector<8x4xbf16>, vector<4x512xbf16>, vector<8x512xf32> -> vector<8x512xf32>
    %71 = arith.addf %66, %70 : vector<8x512xf32>
    %c511_i32 = arith.constant 511 : i32
    %72 = tpu.dynamic_rotate %31 by %c511_i32 dim 1 : vector<4x512xf32>, i32 -> vector<4x512xf32>
    %c5 = arith.constant 5 : index
    %c0_40 = arith.constant 0 : index
    %73 = vector.load %arg3[%c5, %c0_40] : memref<9x512xf32, #tpu.memory_space<vmem>>, vector<1x512xf32>
    %74 = vector.broadcast %73 : vector<1x512xf32> to vector<4x512xf32>
    %75 = arith.mulf %72, %74 : vector<4x512xf32>
    %c5_41 = arith.constant 5 : index
    %c0_42 = arith.constant 0 : index
    %c0_43 = arith.constant 0 : index
    %76 = vector.load %arg7[%c5_41, %c0_42, %c0_43] : memref<9x8x4xbf16, #tpu.memory_space<vmem>>, vector<1x8x4xbf16>
    %77 = vector.shape_cast %76 : vector<1x8x4xbf16> to vector<8x4xbf16>
    %78 = arith.truncf %75 : vector<4x512xf32> to vector<4x512xbf16>
    %cst_44 = arith.constant dense<0.000000e+00> : vector<8x512xf32>
    %79 = tpu.matmul %77, %78, %cst_44 {dimension_numbers = #tpu.dot_dimension_numbers<[1], [0], [0], [1], [0, 0, 1, 1], [], []>} : vector<8x4xbf16>, vector<4x512xbf16>, vector<8x512xf32> -> vector<8x512xf32>
    %80 = arith.addf %71, %79 : vector<8x512xf32>
    %c497_i32 = arith.constant 497 : i32
    %81 = tpu.dynamic_rotate %31 by %c497_i32 dim 1 : vector<4x512xf32>, i32 -> vector<4x512xf32>
    %c6 = arith.constant 6 : index
    %c0_45 = arith.constant 0 : index
    %82 = vector.load %arg3[%c6, %c0_45] : memref<9x512xf32, #tpu.memory_space<vmem>>, vector<1x512xf32>
    %83 = vector.broadcast %82 : vector<1x512xf32> to vector<4x512xf32>
    %84 = arith.mulf %81, %83 : vector<4x512xf32>
    %c6_46 = arith.constant 6 : index
    %c0_47 = arith.constant 0 : index
    %c0_48 = arith.constant 0 : index
    %85 = vector.load %arg7[%c6_46, %c0_47, %c0_48] : memref<9x8x4xbf16, #tpu.memory_space<vmem>>, vector<1x8x4xbf16>
    %86 = vector.shape_cast %85 : vector<1x8x4xbf16> to vector<8x4xbf16>
    %87 = arith.truncf %84 : vector<4x512xf32> to vector<4x512xbf16>
    %cst_49 = arith.constant dense<0.000000e+00> : vector<8x512xf32>
    %88 = tpu.matmul %86, %87, %cst_49 {dimension_numbers = #tpu.dot_dimension_numbers<[1], [0], [0], [1], [0, 0, 1, 1], [], []>} : vector<8x4xbf16>, vector<4x512xbf16>, vector<8x512xf32> -> vector<8x512xf32>
    %89 = arith.addf %80, %88 : vector<8x512xf32>
    %c496_i32 = arith.constant 496 : i32
    %90 = tpu.dynamic_rotate %31 by %c496_i32 dim 1 : vector<4x512xf32>, i32 -> vector<4x512xf32>
    %c7 = arith.constant 7 : index
    %c0_50 = arith.constant 0 : index
    %91 = vector.load %arg3[%c7, %c0_50] : memref<9x512xf32, #tpu.memory_space<vmem>>, vector<1x512xf32>
    %92 = vector.broadcast %91 : vector<1x512xf32> to vector<4x512xf32>
    %93 = arith.mulf %90, %92 : vector<4x512xf32>
    %c7_51 = arith.constant 7 : index
    %c0_52 = arith.constant 0 : index
    %c0_53 = arith.constant 0 : index
    %94 = vector.load %arg7[%c7_51, %c0_52, %c0_53] : memref<9x8x4xbf16, #tpu.memory_space<vmem>>, vector<1x8x4xbf16>
    %95 = vector.shape_cast %94 : vector<1x8x4xbf16> to vector<8x4xbf16>
    %96 = arith.truncf %93 : vector<4x512xf32> to vector<4x512xbf16>
    %cst_54 = arith.constant dense<0.000000e+00> : vector<8x512xf32>
    %97 = tpu.matmul %95, %96, %cst_54 {dimension_numbers = #tpu.dot_dimension_numbers<[1], [0], [0], [1], [0, 0, 1, 1], [], []>} : vector<8x4xbf16>, vector<4x512xbf16>, vector<8x512xf32> -> vector<8x512xf32>
    %98 = arith.addf %89, %97 : vector<8x512xf32>
    %c495_i32 = arith.constant 495 : i32
    %99 = tpu.dynamic_rotate %31 by %c495_i32 dim 1 : vector<4x512xf32>, i32 -> vector<4x512xf32>
    %c8 = arith.constant 8 : index
    %c0_55 = arith.constant 0 : index
    %100 = vector.load %arg3[%c8, %c0_55] : memref<9x512xf32, #tpu.memory_space<vmem>>, vector<1x512xf32>
    %101 = vector.broadcast %100 : vector<1x512xf32> to vector<4x512xf32>
    %102 = arith.mulf %99, %101 : vector<4x512xf32>
    %c8_56 = arith.constant 8 : index
    %c0_57 = arith.constant 0 : index
    %c0_58 = arith.constant 0 : index
    %103 = vector.load %arg7[%c8_56, %c0_57, %c0_58] : memref<9x8x4xbf16, #tpu.memory_space<vmem>>, vector<1x8x4xbf16>
    %104 = vector.shape_cast %103 : vector<1x8x4xbf16> to vector<8x4xbf16>
    %105 = arith.truncf %102 : vector<4x512xf32> to vector<4x512xbf16>
    %cst_59 = arith.constant dense<0.000000e+00> : vector<8x512xf32>
    %106 = tpu.matmul %104, %105, %cst_59 {dimension_numbers = #tpu.dot_dimension_numbers<[1], [0], [0], [1], [0, 0, 1, 1], [], []>} : vector<8x4xbf16>, vector<4x512xbf16>, vector<8x512xf32> -> vector<8x512xf32>
    %107 = arith.addf %98, %106 : vector<8x512xf32>
    %c0_60 = arith.constant 0 : index
    %c0_61 = arith.constant 0 : index
    %108 = vector.load %arg2[%c0_60, %c0_61] : memref<8x512xf32, #tpu.memory_space<vmem>>, vector<8x512xf32>
    %109 = arith.addf %107, %108 : vector<8x512xf32>
    %c0_62 = arith.constant 0 : index
    %c0_63 = arith.constant 0 : index
    %110 = vector.load %arg8[%c0_62, %c0_63] : memref<8x512xf32, #tpu.memory_space<vmem>>, vector<8x512xf32>
    %c0_64 = arith.constant 0 : index
    %c0_65 = arith.constant 0 : index
    %111 = vector.load %arg9[%c0_64, %c0_65] : memref<8x512xf32, #tpu.memory_space<vmem>>, vector<8x512xf32>
    %cst_66 = arith.constant dense<0.000000e+00> : vector<512xf32>
    %112 = vector.multi_reduction <add>, %109, %cst_66 [0] : vector<8x512xf32> to vector<512xf32>
    %113 = vector.shape_cast %112 : vector<512xf32> to vector<1x512xf32>
    %cst_67 = arith.constant dense<0.000000e+00> : vector<1x2xf32>
    %114 = tpu.matmul %113, %0, %cst_67 {dimension_numbers = #tpu.dot_dimension_numbers<[1], [1], [0], [0], [0, 0, 1, 0], [], []>} : vector<1x512xf32>, vector<2x512xf32>, vector<1x2xf32> -> vector<1x2xf32>
    %cst_68 = arith.constant 4.8828125E-4 : f32
    %115 = vector.broadcast %cst_68 : f32 to vector<1x2xf32>
    %116 = arith.mulf %114, %115 : vector<1x2xf32>
    %cst_69 = arith.constant dense<0.000000e+00> : vector<1x512xf32>
    %117 = tpu.matmul %116, %0, %cst_69 {dimension_numbers = #tpu.dot_dimension_numbers<[1], [0], [0], [1], [0, 0, 1, 1], [], []>} : vector<1x2xf32>, vector<2x512xf32>, vector<1x512xf32> -> vector<1x512xf32>
    %118 = vector.broadcast %117 : vector<1x512xf32> to vector<8x512xf32>
    %119 = arith.subf %109, %118 : vector<8x512xf32>
    %120 = arith.mulf %119, %119 : vector<8x512xf32>
    %cst_70 = arith.constant dense<0.000000e+00> : vector<512xf32>
    %121 = vector.multi_reduction <add>, %120, %cst_70 [0] : vector<8x512xf32> to vector<512xf32>
    %122 = vector.shape_cast %121 : vector<512xf32> to vector<1x512xf32>
    %cst_71 = arith.constant dense<0.000000e+00> : vector<1x2xf32>
    %123 = tpu.matmul %122, %0, %cst_71 {dimension_numbers = #tpu.dot_dimension_numbers<[1], [1], [0], [0], [0, 0, 1, 0], [], []>} : vector<1x512xf32>, vector<2x512xf32>, vector<1x2xf32> -> vector<1x2xf32>
    %cst_72 = arith.constant 4.8828125E-4 : f32
    %124 = vector.broadcast %cst_72 : f32 to vector<1x2xf32>
    %125 = arith.mulf %123, %124 : vector<1x2xf32>
    %cst_73 = arith.constant 9.99999974E-6 : f32
    %126 = vector.broadcast %cst_73 : f32 to vector<1x2xf32>
    %127 = arith.addf %125, %126 : vector<1x2xf32>
    %128 = math.rsqrt %127 : vector<1x2xf32>
    %cst_74 = arith.constant dense<0.000000e+00> : vector<1x512xf32>
    %129 = tpu.matmul %128, %0, %cst_74 {dimension_numbers = #tpu.dot_dimension_numbers<[1], [0], [0], [1], [0, 0, 1, 1], [], []>} : vector<1x2xf32>, vector<2x512xf32>, vector<1x512xf32> -> vector<1x512xf32>
    %130 = vector.broadcast %129 : vector<1x512xf32> to vector<8x512xf32>
    %131 = arith.mulf %119, %130 : vector<8x512xf32>
    %132 = arith.mulf %131, %110 : vector<8x512xf32>
    %133 = arith.addf %132, %111 : vector<8x512xf32>
    %134 = arith.negf %133 : vector<8x512xf32>
    %135 = math.exp %134 : vector<8x512xf32>
    %cst_75 = arith.constant 1.000000e+00 : f32
    %136 = vector.broadcast %cst_75 : f32 to vector<8x512xf32>
    %137 = arith.addf %136, %135 : vector<8x512xf32>
    %138 = arith.divf %136, %137 : vector<8x512xf32>
    %139 = arith.mulf %133, %138 : vector<8x512xf32>
    %c17_i32_76 = arith.constant 17 : i32
    %140 = tpu.dynamic_rotate %139 by %c17_i32_76 dim 1 : vector<8x512xf32>, i32 -> vector<8x512xf32>
    %c0_77 = arith.constant 0 : index
    %c0_78 = arith.constant 0 : index
    %141 = vector.load %arg3[%c0_77, %c0_78] : memref<9x512xf32, #tpu.memory_space<vmem>>, vector<1x512xf32>
    %142 = vector.broadcast %141 : vector<1x512xf32> to vector<8x512xf32>
    %143 = arith.mulf %140, %142 : vector<8x512xf32>
    %c0_79 = arith.constant 0 : index
    %c0_80 = arith.constant 0 : index
    %c0_81 = arith.constant 0 : index
    %144 = vector.load %arg10[%c0_79, %c0_80, %c0_81] : memref<9x8x8xbf16, #tpu.memory_space<vmem>>, vector<1x8x8xbf16>
    %145 = vector.shape_cast %144 : vector<1x8x8xbf16> to vector<8x8xbf16>
    %146 = arith.truncf %143 : vector<8x512xf32> to vector<8x512xbf16>
    %cst_82 = arith.constant dense<0.000000e+00> : vector<8x512xf32>
    %147 = tpu.matmul %145, %146, %cst_82 {dimension_numbers = #tpu.dot_dimension_numbers<[1], [0], [0], [1], [0, 0, 1, 1], [], []>} : vector<8x8xbf16>, vector<8x512xbf16>, vector<8x512xf32> -> vector<8x512xf32>
    %c16_i32_83 = arith.constant 16 : i32
    %148 = tpu.dynamic_rotate %139 by %c16_i32_83 dim 1 : vector<8x512xf32>, i32 -> vector<8x512xf32>
    %c1_84 = arith.constant 1 : index
    %c0_85 = arith.constant 0 : index
    %149 = vector.load %arg3[%c1_84, %c0_85] : memref<9x512xf32, #tpu.memory_space<vmem>>, vector<1x512xf32>
    %150 = vector.broadcast %149 : vector<1x512xf32> to vector<8x512xf32>
    %151 = arith.mulf %148, %150 : vector<8x512xf32>
    %c1_86 = arith.constant 1 : index
    %c0_87 = arith.constant 0 : index
    %c0_88 = arith.constant 0 : index
    %152 = vector.load %arg10[%c1_86, %c0_87, %c0_88] : memref<9x8x8xbf16, #tpu.memory_space<vmem>>, vector<1x8x8xbf16>
    %153 = vector.shape_cast %152 : vector<1x8x8xbf16> to vector<8x8xbf16>
    %154 = arith.truncf %151 : vector<8x512xf32> to vector<8x512xbf16>
    %cst_89 = arith.constant dense<0.000000e+00> : vector<8x512xf32>
    %155 = tpu.matmul %153, %154, %cst_89 {dimension_numbers = #tpu.dot_dimension_numbers<[1], [0], [0], [1], [0, 0, 1, 1], [], []>} : vector<8x8xbf16>, vector<8x512xbf16>, vector<8x512xf32> -> vector<8x512xf32>
    %156 = arith.addf %147, %155 : vector<8x512xf32>
    %c15_i32_90 = arith.constant 15 : i32
    %157 = tpu.dynamic_rotate %139 by %c15_i32_90 dim 1 : vector<8x512xf32>, i32 -> vector<8x512xf32>
    %c2_91 = arith.constant 2 : index
    %c0_92 = arith.constant 0 : index
    %158 = vector.load %arg3[%c2_91, %c0_92] : memref<9x512xf32, #tpu.memory_space<vmem>>, vector<1x512xf32>
    %159 = vector.broadcast %158 : vector<1x512xf32> to vector<8x512xf32>
    %160 = arith.mulf %157, %159 : vector<8x512xf32>
    %c2_93 = arith.constant 2 : index
    %c0_94 = arith.constant 0 : index
    %c0_95 = arith.constant 0 : index
    %161 = vector.load %arg10[%c2_93, %c0_94, %c0_95] : memref<9x8x8xbf16, #tpu.memory_space<vmem>>, vector<1x8x8xbf16>
    %162 = vector.shape_cast %161 : vector<1x8x8xbf16> to vector<8x8xbf16>
    %163 = arith.truncf %160 : vector<8x512xf32> to vector<8x512xbf16>
    %cst_96 = arith.constant dense<0.000000e+00> : vector<8x512xf32>
    %164 = tpu.matmul %162, %163, %cst_96 {dimension_numbers = #tpu.dot_dimension_numbers<[1], [0], [0], [1], [0, 0, 1, 1], [], []>} : vector<8x8xbf16>, vector<8x512xbf16>, vector<8x512xf32> -> vector<8x512xf32>
    %165 = arith.addf %156, %164 : vector<8x512xf32>
    %c1_i32_97 = arith.constant 1 : i32
    %166 = tpu.dynamic_rotate %139 by %c1_i32_97 dim 1 : vector<8x512xf32>, i32 -> vector<8x512xf32>
    %c3_98 = arith.constant 3 : index
    %c0_99 = arith.constant 0 : index
    %167 = vector.load %arg3[%c3_98, %c0_99] : memref<9x512xf32, #tpu.memory_space<vmem>>, vector<1x512xf32>
    %168 = vector.broadcast %167 : vector<1x512xf32> to vector<8x512xf32>
    %169 = arith.mulf %166, %168 : vector<8x512xf32>
    %c3_100 = arith.constant 3 : index
    %c0_101 = arith.constant 0 : index
    %c0_102 = arith.constant 0 : index
    %170 = vector.load %arg10[%c3_100, %c0_101, %c0_102] : memref<9x8x8xbf16, #tpu.memory_space<vmem>>, vector<1x8x8xbf16>
    %171 = vector.shape_cast %170 : vector<1x8x8xbf16> to vector<8x8xbf16>
    %172 = arith.truncf %169 : vector<8x512xf32> to vector<8x512xbf16>
    %cst_103 = arith.constant dense<0.000000e+00> : vector<8x512xf32>
    %173 = tpu.matmul %171, %172, %cst_103 {dimension_numbers = #tpu.dot_dimension_numbers<[1], [0], [0], [1], [0, 0, 1, 1], [], []>} : vector<8x8xbf16>, vector<8x512xbf16>, vector<8x512xf32> -> vector<8x512xf32>
    %174 = arith.addf %165, %173 : vector<8x512xf32>
    %c4_104 = arith.constant 4 : index
    %c0_105 = arith.constant 0 : index
    %c0_106 = arith.constant 0 : index
    %175 = vector.load %arg10[%c4_104, %c0_105, %c0_106] : memref<9x8x8xbf16, #tpu.memory_space<vmem>>, vector<1x8x8xbf16>
    %176 = vector.shape_cast %175 : vector<1x8x8xbf16> to vector<8x8xbf16>
    %177 = arith.truncf %139 : vector<8x512xf32> to vector<8x512xbf16>
    %cst_107 = arith.constant dense<0.000000e+00> : vector<8x512xf32>
    %178 = tpu.matmul %176, %177, %cst_107 {dimension_numbers = #tpu.dot_dimension_numbers<[1], [0], [0], [1], [0, 0, 1, 1], [], []>} : vector<8x8xbf16>, vector<8x512xbf16>, vector<8x512xf32> -> vector<8x512xf32>
    %179 = arith.addf %174, %178 : vector<8x512xf32>
    %c511_i32_108 = arith.constant 511 : i32
    %180 = tpu.dynamic_rotate %139 by %c511_i32_108 dim 1 : vector<8x512xf32>, i32 -> vector<8x512xf32>
    %c5_109 = arith.constant 5 : index
    %c0_110 = arith.constant 0 : index
    %181 = vector.load %arg3[%c5_109, %c0_110] : memref<9x512xf32, #tpu.memory_space<vmem>>, vector<1x512xf32>
    %182 = vector.broadcast %181 : vector<1x512xf32> to vector<8x512xf32>
    %183 = arith.mulf %180, %182 : vector<8x512xf32>
    %c5_111 = arith.constant 5 : index
    %c0_112 = arith.constant 0 : index
    %c0_113 = arith.constant 0 : index
    %184 = vector.load %arg10[%c5_111, %c0_112, %c0_113] : memref<9x8x8xbf16, #tpu.memory_space<vmem>>, vector<1x8x8xbf16>
    %185 = vector.shape_cast %184 : vector<1x8x8xbf16> to vector<8x8xbf16>
    %186 = arith.truncf %183 : vector<8x512xf32> to vector<8x512xbf16>
    %cst_114 = arith.constant dense<0.000000e+00> : vector<8x512xf32>
    %187 = tpu.matmul %185, %186, %cst_114 {dimension_numbers = #tpu.dot_dimension_numbers<[1], [0], [0], [1], [0, 0, 1, 1], [], []>} : vector<8x8xbf16>, vector<8x512xbf16>, vector<8x512xf32> -> vector<8x512xf32>
    %188 = arith.addf %179, %187 : vector<8x512xf32>
    %c497_i32_115 = arith.constant 497 : i32
    %189 = tpu.dynamic_rotate %139 by %c497_i32_115 dim 1 : vector<8x512xf32>, i32 -> vector<8x512xf32>
    %c6_116 = arith.constant 6 : index
    %c0_117 = arith.constant 0 : index
    %190 = vector.load %arg3[%c6_116, %c0_117] : memref<9x512xf32, #tpu.memory_space<vmem>>, vector<1x512xf32>
    %191 = vector.broadcast %190 : vector<1x512xf32> to vector<8x512xf32>
    %192 = arith.mulf %189, %191 : vector<8x512xf32>
    %c6_118 = arith.constant 6 : index
    %c0_119 = arith.constant 0 : index
    %c0_120 = arith.constant 0 : index
    %193 = vector.load %arg10[%c6_118, %c0_119, %c0_120] : memref<9x8x8xbf16, #tpu.memory_space<vmem>>, vector<1x8x8xbf16>
    %194 = vector.shape_cast %193 : vector<1x8x8xbf16> to vector<8x8xbf16>
    %195 = arith.truncf %192 : vector<8x512xf32> to vector<8x512xbf16>
    %cst_121 = arith.constant dense<0.000000e+00> : vector<8x512xf32>
    %196 = tpu.matmul %194, %195, %cst_121 {dimension_numbers = #tpu.dot_dimension_numbers<[1], [0], [0], [1], [0, 0, 1, 1], [], []>} : vector<8x8xbf16>, vector<8x512xbf16>, vector<8x512xf32> -> vector<8x512xf32>
    %197 = arith.addf %188, %196 : vector<8x512xf32>
    %c496_i32_122 = arith.constant 496 : i32
    %198 = tpu.dynamic_rotate %139 by %c496_i32_122 dim 1 : vector<8x512xf32>, i32 -> vector<8x512xf32>
    %c7_123 = arith.constant 7 : index
    %c0_124 = arith.constant 0 : index
    %199 = vector.load %arg3[%c7_123, %c0_124] : memref<9x512xf32, #tpu.memory_space<vmem>>, vector<1x512xf32>
    %200 = vector.broadcast %199 : vector<1x512xf32> to vector<8x512xf32>
    %201 = arith.mulf %198, %200 : vector<8x512xf32>
    %c7_125 = arith.constant 7 : index
    %c0_126 = arith.constant 0 : index
    %c0_127 = arith.constant 0 : index
    %202 = vector.load %arg10[%c7_125, %c0_126, %c0_127] : memref<9x8x8xbf16, #tpu.memory_space<vmem>>, vector<1x8x8xbf16>
    %203 = vector.shape_cast %202 : vector<1x8x8xbf16> to vector<8x8xbf16>
    %204 = arith.truncf %201 : vector<8x512xf32> to vector<8x512xbf16>
    %cst_128 = arith.constant dense<0.000000e+00> : vector<8x512xf32>
    %205 = tpu.matmul %203, %204, %cst_128 {dimension_numbers = #tpu.dot_dimension_numbers<[1], [0], [0], [1], [0, 0, 1, 1], [], []>} : vector<8x8xbf16>, vector<8x512xbf16>, vector<8x512xf32> -> vector<8x512xf32>
    %206 = arith.addf %197, %205 : vector<8x512xf32>
    %c495_i32_129 = arith.constant 495 : i32
    %207 = tpu.dynamic_rotate %139 by %c495_i32_129 dim 1 : vector<8x512xf32>, i32 -> vector<8x512xf32>
    %c8_130 = arith.constant 8 : index
    %c0_131 = arith.constant 0 : index
    %208 = vector.load %arg3[%c8_130, %c0_131] : memref<9x512xf32, #tpu.memory_space<vmem>>, vector<1x512xf32>
    %209 = vector.broadcast %208 : vector<1x512xf32> to vector<8x512xf32>
    %210 = arith.mulf %207, %209 : vector<8x512xf32>
    %c8_132 = arith.constant 8 : index
    %c0_133 = arith.constant 0 : index
    %c0_134 = arith.constant 0 : index
    %211 = vector.load %arg10[%c8_132, %c0_133, %c0_134] : memref<9x8x8xbf16, #tpu.memory_space<vmem>>, vector<1x8x8xbf16>
    %212 = vector.shape_cast %211 : vector<1x8x8xbf16> to vector<8x8xbf16>
    %213 = arith.truncf %210 : vector<8x512xf32> to vector<8x512xbf16>
    %cst_135 = arith.constant dense<0.000000e+00> : vector<8x512xf32>
    %214 = tpu.matmul %212, %213, %cst_135 {dimension_numbers = #tpu.dot_dimension_numbers<[1], [0], [0], [1], [0, 0, 1, 1], [], []>} : vector<8x8xbf16>, vector<8x512xbf16>, vector<8x512xf32> -> vector<8x512xf32>
    %215 = arith.addf %206, %214 : vector<8x512xf32>
    %c0_136 = arith.constant 0 : index
    %c0_137 = arith.constant 0 : index
    %216 = vector.load %arg11[%c0_136, %c0_137] : memref<8x1xf32, #tpu.memory_space<vmem>>, vector<8x1xf32>
    %217 = vector.broadcast %216 : vector<8x1xf32> to vector<8x512xf32>
    %218 = arith.addf %215, %217 : vector<8x512xf32>
    %c0_138 = arith.constant 0 : index
    %c0_139 = arith.constant 0 : index
    %219 = vector.load %arg12[%c0_138, %c0_139] : memref<8x4xbf16, #tpu.memory_space<vmem>>, vector<8x4xbf16>
    %220 = arith.truncf %1 : vector<4x512xf32> to vector<4x512xbf16>
    %cst_140 = arith.constant dense<0.000000e+00> : vector<8x512xf32>
    %221 = tpu.matmul %219, %220, %cst_140 {dimension_numbers = #tpu.dot_dimension_numbers<[1], [0], [0], [1], [0, 0, 1, 1], [], []>} : vector<8x4xbf16>, vector<4x512xbf16>, vector<8x512xf32> -> vector<8x512xf32>
    %c0_141 = arith.constant 0 : index
    %c0_142 = arith.constant 0 : index
    %222 = vector.load %arg13[%c0_141, %c0_142] : memref<8x1xf32, #tpu.memory_space<vmem>>, vector<8x1xf32>
    %223 = vector.broadcast %222 : vector<8x1xf32> to vector<8x512xf32>
    %224 = arith.addf %221, %223 : vector<8x512xf32>
    %225 = arith.addf %218, %224 : vector<8x512xf32>
    %c0_143 = arith.constant 0 : index
    %c0_144 = arith.constant 0 : index
    %226 = vector.load %arg14[%c0_143, %c0_144] : memref<8x512xf32, #tpu.memory_space<vmem>>, vector<8x512xf32>
    %c0_145 = arith.constant 0 : index
    %c0_146 = arith.constant 0 : index
    %227 = vector.load %arg15[%c0_145, %c0_146] : memref<8x512xf32, #tpu.memory_space<vmem>>, vector<8x512xf32>
    %cst_147 = arith.constant dense<0.000000e+00> : vector<512xf32>
    %228 = vector.multi_reduction <add>, %225, %cst_147 [0] : vector<8x512xf32> to vector<512xf32>
    %229 = vector.shape_cast %228 : vector<512xf32> to vector<1x512xf32>
    %cst_148 = arith.constant dense<0.000000e+00> : vector<1x2xf32>
    %230 = tpu.matmul %229, %0, %cst_148 {dimension_numbers = #tpu.dot_dimension_numbers<[1], [1], [0], [0], [0, 0, 1, 0], [], []>} : vector<1x512xf32>, vector<2x512xf32>, vector<1x2xf32> -> vector<1x2xf32>
    %cst_149 = arith.constant 4.8828125E-4 : f32
    %231 = vector.broadcast %cst_149 : f32 to vector<1x2xf32>
    %232 = arith.mulf %230, %231 : vector<1x2xf32>
    %cst_150 = arith.constant dense<0.000000e+00> : vector<1x512xf32>
    %233 = tpu.matmul %232, %0, %cst_150 {dimension_numbers = #tpu.dot_dimension_numbers<[1], [0], [0], [1], [0, 0, 1, 1], [], []>} : vector<1x2xf32>, vector<2x512xf32>, vector<1x512xf32> -> vector<1x512xf32>
    %234 = vector.broadcast %233 : vector<1x512xf32> to vector<8x512xf32>
    %235 = arith.subf %225, %234 : vector<8x512xf32>
    %236 = arith.mulf %235, %235 : vector<8x512xf32>
    %cst_151 = arith.constant dense<0.000000e+00> : vector<512xf32>
    %237 = vector.multi_reduction <add>, %236, %cst_151 [0] : vector<8x512xf32> to vector<512xf32>
    %238 = vector.shape_cast %237 : vector<512xf32> to vector<1x512xf32>
    %cst_152 = arith.constant dense<0.000000e+00> : vector<1x2xf32>
    %239 = tpu.matmul %238, %0, %cst_152 {dimension_numbers = #tpu.dot_dimension_numbers<[1], [1], [0], [0], [0, 0, 1, 0], [], []>} : vector<1x512xf32>, vector<2x512xf32>, vector<1x2xf32> -> vector<1x2xf32>
    %cst_153 = arith.constant 4.8828125E-4 : f32
    %240 = vector.broadcast %cst_153 : f32 to vector<1x2xf32>
    %241 = arith.mulf %239, %240 : vector<1x2xf32>
    %cst_154 = arith.constant 9.99999974E-6 : f32
    %242 = vector.broadcast %cst_154 : f32 to vector<1x2xf32>
    %243 = arith.addf %241, %242 : vector<1x2xf32>
    %244 = math.rsqrt %243 : vector<1x2xf32>
    %cst_155 = arith.constant dense<0.000000e+00> : vector<1x512xf32>
    %245 = tpu.matmul %244, %0, %cst_155 {dimension_numbers = #tpu.dot_dimension_numbers<[1], [0], [0], [1], [0, 0, 1, 1], [], []>} : vector<1x2xf32>, vector<2x512xf32>, vector<1x512xf32> -> vector<1x512xf32>
    %246 = vector.broadcast %245 : vector<1x512xf32> to vector<8x512xf32>
    %247 = arith.mulf %235, %246 : vector<8x512xf32>
    %248 = arith.mulf %247, %226 : vector<8x512xf32>
    %249 = arith.addf %248, %227 : vector<8x512xf32>
    %250 = arith.truncf %249 : vector<8x512xf32> to vector<8x512xbf16>
    %c0_156 = arith.constant 0 : index
    %c0_157 = arith.constant 0 : index
    %251 = vector.load %arg16[%c0_156, %c0_157] : memref<8x8xbf16, #tpu.memory_space<vmem>>, vector<8x8xbf16>
    %cst_158 = arith.constant dense<0.000000e+00> : vector<8x512xf32>
    %252 = tpu.matmul %251, %250, %cst_158 {dimension_numbers = #tpu.dot_dimension_numbers<[1], [0], [0], [1], [0, 0, 1, 1], [], []>} : vector<8x8xbf16>, vector<8x512xbf16>, vector<8x512xf32> -> vector<8x512xf32>
    %c0_159 = arith.constant 0 : index
    %c0_160 = arith.constant 0 : index
    %253 = vector.load %arg17[%c0_159, %c0_160] : memref<8x1xf32, #tpu.memory_space<vmem>>, vector<8x1xf32>
    %254 = vector.broadcast %253 : vector<8x1xf32> to vector<8x512xf32>
    %255 = arith.addf %252, %254 : vector<8x512xf32>
    %256 = arith.truncf %255 : vector<8x512xf32> to vector<8x512xbf16>
    %c0_161 = arith.constant 0 : index
    %c0_162 = arith.constant 0 : index
    %257 = vector.load %arg18[%c0_161, %c0_162] : memref<8x8xbf16, #tpu.memory_space<vmem>>, vector<8x8xbf16>
    %cst_163 = arith.constant dense<0.000000e+00> : vector<8x512xf32>
    %258 = tpu.matmul %257, %250, %cst_163 {dimension_numbers = #tpu.dot_dimension_numbers<[1], [0], [0], [1], [0, 0, 1, 1], [], []>} : vector<8x8xbf16>, vector<8x512xbf16>, vector<8x512xf32> -> vector<8x512xf32>
    %c0_164 = arith.constant 0 : index
    %c0_165 = arith.constant 0 : index
    %259 = vector.load %arg19[%c0_164, %c0_165] : memref<8x1xf32, #tpu.memory_space<vmem>>, vector<8x1xf32>
    %260 = vector.broadcast %259 : vector<8x1xf32> to vector<8x512xf32>
    %261 = arith.addf %258, %260 : vector<8x512xf32>
    %262 = arith.truncf %261 : vector<8x512xf32> to vector<8x512xbf16>
    %c0_166 = arith.constant 0 : index
    %c0_167 = arith.constant 0 : index
    %263 = vector.load %arg20[%c0_166, %c0_167] : memref<8x8xbf16, #tpu.memory_space<vmem>>, vector<8x8xbf16>
    %cst_168 = arith.constant dense<0.000000e+00> : vector<8x512xf32>
    %264 = tpu.matmul %263, %250, %cst_168 {dimension_numbers = #tpu.dot_dimension_numbers<[1], [0], [0], [1], [0, 0, 1, 1], [], []>} : vector<8x8xbf16>, vector<8x512xbf16>, vector<8x512xf32> -> vector<8x512xf32>
    %c0_169 = arith.constant 0 : index
    %c0_170 = arith.constant 0 : index
    %265 = vector.load %arg21[%c0_169, %c0_170] : memref<8x1xf32, #tpu.memory_space<vmem>>, vector<8x1xf32>
    %266 = vector.broadcast %265 : vector<8x1xf32> to vector<8x512xf32>
    %267 = arith.addf %264, %266 : vector<8x512xf32>
    %268 = arith.truncf %267 : vector<8x512xf32> to vector<8x512xbf16>
    %c0_171 = arith.constant 0 : index
    %c0_172 = arith.constant 0 : index
    %269 = vector.load %arg22[%c0_171, %c0_172] : memref<8x8xbf16, #tpu.memory_space<vmem>>, vector<8x8xbf16>
    %270 = vector.extract_strided_slice %262 {offsets = [0, 0], sizes = [8, 256], strides = [1, 1]} : vector<8x512xbf16> to vector<8x256xbf16>
    %271 = vector.extract_strided_slice %268 {offsets = [0, 0], sizes = [8, 256], strides = [1, 1]} : vector<8x512xbf16> to vector<8x256xbf16>
    %272 = vector.extract_strided_slice %256 {offsets = [0, 0], sizes = [8, 128], strides = [1, 1]} : vector<8x512xbf16> to vector<8x128xbf16>
    %cst_173 = arith.constant dense<0.000000e+00> : vector<128x256xf32>
    %273 = tpu.matmul %272, %270, %cst_173 {dimension_numbers = #tpu.dot_dimension_numbers<[0], [0], [1], [1], [0, 1, 1, 1], [], []>} : vector<8x128xbf16>, vector<8x256xbf16>, vector<128x256xf32> -> vector<128x256xf32>
    %cst_174 = arith.constant dense<0xFF800000> : vector<128xf32>
    %274 = vector.multi_reduction <maximumf>, %273, %cst_174 [1] : vector<128x256xf32> to vector<128xf32>
    %275 = vector.shape_cast %274 : vector<128xf32> to vector<128x1xf32>
    %276 = vector.broadcast %275 : vector<128x1xf32> to vector<128x256xf32>
    %277 = arith.subf %273, %276 : vector<128x256xf32>
    %278 = math.exp %277 : vector<128x256xf32>
    %cst_175 = arith.constant dense<0.000000e+00> : vector<128xf32>
    %279 = vector.multi_reduction <add>, %278, %cst_175 [1] : vector<128x256xf32> to vector<128xf32>
    %280 = vector.shape_cast %279 : vector<128xf32> to vector<128x1xf32>
    %281 = tpu.reciprocal %280 {approx = true} : vector<128x1xf32> -> vector<128x1xf32>
    %282 = vector.broadcast %281 : vector<128x1xf32> to vector<128x256xf32>
    %283 = arith.mulf %278, %282 : vector<128x256xf32>
    %284 = arith.truncf %283 : vector<128x256xf32> to vector<128x256xbf16>
    %cst_176 = arith.constant dense<0.000000e+00> : vector<8x128xf32>
    %285 = tpu.matmul %271, %284, %cst_176 {dimension_numbers = #tpu.dot_dimension_numbers<[1], [1], [0], [0], [0, 0, 1, 0], [], []>} : vector<8x256xbf16>, vector<128x256xbf16>, vector<8x128xf32> -> vector<8x128xf32>
    %286 = arith.truncf %285 : vector<8x128xf32> to vector<8x128xbf16>
    %cst_177 = arith.constant dense<0.000000e+00> : vector<8x128xf32>
    %287 = tpu.matmul %269, %286, %cst_177 {dimension_numbers = #tpu.dot_dimension_numbers<[1], [0], [0], [1], [0, 0, 1, 1], [], []>} : vector<8x8xbf16>, vector<8x128xbf16>, vector<8x128xf32> -> vector<8x128xf32>
    %c0_178 = arith.constant 0 : index
    %c0_179 = arith.constant 0 : index
    %288 = vector.load %arg23[%c0_178, %c0_179] : memref<8x1xf32, #tpu.memory_space<vmem>>, vector<8x1xf32>
    %289 = vector.broadcast %288 : vector<8x1xf32> to vector<8x128xf32>
    %290 = arith.addf %287, %289 : vector<8x128xf32>
    %291 = vector.extract_strided_slice %225 {offsets = [0, 0], sizes = [8, 128], strides = [1, 1]} : vector<8x512xf32> to vector<8x128xf32>
    %292 = arith.addf %291, %290 : vector<8x128xf32>
    %c0_180 = arith.constant 0 : index
    %c0_181 = arith.constant 0 : index
    %293 = vector.load %arg24[%c0_180, %c0_181] : memref<8x512xf32, #tpu.memory_space<vmem>>, vector<8x128xf32>
    tpu.vector_store %arg24[%c0_180, %c0_181], %292 {strides = array<i32>} : memref<8x512xf32, #tpu.memory_space<vmem>>, vector<8x128xf32>,
    %294 = vector.extract_strided_slice %256 {offsets = [0, 128], sizes = [8, 128], strides = [1, 1]} : vector<8x512xbf16> to vector<8x128xbf16>
    %cst_182 = arith.constant dense<0.000000e+00> : vector<128x256xf32>
    %295 = tpu.matmul %294, %270, %cst_182 {dimension_numbers = #tpu.dot_dimension_numbers<[0], [0], [1], [1], [0, 1, 1, 1], [], []>} : vector<8x128xbf16>, vector<8x256xbf16>, vector<128x256xf32> -> vector<128x256xf32>
    %cst_183 = arith.constant dense<0xFF800000> : vector<128xf32>
    %296 = vector.multi_reduction <maximumf>, %295, %cst_183 [1] : vector<128x256xf32> to vector<128xf32>
    %297 = vector.shape_cast %296 : vector<128xf32> to vector<128x1xf32>
    %298 = vector.broadcast %297 : vector<128x1xf32> to vector<128x256xf32>
    %299 = arith.subf %295, %298 : vector<128x256xf32>
    %300 = math.exp %299 : vector<128x256xf32>
    %cst_184 = arith.constant dense<0.000000e+00> : vector<128xf32>
    %301 = vector.multi_reduction <add>, %300, %cst_184 [1] : vector<128x256xf32> to vector<128xf32>
    %302 = vector.shape_cast %301 : vector<128xf32> to vector<128x1xf32>
    %303 = tpu.reciprocal %302 {approx = true} : vector<128x1xf32> -> vector<128x1xf32>
    %304 = vector.broadcast %303 : vector<128x1xf32> to vector<128x256xf32>
    %305 = arith.mulf %300, %304 : vector<128x256xf32>
    %306 = arith.truncf %305 : vector<128x256xf32> to vector<128x256xbf16>
    %cst_185 = arith.constant dense<0.000000e+00> : vector<8x128xf32>
    %307 = tpu.matmul %271, %306, %cst_185 {dimension_numbers = #tpu.dot_dimension_numbers<[1], [1], [0], [0], [0, 0, 1, 0], [], []>} : vector<8x256xbf16>, vector<128x256xbf16>, vector<8x128xf32> -> vector<8x128xf32>
    %308 = arith.truncf %307 : vector<8x128xf32> to vector<8x128xbf16>
    %cst_186 = arith.constant dense<0.000000e+00> : vector<8x128xf32>
    %309 = tpu.matmul %269, %308, %cst_186 {dimension_numbers = #tpu.dot_dimension_numbers<[1], [0], [0], [1], [0, 0, 1, 1], [], []>} : vector<8x8xbf16>, vector<8x128xbf16>, vector<8x128xf32> -> vector<8x128xf32>
    %c0_187 = arith.constant 0 : index
    %c0_188 = arith.constant 0 : index
    %310 = vector.load %arg23[%c0_187, %c0_188] : memref<8x1xf32, #tpu.memory_space<vmem>>, vector<8x1xf32>
    %311 = vector.broadcast %310 : vector<8x1xf32> to vector<8x128xf32>
    %312 = arith.addf %309, %311 : vector<8x128xf32>
    %313 = vector.extract_strided_slice %225 {offsets = [0, 128], sizes = [8, 128], strides = [1, 1]} : vector<8x512xf32> to vector<8x128xf32>
    %314 = arith.addf %313, %312 : vector<8x128xf32>
    %c0_189 = arith.constant 0 : index
    %c128 = arith.constant 128 : index
    %315 = vector.load %arg24[%c0_189, %c128] : memref<8x512xf32, #tpu.memory_space<vmem>>, vector<8x128xf32>
    tpu.vector_store %arg24[%c0_189, %c128], %314 {strides = array<i32>} : memref<8x512xf32, #tpu.memory_space<vmem>>, vector<8x128xf32>,
    %316 = vector.extract_strided_slice %262 {offsets = [0, 256], sizes = [8, 256], strides = [1, 1]} : vector<8x512xbf16> to vector<8x256xbf16>
    %317 = vector.extract_strided_slice %268 {offsets = [0, 256], sizes = [8, 256], strides = [1, 1]} : vector<8x512xbf16> to vector<8x256xbf16>
    %318 = vector.extract_strided_slice %256 {offsets = [0, 256], sizes = [8, 128], strides = [1, 1]} : vector<8x512xbf16> to vector<8x128xbf16>
    %cst_190 = arith.constant dense<0.000000e+00> : vector<128x256xf32>
    %319 = tpu.matmul %318, %316, %cst_190 {dimension_numbers = #tpu.dot_dimension_numbers<[0], [0], [1], [1], [0, 1, 1, 1], [], []>} : vector<8x128xbf16>, vector<8x256xbf16>, vector<128x256xf32> -> vector<128x256xf32>
    %cst_191 = arith.constant dense<0xFF800000> : vector<128xf32>
    %320 = vector.multi_reduction <maximumf>, %319, %cst_191 [1] : vector<128x256xf32> to vector<128xf32>
    %321 = vector.shape_cast %320 : vector<128xf32> to vector<128x1xf32>
    %322 = vector.broadcast %321 : vector<128x1xf32> to vector<128x256xf32>
    %323 = arith.subf %319, %322 : vector<128x256xf32>
    %324 = math.exp %323 : vector<128x256xf32>
    %cst_192 = arith.constant dense<0.000000e+00> : vector<128xf32>
    %325 = vector.multi_reduction <add>, %324, %cst_192 [1] : vector<128x256xf32> to vector<128xf32>
    %326 = vector.shape_cast %325 : vector<128xf32> to vector<128x1xf32>
    %327 = tpu.reciprocal %326 {approx = true} : vector<128x1xf32> -> vector<128x1xf32>
    %328 = vector.broadcast %327 : vector<128x1xf32> to vector<128x256xf32>
    %329 = arith.mulf %324, %328 : vector<128x256xf32>
    %330 = arith.truncf %329 : vector<128x256xf32> to vector<128x256xbf16>
    %cst_193 = arith.constant dense<0.000000e+00> : vector<8x128xf32>
    %331 = tpu.matmul %317, %330, %cst_193 {dimension_numbers = #tpu.dot_dimension_numbers<[1], [1], [0], [0], [0, 0, 1, 0], [], []>} : vector<8x256xbf16>, vector<128x256xbf16>, vector<8x128xf32> -> vector<8x128xf32>
    %332 = arith.truncf %331 : vector<8x128xf32> to vector<8x128xbf16>
    %cst_194 = arith.constant dense<0.000000e+00> : vector<8x128xf32>
    %333 = tpu.matmul %269, %332, %cst_194 {dimension_numbers = #tpu.dot_dimension_numbers<[1], [0], [0], [1], [0, 0, 1, 1], [], []>} : vector<8x8xbf16>, vector<8x128xbf16>, vector<8x128xf32> -> vector<8x128xf32>
    %c0_195 = arith.constant 0 : index
    %c0_196 = arith.constant 0 : index
    %334 = vector.load %arg23[%c0_195, %c0_196] : memref<8x1xf32, #tpu.memory_space<vmem>>, vector<8x1xf32>
    %335 = vector.broadcast %334 : vector<8x1xf32> to vector<8x128xf32>
    %336 = arith.addf %333, %335 : vector<8x128xf32>
    %337 = vector.extract_strided_slice %225 {offsets = [0, 256], sizes = [8, 128], strides = [1, 1]} : vector<8x512xf32> to vector<8x128xf32>
    %338 = arith.addf %337, %336 : vector<8x128xf32>
    %c0_197 = arith.constant 0 : index
    %c256 = arith.constant 256 : index
    %339 = vector.load %arg24[%c0_197, %c256] : memref<8x512xf32, #tpu.memory_space<vmem>>, vector<8x128xf32>
    tpu.vector_store %arg24[%c0_197, %c256], %338 {strides = array<i32>} : memref<8x512xf32, #tpu.memory_space<vmem>>, vector<8x128xf32>,
    %340 = vector.extract_strided_slice %256 {offsets = [0, 384], sizes = [8, 128], strides = [1, 1]} : vector<8x512xbf16> to vector<8x128xbf16>
    %cst_198 = arith.constant dense<0.000000e+00> : vector<128x256xf32>
    %341 = tpu.matmul %340, %316, %cst_198 {dimension_numbers = #tpu.dot_dimension_numbers<[0], [0], [1], [1], [0, 1, 1, 1], [], []>} : vector<8x128xbf16>, vector<8x256xbf16>, vector<128x256xf32> -> vector<128x256xf32>
    %cst_199 = arith.constant dense<0xFF800000> : vector<128xf32>
    %342 = vector.multi_reduction <maximumf>, %341, %cst_199 [1] : vector<128x256xf32> to vector<128xf32>
    %343 = vector.shape_cast %342 : vector<128xf32> to vector<128x1xf32>
    %344 = vector.broadcast %343 : vector<128x1xf32> to vector<128x256xf32>
    %345 = arith.subf %341, %344 : vector<128x256xf32>
    %346 = math.exp %345 : vector<128x256xf32>
    %cst_200 = arith.constant dense<0.000000e+00> : vector<128xf32>
    %347 = vector.multi_reduction <add>, %346, %cst_200 [1] : vector<128x256xf32> to vector<128xf32>
    %348 = vector.shape_cast %347 : vector<128xf32> to vector<128x1xf32>
    %349 = tpu.reciprocal %348 {approx = true} : vector<128x1xf32> -> vector<128x1xf32>
    %350 = vector.broadcast %349 : vector<128x1xf32> to vector<128x256xf32>
    %351 = arith.mulf %346, %350 : vector<128x256xf32>
    %352 = arith.truncf %351 : vector<128x256xf32> to vector<128x256xbf16>
    %cst_201 = arith.constant dense<0.000000e+00> : vector<8x128xf32>
    %353 = tpu.matmul %317, %352, %cst_201 {dimension_numbers = #tpu.dot_dimension_numbers<[1], [1], [0], [0], [0, 0, 1, 0], [], []>} : vector<8x256xbf16>, vector<128x256xbf16>, vector<8x128xf32> -> vector<8x128xf32>
    %354 = arith.truncf %353 : vector<8x128xf32> to vector<8x128xbf16>
    %cst_202 = arith.constant dense<0.000000e+00> : vector<8x128xf32>
    %355 = tpu.matmul %269, %354, %cst_202 {dimension_numbers = #tpu.dot_dimension_numbers<[1], [0], [0], [1], [0, 0, 1, 1], [], []>} : vector<8x8xbf16>, vector<8x128xbf16>, vector<8x128xf32> -> vector<8x128xf32>
    %c0_203 = arith.constant 0 : index
    %c0_204 = arith.constant 0 : index
    %356 = vector.load %arg23[%c0_203, %c0_204] : memref<8x1xf32, #tpu.memory_space<vmem>>, vector<8x1xf32>
    %357 = vector.broadcast %356 : vector<8x1xf32> to vector<8x128xf32>
    %358 = arith.addf %355, %357 : vector<8x128xf32>
    %359 = vector.extract_strided_slice %225 {offsets = [0, 384], sizes = [8, 128], strides = [1, 1]} : vector<8x512xf32> to vector<8x128xf32>
    %360 = arith.addf %359, %358 : vector<8x128xf32>
    %c0_205 = arith.constant 0 : index
    %c384 = arith.constant 384 : index
    %361 = vector.load %arg24[%c0_205, %c384] : memref<8x512xf32, #tpu.memory_space<vmem>>, vector<8x128xf32>
    tpu.vector_store %arg24[%c0_205, %c384], %360 {strides = array<i32>} : memref<8x512xf32, #tpu.memory_space<vmem>>, vector<8x128xf32>,
    return
  }
  func.func @transform_0(%arg0: i32) -> (i32, i32) {
    %c0_i32 = arith.constant 0 : i32
    %c0_i32_0 = arith.constant 0 : i32
    return %c0_i32, %arg0 : i32, i32
  }
  func.func @transform_1(%arg0: i32) -> (i32, i32) {
    %c0_i32 = arith.constant 0 : i32
    %c0_i32_0 = arith.constant 0 : i32
    return %c0_i32, %arg0 : i32, i32
  }
  func.func @transform_2(%arg0: i32) -> (i32, i32) {
    %c0_i32 = arith.constant 0 : i32
    %c0_i32_0 = arith.constant 0 : i32
    %c0_i32_1 = arith.constant 0 : i32
    return %c0_i32, %c0_i32_0 : i32, i32
  }
  func.func @transform_3(%arg0: i32) -> (i32, i32) {
    %c0_i32 = arith.constant 0 : i32
    %c0_i32_0 = arith.constant 0 : i32
    %c0_i32_1 = arith.constant 0 : i32
    return %c0_i32, %c0_i32_0 : i32, i32
  }
  func.func @transform_4(%arg0: i32) -> (i32, i32) {
    %c0_i32 = arith.constant 0 : i32
    %c0_i32_0 = arith.constant 0 : i32
    %c0_i32_1 = arith.constant 0 : i32
    return %c0_i32, %c0_i32_0 : i32, i32
  }
  func.func @transform_5(%arg0: i32) -> (i32, i32) {
    %c0_i32 = arith.constant 0 : i32
    %c0_i32_0 = arith.constant 0 : i32
    %c0_i32_1 = arith.constant 0 : i32
    return %c0_i32, %c0_i32_0 : i32, i32
  }
  func.func @transform_6(%arg0: i32) -> (i32, i32, i32) {
    %c0_i32 = arith.constant 0 : i32
    %c0_i32_0 = arith.constant 0 : i32
    %c0_i32_1 = arith.constant 0 : i32
    %c0_i32_2 = arith.constant 0 : i32
    return %c0_i32, %c0_i32_0, %c0_i32_1 : i32, i32, i32
  }
  func.func @transform_7(%arg0: i32) -> (i32, i32) {
    %c0_i32 = arith.constant 0 : i32
    %c0_i32_0 = arith.constant 0 : i32
    %c0_i32_1 = arith.constant 0 : i32
    return %c0_i32, %c0_i32_0 : i32, i32
  }
  func.func @transform_8(%arg0: i32) -> (i32, i32) {
    %c0_i32 = arith.constant 0 : i32
    %c0_i32_0 = arith.constant 0 : i32
    %c0_i32_1 = arith.constant 0 : i32
    return %c0_i32, %c0_i32_0 : i32, i32
  }
  func.func @transform_9(%arg0: i32) -> (i32, i32, i32) {
    %c0_i32 = arith.constant 0 : i32
    %c0_i32_0 = arith.constant 0 : i32
    %c0_i32_1 = arith.constant 0 : i32
    %c0_i32_2 = arith.constant 0 : i32
    return %c0_i32, %c0_i32_0, %c0_i32_1 : i32, i32, i32
  }
  func.func @transform_10(%arg0: i32) -> (i32, i32) {
    %c0_i32 = arith.constant 0 : i32
    %c0_i32_0 = arith.constant 0 : i32
    %c0_i32_1 = arith.constant 0 : i32
    return %c0_i32, %c0_i32_0 : i32, i32
  }
  func.func @transform_11(%arg0: i32) -> (i32, i32) {
    %c0_i32 = arith.constant 0 : i32
    %c0_i32_0 = arith.constant 0 : i32
    %c0_i32_1 = arith.constant 0 : i32
    return %c0_i32, %c0_i32_0 : i32, i32
  }
  func.func @transform_12(%arg0: i32) -> (i32, i32) {
    %c0_i32 = arith.constant 0 : i32
    %c0_i32_0 = arith.constant 0 : i32
    %c0_i32_1 = arith.constant 0 : i32
    return %c0_i32, %c0_i32_0 : i32, i32
  }
  func.func @transform_13(%arg0: i32) -> (i32, i32) {
    %c0_i32 = arith.constant 0 : i32
    %c0_i32_0 = arith.constant 0 : i32
    %c0_i32_1 = arith.constant 0 : i32
    return %c0_i32, %c0_i32_0 : i32, i32
  }
  func.func @transform_14(%arg0: i32) -> (i32, i32) {
    %c0_i32 = arith.constant 0 : i32
    %c0_i32_0 = arith.constant 0 : i32
    %c0_i32_1 = arith.constant 0 : i32
    return %c0_i32, %c0_i32_0 : i32, i32
  }
  func.func @transform_15(%arg0: i32) -> (i32, i32) {
    %c0_i32 = arith.constant 0 : i32
    %c0_i32_0 = arith.constant 0 : i32
    %c0_i32_1 = arith.constant 0 : i32
    return %c0_i32, %c0_i32_0 : i32, i32
  }
  func.func @transform_16(%arg0: i32) -> (i32, i32) {
    %c0_i32 = arith.constant 0 : i32
    %c0_i32_0 = arith.constant 0 : i32
    %c0_i32_1 = arith.constant 0 : i32
    return %c0_i32, %c0_i32_0 : i32, i32
  }
  func.func @transform_17(%arg0: i32) -> (i32, i32) {
    %c0_i32 = arith.constant 0 : i32
    %c0_i32_0 = arith.constant 0 : i32
    %c0_i32_1 = arith.constant 0 : i32
    return %c0_i32, %c0_i32_0 : i32, i32
  }
  func.func @transform_18(%arg0: i32) -> (i32, i32) {
    %c0_i32 = arith.constant 0 : i32
    %c0_i32_0 = arith.constant 0 : i32
    %c0_i32_1 = arith.constant 0 : i32
    return %c0_i32, %c0_i32_0 : i32, i32
  }
  func.func @transform_19(%arg0: i32) -> (i32, i32) {
    %c0_i32 = arith.constant 0 : i32
    %c0_i32_0 = arith.constant 0 : i32
    %c0_i32_1 = arith.constant 0 : i32
    return %c0_i32, %c0_i32_0 : i32, i32
  }
  func.func @transform_20(%arg0: i32) -> (i32, i32) {
    %c0_i32 = arith.constant 0 : i32
    %c0_i32_0 = arith.constant 0 : i32
    %c0_i32_1 = arith.constant 0 : i32
    return %c0_i32, %c0_i32_0 : i32, i32
  }
  func.func @transform_21(%arg0: i32) -> (i32, i32) {
    %c0_i32 = arith.constant 0 : i32
    %c0_i32_0 = arith.constant 0 : i32
    %c0_i32_1 = arith.constant 0 : i32
    return %c0_i32, %c0_i32_0 : i32, i32
  }
  func.func @transform_22(%arg0: i32) -> (i32, i32) {
    %c0_i32 = arith.constant 0 : i32
    %c0_i32_0 = arith.constant 0 : i32
    %c0_i32_1 = arith.constant 0 : i32
    return %c0_i32, %c0_i32_0 : i32, i32
  }
  func.func @transform_23(%arg0: i32) -> (i32, i32) {
    %c0_i32 = arith.constant 0 : i32
    %c0_i32_0 = arith.constant 0 : i32
    return %c0_i32, %arg0 : i32, i32
  }
}

</mosaic_0001>

<llo_original>
// kernel: res_attn_block_pallas.1
$region0: #{res_attn_block_pallas.1}
  #allocation0 [shape = 'u32[]', space=smem, size = 0x4, offset = 0x4, fixed_abs, tag = 'smem constant byte address 0x4 - core index']
  #allocation1 [shape = 'u32[144,128]{1,0:T(1,128)}', space=vmem, size = 0x12000, scoped, tag = 'internal scratch']
  %s0 = inlined_call_operand.vmem [shape: f32[4,1024], index: 0, kind: input, shape index: {}]
  %s1 = inlined_call_operand.vmem [shape: f32[8,1024], index: 1, kind: input, shape index: {}]
  %s2 = inlined_call_operand.vmem [shape: f32[9,512], index: 2, kind: input, shape index: {}]
  %s3 = inlined_call_operand.vmem [shape: f32[2,512], index: 3, kind: input, shape index: {}]
  %s4 = inlined_call_operand.vmem [shape: f32[4,512], index: 4, kind: input, shape index: {}]
  %s5 = inlined_call_operand.vmem [shape: f32[4,512], index: 5, kind: input, shape index: {}]
  %s6 = inlined_call_operand.vmem [shape: bf16[9,8,4], index: 6, kind: input, shape index: {}]
  %s7 = inlined_call_operand.vmem [shape: f32[8,512], index: 7, kind: input, shape index: {}]
  %s8 = inlined_call_operand.vmem [shape: f32[8,512], index: 8, kind: input, shape index: {}]
  %s9 = inlined_call_operand.vmem [shape: bf16[9,8,8], index: 9, kind: input, shape index: {}]
  %s10 = inlined_call_operand.vmem [shape: f32[8,1], index: 10, kind: input, shape index: {}]
  %s11 = inlined_call_operand.vmem [shape: bf16[8,4], index: 11, kind: input, shape index: {}]
  %s12 = inlined_call_operand.vmem [shape: f32[8,1], index: 12, kind: input, shape index: {}]
  %s13 = inlined_call_operand.vmem [shape: f32[8,512], index: 13, kind: input, shape index: {}]
  %s14 = inlined_call_operand.vmem [shape: f32[8,512], index: 14, kind: input, shape index: {}]
  %s15 = inlined_call_operand.vmem [shape: bf16[8,8], index: 15, kind: input, shape index: {}]
  %s16 = inlined_call_operand.vmem [shape: f32[8,1], index: 16, kind: input, shape index: {}]
  %s17 = inlined_call_operand.vmem [shape: bf16[8,8], index: 17, kind: input, shape index: {}]
  %s18 = inlined_call_operand.vmem [shape: f32[8,1], index: 18, kind: input, shape index: {}]
  %s19 = inlined_call_operand.vmem [shape: bf16[8,8], index: 19, kind: input, shape index: {}]
  %s20 = inlined_call_operand.vmem [shape: f32[8,1], index: 20, kind: input, shape index: {}]
  %s21 = inlined_call_operand.vmem [shape: bf16[8,8], index: 21, kind: input, shape index: {}]
  %s22 = inlined_call_operand.vmem [shape: f32[8,1], index: 22, kind: input, shape index: {}]
  %s23 = inlined_call_operand.vmem [shape: f32[8,1024], index: 23, kind: output, shape index: {}]
  %s24 = sld [smem:[#allocation0]]
  $region125: #{res_attn_block_pallas.1} parent=0
    _
  %s26 = ssub.s32 1, %s24
  %s27 = scalar_select 0, %s26, %s24
  loop: start=0, step=1, limit=4
  $region2: #{res_attn_block_pallas.1} parent=0 // loop_pre_header
    _
  $region3: #{res_attn_block_pallas.1} parent=0 // loop_header
    %s29 = sphi 0, %s33
    %p30 = scmp.ge.s32.totalorder %s29, 4
    %s39 = sphi 0, %s41
    %s42 = sphi 0, %s39
    %s43 = sphi 0, %s42
    %s59 = sphi 0, %s43
    %s65 = sphi 0, %s67
    %s68 = sphi 0, %s65
    %s69 = sphi 0, %s68
    %s85 = sphi 0, %s69
    %s89 = sphi 0, %s89
    %s91 = sphi 0, %s89
    %s92 = sphi 0, %s91
    %s106 = sphi 0, %s92
    %s110 = sphi 0, %s110
    %s112 = sphi 0, %s110
    %s113 = sphi 0, %s112
    %s127 = sphi 0, %s113
    %s131 = sphi 0, %s131
    %s133 = sphi 0, %s131
    %s134 = sphi 0, %s133
    %s148 = sphi 0, %s134
    %s152 = sphi 0, %s152
    %s154 = sphi 0, %s152
    %s155 = sphi 0, %s154
    %s169 = sphi 0, %s155
    %s173 = sphi 0, %s173
    %s175 = sphi 0, %s173
    %s176 = sphi 0, %s175
    %s190 = sphi 0, %s176
    %s194 = sphi 0, %s194
    %s196 = sphi 0, %s194
    %s197 = sphi 0, %s196
    %s211 = sphi 0, %s197
    %s215 = sphi 0, %s215
    %s217 = sphi 0, %s215
    %s218 = sphi 0, %s217
    %s232 = sphi 0, %s218
    %s236 = sphi 0, %s236
    %s238 = sphi 0, %s236
    %s239 = sphi 0, %s238
    %s253 = sphi 0, %s239
    %s257 = sphi 0, %s257
    %s259 = sphi 0, %s257
    %s260 = sphi 0, %s259
    %s274 = sphi 0, %s260
    %s278 = sphi 0, %s278
    %s280 = sphi 0, %s278
    %s281 = sphi 0, %s280
    %s295 = sphi 0, %s281
    %s299 = sphi 0, %s299
    %s301 = sphi 0, %s299
    %s302 = sphi 0, %s301
    %s316 = sphi 0, %s302
    %s320 = sphi 0, %s320
    %s322 = sphi 0, %s320
    %s323 = sphi 0, %s322
    %s337 = sphi 0, %s323
    %s341 = sphi 0, %s341
    %s343 = sphi 0, %s341
    %s344 = sphi 0, %s343
    %s358 = sphi 0, %s344
    %s362 = sphi 0, %s362
    %s364 = sphi 0, %s362
    %s365 = sphi 0, %s364
    %s379 = sphi 0, %s365
    %s383 = sphi 0, %s383
    %s385 = sphi 0, %s383
    %s386 = sphi 0, %s385
    %s400 = sphi 0, %s386
    %s404 = sphi 0, %s404
    %s406 = sphi 0, %s404
    %s407 = sphi 0, %s406
    %s421 = sphi 0, %s407
    %s425 = sphi 0, %s425
    %s427 = sphi 0, %s425
    %s428 = sphi 0, %s427
    %s442 = sphi 0, %s428
    %s446 = sphi 0, %s446
    %s448 = sphi 0, %s446
    %s449 = sphi 0, %s448
    %s463 = sphi 0, %s449
    %s467 = sphi 0, %s467
    %s469 = sphi 0, %s467
    %s470 = sphi 0, %s469
    %s484 = sphi 0, %s470
    %s488 = sphi 0, %s488
    %s490 = sphi 0, %s488
    %s491 = sphi 0, %s490
    %s505 = sphi 0, %s491
    %s509 = sphi 0, %s509
    %s511 = sphi 0, %s509
    %s512 = sphi 0, %s511
    %s526 = sphi 0, %s512
    %s532 = sphi 0, %s534
    %s535 = sphi 0, %s532
    %s536 = sphi 0, %s535
    %s552 = sphi 0, %s536
  $region4: #{res_attn_block_pallas.1} parent=0 // loop_header_branch
    %32 = sbr.rel (%p30) target = $region8
  $region5: #{res_attn_block_pallas.1} parent=0 // loop_body
    %s34 = ssub.s32 %s29, 1
    %s35 = ssub.s32 %s29, 2
    %s36 = sadd.s32 %s29, 1
    %s37 = ssub.s32 %s29, %s36
    %p38 = scmp.eq.s32.totalorder %s37, 0
    %s40 = sadd.s32 %s39, 1
    %s41 = scalar_select %p38, %s39, %s40
    %p44 = pneg %p38
    %p45 = scmp.eq.s32.totalorder %s29, 1
    %p46 = por %p44, %p45
    %p47 = scmp.ne.s32.totalorder %s39, %s42
    %p48 = scmp.eq.s32.totalorder %s29, 0
    %p49 = por %p47, %p48
    %p50 = scmp.ne.s32.totalorder %s39, %s42
    %p51 = scmp.eq.s32.totalorder %s34, 1
    %p52 = por %p50, %p51
    %p53 = scmp.ne.s32.totalorder %s42, %s43
    %p54 = scmp.eq.s32.totalorder %s34, 0
    %p55 = por %p53, %p54
    %p56 = scmp.ne.s32.totalorder %s42, %s43
    %p57 = scmp.eq.s32.totalorder %s35, 1
    %p58 = por %p56, %p57
    %p60 = scmp.ne.s32.totalorder %s43, %s59
    %p61 = scmp.eq.s32.totalorder %s35, 0
    %p62 = por %p60, %p61
    %s63 = ssub.s32 %s29, %s36
    %p64 = scmp.eq.s32.totalorder %s63, 0
    %s66 = sadd.s32 %s65, 1
    %s67 = scalar_select %p64, %s65, %s66
    %p70 = pneg %p64
    %p71 = scmp.eq.s32.totalorder %s29, 1
    %p72 = por %p70, %p71
    %p73 = scmp.ne.s32.totalorder %s65, %s68
    %p74 = scmp.eq.s32.totalorder %s29, 0
    %p75 = por %p73, %p74
    %p76 = scmp.ne.s32.totalorder %s65, %s68
    %p77 = scmp.eq.s32.totalorder %s34, 1
    %p78 = por %p76, %p77
    %p79 = scmp.ne.s32.totalorder %s68, %s69
    %p80 = scmp.eq.s32.totalorder %s34, 0
    %p81 = por %p79, %p80
    %p82 = scmp.ne.s32.totalorder %s68, %s69
    %p83 = scmp.eq.s32.totalorder %s35, 1
    %p84 = por %p82, %p83
    %p86 = scmp.ne.s32.totalorder %s69, %s85
    %p87 = scmp.eq.s32.totalorder %s35, 0
    %p88 = por %p86, %p87
    %s90 = sadd.s32 %s89, 1
    %p93 = scmp.eq.s32.totalorder %s29, 1
    %p94 = scmp.ne.s32.totalorder %s89, %s91
    %p95 = scmp.eq.s32.totalorder %s29, 0
    %p96 = por %p94, %p95
    %p97 = scmp.ne.s32.totalorder %s89, %s91
    %p98 = scmp.eq.s32.totalorder %s34, 1
    %p99 = por %p97, %p98
    %p100 = scmp.ne.s32.totalorder %s91, %s92
    %p101 = scmp.eq.s32.totalorder %s34, 0
    %p102 = por %p100, %p101
    %p103 = scmp.ne.s32.totalorder %s91, %s92
    %p104 = scmp.eq.s32.totalorder %s35, 1
    %p105 = por %p103, %p104
    %p107 = scmp.ne.s32.totalorder %s92, %s106
    %p108 = scmp.eq.s32.totalorder %s35, 0
    %p109 = por %p107, %p108
    %s111 = sadd.s32 %s110, 1
    %p114 = scmp.eq.s32.totalorder %s29, 1
    %p115 = scmp.ne.s32.totalorder %s110, %s112
    %p116 = scmp.eq.s32.totalorder %s29, 0
    %p117 = por %p115, %p116
    %p118 = scmp.ne.s32.totalorder %s110, %s112
    %p119 = scmp.eq.s32.totalorder %s34, 1
    %p120 = por %p118, %p119
    %p121 = scmp.ne.s32.totalorder %s112, %s113
    %p122 = scmp.eq.s32.totalorder %s34, 0
    %p123 = por %p121, %p122
    %p124 = scmp.ne.s32.totalorder %s112, %s113
    %p125 = scmp.eq.s32.totalorder %s35, 1
    %p126 = por %p124, %p125
    %p128 = scmp.ne.s32.totalorder %s113, %s127
    %p129 = scmp.eq.s32.totalorder %s35, 0
    %p130 = por %p128, %p129
    %s132 = sadd.s32 %s131, 1
    %p135 = scmp.eq.s32.totalorder %s29, 1
    %p136 = scmp.ne.s32.totalorder %s131, %s133
    %p137 = scmp.eq.s32.totalorder %s29, 0
    %p138 = por %p136, %p137
    %p139 = scmp.ne.s32.totalorder %s131, %s133
    %p140 = scmp.eq.s32.totalorder %s34, 1
    %p141 = por %p139, %p140
    %p142 = scmp.ne.s32.totalorder %s133, %s134
    %p143 = scmp.eq.s32.totalorder %s34, 0
    %p144 = por %p142, %p143
    %p145 = scmp.ne.s32.totalorder %s133, %s134
    %p146 = scmp.eq.s32.totalorder %s35, 1
    %p147 = por %p145, %p146
    %p149 = scmp.ne.s32.totalorder %s134, %s148
    %p150 = scmp.eq.s32.totalorder %s35, 0
    %p151 = por %p149, %p150
    %s153 = sadd.s32 %s152, 1
    %p156 = scmp.eq.s32.totalorder %s29, 1
    %p157 = scmp.ne.s32.totalorder %s152, %s154
    %p158 = scmp.eq.s32.totalorder %s29, 0
    %p159 = por %p157, %p158
    %p160 = scmp.ne.s32.totalorder %s152, %s154
    %p161 = scmp.eq.s32.totalorder %s34, 1
    %p162 = por %p160, %p161
    %p163 = scmp.ne.s32.totalorder %s154, %s155
    %p164 = scmp.eq.s32.totalorder %s34, 0
    %p165 = por %p163, %p164
    %p166 = scmp.ne.s32.totalorder %s154, %s155
    %p167 = scmp.eq.s32.totalorder %s35, 1
    %p168 = por %p166, %p167
    %p170 = scmp.ne.s32.totalorder %s155, %s169
    %p171 = scmp.eq.s32.totalorder %s35, 0
    %p172 = por %p170, %p171
    %s174 = sadd.s32 %s173, 1
    %p177 = scmp.eq.s32.totalorder %s29, 1
    %p178 = scmp.ne.s32.totalorder %s173, %s175
    %p179 = scmp.eq.s32.totalorder %s29, 0
    %p180 = por %p178, %p179
    %p181 = scmp.ne.s32.totalorder %s173, %s175
    %p182 = scmp.eq.s32.totalorder %s34, 1
    %p183 = por %p181, %p182
    %p184 = scmp.ne.s32.totalorder %s175, %s176
    %p185 = scmp.eq.s32.totalorder %s34, 0
    %p186 = por %p184, %p185
    %p187 = scmp.ne.s32.totalorder %s175, %s176
    %p188 = scmp.eq.s32.totalorder %s35, 1
    %p189 = por %p187, %p188
    %p191 = scmp.ne.s32.totalorder %s176, %s190
    %p192 = scmp.eq.s32.totalorder %s35, 0
    %p193 = por %p191, %p192
    %s195 = sadd.s32 %s194, 1
    %p198 = scmp.eq.s32.totalorder %s29, 1
    %p199 = scmp.ne.s32.totalorder %s194, %s196
    %p200 = scmp.eq.s32.totalorder %s29, 0
    %p201 = por %p199, %p200
    %p202 = scmp.ne.s32.totalorder %s194, %s196
    %p203 = scmp.eq.s32.totalorder %s34, 1
    %p204 = por %p202, %p203
    %p205 = scmp.ne.s32.totalorder %s196, %s197
    %p206 = scmp.eq.s32.totalorder %s34, 0
    %p207 = por %p205, %p206
    %p208 = scmp.ne.s32.totalorder %s196, %s197
    %p209 = scmp.eq.s32.totalorder %s35, 1
    %p210 = por %p208, %p209
    %p212 = scmp.ne.s32.totalorder %s197, %s211
    %p213 = scmp.eq.s32.totalorder %s35, 0
    %p214 = por %p212, %p213
    %s216 = sadd.s32 %s215, 1
    %p219 = scmp.eq.s32.totalorder %s29, 1
    %p220 = scmp.ne.s32.totalorder %s215, %s217
    %p221 = scmp.eq.s32.totalorder %s29, 0
    %p222 = por %p220, %p221
    %p223 = scmp.ne.s32.totalorder %s215, %s217
    %p224 = scmp.eq.s32.totalorder %s34, 1
    %p225 = por %p223, %p224
    %p226 = scmp.ne.s32.totalorder %s217, %s218
    %p227 = scmp.eq.s32.totalorder %s34, 0
    %p228 = por %p226, %p227
    %p229 = scmp.ne.s32.totalorder %s217, %s218
    %p230 = scmp.eq.s32.totalorder %s35, 1
    %p231 = por %p229, %p230
    %p233 = scmp.ne.s32.totalorder %s218, %s232
    %p234 = scmp.eq.s32.totalorder %s35, 0
    %p235 = por %p233, %p234
    %s237 = sadd.s32 %s236, 1
    %p240 = scmp.eq.s32.totalorder %s29, 1
    %p241 = scmp.ne.s32.totalorder %s236, %s238
    %p242 = scmp.eq.s32.totalorder %s29, 0
    %p243 = por %p241, %p242
    %p244 = scmp.ne.s32.totalorder %s236, %s238
    %p245 = scmp.eq.s32.totalorder %s34, 1
    %p246 = por %p244, %p245
    %p247 = scmp.ne.s32.totalorder %s238, %s239
    %p248 = scmp.eq.s32.totalorder %s34, 0
    %p249 = por %p247, %p248
    %p250 = scmp.ne.s32.totalorder %s238, %s239
    %p251 = scmp.eq.s32.totalorder %s35, 1
    %p252 = por %p250, %p251
    %p254 = scmp.ne.s32.totalorder %s239, %s253
    %p255 = scmp.eq.s32.totalorder %s35, 0
    %p256 = por %p254, %p255
    %s258 = sadd.s32 %s257, 1
    %p261 = scmp.eq.s32.totalorder %s29, 1
    %p262 = scmp.ne.s32.totalorder %s257, %s259
    %p263 = scmp.eq.s32.totalorder %s29, 0
    %p264 = por %p262, %p263
    %p265 = scmp.ne.s32.totalorder %s257, %s259
    %p266 = scmp.eq.s32.totalorder %s34, 1
    %p267 = por %p265, %p266
    %p268 = scmp.ne.s32.totalorder %s259, %s260
    %p269 = scmp.eq.s32.totalorder %s34, 0
    %p270 = por %p268, %p269
    %p271 = scmp.ne.s32.totalorder %s259, %s260
    %p272 = scmp.eq.s32.totalorder %s35, 1
    %p273 = por %p271, %p272
    %p275 = scmp.ne.s32.totalorder %s260, %s274
    %p276 = scmp.eq.s32.totalorder %s35, 0
    %p277 = por %p275, %p276
    %s279 = sadd.s32 %s278, 1
    %p282 = scmp.eq.s32.totalorder %s29, 1
    %p283 = scmp.ne.s32.totalorder %s278, %s280
    %p284 = scmp.eq.s32.totalorder %s29, 0
    %p285 = por %p283, %p284
    %p286 = scmp.ne.s32.totalorder %s278, %s280
    %p287 = scmp.eq.s32.totalorder %s34, 1
    %p288 = por %p286, %p287
    %p289 = scmp.ne.s32.totalorder %s280, %s281
    %p290 = scmp.eq.s32.totalorder %s34, 0
    %p291 = por %p289, %p290
    %p292 = scmp.ne.s32.totalorder %s280, %s281
    %p293 = scmp.eq.s32.totalorder %s35, 1
    %p294 = por %p292, %p293
    %p296 = scmp.ne.s32.totalorder %s281, %s295
    %p297 = scmp.eq.s32.totalorder %s35, 0
    %p298 = por %p296, %p297
    %s300 = sadd.s32 %s299, 1
    %p303 = scmp.eq.s32.totalorder %s29, 1
    %p304 = scmp.ne.s32.totalorder %s299, %s301
    %p305 = scmp.eq.s32.totalorder %s29, 0
    %p306 = por %p304, %p305
    %p307 = scmp.ne.s32.totalorder %s299, %s301
    %p308 = scmp.eq.s32.totalorder %s34, 1
    %p309 = por %p307, %p308
    %p310 = scmp.ne.s32.totalorder %s301, %s302
    %p311 = scmp.eq.s32.totalorder %s34, 0
    %p312 = por %p310, %p311
    %p313 = scmp.ne.s32.totalorder %s301, %s302
    %p314 = scmp.eq.s32.totalorder %s35, 1
    %p315 = por %p313, %p314
    %p317 = scmp.ne.s32.totalorder %s302, %s316
    %p318 = scmp.eq.s32.totalorder %s35, 0
    %p319 = por %p317, %p318
    %s321 = sadd.s32 %s320, 1
    %p324 = scmp.eq.s32.totalorder %s29, 1
    %p325 = scmp.ne.s32.totalorder %s320, %s322
    %p326 = scmp.eq.s32.totalorder %s29, 0
    %p327 = por %p325, %p326
    %p328 = scmp.ne.s32.totalorder %s320, %s322
    %p329 = scmp.eq.s32.totalorder %s34, 1
    %p330 = por %p328, %p329
    %p331 = scmp.ne.s32.totalorder %s322, %s323
    %p332 = scmp.eq.s32.totalorder %s34, 0
    %p333 = por %p331, %p332
    %p334 = scmp.ne.s32.totalorder %s322, %s323
    %p335 = scmp.eq.s32.totalorder %s35, 1
    %p336 = por %p334, %p335
    %p338 = scmp.ne.s32.totalorder %s323, %s337
    %p339 = scmp.eq.s32.totalorder %s35, 0
    %p340 = por %p338, %p339
    %s342 = sadd.s32 %s341, 1
    %p345 = scmp.eq.s32.totalorder %s29, 1
    %p346 = scmp.ne.s32.totalorder %s341, %s343
    %p347 = scmp.eq.s32.totalorder %s29, 0
    %p348 = por %p346, %p347
    %p349 = scmp.ne.s32.totalorder %s341, %s343
    %p350 = scmp.eq.s32.totalorder %s34, 1
    %p351 = por %p349, %p350
    %p352 = scmp.ne.s32.totalorder %s343, %s344
    %p353 = scmp.eq.s32.totalorder %s34, 0
    %p354 = por %p352, %p353
    %p355 = scmp.ne.s32.totalorder %s343, %s344
    %p356 = scmp.eq.s32.totalorder %s35, 1
    %p357 = por %p355, %p356
    %p359 = scmp.ne.s32.totalorder %s344, %s358
    %p360 = scmp.eq.s32.totalorder %s35, 0
    %p361 = por %p359, %p360
    %s363 = sadd.s32 %s362, 1
    %p366 = scmp.eq.s32.totalorder %s29, 1
    %p367 = scmp.ne.s32.totalorder %s362, %s364
    %p368 = scmp.eq.s32.totalorder %s29, 0
    %p369 = por %p367, %p368
    %p370 = scmp.ne.s32.totalorder %s362, %s364
    %p371 = scmp.eq.s32.totalorder %s34, 1
    %p372 = por %p370, %p371
    %p373 = scmp.ne.s32.totalorder %s364, %s365
    %p374 = scmp.eq.s32.totalorder %s34, 0
    %p375 = por %p373, %p374
    %p376 = scmp.ne.s32.totalorder %s364, %s365
    %p377 = scmp.eq.s32.totalorder %s35, 1
    %p378 = por %p376, %p377
    %p380 = scmp.ne.s32.totalorder %s365, %s379
    %p381 = scmp.eq.s32.totalorder %s35, 0
    %p382 = por %p380, %p381
    %s384 = sadd.s32 %s383, 1
    %p387 = scmp.eq.s32.totalorder %s29, 1
    %p388 = scmp.ne.s32.totalorder %s383, %s385
    %p389 = scmp.eq.s32.totalorder %s29, 0
    %p390 = por %p388, %p389
    %p391 = scmp.ne.s32.totalorder %s383, %s385
    %p392 = scmp.eq.s32.totalorder %s34, 1
    %p393 = por %p391, %p392
    %p394 = scmp.ne.s32.totalorder %s385, %s386
    %p395 = scmp.eq.s32.totalorder %s34, 0
    %p396 = por %p394, %p395
    %p397 = scmp.ne.s32.totalorder %s385, %s386
    %p398 = scmp.eq.s32.totalorder %s35, 1
    %p399 = por %p397, %p398
    %p401 = scmp.ne.s32.totalorder %s386, %s400
    %p402 = scmp.eq.s32.totalorder %s35, 0
    %p403 = por %p401, %p402
    %s405 = sadd.s32 %s404, 1
    %p408 = scmp.eq.s32.totalorder %s29, 1
    %p409 = scmp.ne.s32.totalorder %s404, %s406
    %p410 = scmp.eq.s32.totalorder %s29, 0
    %p411 = por %p409, %p410
    %p412 = scmp.ne.s32.totalorder %s404, %s406
    %p413 = scmp.eq.s32.totalorder %s34, 1
    %p414 = por %p412, %p413
    %p415 = scmp.ne.s32.totalorder %s406, %s407
    %p416 = scmp.eq.s32.totalorder %s34, 0
    %p417 = por %p415, %p416
    %p418 = scmp.ne.s32.totalorder %s406, %s407
    %p419 = scmp.eq.s32.totalorder %s35, 1
    %p420 = por %p418, %p419
    %p422 = scmp.ne.s32.totalorder %s407, %s421
    %p423 = scmp.eq.s32.totalorder %s35, 0
    %p424 = por %p422, %p423
    %s426 = sadd.s32 %s425, 1
    %p429 = scmp.eq.s32.totalorder %s29, 1
    %p430 = scmp.ne.s32.totalorder %s425, %s427
    %p431 = scmp.eq.s32.totalorder %s29, 0
    %p432 = por %p430, %p431
    %p433 = scmp.ne.s32.totalorder %s425, %s427
    %p434 = scmp.eq.s32.totalorder %s34, 1
    %p435 = por %p433, %p434
    %p436 = scmp.ne.s32.totalorder %s427, %s428
    %p437 = scmp.eq.s32.totalorder %s34, 0
    %p438 = por %p436, %p437
    %p439 = scmp.ne.s32.totalorder %s427, %s428
    %p440 = scmp.eq.s32.totalorder %s35, 1
    %p441 = por %p439, %p440
    %p443 = scmp.ne.s32.totalorder %s428, %s442
    %p444 = scmp.eq.s32.totalorder %s35, 0
    %p445 = por %p443, %p444
    %s447 = sadd.s32 %s446, 1
    %p450 = scmp.eq.s32.totalorder %s29, 1
    %p451 = scmp.ne.s32.totalorder %s446, %s448
    %p452 = scmp.eq.s32.totalorder %s29, 0
    %p453 = por %p451, %p452
    %p454 = scmp.ne.s32.totalorder %s446, %s448
    %p455 = scmp.eq.s32.totalorder %s34, 1
    %p456 = por %p454, %p455
    %p457 = scmp.ne.s32.totalorder %s448, %s449
    %p458 = scmp.eq.s32.totalorder %s34, 0
    %p459 = por %p457, %p458
    %p460 = scmp.ne.s32.totalorder %s448, %s449
    %p461 = scmp.eq.s32.totalorder %s35, 1
    %p462 = por %p460, %p461
    %p464 = scmp.ne.s32.totalorder %s449, %s463
    %p465 = scmp.eq.s32.totalorder %s35, 0
    %p466 = por %p464, %p465
    %s468 = sadd.s32 %s467, 1
    %p471 = scmp.eq.s32.totalorder %s29, 1
    %p472 = scmp.ne.s32.totalorder %s467, %s469
    %p473 = scmp.eq.s32.totalorder %s29, 0
    %p474 = por %p472, %p473
    %p475 = scmp.ne.s32.totalorder %s467, %s469
    %p476 = scmp.eq.s32.totalorder %s34, 1
    %p477 = por %p475, %p476
    %p478 = scmp.ne.s32.totalorder %s469, %s470
    %p479 = scmp.eq.s32.totalorder %s34, 0
    %p480 = por %p478, %p479
    %p481 = scmp.ne.s32.totalorder %s469, %s470
    %p482 = scmp.eq.s32.totalorder %s35, 1
    %p483 = por %p481, %p482
    %p485 = scmp.ne.s32.totalorder %s470, %s484
    %p486 = scmp.eq.s32.totalorder %s35, 0
    %p487 = por %p485, %p486
    %s489 = sadd.s32 %s488, 1
    %p492 = scmp.eq.s32.totalorder %s29, 1
    %p493 = scmp.ne.s32.totalorder %s488, %s490
    %p494 = scmp.eq.s32.totalorder %s29, 0
    %p495 = por %p493, %p494
    %p496 = scmp.ne.s32.totalorder %s488, %s490
    %p497 = scmp.eq.s32.totalorder %s34, 1
    %p498 = por %p496, %p497
    %p499 = scmp.ne.s32.totalorder %s490, %s491
    %p500 = scmp.eq.s32.totalorder %s34, 0
    %p501 = por %p499, %p500
    %p502 = scmp.ne.s32.totalorder %s490, %s491
    %p503 = scmp.eq.s32.totalorder %s35, 1
    %p504 = por %p502, %p503
    %p506 = scmp.ne.s32.totalorder %s491, %s505
    %p507 = scmp.eq.s32.totalorder %s35, 0
    %p508 = por %p506, %p507
    %s510 = sadd.s32 %s509, 1
    %p513 = scmp.eq.s32.totalorder %s29, 1
    %p514 = scmp.ne.s32.totalorder %s509, %s511
    %p515 = scmp.eq.s32.totalorder %s29, 0
    %p516 = por %p514, %p515
    %p517 = scmp.ne.s32.totalorder %s509, %s511
    %p518 = scmp.eq.s32.totalorder %s34, 1
    %p519 = por %p517, %p518
    %p520 = scmp.ne.s32.totalorder %s511, %s512
    %p521 = scmp.eq.s32.totalorder %s34, 0
    %p522 = por %p520, %p521
    %p523 = scmp.ne.s32.totalorder %s511, %s512
    %p524 = scmp.eq.s32.totalorder %s35, 1
    %p525 = por %p523, %p524
    %p527 = scmp.ne.s32.totalorder %s512, %s526
    %p528 = scmp.eq.s32.totalorder %s35, 0
    %p529 = por %p527, %p528
    %s530 = ssub.s32 %s29, %s36
    %p531 = scmp.eq.s32.totalorder %s530, 0
    %s533 = sadd.s32 %s532, 1
    %s534 = scalar_select %p531, %s532, %s533
    %p537 = pneg %p531
    %p538 = scmp.eq.s32.totalorder %s29, 1
    %p539 = por %p537, %p538
    %p540 = scmp.ne.s32.totalorder %s532, %s535
    %p541 = scmp.eq.s32.totalorder %s29, 0
    %p542 = por %p540, %p541
    %p543 = scmp.ne.s32.totalorder %s532, %s535
    %p544 = scmp.eq.s32.totalorder %s34, 1
    %p545 = por %p543, %p544
    %p546 = scmp.ne.s32.totalorder %s535, %s536
    %p547 = scmp.eq.s32.totalorder %s34, 0
    %p548 = por %p546, %p547
    %p549 = scmp.ne.s32.totalorder %s535, %s536
    %p550 = scmp.eq.s32.totalorder %s35, 1
    %p551 = por %p549, %p550
    %p553 = scmp.ne.s32.totalorder %s536, %s552
    %p554 = scmp.eq.s32.totalorder %s35, 0
    %p555 = por %p553, %p554
    %p556 = scmp.le.s32.totalorder 1, %s29
    %p557 = scmp.lt.s32.totalorder %s29, 3
    %p558 = pnand %p556, %p557
    %p559 = pneg %p558
    // Predicated region
    $region9: #{res_attn_block_pallas.1} parent=5 // pred_check
      _
    $region10: #{res_attn_block_pallas.1} parent=5 // pred_check_branch
      %561 = sbr.rel (%p558) target = $region12
    $region11: #{res_attn_block_pallas.1} parent=5 // pred_region
      %s562 = ssub.s32 %s29, 1
      // Predicated region
      $region13: #{res_attn_block_pallas.1} parent=11 // pred_check
        %p563 = pneg %p102
      $region14: #{res_attn_block_pallas.1} parent=11 // pred_check_branch
        %565 = sbr.rel (%p563) target = $region16
      $region15: #{res_attn_block_pallas.1} parent=11 // pred_region
        _
      $region16: #{res_attn_block_pallas.1} parent=11 // pred_fallthru
        _
      // Predicated region
      $region17: #{res_attn_block_pallas.1} parent=11 // pred_check
        %p566 = pneg %p123
      $region18: #{res_attn_block_pallas.1} parent=11 // pred_check_branch
        %568 = sbr.rel (%p566) target = $region20
      $region19: #{res_attn_block_pallas.1} parent=11 // pred_region
        _
      $region20: #{res_attn_block_pallas.1} parent=11 // pred_fallthru
        _
      // Predicated region
      $region21: #{res_attn_block_pallas.1} parent=11 // pred_check
        %p569 = pneg %p144
      $region22: #{res_attn_block_pallas.1} parent=11 // pred_check_branch
        %571 = sbr.rel (%p569) target = $region24
      $region23: #{res_attn_block_pallas.1} parent=11 // pred_region
        _
      $region24: #{res_attn_block_pallas.1} parent=11 // pred_fallthru
        _
      // Predicated region
      $region25: #{res_attn_block_pallas.1} parent=11 // pred_check
        %p572 = pneg %p165
      $region26: #{res_attn_block_pallas.1} parent=11 // pred_check_branch
        %574 = sbr.rel (%p572) target = $region28
      $region27: #{res_attn_block_pallas.1} parent=11 // pred_region
        _
      $region28: #{res_attn_block_pallas.1} parent=11 // pred_fallthru
        _
      // Predicated region
      $region29: #{res_attn_block_pallas.1} parent=11 // pred_check
        %p575 = pneg %p186
      $region30: #{res_attn_block_pallas.1} parent=11 // pred_check_branch
        %577 = sbr.rel (%p575) target = $region32
      $region31: #{res_attn_block_pallas.1} parent=11 // pred_region
        _
      $region32: #{res_attn_block_pallas.1} parent=11 // pred_fallthru
        _
      // Predicated region
      $region33: #{res_attn_block_pallas.1} parent=11 // pred_check
        %p578 = pneg %p207
      $region34: #{res_attn_block_pallas.1} parent=11 // pred_check_branch
        %580 = sbr.rel (%p578) target = $region36
      $region35: #{res_attn_block_pallas.1} parent=11 // pred_region
        _
      $region36: #{res_attn_block_pallas.1} parent=11 // pred_fallthru
        _
      // Predicated region
      $region37: #{res_attn_block_pallas.1} parent=11 // pred_check
        %p581 = pneg %p228
      $region38: #{res_attn_block_pallas.1} parent=11 // pred_check_branch
        %583 = sbr.rel (%p581) target = $region40
      $region39: #{res_attn_block_pallas.1} parent=11 // pred_region
        _
      $region40: #{res_attn_block_pallas.1} parent=11 // pred_fallthru
        _
      // Predicated region
      $region41: #{res_attn_block_pallas.1} parent=11 // pred_check
        %p584 = pneg %p249
      $region42: #{res_attn_block_pallas.1} parent=11 // pred_check_branch
        %586 = sbr.rel (%p584) target = $region44
      $region43: #{res_attn_block_pallas.1} parent=11 // pred_region
        _
      $region44: #{res_attn_block_pallas.1} parent=11 // pred_fallthru
        _
      // Predicated region
      $region45: #{res_attn_block_pallas.1} parent=11 // pred_check
        %p587 = pneg %p270
      $region46: #{res_attn_block_pallas.1} parent=11 // pred_check_branch
        %589 = sbr.rel (%p587) target = $region48
      $region47: #{res_attn_block_pallas.1} parent=11 // pred_region
        _
      $region48: #{res_attn_block_pallas.1} parent=11 // pred_fallthru
        _
      // Predicated region
      $region49: #{res_attn_block_pallas.1} parent=11 // pred_check
        %p590 = pneg %p291
      $region50: #{res_attn_block_pallas.1} parent=11 // pred_check_branch
        %592 = sbr.rel (%p590) target = $region52
      $region51: #{res_attn_block_pallas.1} parent=11 // pred_region
        _
      $region52: #{res_attn_block_pallas.1} parent=11 // pred_fallthru
        _
      // Predicated region
      $region53: #{res_attn_block_pallas.1} parent=11 // pred_check
        %p593 = pneg %p312
      $region54: #{res_attn_block_pallas.1} parent=11 // pred_check_branch
        %595 = sbr.rel (%p593) target = $region56
      $region55: #{res_attn_block_pallas.1} parent=11 // pred_region
        _
      $region56: #{res_attn_block_pallas.1} parent=11 // pred_fallthru
        _
      // Predicated region
      $region57: #{res_attn_block_pallas.1} parent=11 // pred_check
        %p596 = pneg %p333
      $region58: #{res_attn_block_pallas.1} parent=11 // pred_check_branch
        %598 = sbr.rel (%p596) target = $region60
      $region59: #{res_attn_block_pallas.1} parent=11 // pred_region
        _
      $region60: #{res_attn_block_pallas.1} parent=11 // pred_fallthru
        _
      // Predicated region
      $region61: #{res_attn_block_pallas.1} parent=11 // pred_check
        %p599 = pneg %p354
      $region62: #{res_attn_block_pallas.1} parent=11 // pred_check_branch
        %601 = sbr.rel (%p599) target = $region64
      $region63: #{res_attn_block_pallas.1} parent=11 // pred_region
        _
      $region64: #{res_attn_block_pallas.1} parent=11 // pred_fallthru
        _
      // Predicated region
      $region65: #{res_attn_block_pallas.1} parent=11 // pred_check
        %p602 = pneg %p375
      $region66: #{res_attn_block_pallas.1} parent=11 // pred_check_branch
        %604 = sbr.rel (%p602) target = $region68
      $region67: #{res_attn_block_pallas.1} parent=11 // pred_region
        _
      $region68: #{res_attn_block_pallas.1} parent=11 // pred_fallthru
        _
      // Predicated region
      $region69: #{res_attn_block_pallas.1} parent=11 // pred_check
        %p605 = pneg %p396
      $region70: #{res_attn_block_pallas.1} parent=11 // pred_check_branch
        %607 = sbr.rel (%p605) target = $region72
      $region71: #{res_attn_block_pallas.1} parent=11 // pred_region
        _
      $region72: #{res_attn_block_pallas.1} parent=11 // pred_fallthru
        _
      // Predicated region
      $region73: #{res_attn_block_pallas.1} parent=11 // pred_check
        %p608 = pneg %p417
      $region74: #{res_attn_block_pallas.1} parent=11 // pred_check_branch
        %610 = sbr.rel (%p608) target = $region76
      $region75: #{res_attn_block_pallas.1} parent=11 // pred_region
        _
      $region76: #{res_attn_block_pallas.1} parent=11 // pred_fallthru
        _
      // Predicated region
      $region77: #{res_attn_block_pallas.1} parent=11 // pred_check
        %p611 = pneg %p438
      $region78: #{res_attn_block_pallas.1} parent=11 // pred_check_branch
        %613 = sbr.rel (%p611) target = $region80
      $region79: #{res_attn_block_pallas.1} parent=11 // pred_region
        _
      $region80: #{res_attn_block_pallas.1} parent=11 // pred_fallthru
        _
      // Predicated region
      $region81: #{res_attn_block_pallas.1} parent=11 // pred_check
        %p614 = pneg %p459
      $region82: #{res_attn_block_pallas.1} parent=11 // pred_check_branch
        %616 = sbr.rel (%p614) target = $region84
      $region83: #{res_attn_block_pallas.1} parent=11 // pred_region
        _
      $region84: #{res_attn_block_pallas.1} parent=11 // pred_fallthru
        _
      // Predicated region
      $region85: #{res_attn_block_pallas.1} parent=11 // pred_check
        %p617 = pneg %p480
      $region86: #{res_attn_block_pallas.1} parent=11 // pred_check_branch
        %619 = sbr.rel (%p617) target = $region88
      $region87: #{res_attn_block_pallas.1} parent=11 // pred_region
        _
      $region88: #{res_attn_block_pallas.1} parent=11 // pred_fallthru
        _
      // Predicated region
      $region89: #{res_attn_block_pallas.1} parent=11 // pred_check
        %p620 = pneg %p501
      $region90: #{res_attn_block_pallas.1} parent=11 // pred_check_branch
        %622 = sbr.rel (%p620) target = $region92
      $region91: #{res_attn_block_pallas.1} parent=11 // pred_region
        _
      $region92: #{res_attn_block_pallas.1} parent=11 // pred_fallthru
        _
      // Predicated region
      $region93: #{res_attn_block_pallas.1} parent=11 // pred_check
        %p623 = pneg %p522
      $region94: #{res_attn_block_pallas.1} parent=11 // pred_check_branch
        %625 = sbr.rel (%p623) target = $region96
      $region95: #{res_attn_block_pallas.1} parent=11 // pred_region
        _
      $region96: #{res_attn_block_pallas.1} parent=11 // pred_fallthru
        _
    $region12: #{res_attn_block_pallas.1} parent=5 // pred_fallthru
      _
    %p626 = scmp.lt.s32.totalorder %s29, 2
    // Predicated region
    $region97: #{res_attn_block_pallas.1} parent=5 // pred_check
      %p627 = pneg %p626
    $region98: #{res_attn_block_pallas.1} parent=5 // pred_check_branch
      %629 = sbr.rel (%p627) target = $region100
    $region99: #{res_attn_block_pallas.1} parent=5 // pred_region
      // Predicated region
      $region101: #{res_attn_block_pallas.1} parent=99 // pred_check
        %p630 = pneg %p49
      $region102: #{res_attn_block_pallas.1} parent=99 // pred_check_branch
        %632 = sbr.rel (%p630) target = $region104
      $region103: #{res_attn_block_pallas.1} parent=99 // pred_region
        %s633 = smul.u32 4, %s29
        %p634 = scmp.lt.s32.totalorder %s633, 7
        %s635 = scalar_select %p634, %s633, 7
        %s636 = smul.addr %s635, 4
        %s637 = scalar_lea.vmem %s0, %s636
        %s638 = smul.u32 4, %s29
      $region104: #{res_attn_block_pallas.1} parent=99 // pred_fallthru
        _
      // Predicated region
      $region105: #{res_attn_block_pallas.1} parent=99 // pred_check
        %p639 = pneg %p75
      $region106: #{res_attn_block_pallas.1} parent=99 // pred_check_branch
        %641 = sbr.rel (%p639) target = $region108
      $region107: #{res_attn_block_pallas.1} parent=99 // pred_region
        %s642 = smul.u32 4, %s29
        %p643 = scmp.lt.s32.totalorder %s642, 7
        %s644 = scalar_select %p643, %s642, 7
        %s645 = smul.addr %s644, 8
        %s646 = scalar_lea.vmem %s1, %s645
        %s647 = smul.u32 4, %s29
      $region108: #{res_attn_block_pallas.1} parent=99 // pred_fallthru
        _
    $region100: #{res_attn_block_pallas.1} parent=5 // pred_fallthru
      _
    %p648 = scmp.le.s32.totalorder 1, %s29
    %p649 = scmp.lt.s32.totalorder %s29, 3
    %p650 = pnand %p648, %p649
    %p651 = pneg %p650
    // Predicated region
    $region109: #{res_attn_block_pallas.1} parent=5 // pred_check
      _
    $region110: #{res_attn_block_pallas.1} parent=5 // pred_check_branch
      %653 = sbr.rel (%p650) target = $region112
    $region111: #{res_attn_block_pallas.1} parent=5 // pred_region
      %s654 = ssub.s32 %s29, 1
      %s655 = smul.u32 4, %s34
      %p656 = scmp.lt.s32.totalorder %s655, 7
      %s657 = scalar_select %p656, %s655, 7
      %s658 = smul.addr %s657, 4
      %s659 = scalar_lea.vmem %s0, %s658
      %p660 = pneg %p55
      %p661 = pneg %p52
      %s662 = smul.u32 4, %s34
      %p663 = scmp.lt.s32.totalorder %s662, 7
      %s664 = scalar_select %p663, %s662, 7
      %s665 = smul.addr %s664, 8
      %s666 = scalar_lea.vmem %s1, %s665
      %p667 = pneg %p81
      %p668 = pneg %p78
      %p669 = pneg %p102
      %p670 = pneg %p99
      %p671 = pneg %p123
      %p672 = pneg %p120
      %p673 = pneg %p144
      %p674 = pneg %p141
      %p675 = pneg %p165
      %p676 = pneg %p162
      %p677 = pneg %p186
      %p678 = pneg %p183
      %p679 = pneg %p207
      %p680 = pneg %p204
      %p681 = pneg %p228
      %p682 = pneg %p225
      %p683 = pneg %p249
      %p684 = pneg %p246
      %p685 = pneg %p270
      %p686 = pneg %p267
      %p687 = pneg %p291
      %p688 = pneg %p288
      %p689 = pneg %p312
      %p690 = pneg %p309
      %p691 = pneg %p333
      %p692 = pneg %p330
      %p693 = pneg %p354
      %p694 = pneg %p351
      %p695 = pneg %p375
      %p696 = pneg %p372
      %p697 = pneg %p396
      %p698 = pneg %p393
      %p699 = pneg %p417
      %p700 = pneg %p414
      %p701 = pneg %p438
      %p702 = pneg %p435
      %p703 = pneg %p459
      %p704 = pneg %p456
      %p705 = pneg %p480
      %p706 = pneg %p477
      %p707 = pneg %p501
      %p708 = pneg %p498
      %p709 = pneg %p522
      %p710 = pneg %p519
      %p711 = pneg %p548
      %p712 = pneg %p545
      %s713 = smul.u32 4, %s34
      %p714 = scmp.lt.s32.totalorder %s713, 7
      %s715 = scalar_select %p714, %s713, 7
      %s716 = smul.addr %s715, 8
      %s717 = scalar_lea.vmem %s23, %s716
      %s718 = smul.u32 4, %s34
      %p719 = scmp.lt.s32.totalorder %s718, 7
      %s720 = scalar_select %p719, %s718, 7
      %s721 = smul.addr %s720, 4
      %s722 = scalar_lea.vmem %s0, %s721
      %s723 = smul.u32 4, %s34
      %s724 = smul.u32 4, %s34
      %p725 = scmp.lt.s32.totalorder %s724, 7
      %s726 = scalar_select %p725, %s724, 7
      %s727 = smul.addr %s726, 8
      %s728 = scalar_lea.vmem %s1, %s727
      %s729 = smul.u32 4, %s34
      %s730 = smul.u32 4, %s34
      %p731 = scmp.lt.s32.totalorder %s730, 7
      %s732 = scalar_select %p731, %s730, 7
      %s733 = smul.addr %s732, 8
      %s734 = scalar_lea.vmem %s23, %s733
      %s735 = smul.u32 4, %s34
      %v737 = vld [vmem:[%s3] sm:$0xff]
      %v738 = vld [vmem:[%s722] sm:$0xff]
      %v739 = vld [vmem:[%s722 + $0x8] sm:$0xff]
      %v740 = vld [vmem:[%s4] sm:$0xff]
      %v741 = vld [vmem:[%s4 + $0x8] sm:$0xff]
      %v742 = vld [vmem:[%s5] sm:$0xff]
      %v743 = vld [vmem:[%s5 + $0x8] sm:$0xff]
      %v746 = vcombine.high %v738, %v738
      %v747 = vcombine.high %v739, %v739
      %vm750 = vcmask 1043456
      %v751 = vsel %vm750, %v738, 0.0
      %v752 = vrot.slane %v751, 4
      %v753 = vadd.f32 %v751, %v752
      %v754 = vrot.slane %v753, 2
      %v755 = vadd.f32 %v753, %v754
      %v756 = vrot.slane %v755, 1
      %v757 = vadd.f32 %v755, %v756
      %v758 = vsel %vm750, %v746, 0.0
      %v759 = vrot.slane %v758, 4
      %v760 = vadd.f32 %v758, %v759
      %v761 = vrot.slane %v760, 2
      %v762 = vadd.f32 %v760, %v761
      %v763 = vrot.slane %v762, 1
      %v764 = vadd.f32 %v762, %v763
      %v765 = vsel %vm750, %v739, 0.0
      %v766 = vrot.slane %v765, 4
      %v767 = vadd.f32 %v765, %v766
      %v768 = vrot.slane %v767, 2
      %v769 = vadd.f32 %v767, %v768
      %v770 = vrot.slane %v769, 1
      %v771 = vadd.f32 %v769, %v770
      %v772 = vsel %vm750, %v747, 0.0
      %v773 = vrot.slane %v772, 4
      %v774 = vadd.f32 %v772, %v773
      %v775 = vrot.slane %v774, 2
      %v776 = vadd.f32 %v774, %v775
      %v777 = vrot.slane %v776, 1
      %v778 = vadd.f32 %v776, %v777
      %v780 = vcombine.high %v737, %v737
      %v782 = vunpack.c.l.s4 1983009808
      %v783 = vunpack.c.0.s8 %v782
      %v784 = vlaneseq
      %v785 = vshrl.u32 %v784, 7
      %v786 = vsub.s32 %v783, %v785
      %v787 = vrot.slane %v737, %v786
      %v789 = vunpack.c.l.s4 1983009808
      %v790 = vunpack.c.0.s8 %v789
      %v791 = vlaneseq
      %v792 = vshrl.u32 %v791, 7
      %v793 = vsub.s32 %v790, %v792
      %v794 = vrot.slane %v780, %v793
      %v795 = vcombine.high %v787, %v787
      %v796 = vcombine.high %v794, %v794
      %801 = vmatprep.subr.mxu0 %v795
      %802 = vmatpush1.xpose.msra.mxu0 %v787
      %803 = vmatprep.subr.mxu0 0.0
      %804 = vmatpush1.xpose.msra.mxu0 0.0
      %805 = vmatprep.subr.mxu0 0.0
      %806 = vmatpush1.xpose.msra.mxu0 0.0
      %807 = vmatprep.subr.mxu0 0.0
      %808 = vmatpush1.xpose.msra.mxu0 0.0
      %809 = vmatprep.subr.mxu0 0.0
      %810 = vmatpush1.xpose.msra.mxu0 0.0
      %811 = vmatprep.subr.mxu0 0.0
      %812 = vmatpush1.xpose.msra.mxu0 0.0
      %813 = vmatprep.subr.mxu0 0.0
      %814 = vmatpush1.xpose.msra.mxu0 0.0
      %815 = vmatprep.subr.mxu0 0.0
      %816 = vmatpush1.xpose.msra.mxu0 0.0
      %817 = vmatprep.subr.mxu0 0.0
      %818 = vmatpush1.xpose.msra.mxu0 0.0
      %819 = vmatprep.subr.mxu0 0.0
      %820 = vmatpush1.xpose.msra.mxu0 0.0
      %821 = vmatprep.subr.mxu0 0.0
      %822 = vmatpush1.xpose.msra.mxu0 0.0
      %823 = vmatprep.subr.mxu0 0.0
      %824 = vmatpush1.xpose.msra.mxu0 0.0
      %825 = vmatprep.subr.mxu0 0.0
      %826 = vmatpush1.xpose.msra.mxu0 0.0
      %827 = vmatprep.subr.mxu0 0.0
      %828 = vmatpush1.xpose.msra.mxu0 0.0
      %829 = vmatprep.subr.mxu0 0.0
      %830 = vmatpush1.xpose.msra.mxu0 0.0
      %831 = vmatprep.subr.mxu0 0.0
      %832 = vmatpush1.xpose.msra.mxu0 0.0
      %833 = vmatprep.subr.mxu0 0.0
      %834 = vmatpush1.xpose.msra.mxu0 0.0
      %835 = vmatprep.subr.mxu0 0.0
      %836 = vmatpush1.xpose.msra.mxu0 0.0
      %837 = vmatprep.subr.mxu0 0.0
      %838 = vmatpush1.xpose.msra.mxu0 0.0
      %839 = vmatprep.subr.mxu0 0.0
      %840 = vmatpush1.xpose.msra.mxu0 0.0
      %841 = vmatprep.subr.mxu0 0.0
      %842 = vmatpush1.xpose.msra.mxu0 0.0
      %843 = vmatprep.subr.mxu0 0.0
      %844 = vmatpush1.xpose.msra.mxu0 0.0
      %845 = vmatprep.subr.mxu0 0.0
      %846 = vmatpush1.xpose.msra.mxu0 0.0
      %847 = vmatprep.subr.mxu0 0.0
      %848 = vmatpush1.xpose.msra.mxu0 0.0
      %849 = vmatprep.subr.mxu0 0.0
      %850 = vmatpush1.xpose.msra.mxu0 0.0
      %851 = vmatprep.subr.mxu0 0.0
      %852 = vmatpush1.xpose.msra.mxu0 0.0
      %853 = vmatprep.subr.mxu0 0.0
      %854 = vmatpush1.xpose.msra.mxu0 0.0
      %855 = vmatprep.subr.mxu0 0.0
      %856 = vmatpush1.xpose.msra.mxu0 0.0
      %857 = vmatprep.subr.mxu0 0.0
      %858 = vmatpush1.xpose.msra.mxu0 0.0
      %859 = vmatprep.subr.mxu0 0.0
      %860 = vmatpush1.xpose.msra.mxu0 0.0
      %861 = vmatprep.subr.mxu0 0.0
      %862 = vmatpush1.xpose.msra.mxu0 0.0
      %863 = vmatprep.subr.mxu0 0.0
      %864 = vmatpush1.xpose.msra.mxu0 0.0
      %865 = vmatprep.mubr.f32.mxu0 %v764
      %866 = vmatmul.mubr.f32.gmra.mrb[0].mxu0 %v757
      %v867 = vpop.f32.mrb[0].mxu0
      %v868 = vadd.f32 0.0, %v867
      %v869 = vpop.f32.mrb[0].mxu0
      %870 = vdwg.mxu0
      %871 = vmatprep.subr.mxu0 %v796
      %872 = vmatpush1.xpose.msra.mxu0 %v794
      %873 = vmatprep.subr.mxu0 0.0
      %874 = vmatpush1.xpose.msra.mxu0 0.0
      %875 = vmatprep.subr.mxu0 0.0
      %876 = vmatpush1.xpose.msra.mxu0 0.0
      %877 = vmatprep.subr.mxu0 0.0
      %878 = vmatpush1.xpose.msra.mxu0 0.0
      %879 = vmatprep.subr.mxu0 0.0
      %880 = vmatpush1.xpose.msra.mxu0 0.0
      %881 = vmatprep.subr.mxu0 0.0
      %882 = vmatpush1.xpose.msra.mxu0 0.0
      %883 = vmatprep.subr.mxu0 0.0
      %884 = vmatpush1.xpose.msra.mxu0 0.0
      %885 = vmatprep.subr.mxu0 0.0
      %886 = vmatpush1.xpose.msra.mxu0 0.0
      %887 = vmatprep.subr.mxu0 0.0
      %888 = vmatpush1.xpose.msra.mxu0 0.0
      %889 = vmatprep.subr.mxu0 0.0
      %890 = vmatpush1.xpose.msra.mxu0 0.0
      %891 = vmatprep.subr.mxu0 0.0
      %892 = vmatpush1.xpose.msra.mxu0 0.0
      %893 = vmatprep.subr.mxu0 0.0
      %894 = vmatpush1.xpose.msra.mxu0 0.0
      %895 = vmatprep.subr.mxu0 0.0
      %896 = vmatpush1.xpose.msra.mxu0 0.0
      %897 = vmatprep.subr.mxu0 0.0
      %898 = vmatpush1.xpose.msra.mxu0 0.0
      %899 = vmatprep.subr.mxu0 0.0
      %900 = vmatpush1.xpose.msra.mxu0 0.0
      %901 = vmatprep.subr.mxu0 0.0
      %902 = vmatpush1.xpose.msra.mxu0 0.0
      %903 = vmatprep.subr.mxu0 0.0
      %904 = vmatpush1.xpose.msra.mxu0 0.0
      %905 = vmatprep.subr.mxu0 0.0
      %906 = vmatpush1.xpose.msra.mxu0 0.0
      %907 = vmatprep.subr.mxu0 0.0
      %908 = vmatpush1.xpose.msra.mxu0 0.0
      %909 = vmatprep.subr.mxu0 0.0
      %910 = vmatpush1.xpose.msra.mxu0 0.0
      %911 = vmatprep.subr.mxu0 0.0
      %912 = vmatpush1.xpose.msra.mxu0 0.0
      %913 = vmatprep.subr.mxu0 0.0
      %914 = vmatpush1.xpose.msra.mxu0 0.0
      %915 = vmatprep.subr.mxu0 0.0
      %916 = vmatpush1.xpose.msra.mxu0 0.0
      %917 = vmatprep.subr.mxu0 0.0
      %918 = vmatpush1.xpose.msra.mxu0 0.0
      %919 = vmatprep.subr.mxu0 0.0
      %920 = vmatpush1.xpose.msra.mxu0 0.0
      %921 = vmatprep.subr.mxu0 0.0
      %922 = vmatpush1.xpose.msra.mxu0 0.0
      %923 = vmatprep.subr.mxu0 0.0
      %924 = vmatpush1.xpose.msra.mxu0 0.0
      %925 = vmatprep.subr.mxu0 0.0
      %926 = vmatpush1.xpose.msra.mxu0 0.0
      %927 = vmatprep.subr.mxu0 0.0
      %928 = vmatpush1.xpose.msra.mxu0 0.0
      %929 = vmatprep.subr.mxu0 0.0
      %930 = vmatpush1.xpose.msra.mxu0 0.0
      %931 = vmatprep.subr.mxu0 0.0
      %932 = vmatpush1.xpose.msra.mxu0 0.0
      %933 = vmatprep.subr.mxu0 0.0
      %934 = vmatpush1.xpose.msra.mxu0 0.0
      %935 = vmatprep.mubr.f32.mxu0 %v778
      %936 = vmatmul.mubr.f32.gmra.mrb[0].mxu0 %v771
      %v937 = vpop.f32.mrb[0].mxu0
      %v938 = vadd.f32 %v868, %v937
      %v939 = vpop.f32.mrb[0].mxu0
      %940 = vdwg.mxu0
      %v941 = vmul.f32 %v938, 0.0009765625
      %vm942 = vcmask 15360
      %v944 = vsel %vm942, %v941, 0
      %vm946 = vcmask 1041408
      %v947 = vsel %vm946, %v787, 0
      %v949 = vsel %vm946, %v795, 0
      %v951 = vsel %vm946, %v794, 0
      %v953 = vsel %vm946, %v796, 0
      %955 = vmatprep.subr.mxu0 %v949
      %956 = vmatpush1.msra.mxu0 %v947
      %957 = vmatprep.subr.mxu0 0.0
      %958 = vmatpush1.msra.mxu0 0.0
      %959 = vmatprep.subr.mxu0 0.0
      %960 = vmatpush1.msra.mxu0 0.0
      %961 = vmatprep.subr.mxu0 0.0
      %962 = vmatpush1.msra.mxu0 0.0
      %963 = vmatprep.subr.mxu0 0.0
      %964 = vmatpush1.msra.mxu0 0.0
      %965 = vmatprep.subr.mxu0 0.0
      %966 = vmatpush1.msra.mxu0 0.0
      %967 = vmatprep.subr.mxu0 0.0
      %968 = vmatpush1.msra.mxu0 0.0
      %969 = vmatprep.subr.mxu0 0.0
      %970 = vmatpush1.msra.mxu0 0.0
      %971 = vmatprep.subr.mxu0 0.0
      %972 = vmatpush1.msra.mxu0 0.0
      %973 = vmatprep.subr.mxu0 0.0
      %974 = vmatpush1.msra.mxu0 0.0
      %975 = vmatprep.subr.mxu0 0.0
      %976 = vmatpush1.msra.mxu0 0.0
      %977 = vmatprep.subr.mxu0 0.0
      %978 = vmatpush1.msra.mxu0 0.0
      %979 = vmatprep.subr.mxu0 0.0
      %980 = vmatpush1.msra.mxu0 0.0
      %981 = vmatprep.subr.mxu0 0.0
      %982 = vmatpush1.msra.mxu0 0.0
      %983 = vmatprep.subr.mxu0 0.0
      %984 = vmatpush1.msra.mxu0 0.0
      %985 = vmatprep.subr.mxu0 0.0
      %986 = vmatpush1.msra.mxu0 0.0
      %987 = vmatprep.subr.mxu0 0.0
      %988 = vmatpush1.msra.mxu0 0.0
      %989 = vmatprep.subr.mxu0 0.0
      %990 = vmatpush1.msra.mxu0 0.0
      %991 = vmatprep.subr.mxu0 0.0
      %992 = vmatpush1.msra.mxu0 0.0
      %993 = vmatprep.subr.mxu0 0.0
      %994 = vmatpush1.msra.mxu0 0.0
      %995 = vmatprep.subr.mxu0 0.0
      %996 = vmatpush1.msra.mxu0 0.0
      %997 = vmatprep.subr.mxu0 0.0
      %998 = vmatpush1.msra.mxu0 0.0
      %999 = vmatprep.subr.mxu0 0.0
      %1000 = vmatpush1.msra.mxu0 0.0
      %1001 = vmatprep.subr.mxu0 0.0
      %1002 = vmatpush1.msra.mxu0 0.0
      %1003 = vmatprep.subr.mxu0 0.0
      %1004 = vmatpush1.msra.mxu0 0.0
      %1005 = vmatprep.subr.mxu0 0.0
      %1006 = vmatpush1.msra.mxu0 0.0
      %1007 = vmatprep.subr.mxu0 0.0
      %1008 = vmatpush1.msra.mxu0 0.0
      %1009 = vmatprep.subr.mxu0 0.0
      %1010 = vmatpush1.msra.mxu0 0.0
      %1011 = vmatprep.subr.mxu0 0.0
      %1012 = vmatpush1.msra.mxu0 0.0
      %1013 = vmatprep.subr.mxu0 0.0
      %1014 = vmatpush1.msra.mxu0 0.0
      %1015 = vmatprep.subr.mxu0 0.0
      %1016 = vmatpush1.msra.mxu0 0.0
      %1017 = vmatprep.subr.mxu0 0.0
      %1018 = vmatpush1.msra.mxu0 0.0
      %1019 = vmatprep.mubr.f32.mxu0 0.0
      %1020 = vmatmul.mubr.f32.gmra.mrb[0].mxu0 %v944
      %v1021 = vpop.f32.mrb[0].mxu0
      %v1022 = vadd.f32 0.0, %v1021
      %v1023 = vpop.f32.mrb[0].mxu0
      %v1024 = vadd.f32 0.0, %v1023
      %1025 = vdwg.mxu0
      %1026 = vmatprep.subr.mxu0 %v953
      %1027 = vmatpush1.msra.mxu0 %v951
      %1028 = vmatprep.subr.mxu0 0.0
      %1029 = vmatpush1.msra.mxu0 0.0
      %1030 = vmatprep.subr.mxu0 0.0
      %1031 = vmatpush1.msra.mxu0 0.0
      %1032 = vmatprep.subr.mxu0 0.0
      %1033 = vmatpush1.msra.mxu0 0.0
      %1034 = vmatprep.subr.mxu0 0.0
      %1035 = vmatpush1.msra.mxu0 0.0
      %1036 = vmatprep.subr.mxu0 0.0
      %1037 = vmatpush1.msra.mxu0 0.0
      %1038 = vmatprep.subr.mxu0 0.0
      %1039 = vmatpush1.msra.mxu0 0.0
      %1040 = vmatprep.subr.mxu0 0.0
      %1041 = vmatpush1.msra.mxu0 0.0
      %1042 = vmatprep.subr.mxu0 0.0
      %1043 = vmatpush1.msra.mxu0 0.0
      %1044 = vmatprep.subr.mxu0 0.0
      %1045 = vmatpush1.msra.mxu0 0.0
      %1046 = vmatprep.subr.mxu0 0.0
      %1047 = vmatpush1.msra.mxu0 0.0
      %1048 = vmatprep.subr.mxu0 0.0
      %1049 = vmatpush1.msra.mxu0 0.0
      %1050 = vmatprep.subr.mxu0 0.0
      %1051 = vmatpush1.msra.mxu0 0.0
      %1052 = vmatprep.subr.mxu0 0.0
      %1053 = vmatpush1.msra.mxu0 0.0
      %1054 = vmatprep.subr.mxu0 0.0
      %1055 = vmatpush1.msra.mxu0 0.0
      %1056 = vmatprep.subr.mxu0 0.0
      %1057 = vmatpush1.msra.mxu0 0.0
      %1058 = vmatprep.subr.mxu0 0.0
      %1059 = vmatpush1.msra.mxu0 0.0
      %1060 = vmatprep.subr.mxu0 0.0
      %1061 = vmatpush1.msra.mxu0 0.0
      %1062 = vmatprep.subr.mxu0 0.0
      %1063 = vmatpush1.msra.mxu0 0.0
      %1064 = vmatprep.subr.mxu0 0.0
      %1065 = vmatpush1.msra.mxu0 0.0
      %1066 = vmatprep.subr.mxu0 0.0
      %1067 = vmatpush1.msra.mxu0 0.0
      %1068 = vmatprep.subr.mxu0 0.0
      %1069 = vmatpush1.msra.mxu0 0.0
      %1070 = vmatprep.subr.mxu0 0.0
      %1071 = vmatpush1.msra.mxu0 0.0
      %1072 = vmatprep.subr.mxu0 0.0
      %1073 = vmatpush1.msra.mxu0 0.0
      %1074 = vmatprep.subr.mxu0 0.0
      %1075 = vmatpush1.msra.mxu0 0.0
      %1076 = vmatprep.subr.mxu0 0.0
      %1077 = vmatpush1.msra.mxu0 0.0
      %1078 = vmatprep.subr.mxu0 0.0
      %1079 = vmatpush1.msra.mxu0 0.0
      %1080 = vmatprep.subr.mxu0 0.0
      %1081 = vmatpush1.msra.mxu0 0.0
      %1082 = vmatprep.subr.mxu0 0.0
      %1083 = vmatpush1.msra.mxu0 0.0
      %1084 = vmatprep.subr.mxu0 0.0
      %1085 = vmatpush1.msra.mxu0 0.0
      %1086 = vmatprep.subr.mxu0 0.0
      %1087 = vmatpush1.msra.mxu0 0.0
      %1088 = vmatprep.subr.mxu0 0.0
      %1089 = vmatpush1.msra.mxu0 0.0
      %1090 = vmatprep.mubr.f32.mxu0 0.0
      %1091 = vmatmul.mubr.f32.gmra.mrb[0].mxu0 %v944
      %v1092 = vpop.f32.mrb[0].mxu0
      %v1093 = vadd.f32 0.0, %v1092
      %v1094 = vpop.f32.mrb[0].mxu0
      %v1095 = vadd.f32 0.0, %v1094
      %1096 = vdwg.mxu0
      %v1097 = vlaneseq
      %v1098 = vshrl.u32 %v1097, 7
      %v1099 = vsub.s32 0, %v1098
      %v1100 = vrot.slane %v1022, %v1099
      %v1101 = vlaneseq
      %v1102 = vshrl.u32 %v1101, 7
      %v1103 = vsub.s32 0, %v1102
      %v1104 = vrot.slane %v1024, %v1103
      %v1105 = vlaneseq
      %v1106 = vshrl.u32 %v1105, 7
      %v1107 = vsub.s32 0, %v1106
      %v1108 = vrot.slane %v1093, %v1107
      %v1109 = vlaneseq
      %v1110 = vshrl.u32 %v1109, 7
      %v1111 = vsub.s32 0, %v1110
      %v1112 = vrot.slane %v1095, %v1111
      %v1117 = vcombine.low %v1100, %v1104
      %v1118 = vcombine.low %v1108, %v1112
      %v1121 = vsub.f32 %v738, %v1117
      %v1122 = vsub.f32 %v739, %v1118
      %v1123 = vmul.f32 %v1121, %v1121
      %v1124 = vmul.f32 %v1122, %v1122
      %v1127 = vcombine.high %v1123, %v1123
      %v1128 = vcombine.high %v1124, %v1124
      %v1131 = vsel %vm750, %v1123, 0.0
      %v1132 = vrot.slane %v1131, 4
      %v1133 = vadd.f32 %v1131, %v1132
      %v1134 = vrot.slane %v1133, 2
      %v1135 = vadd.f32 %v1133, %v1134
      %v1136 = vrot.slane %v1135, 1
      %v1137 = vadd.f32 %v1135, %v1136
      %v1138 = vsel %vm750, %v1127, 0.0
      %v1139 = vrot.slane %v1138, 4
      %v1140 = vadd.f32 %v1138, %v1139
      %v1141 = vrot.slane %v1140, 2
      %v1142 = vadd.f32 %v1140, %v1141
      %v1143 = vrot.slane %v1142, 1
      %v1144 = vadd.f32 %v1142, %v1143
      %v1145 = vsel %vm750, %v1124, 0.0
      %v1146 = vrot.slane %v1145, 4
      %v1147 = vadd.f32 %v1145, %v1146
      %v1148 = vrot.slane %v1147, 2
      %v1149 = vadd.f32 %v1147, %v1148
      %v1150 = vrot.slane %v1149, 1
      %v1151 = vadd.f32 %v1149, %v1150
      %v1152 = vsel %vm750, %v1128, 0.0
      %v1153 = vrot.slane %v1152, 4
      %v1154 = vadd.f32 %v1152, %v1153
      %v1155 = vrot.slane %v1154, 2
      %v1156 = vadd.f32 %v1154, %v1155
      %v1157 = vrot.slane %v1156, 1
      %v1158 = vadd.f32 %v1156, %v1157
      %1159 = vmatprep.subr.mxu0 %v795
      %1160 = vmatpush1.xpose.msra.mxu0 %v787
      %1161 = vmatprep.subr.mxu0 0.0
      %1162 = vmatpush1.xpose.msra.mxu0 0.0
      %1163 = vmatprep.subr.mxu0 0.0
      %1164 = vmatpush1.xpose.msra.mxu0 0.0
      %1165 = vmatprep.subr.mxu0 0.0
      %1166 = vmatpush1.xpose.msra.mxu0 0.0
      %1167 = vmatprep.subr.mxu0 0.0
      %1168 = vmatpush1.xpose.msra.mxu0 0.0
      %1169 = vmatprep.subr.mxu0 0.0
      %1170 = vmatpush1.xpose.msra.mxu0 0.0
      %1171 = vmatprep.subr.mxu0 0.0
      %1172 = vmatpush1.xpose.msra.mxu0 0.0
      %1173 = vmatprep.subr.mxu0 0.0
      %1174 = vmatpush1.xpose.msra.mxu0 0.0
      %1175 = vmatprep.subr.mxu0 0.0
      %1176 = vmatpush1.xpose.msra.mxu0 0.0
      %1177 = vmatprep.subr.mxu0 0.0
      %1178 = vmatpush1.xpose.msra.mxu0 0.0
      %1179 = vmatprep.subr.mxu0 0.0
      %1180 = vmatpush1.xpose.msra.mxu0 0.0
      %1181 = vmatprep.subr.mxu0 0.0
      %1182 = vmatpush1.xpose.msra.mxu0 0.0
      %1183 = vmatprep.subr.mxu0 0.0
      %1184 = vmatpush1.xpose.msra.mxu0 0.0
      %1185 = vmatprep.subr.mxu0 0.0
      %1186 = vmatpush1.xpose.msra.mxu0 0.0
      %1187 = vmatprep.subr.mxu0 0.0
      %1188 = vmatpush1.xpose.msra.mxu0 0.0
      %1189 = vmatprep.subr.mxu0 0.0
      %1190 = vmatpush1.xpose.msra.mxu0 0.0
      %1191 = vmatprep.subr.mxu0 0.0
      %1192 = vmatpush1.xpose.msra.mxu0 0.0
      %1193 = vmatprep.subr.mxu0 0.0
      %1194 = vmatpush1.xpose.msra.mxu0 0.0
      %1195 = vmatprep.subr.mxu0 0.0
      %1196 = vmatpush1.xpose.msra.mxu0 0.0
      %1197 = vmatprep.subr.mxu0 0.0
      %1198 = vmatpush1.xpose.msra.mxu0 0.0
      %1199 = vmatprep.subr.mxu0 0.0
      %1200 = vmatpush1.xpose.msra.mxu0 0.0
      %1201 = vmatprep.subr.mxu0 0.0
      %1202 = vmatpush1.xpose.msra.mxu0 0.0
      %1203 = vmatprep.subr.mxu0 0.0
      %1204 = vmatpush1.xpose.msra.mxu0 0.0
      %1205 = vmatprep.subr.mxu0 0.0
      %1206 = vmatpush1.xpose.msra.mxu0 0.0
      %1207 = vmatprep.subr.mxu0 0.0
      %1208 = vmatpush1.xpose.msra.mxu0 0.0
      %1209 = vmatprep.subr.mxu0 0.0
      %1210 = vmatpush1.xpose.msra.mxu0 0.0
      %1211 = vmatprep.subr.mxu0 0.0
      %1212 = vmatpush1.xpose.msra.mxu0 0.0
      %1213 = vmatprep.subr.mxu0 0.0
      %1214 = vmatpush1.xpose.msra.mxu0 0.0
      %1215 = vmatprep.subr.mxu0 0.0
      %1216 = vmatpush1.xpose.msra.mxu0 0.0
      %1217 = vmatprep.subr.mxu0 0.0
      %1218 = vmatpush1.xpose.msra.mxu0 0.0
      %1219 = vmatprep.subr.mxu0 0.0
      %1220 = vmatpush1.xpose.msra.mxu0 0.0
      %1221 = vmatprep.subr.mxu0 0.0
      %1222 = vmatpush1.xpose.msra.mxu0 0.0
      %1223 = vmatprep.mubr.f32.mxu0 %v1144
      %1224 = vmatmul.mubr.f32.gmra.mrb[0].mxu0 %v1137
      %v1225 = vpop.f32.mrb[0].mxu0
      %v1226 = vadd.f32 0.0, %v1225
      %v1227 = vpop.f32.mrb[0].mxu0
      %1228 = vdwg.mxu0
      %1229 = vmatprep.subr.mxu0 %v796
      %1230 = vmatpush1.xpose.msra.mxu0 %v794
      %1231 = vmatprep.subr.mxu0 0.0
      %1232 = vmatpush1.xpose.msra.mxu0 0.0
      %1233 = vmatprep.subr.mxu0 0.0
      %1234 = vmatpush1.xpose.msra.mxu0 0.0
      %1235 = vmatprep.subr.mxu0 0.0
      %1236 = vmatpush1.xpose.msra.mxu0 0.0
      %1237 = vmatprep.subr.mxu0 0.0
      %1238 = vmatpush1.xpose.msra.mxu0 0.0
      %1239 = vmatprep.subr.mxu0 0.0
      %1240 = vmatpush1.xpose.msra.mxu0 0.0
      %1241 = vmatprep.subr.mxu0 0.0
      %1242 = vmatpush1.xpose.msra.mxu0 0.0
      %1243 = vmatprep.subr.mxu0 0.0
      %1244 = vmatpush1.xpose.msra.mxu0 0.0
      %1245 = vmatprep.subr.mxu0 0.0
      %1246 = vmatpush1.xpose.msra.mxu0 0.0
      %1247 = vmatprep.subr.mxu0 0.0
      %1248 = vmatpush1.xpose.msra.mxu0 0.0
      %1249 = vmatprep.subr.mxu0 0.0
      %1250 = vmatpush1.xpose.msra.mxu0 0.0
      %1251 = vmatprep.subr.mxu0 0.0
      %1252 = vmatpush1.xpose.msra.mxu0 0.0
      %1253 = vmatprep.subr.mxu0 0.0
      %1254 = vmatpush1.xpose.msra.mxu0 0.0
      %1255 = vmatprep.subr.mxu0 0.0
      %1256 = vmatpush1.xpose.msra.mxu0 0.0
      %1257 = vmatprep.subr.mxu0 0.0
      %1258 = vmatpush1.xpose.msra.mxu0 0.0
      %1259 = vmatprep.subr.mxu0 0.0
      %1260 = vmatpush1.xpose.msra.mxu0 0.0
      %1261 = vmatprep.subr.mxu0 0.0
      %1262 = vmatpush1.xpose.msra.mxu0 0.0
      %1263 = vmatprep.subr.mxu0 0.0
      %1264 = vmatpush1.xpose.msra.mxu0 0.0
      %1265 = vmatprep.subr.mxu0 0.0
      %1266 = vmatpush1.xpose.msra.mxu0 0.0
      %1267 = vmatprep.subr.mxu0 0.0
      %1268 = vmatpush1.xpose.msra.mxu0 0.0
      %1269 = vmatprep.subr.mxu0 0.0
      %1270 = vmatpush1.xpose.msra.mxu0 0.0
      %1271 = vmatprep.subr.mxu0 0.0
      %1272 = vmatpush1.xpose.msra.mxu0 0.0
      %1273 = vmatprep.subr.mxu0 0.0
      %1274 = vmatpush1.xpose.msra.mxu0 0.0
      %1275 = vmatprep.subr.mxu0 0.0
      %1276 = vmatpush1.xpose.msra.mxu0 0.0
      %1277 = vmatprep.subr.mxu0 0.0
      %1278 = vmatpush1.xpose.msra.mxu0 0.0
      %1279 = vmatprep.subr.mxu0 0.0
      %1280 = vmatpush1.xpose.msra.mxu0 0.0
      %1281 = vmatprep.subr.mxu0 0.0
      %1282 = vmatpush1.xpose.msra.mxu0 0.0
      %1283 = vmatprep.subr.mxu0 0.0
      %1284 = vmatpush1.xpose.msra.mxu0 0.0
      %1285 = vmatprep.subr.mxu0 0.0
      %1286 = vmatpush1.xpose.msra.mxu0 0.0
      %1287 = vmatprep.subr.mxu0 0.0
      %1288 = vmatpush1.xpose.msra.mxu0 0.0
      %1289 = vmatprep.subr.mxu0 0.0
      %1290 = vmatpush1.xpose.msra.mxu0 0.0
      %1291 = vmatprep.subr.mxu0 0.0
      %1292 = vmatpush1.xpose.msra.mxu0 0.0
      %1293 = vmatprep.mubr.f32.mxu0 %v1158
      %1294 = vmatmul.mubr.f32.gmra.mrb[0].mxu0 %v1151
      %v1295 = vpop.f32.mrb[0].mxu0
      %v1296 = vadd.f32 %v1226, %v1295
      %v1297 = vpop.f32.mrb[0].mxu0
      %1298 = vdwg.mxu0
      %v1299 = vmul.f32 %v1296, 0.0009765625
      %v1300 = vadd.f32 %v1299, 1e-05
      %v1301 = vrsqrt.pop %v1300
      %v1303 = vsel %vm942, %v1301, 0
      %1305 = vmatprep.subr.mxu0 %v949
      %1306 = vmatpush1.msra.mxu0 %v947
      %1307 = vmatprep.subr.mxu0 0.0
      %1308 = vmatpush1.msra.mxu0 0.0
      %1309 = vmatprep.subr.mxu0 0.0
      %1310 = vmatpush1.msra.mxu0 0.0
      %1311 = vmatprep.subr.mxu0 0.0
      %1312 = vmatpush1.msra.mxu0 0.0
      %1313 = vmatprep.subr.mxu0 0.0
      %1314 = vmatpush1.msra.mxu0 0.0
      %1315 = vmatprep.subr.mxu0 0.0
      %1316 = vmatpush1.msra.mxu0 0.0
      %1317 = vmatprep.subr.mxu0 0.0
      %1318 = vmatpush1.msra.mxu0 0.0
      %1319 = vmatprep.subr.mxu0 0.0
      %1320 = vmatpush1.msra.mxu0 0.0
      %1321 = vmatprep.subr.mxu0 0.0
      %1322 = vmatpush1.msra.mxu0 0.0
      %1323 = vmatprep.subr.mxu0 0.0
      %1324 = vmatpush1.msra.mxu0 0.0
      %1325 = vmatprep.subr.mxu0 0.0
      %1326 = vmatpush1.msra.mxu0 0.0
      %1327 = vmatprep.subr.mxu0 0.0
      %1328 = vmatpush1.msra.mxu0 0.0
      %1329 = vmatprep.subr.mxu0 0.0
      %1330 = vmatpush1.msra.mxu0 0.0
      %1331 = vmatprep.subr.mxu0 0.0
      %1332 = vmatpush1.msra.mxu0 0.0
      %1333 = vmatprep.subr.mxu0 0.0
      %1334 = vmatpush1.msra.mxu0 0.0
      %1335 = vmatprep.subr.mxu0 0.0
      %1336 = vmatpush1.msra.mxu0 0.0
      %1337 = vmatprep.subr.mxu0 0.0
      %1338 = vmatpush1.msra.mxu0 0.0
      %1339 = vmatprep.subr.mxu0 0.0
      %1340 = vmatpush1.msra.mxu0 0.0
      %1341 = vmatprep.subr.mxu0 0.0
      %1342 = vmatpush1.msra.mxu0 0.0
      %1343 = vmatprep.subr.mxu0 0.0
      %1344 = vmatpush1.msra.mxu0 0.0
      %1345 = vmatprep.subr.mxu0 0.0
      %1346 = vmatpush1.msra.mxu0 0.0
      %1347 = vmatprep.subr.mxu0 0.0
      %1348 = vmatpush1.msra.mxu0 0.0
      %1349 = vmatprep.subr.mxu0 0.0
      %1350 = vmatpush1.msra.mxu0 0.0
      %1351 = vmatprep.subr.mxu0 0.0
      %1352 = vmatpush1.msra.mxu0 0.0
      %1353 = vmatprep.subr.mxu0 0.0
      %1354 = vmatpush1.msra.mxu0 0.0
      %1355 = vmatprep.subr.mxu0 0.0
      %1356 = vmatpush1.msra.mxu0 0.0
      %1357 = vmatprep.subr.mxu0 0.0
      %1358 = vmatpush1.msra.mxu0 0.0
      %1359 = vmatprep.subr.mxu0 0.0
      %1360 = vmatpush1.msra.mxu0 0.0
      %1361 = vmatprep.subr.mxu0 0.0
      %1362 = vmatpush1.msra.mxu0 0.0
      %1363 = vmatprep.subr.mxu0 0.0
      %1364 = vmatpush1.msra.mxu0 0.0
      %1365 = vmatprep.subr.mxu0 0.0
      %1366 = vmatpush1.msra.mxu0 0.0
      %1367 = vmatprep.subr.mxu0 0.0
      %1368 = vmatpush1.msra.mxu0 0.0
      %1369 = vmatprep.mubr.f32.mxu0 0.0
      %1370 = vmatmul.mubr.f32.gmra.mrb[0].mxu0 %v1303
      %v1371 = vpop.f32.mrb[0].mxu0
      %v1372 = vadd.f32 0.0, %v1371
      %v1373 = vpop.f32.mrb[0].mxu0
      %v1374 = vadd.f32 0.0, %v1373
      %1375 = vdwg.mxu0
      %1376 = vmatprep.subr.mxu0 %v953
      %1377 = vmatpush1.msra.mxu0 %v951
      %1378 = vmatprep.subr.mxu0 0.0
      %1379 = vmatpush1.msra.mxu0 0.0
      %1380 = vmatprep.subr.mxu0 0.0
      %1381 = vmatpush1.msra.mxu0 0.0
      %1382 = vmatprep.subr.mxu0 0.0
      %1383 = vmatpush1.msra.mxu0 0.0
      %1384 = vmatprep.subr.mxu0 0.0
      %1385 = vmatpush1.msra.mxu0 0.0
      %1386 = vmatprep.subr.mxu0 0.0
      %1387 = vmatpush1.msra.mxu0 0.0
      %1388 = vmatprep.subr.mxu0 0.0
      %1389 = vmatpush1.msra.mxu0 0.0
      %1390 = vmatprep.subr.mxu0 0.0
      %1391 = vmatpush1.msra.mxu0 0.0
      %1392 = vmatprep.subr.mxu0 0.0
      %1393 = vmatpush1.msra.mxu0 0.0
      %1394 = vmatprep.subr.mxu0 0.0
      %1395 = vmatpush1.msra.mxu0 0.0
      %1396 = vmatprep.subr.mxu0 0.0
      %1397 = vmatpush1.msra.mxu0 0.0
      %1398 = vmatprep.subr.mxu0 0.0
      %1399 = vmatpush1.msra.mxu0 0.0
      %1400 = vmatprep.subr.mxu0 0.0
      %1401 = vmatpush1.msra.mxu0 0.0
      %1402 = vmatprep.subr.mxu0 0.0
      %1403 = vmatpush1.msra.mxu0 0.0
      %1404 = vmatprep.subr.mxu0 0.0
      %1405 = vmatpush1.msra.mxu0 0.0
      %1406 = vmatprep.subr.mxu0 0.0
      %1407 = vmatpush1.msra.mxu0 0.0
      %1408 = vmatprep.subr.mxu0 0.0
      %1409 = vmatpush1.msra.mxu0 0.0
      %1410 = vmatprep.subr.mxu0 0.0
      %1411 = vmatpush1.msra.mxu0 0.0
      %1412 = vmatprep.subr.mxu0 0.0
      %1413 = vmatpush1.msra.mxu0 0.0
      %1414 = vmatprep.subr.mxu0 0.0
      %1415 = vmatpush1.msra.mxu0 0.0
      %1416 = vmatprep.subr.mxu0 0.0
      %1417 = vmatpush1.msra.mxu0 0.0
      %1418 = vmatprep.subr.mxu0 0.0
      %1419 = vmatpush1.msra.mxu0 0.0
      %1420 = vmatprep.subr.mxu0 0.0
      %1421 = vmatpush1.msra.mxu0 0.0
      %1422 = vmatprep.subr.mxu0 0.0
      %1423 = vmatpush1.msra.mxu0 0.0
      %1424 = vmatprep.subr.mxu0 0.0
      %1425 = vmatpush1.msra.mxu0 0.0
      %1426 = vmatprep.subr.mxu0 0.0
      %1427 = vmatpush1.msra.mxu0 0.0
      %1428 = vmatprep.subr.mxu0 0.0
      %1429 = vmatpush1.msra.mxu0 0.0
      %1430 = vmatprep.subr.mxu0 0.0
      %1431 = vmatpush1.msra.mxu0 0.0
      %1432 = vmatprep.subr.mxu0 0.0
      %1433 = vmatpush1.msra.mxu0 0.0
      %1434 = vmatprep.subr.mxu0 0.0
      %1435 = vmatpush1.msra.mxu0 0.0
      %1436 = vmatprep.subr.mxu0 0.0
      %1437 = vmatpush1.msra.mxu0 0.0
      %1438 = vmatprep.subr.mxu0 0.0
      %1439 = vmatpush1.msra.mxu0 0.0
      %1440 = vmatprep.mubr.f32.mxu0 0.0
      %1441 = vmatmul.mubr.f32.gmra.mrb[0].mxu0 %v1303
      %v1442 = vpop.f32.mrb[0].mxu0
      %v1443 = vadd.f32 0.0, %v1442
      %v1444 = vpop.f32.mrb[0].mxu0
      %v1445 = vadd.f32 0.0, %v1444
      %1446 = vdwg.mxu0
      %v1447 = vlaneseq
      %v1448 = vshrl.u32 %v1447, 7
      %v1449 = vsub.s32 0, %v1448
      %v1450 = vrot.slane %v1372, %v1449
      %v1451 = vlaneseq
      %v1452 = vshrl.u32 %v1451, 7
      %v1453 = vsub.s32 0, %v1452
      %v1454 = vrot.slane %v1374, %v1453
      %v1455 = vlaneseq
      %v1456 = vshrl.u32 %v1455, 7
      %v1457 = vsub.s32 0, %v1456
      %v1458 = vrot.slane %v1443, %v1457
      %v1459 = vlaneseq
      %v1460 = vshrl.u32 %v1459, 7
      %v1461 = vsub.s32 0, %v1460
      %v1462 = vrot.slane %v1445, %v1461
      %v1467 = vcombine.low %v1450, %v1454
      %v1468 = vcombine.low %v1458, %v1462
      %v1471 = vmul.f32 %v1121, %v1467
      %v1472 = vmul.f32 %v1122, %v1468
      %v1473 = vmul.f32 %v1471, %v740
      %v1474 = vmul.f32 %v1472, %v741
      %v1475 = vadd.f32 %v1473, %v742
      %v1476 = vadd.f32 %v1474, %v743
      %v1477 = vxor.u32 %v1475, 2147483648
      %v1478 = vxor.u32 %v1476, 2147483648
      %v1479 = vmul.f32 %v1477, 1.442695
      %v1480 = vpow.pop %v1479
      %v1481 = vmul.f32 %v1478, 1.442695
      %v1482 = vpow.pop %v1481
      %v1483 = vadd.f32 %v1480, 1.0
      %v1484 = vadd.f32 %v1482, 1.0
      %v1485 = vrcp.pop %v1483
      %v1486 = vmul.f32 1.0, %v1485
      %v1487 = vrcp.pop %v1484
      %v1488 = vmul.f32 1.0, %v1487
      %v1489 = vmul.f32 %v1475, %v1486
      %v1490 = vmul.f32 %v1476, %v1488
      %v1493 = vcombine.high %v1489, %v1489
      %v1494 = vcombine.high %v1490, %v1490
      %1497 = vrot.lane.b32.xlu0 %v1489, 17
      %v1498 = vpop.permute.xlu0 %1497
      %1499 = vrot.lane.b32.xlu0 %v1493, 17
      %v1500 = vpop.permute.xlu0 %1499
      %1501 = vrot.lane.b32.xlu0 %v1490, 17
      %v1502 = vpop.permute.xlu0 %1501
      %1503 = vrot.lane.b32.xlu0 %v1494, 17
      %v1504 = vpop.permute.xlu0 %1503
      %v1505 = vlaneseq
      %v1506 = vand.u32 %v1505, 127
      %vm1507 = vcmp.lt.s32.totalorder %v1506, 17
      %v1508 = vsel %vm1507, %v1502, %v1504
      %v1509 = vsel %vm1507, %v1500, %v1502
      %v1510 = vsel %vm1507, %v1498, %v1500
      %v1511 = vsel %vm1507, %v1504, %v1498
      %v1512 = vld [vmem:[%s2] ss:$8 sm:$0xf]
      %v1514 = vlaneseq
      %v1515 = vshrl.u32 %v1514, 7
      %v1516 = vsub.s32 0, %v1515
      %v1517 = vrot.slane %v1512, %v1516
      %v1518 = vlaneseq
      %v1519 = vshrl.u32 %v1518, 7
      %v1520 = vsub.s32 1, %v1519
      %v1521 = vrot.slane %v1512, %v1520
      %v1522 = vlaneseq
      %v1523 = vshrl.u32 %v1522, 7
      %v1524 = vsub.s32 2, %v1523
      %v1525 = vrot.slane %v1512, %v1524
      %v1526 = vlaneseq
      %v1527 = vshrl.u32 %v1526, 7
      %v1528 = vsub.s32 3, %v1527
      %v1529 = vrot.slane %v1512, %v1528
      %v1534 = vmul.f32 %v1511, %v1517
      %v1535 = vmul.f32 %v1510, %v1521
      %v1536 = vmul.f32 %v1509, %v1525
      %v1537 = vmul.f32 %v1508, %v1529
      %v1538 = vld [vmem:[%s6] sm:$0xf]
      %v1539 = vpack.c.bf16 %v1534, %v1534
      %v1540 = vpack.c.bf16 %v1535, %v1535
      %v1541 = vpack.c.bf16 %v1536, %v1536
      %v1542 = vpack.c.bf16 %v1537, %v1537
      %1543 = vrot.lane.b32.xlu0 %v1489, 16
      %v1544 = vpop.permute.xlu0 %1543
      %1545 = vrot.lane.b32.xlu0 %v1493, 16
      %v1546 = vpop.permute.xlu0 %1545
      %1547 = vrot.lane.b32.xlu0 %v1490, 16
      %v1548 = vpop.permute.xlu0 %1547
      %1549 = vrot.lane.b32.xlu0 %v1494, 16
      %v1550 = vpop.permute.xlu0 %1549
      %vm1551 = vcmp.lt.s32.totalorder %v1506, 16
      %v1552 = vsel %vm1551, %v1548, %v1550
      %v1553 = vsel %vm1551, %v1546, %v1548
      %v1554 = vsel %vm1551, %v1544, %v1546
      %v1555 = vsel %vm1551, %v1550, %v1544
      %s1556 = scalar_lea.vmem %s2, 1
      %v1557 = vld [vmem:[%s1556] ss:$8 sm:$0xf]
      %v1559 = vlaneseq
      %v1560 = vshrl.u32 %v1559, 7
      %v1561 = vsub.s32 0, %v1560
      %v1562 = vrot.slane %v1557, %v1561
      %v1563 = vlaneseq
      %v1564 = vshrl.u32 %v1563, 7
      %v1565 = vsub.s32 1, %v1564
      %v1566 = vrot.slane %v1557, %v1565
      %v1567 = vlaneseq
      %v1568 = vshrl.u32 %v1567, 7
      %v1569 = vsub.s32 2, %v1568
      %v1570 = vrot.slane %v1557, %v1569
      %v1571 = vlaneseq
      %v1572 = vshrl.u32 %v1571, 7
      %v1573 = vsub.s32 3, %v1572
      %v1574 = vrot.slane %v1557, %v1573
      %v1579 = vmul.f32 %v1555, %v1562
      %v1580 = vmul.f32 %v1554, %v1566
      %v1581 = vmul.f32 %v1553, %v1570
      %v1582 = vmul.f32 %v1552, %v1574
      %s1583 = scalar_lea.vmem %s6, 4
      %v1584 = vld [vmem:[%s1583] sm:$0xf]
      %v1585 = vpack.c.bf16 %v1579, %v1579
      %v1586 = vpack.c.bf16 %v1580, %v1580
      %v1587 = vpack.c.bf16 %v1581, %v1581
      %v1588 = vpack.c.bf16 %v1582, %v1582
      %vm1589 = vcmask 31744
      %v1591 = vsel %vm1589, %v1584, 0
      %v1594 = vsel %vm946, %v1585, 0
      %v1597 = vsel %vm946, %v1586, 0
      %v1600 = vsel %vm946, %v1587, 0
      %v1603 = vsel %vm946, %v1588, 0
      %1605 = vmatprep.subr.bf16.mxu0 %v1597
      %1606 = vmatpush1.bf16.msra.mxu0 %v1594
      %1607 = vmatprep.subr.bf16.mxu0 0
      %1608 = vmatpush1.bf16.msra.mxu0 0
      %1609 = vmatprep.subr.bf16.mxu0 0
      %1610 = vmatpush1.bf16.msra.mxu0 0
      %1611 = vmatprep.subr.bf16.mxu0 0
      %1612 = vmatpush1.bf16.msra.mxu0 0
      %1613 = vmatprep.subr.bf16.mxu0 0
      %1614 = vmatpush1.bf16.msra.mxu0 0
      %1615 = vmatprep.subr.bf16.mxu0 0
      %1616 = vmatpush1.bf16.msra.mxu0 0
      %1617 = vmatprep.subr.bf16.mxu0 0
      %1618 = vmatpush1.bf16.msra.mxu0 0
      %1619 = vmatprep.subr.bf16.mxu0 0
      %1620 = vmatpush1.bf16.msra.mxu0 0
      %1621 = vmatprep.subr.bf16.mxu0 0
      %1622 = vmatpush1.bf16.msra.mxu0 0
      %1623 = vmatprep.subr.bf16.mxu0 0
      %1624 = vmatpush1.bf16.msra.mxu0 0
      %1625 = vmatprep.subr.bf16.mxu0 0
      %1626 = vmatpush1.bf16.msra.mxu0 0
      %1627 = vmatprep.subr.bf16.mxu0 0
      %1628 = vmatpush1.bf16.msra.mxu0 0
      %1629 = vmatprep.subr.bf16.mxu0 0
      %1630 = vmatpush1.bf16.msra.mxu0 0
      %1631 = vmatprep.subr.bf16.mxu0 0
      %1632 = vmatpush1.bf16.msra.mxu0 0
      %1633 = vmatprep.subr.bf16.mxu0 0
      %1634 = vmatpush1.bf16.msra.mxu0 0
      %1635 = vmatprep.subr.bf16.mxu0 0
      %1636 = vmatpush1.bf16.msra.mxu0 0
      %1637 = vmatprep.mubr.bf16.mxu0 0
      %1638 = vmatmul.mubr.bf16.gmra.mrb[0].mxu0 %v1591
      %v1639 = vpop.f32.mrb[0].mxu0
      %v1640 = vadd.f32 0.0, %v1639
      %v1641 = vpop.f32.mrb[0].mxu0
      %v1642 = vadd.f32 0.0, %v1641
      %v1643 = vpop.f32.mrb[0].mxu0
      %v1644 = vpop.f32.mrb[0].mxu0
      %1645 = vdwg.mxu0
      %1646 = vmatprep.subr.bf16.mxu0 %v1603
      %1647 = vmatpush1.bf16.msra.mxu0 %v1600
      %1648 = vmatprep.subr.bf16.mxu0 0
      %1649 = vmatpush1.bf16.msra.mxu0 0
      %1650 = vmatprep.subr.bf16.mxu0 0
      %1651 = vmatpush1.bf16.msra.mxu0 0
      %1652 = vmatprep.subr.bf16.mxu0 0
      %1653 = vmatpush1.bf16.msra.mxu0 0
      %1654 = vmatprep.subr.bf16.mxu0 0
      %1655 = vmatpush1.bf16.msra.mxu0 0
      %1656 = vmatprep.subr.bf16.mxu0 0
      %1657 = vmatpush1.bf16.msra.mxu0 0
      %1658 = vmatprep.subr.bf16.mxu0 0
      %1659 = vmatpush1.bf16.msra.mxu0 0
      %1660 = vmatprep.subr.bf16.mxu0 0
      %1661 = vmatpush1.bf16.msra.mxu0 0
      %1662 = vmatprep.subr.bf16.mxu0 0
      %1663 = vmatpush1.bf16.msra.mxu0 0
      %1664 = vmatprep.subr.bf16.mxu0 0
      %1665 = vmatpush1.bf16.msra.mxu0 0
      %1666 = vmatprep.subr.bf16.mxu0 0
      %1667 = vmatpush1.bf16.msra.mxu0 0
      %1668 = vmatprep.subr.bf16.mxu0 0
      %1669 = vmatpush1.bf16.msra.mxu0 0
      %1670 = vmatprep.subr.bf16.mxu0 0
      %1671 = vmatpush1.bf16.msra.mxu0 0
      %1672 = vmatprep.subr.bf16.mxu0 0
      %1673 = vmatpush1.bf16.msra.mxu0 0
      %1674 = vmatprep.subr.bf16.mxu0 0
      %1675 = vmatpush1.bf16.msra.mxu0 0
      %1676 = vmatprep.subr.bf16.mxu0 0
      %1677 = vmatpush1.bf16.msra.mxu0 0
      %1678 = vmatprep.mubr.bf16.mxu0 0
      %1679 = vmatmul.mubr.bf16.gmra.mrb[0].mxu0 %v1591
      %v1680 = vpop.f32.mrb[0].mxu0
      %v1681 = vadd.f32 0.0, %v1680
      %v1682 = vpop.f32.mrb[0].mxu0
      %v1683 = vadd.f32 0.0, %v1682
      %v1684 = vpop.f32.mrb[0].mxu0
      %v1685 = vpop.f32.mrb[0].mxu0
      %1686 = vdwg.mxu0
      %v1688 = vsel %vm1589, %v1538, 0
      %v1691 = vsel %vm946, %v1539, 0
      %v1694 = vsel %vm946, %v1540, 0
      %v1697 = vsel %vm946, %v1541, 0
      %v1700 = vsel %vm946, %v1542, 0
      %1702 = vmatprep.subr.bf16.mxu0 %v1694
      %1703 = vmatpush1.bf16.msra.mxu0 %v1691
      %1704 = vmatprep.subr.bf16.mxu0 0
      %1705 = vmatpush1.bf16.msra.mxu0 0
      %1706 = vmatprep.subr.bf16.mxu0 0
      %1707 = vmatpush1.bf16.msra.mxu0 0
      %1708 = vmatprep.subr.bf16.mxu0 0
      %1709 = vmatpush1.bf16.msra.mxu0 0
      %1710 = vmatprep.subr.bf16.mxu0 0
      %1711 = vmatpush1.bf16.msra.mxu0 0
      %1712 = vmatprep.subr.bf16.mxu0 0
      %1713 = vmatpush1.bf16.msra.mxu0 0
      %1714 = vmatprep.subr.bf16.mxu0 0
      %1715 = vmatpush1.bf16.msra.mxu0 0
      %1716 = vmatprep.subr.bf16.mxu0 0
      %1717 = vmatpush1.bf16.msra.mxu0 0
      %1718 = vmatprep.subr.bf16.mxu0 0
      %1719 = vmatpush1.bf16.msra.mxu0 0
      %1720 = vmatprep.subr.bf16.mxu0 0
      %1721 = vmatpush1.bf16.msra.mxu0 0
      %1722 = vmatprep.subr.bf16.mxu0 0
      %1723 = vmatpush1.bf16.msra.mxu0 0
      %1724 = vmatprep.subr.bf16.mxu0 0
      %1725 = vmatpush1.bf16.msra.mxu0 0
      %1726 = vmatprep.subr.bf16.mxu0 0
      %1727 = vmatpush1.bf16.msra.mxu0 0
      %1728 = vmatprep.subr.bf16.mxu0 0
      %1729 = vmatpush1.bf16.msra.mxu0 0
      %1730 = vmatprep.subr.bf16.mxu0 0
      %1731 = vmatpush1.bf16.msra.mxu0 0
      %1732 = vmatprep.subr.bf16.mxu0 0
      %1733 = vmatpush1.bf16.msra.mxu0 0
      %1734 = vmatprep.mubr.bf16.mxu0 0
      %1735 = vmatmul.mubr.bf16.gmra.mrb[0].mxu0 %v1688
      %v1736 = vpop.f32.mrb[0].mxu0
      %v1737 = vadd.f32 %v1640, %v1736
      %v1738 = vpop.f32.mrb[0].mxu0
      %v1739 = vadd.f32 %v1642, %v1738
      %v1740 = vpop.f32.mrb[0].mxu0
      %v1741 = vpop.f32.mrb[0].mxu0
      %1742 = vdwg.mxu0
      %1743 = vmatprep.subr.bf16.mxu0 %v1700
      %1744 = vmatpush1.bf16.msra.mxu0 %v1697
      %1745 = vmatprep.subr.bf16.mxu0 0
      %1746 = vmatpush1.bf16.msra.mxu0 0
      %1747 = vmatprep.subr.bf16.mxu0 0
      %1748 = vmatpush1.bf16.msra.mxu0 0
      %1749 = vmatprep.subr.bf16.mxu0 0
      %1750 = vmatpush1.bf16.msra.mxu0 0
      %1751 = vmatprep.subr.bf16.mxu0 0
      %1752 = vmatpush1.bf16.msra.mxu0 0
      %1753 = vmatprep.subr.bf16.mxu0 0
      %1754 = vmatpush1.bf16.msra.mxu0 0
      %1755 = vmatprep.subr.bf16.mxu0 0
      %1756 = vmatpush1.bf16.msra.mxu0 0
      %1757 = vmatprep.subr.bf16.mxu0 0
      %1758 = vmatpush1.bf16.msra.mxu0 0
      %1759 = vmatprep.subr.bf16.mxu0 0
      %1760 = vmatpush1.bf16.msra.mxu0 0
      %1761 = vmatprep.subr.bf16.mxu0 0
      %1762 = vmatpush1.bf16.msra.mxu0 0
      %1763 = vmatprep.subr.bf16.mxu0 0
      %1764 = vmatpush1.bf16.msra.mxu0 0
      %1765 = vmatprep.subr.bf16.mxu0 0
      %1766 = vmatpush1.bf16.msra.mxu0 0
      %1767 = vmatprep.subr.bf16.mxu0 0
      %1768 = vmatpush1.bf16.msra.mxu0 0
      %1769 = vmatprep.subr.bf16.mxu0 0
      %1770 = vmatpush1.bf16.msra.mxu0 0
      %1771 = vmatprep.subr.bf16.mxu0 0
      %1772 = vmatpush1.bf16.msra.mxu0 0
      %1773 = vmatprep.subr.bf16.mxu0 0
      %1774 = vmatpush1.bf16.msra.mxu0 0
      %1775 = vmatprep.mubr.bf16.mxu0 0
      %1776 = vmatmul.mubr.bf16.gmra.mrb[0].mxu0 %v1688
      %v1777 = vpop.f32.mrb[0].mxu0
      %v1778 = vadd.f32 %v1681, %v1777
      %v1779 = vpop.f32.mrb[0].mxu0
      %v1780 = vadd.f32 %v1683, %v1779
      %v1781 = vpop.f32.mrb[0].mxu0
      %v1782 = vpop.f32.mrb[0].mxu0
      %1783 = vdwg.mxu0
      %1784 = vrot.lane.b32.xlu0 %v1489, 15
      %v1785 = vpop.permute.xlu0 %1784
      %1786 = vrot.lane.b32.xlu0 %v1493, 15
      %v1787 = vpop.permute.xlu0 %1786
      %1788 = vrot.lane.b32.xlu0 %v1490, 15
      %v1789 = vpop.permute.xlu0 %1788
      %1790 = vrot.lane.b32.xlu0 %v1494, 15
      %v1791 = vpop.permute.xlu0 %1790
      %vm1792 = vcmp.lt.s32.totalorder %v1506, 15
      %v1793 = vsel %vm1792, %v1789, %v1791
      %v1794 = vsel %vm1792, %v1787, %v1789
      %v1795 = vsel %vm1792, %v1785, %v1787
      %v1796 = vsel %vm1792, %v1791, %v1785
      %s1797 = scalar_lea.vmem %s2, 2
      %v1798 = vld [vmem:[%s1797] ss:$8 sm:$0xf]
      %v1800 = vlaneseq
      %v1801 = vshrl.u32 %v1800, 7
      %v1802 = vsub.s32 0, %v1801
      %v1803 = vrot.slane %v1798, %v1802
      %v1804 = vlaneseq
      %v1805 = vshrl.u32 %v1804, 7
      %v1806 = vsub.s32 1, %v1805
      %v1807 = vrot.slane %v1798, %v1806
      %v1808 = vlaneseq
      %v1809 = vshrl.u32 %v1808, 7
      %v1810 = vsub.s32 2, %v1809
      %v1811 = vrot.slane %v1798, %v1810
      %v1812 = vlaneseq
      %v1813 = vshrl.u32 %v1812, 7
      %v1814 = vsub.s32 3, %v1813
      %v1815 = vrot.slane %v1798, %v1814
      %v1820 = vmul.f32 %v1796, %v1803
      %v1821 = vmul.f32 %v1795, %v1807
      %v1822 = vmul.f32 %v1794, %v1811
      %v1823 = vmul.f32 %v1793, %v1815
      %s1824 = scalar_lea.vmem %s6, 8
      %v1825 = vld [vmem:[%s1824] sm:$0xf]
      %v1826 = vpack.c.bf16 %v1820, %v1820
      %v1827 = vpack.c.bf16 %v1821, %v1821
      %v1828 = vpack.c.bf16 %v1822, %v1822
      %v1829 = vpack.c.bf16 %v1823, %v1823
      %v1831 = vsel %vm1589, %v1825, 0
      %v1834 = vsel %vm946, %v1826, 0
      %v1837 = vsel %vm946, %v1827, 0
      %v1840 = vsel %vm946, %v1828, 0
      %v1843 = vsel %vm946, %v1829, 0
      %1845 = vmatprep.subr.bf16.mxu0 %v1837
      %1846 = vmatpush1.bf16.msra.mxu0 %v1834
      %1847 = vmatprep.subr.bf16.mxu0 0
      %1848 = vmatpush1.bf16.msra.mxu0 0
      %1849 = vmatprep.subr.bf16.mxu0 0
      %1850 = vmatpush1.bf16.msra.mxu0 0
      %1851 = vmatprep.subr.bf16.mxu0 0
      %1852 = vmatpush1.bf16.msra.mxu0 0
      %1853 = vmatprep.subr.bf16.mxu0 0
      %1854 = vmatpush1.bf16.msra.mxu0 0
      %1855 = vmatprep.subr.bf16.mxu0 0
      %1856 = vmatpush1.bf16.msra.mxu0 0
      %1857 = vmatprep.subr.bf16.mxu0 0
      %1858 = vmatpush1.bf16.msra.mxu0 0
      %1859 = vmatprep.subr.bf16.mxu0 0
      %1860 = vmatpush1.bf16.msra.mxu0 0
      %1861 = vmatprep.subr.bf16.mxu0 0
      %1862 = vmatpush1.bf16.msra.mxu0 0
      %1863 = vmatprep.subr.bf16.mxu0 0
      %1864 = vmatpush1.bf16.msra.mxu0 0
      %1865 = vmatprep.subr.bf16.mxu0 0
      %1866 = vmatpush1.bf16.msra.mxu0 0
      %1867 = vmatprep.subr.bf16.mxu0 0
      %1868 = vmatpush1.bf16.msra.mxu0 0
      %1869 = vmatprep.subr.bf16.mxu0 0
      %1870 = vmatpush1.bf16.msra.mxu0 0
      %1871 = vmatprep.subr.bf16.mxu0 0
      %1872 = vmatpush1.bf16.msra.mxu0 0
      %1873 = vmatprep.subr.bf16.mxu0 0
      %1874 = vmatpush1.bf16.msra.mxu0 0
      %1875 = vmatprep.subr.bf16.mxu0 0
      %1876 = vmatpush1.bf16.msra.mxu0 0
      %1877 = vmatprep.mubr.bf16.mxu0 0
      %1878 = vmatmul.mubr.bf16.gmra.mrb[0].mxu0 %v1831
      %v1879 = vpop.f32.mrb[0].mxu0
      %v1880 = vadd.f32 0.0, %v1879
      %v1881 = vpop.f32.mrb[0].mxu0
      %v1882 = vadd.f32 0.0, %v1881
      %v1883 = vpop.f32.mrb[0].mxu0
      %v1884 = vpop.f32.mrb[0].mxu0
      %1885 = vdwg.mxu0
      %1886 = vmatprep.subr.bf16.mxu0 %v1843
      %1887 = vmatpush1.bf16.msra.mxu0 %v1840
      %1888 = vmatprep.subr.bf16.mxu0 0
      %1889 = vmatpush1.bf16.msra.mxu0 0
      %1890 = vmatprep.subr.bf16.mxu0 0
      %1891 = vmatpush1.bf16.msra.mxu0 0
      %1892 = vmatprep.subr.bf16.mxu0 0
      %1893 = vmatpush1.bf16.msra.mxu0 0
      %1894 = vmatprep.subr.bf16.mxu0 0
      %1895 = vmatpush1.bf16.msra.mxu0 0
      %1896 = vmatprep.subr.bf16.mxu0 0
      %1897 = vmatpush1.bf16.msra.mxu0 0
      %1898 = vmatprep.subr.bf16.mxu0 0
      %1899 = vmatpush1.bf16.msra.mxu0 0
      %1900 = vmatprep.subr.bf16.mxu0 0
      %1901 = vmatpush1.bf16.msra.mxu0 0
      %1902 = vmatprep.subr.bf16.mxu0 0
      %1903 = vmatpush1.bf16.msra.mxu0 0
      %1904 = vmatprep.subr.bf16.mxu0 0
      %1905 = vmatpush1.bf16.msra.mxu0 0
      %1906 = vmatprep.subr.bf16.mxu0 0
      %1907 = vmatpush1.bf16.msra.mxu0 0
      %1908 = vmatprep.subr.bf16.mxu0 0
      %1909 = vmatpush1.bf16.msra.mxu0 0
      %1910 = vmatprep.subr.bf16.mxu0 0
      %1911 = vmatpush1.bf16.msra.mxu0 0
      %1912 = vmatprep.subr.bf16.mxu0 0
      %1913 = vmatpush1.bf16.msra.mxu0 0
      %1914 = vmatprep.subr.bf16.mxu0 0
      %1915 = vmatpush1.bf16.msra.mxu0 0
      %1916 = vmatprep.subr.bf16.mxu0 0
      %1917 = vmatpush1.bf16.msra.mxu0 0
      %1918 = vmatprep.mubr.bf16.mxu0 0
      %1919 = vmatmul.mubr.bf16.gmra.mrb[0].mxu0 %v1831
      %v1920 = vpop.f32.mrb[0].mxu0
      %v1921 = vadd.f32 0.0, %v1920
      %v1922 = vpop.f32.mrb[0].mxu0
      %v1923 = vadd.f32 0.0, %v1922
      %v1924 = vpop.f32.mrb[0].mxu0
      %v1925 = vpop.f32.mrb[0].mxu0
      %1926 = vdwg.mxu0
      %v1927 = vadd.f32 %v1737, %v1880
      %v1928 = vadd.f32 %v1739, %v1882
      %v1929 = vadd.f32 %v1778, %v1921
      %v1930 = vadd.f32 %v1780, %v1923
      %1931 = vrot.lane.b32.xlu0 %v1489, 1
      %v1932 = vpop.permute.xlu0 %1931
      %1933 = vrot.lane.b32.xlu0 %v1493, 1
      %v1934 = vpop.permute.xlu0 %1933
      %1935 = vrot.lane.b32.xlu0 %v1490, 1
      %v1936 = vpop.permute.xlu0 %1935
      %1937 = vrot.lane.b32.xlu0 %v1494, 1
      %v1938 = vpop.permute.xlu0 %1937
      %vm1939 = vcmp.lt.s32.totalorder %v1506, 1
      %v1940 = vsel %vm1939, %v1936, %v1938
      %v1941 = vsel %vm1939, %v1934, %v1936
      %v1942 = vsel %vm1939, %v1932, %v1934
      %v1943 = vsel %vm1939, %v1938, %v1932
      %s1944 = scalar_lea.vmem %s2, 3
      %v1945 = vld [vmem:[%s1944] ss:$8 sm:$0xf]
      %v1947 = vlaneseq
      %v1948 = vshrl.u32 %v1947, 7
      %v1949 = vsub.s32 0, %v1948
      %v1950 = vrot.slane %v1945, %v1949
      %v1951 = vlaneseq
      %v1952 = vshrl.u32 %v1951, 7
      %v1953 = vsub.s32 1, %v1952
      %v1954 = vrot.slane %v1945, %v1953
      %v1955 = vlaneseq
      %v1956 = vshrl.u32 %v1955, 7
      %v1957 = vsub.s32 2, %v1956
      %v1958 = vrot.slane %v1945, %v1957
      %v1959 = vlaneseq
      %v1960 = vshrl.u32 %v1959, 7
      %v1961 = vsub.s32 3, %v1960
      %v1962 = vrot.slane %v1945, %v1961
      %v1967 = vmul.f32 %v1943, %v1950
      %v1968 = vmul.f32 %v1942, %v1954
      %v1969 = vmul.f32 %v1941, %v1958
      %v1970 = vmul.f32 %v1940, %v1962
      %s1971 = scalar_lea.vmem %s6, 12
      %v1972 = vld [vmem:[%s1971] sm:$0xf]
      %v1973 = vpack.c.bf16 %v1967, %v1967
      %v1974 = vpack.c.bf16 %v1968, %v1968
      %v1975 = vpack.c.bf16 %v1969, %v1969
      %v1976 = vpack.c.bf16 %v1970, %v1970
      %v1978 = vsel %vm1589, %v1972, 0
      %v1981 = vsel %vm946, %v1973, 0
      %v1984 = vsel %vm946, %v1974, 0
      %v1987 = vsel %vm946, %v1975, 0
      %v1990 = vsel %vm946, %v1976, 0
      %1992 = vmatprep.subr.bf16.mxu0 %v1984
      %1993 = vmatpush1.bf16.msra.mxu0 %v1981
      %1994 = vmatprep.subr.bf16.mxu0 0
      %1995 = vmatpush1.bf16.msra.mxu0 0
      %1996 = vmatprep.subr.bf16.mxu0 0
      %1997 = vmatpush1.bf16.msra.mxu0 0
      %1998 = vmatprep.subr.bf16.mxu0 0
      %1999 = vmatpush1.bf16.msra.mxu0 0
      %2000 = vmatprep.subr.bf16.mxu0 0
      %2001 = vmatpush1.bf16.msra.mxu0 0
      %2002 = vmatprep.subr.bf16.mxu0 0
      %2003 = vmatpush1.bf16.msra.mxu0 0
      %2004 = vmatprep.subr.bf16.mxu0 0
      %2005 = vmatpush1.bf16.msra.mxu0 0
      %2006 = vmatprep.subr.bf16.mxu0 0
      %2007 = vmatpush1.bf16.msra.mxu0 0
      %2008 = vmatprep.subr.bf16.mxu0 0
      %2009 = vmatpush1.bf16.msra.mxu0 0
      %2010 = vmatprep.subr.bf16.mxu0 0
      %2011 = vmatpush1.bf16.msra.mxu0 0
      %2012 = vmatprep.subr.bf16.mxu0 0
      %2013 = vmatpush1.bf16.msra.mxu0 0
      %2014 = vmatprep.subr.bf16.mxu0 0
      %2015 = vmatpush1.bf16.msra.mxu0 0
      %2016 = vmatprep.subr.bf16.mxu0 0
      %2017 = vmatpush1.bf16.msra.mxu0 0
      %2018 = vmatprep.subr.bf16.mxu0 0
      %2019 = vmatpush1.bf16.msra.mxu0 0
      %2020 = vmatprep.subr.bf16.mxu0 0
      %2021 = vmatpush1.bf16.msra.mxu0 0
      %2022 = vmatprep.subr.bf16.mxu0 0
      %2023 = vmatpush1.bf16.msra.mxu0 0
      %2024 = vmatprep.mubr.bf16.mxu0 0
      %2025 = vmatmul.mubr.bf16.gmra.mrb[0].mxu0 %v1978
      %v2026 = vpop.f32.mrb[0].mxu0
      %v2027 = vadd.f32 0.0, %v2026
      %v2028 = vpop.f32.mrb[0].mxu0
      %v2029 = vadd.f32 0.0, %v2028
      %v2030 = vpop.f32.mrb[0].mxu0
      %v2031 = vpop.f32.mrb[0].mxu0
      %2032 = vdwg.mxu0
      %2033 = vmatprep.subr.bf16.mxu0 %v1990
      %2034 = vmatpush1.bf16.msra.mxu0 %v1987
      %2035 = vmatprep.subr.bf16.mxu0 0
      %2036 = vmatpush1.bf16.msra.mxu0 0
      %2037 = vmatprep.subr.bf16.mxu0 0
      %2038 = vmatpush1.bf16.msra.mxu0 0
      %2039 = vmatprep.subr.bf16.mxu0 0
      %2040 = vmatpush1.bf16.msra.mxu0 0
      %2041 = vmatprep.subr.bf16.mxu0 0
      %2042 = vmatpush1.bf16.msra.mxu0 0
      %2043 = vmatprep.subr.bf16.mxu0 0
      %2044 = vmatpush1.bf16.msra.mxu0 0
      %2045 = vmatprep.subr.bf16.mxu0 0
      %2046 = vmatpush1.bf16.msra.mxu0 0
      %2047 = vmatprep.subr.bf16.mxu0 0
      %2048 = vmatpush1.bf16.msra.mxu0 0
      %2049 = vmatprep.subr.bf16.mxu0 0
      %2050 = vmatpush1.bf16.msra.mxu0 0
      %2051 = vmatprep.subr.bf16.mxu0 0
      %2052 = vmatpush1.bf16.msra.mxu0 0
      %2053 = vmatprep.subr.bf16.mxu0 0
      %2054 = vmatpush1.bf16.msra.mxu0 0
      %2055 = vmatprep.subr.bf16.mxu0 0
      %2056 = vmatpush1.bf16.msra.mxu0 0
      %2057 = vmatprep.subr.bf16.mxu0 0
      %2058 = vmatpush1.bf16.msra.mxu0 0
      %2059 = vmatprep.subr.bf16.mxu0 0
      %2060 = vmatpush1.bf16.msra.mxu0 0
      %2061 = vmatprep.subr.bf16.mxu0 0
      %2062 = vmatpush1.bf16.msra.mxu0 0
      %2063 = vmatprep.subr.bf16.mxu0 0
      %2064 = vmatpush1.bf16.msra.mxu0 0
      %2065 = vmatprep.mubr.bf16.mxu0 0
      %2066 = vmatmul.mubr.bf16.gmra.mrb[0].mxu0 %v1978
      %v2067 = vpop.f32.mrb[0].mxu0
      %v2068 = vadd.f32 0.0, %v2067
      %v2069 = vpop.f32.mrb[0].mxu0
      %v2070 = vadd.f32 0.0, %v2069
      %v2071 = vpop.f32.mrb[0].mxu0
      %v2072 = vpop.f32.mrb[0].mxu0
      %2073 = vdwg.mxu0
      %v2074 = vadd.f32 %v1927, %v2027
      %v2075 = vadd.f32 %v1928, %v2029
      %v2076 = vadd.f32 %v1929, %v2068
      %v2077 = vadd.f32 %v1930, %v2070
      %s2078 = scalar_lea.vmem %s6, 16
      %v2079 = vld [vmem:[%s2078] sm:$0xf]
      %v2080 = vpack.c.bf16 %v1489, %v1489
      %v2081 = vpack.c.bf16 %v1493, %v1493
      %v2082 = vpack.c.bf16 %v1490, %v1490
      %v2083 = vpack.c.bf16 %v1494, %v1494
      %v2085 = vsel %vm1589, %v2079, 0
      %v2088 = vsel %vm946, %v2080, 0
      %v2091 = vsel %vm946, %v2081, 0
      %v2094 = vsel %vm946, %v2082, 0
      %v2097 = vsel %vm946, %v2083, 0
      %2099 = vmatprep.subr.bf16.mxu0 %v2091
      %2100 = vmatpush1.bf16.msra.mxu0 %v2088
      %2101 = vmatprep.subr.bf16.mxu0 0
      %2102 = vmatpush1.bf16.msra.mxu0 0
      %2103 = vmatprep.subr.bf16.mxu0 0
      %2104 = vmatpush1.bf16.msra.mxu0 0
      %2105 = vmatprep.subr.bf16.mxu0 0
      %2106 = vmatpush1.bf16.msra.mxu0 0
      %2107 = vmatprep.subr.bf16.mxu0 0
      %2108 = vmatpush1.bf16.msra.mxu0 0
      %2109 = vmatprep.subr.bf16.mxu0 0
      %2110 = vmatpush1.bf16.msra.mxu0 0
      %2111 = vmatprep.subr.bf16.mxu0 0
      %2112 = vmatpush1.bf16.msra.mxu0 0
      %2113 = vmatprep.subr.bf16.mxu0 0
      %2114 = vmatpush1.bf16.msra.mxu0 0
      %2115 = vmatprep.subr.bf16.mxu0 0
      %2116 = vmatpush1.bf16.msra.mxu0 0
      %2117 = vmatprep.subr.bf16.mxu0 0
      %2118 = vmatpush1.bf16.msra.mxu0 0
      %2119 = vmatprep.subr.bf16.mxu0 0
      %2120 = vmatpush1.bf16.msra.mxu0 0
      %2121 = vmatprep.subr.bf16.mxu0 0
      %2122 = vmatpush1.bf16.msra.mxu0 0
      %2123 = vmatprep.subr.bf16.mxu0 0
      %2124 = vmatpush1.bf16.msra.mxu0 0
      %2125 = vmatprep.subr.bf16.mxu0 0
      %2126 = vmatpush1.bf16.msra.mxu0 0
      %2127 = vmatprep.subr.bf16.mxu0 0
      %2128 = vmatpush1.bf16.msra.mxu0 0
      %2129 = vmatprep.subr.bf16.mxu0 0
      %2130 = vmatpush1.bf16.msra.mxu0 0
      %2131 = vmatprep.mubr.bf16.mxu0 0
      %2132 = vmatmul.mubr.bf16.gmra.mrb[0].mxu0 %v2085
      %v2133 = vpop.f32.mrb[0].mxu0
      %v2134 = vadd.f32 0.0, %v2133
      %v2135 = vpop.f32.mrb[0].mxu0
      %v2136 = vadd.f32 0.0, %v2135
      %v2137 = vpop.f32.mrb[0].mxu0
      %v2138 = vpop.f32.mrb[0].mxu0
      %2139 = vdwg.mxu0
      %2140 = vmatprep.subr.bf16.mxu0 %v2097
      %2141 = vmatpush1.bf16.msra.mxu0 %v2094
      %2142 = vmatprep.subr.bf16.mxu0 0
      %2143 = vmatpush1.bf16.msra.mxu0 0
      %2144 = vmatprep.subr.bf16.mxu0 0
      %2145 = vmatpush1.bf16.msra.mxu0 0
      %2146 = vmatprep.subr.bf16.mxu0 0
      %2147 = vmatpush1.bf16.msra.mxu0 0
      %2148 = vmatprep.subr.bf16.mxu0 0
      %2149 = vmatpush1.bf16.msra.mxu0 0
      %2150 = vmatprep.subr.bf16.mxu0 0
      %2151 = vmatpush1.bf16.msra.mxu0 0
      %2152 = vmatprep.subr.bf16.mxu0 0
      %2153 = vmatpush1.bf16.msra.mxu0 0
      %2154 = vmatprep.subr.bf16.mxu0 0
      %2155 = vmatpush1.bf16.msra.mxu0 0
      %2156 = vmatprep.subr.bf16.mxu0 0
      %2157 = vmatpush1.bf16.msra.mxu0 0
      %2158 = vmatprep.subr.bf16.mxu0 0
      %2159 = vmatpush1.bf16.msra.mxu0 0
      %2160 = vmatprep.subr.bf16.mxu0 0
      %2161 = vmatpush1.bf16.msra.mxu0 0
      %2162 = vmatprep.subr.bf16.mxu0 0
      %2163 = vmatpush1.bf16.msra.mxu0 0
      %2164 = vmatprep.subr.bf16.mxu0 0
      %2165 = vmatpush1.bf16.msra.mxu0 0
      %2166 = vmatprep.subr.bf16.mxu0 0
      %2167 = vmatpush1.bf16.msra.mxu0 0
      %2168 = vmatprep.subr.bf16.mxu0 0
      %2169 = vmatpush1.bf16.msra.mxu0 0
      %2170 = vmatprep.subr.bf16.mxu0 0
      %2171 = vmatpush1.bf16.msra.mxu0 0
      %2172 = vmatprep.mubr.bf16.mxu0 0
      %2173 = vmatmul.mubr.bf16.gmra.mrb[0].mxu0 %v2085
      %v2174 = vpop.f32.mrb[0].mxu0
      %v2175 = vadd.f32 0.0, %v2174
      %v2176 = vpop.f32.mrb[0].mxu0
      %v2177 = vadd.f32 0.0, %v2176
      %v2178 = vpop.f32.mrb[0].mxu0
      %v2179 = vpop.f32.mrb[0].mxu0
      %2180 = vdwg.mxu0
      %v2181 = vadd.f32 %v2074, %v2134
      %v2182 = vadd.f32 %v2075, %v2136
      %v2183 = vadd.f32 %v2076, %v2175
      %v2184 = vadd.f32 %v2077, %v2177
      %2185 = vrot.lane.b32.xlu0 %v1489, 127
      %v2186 = vpop.permute.xlu0 %2185
      %2187 = vrot.lane.b32.xlu0 %v1493, 127
      %v2188 = vpop.permute.xlu0 %2187
      %2189 = vrot.lane.b32.xlu0 %v1490, 127
      %v2190 = vpop.permute.xlu0 %2189
      %2191 = vrot.lane.b32.xlu0 %v1494, 127
      %v2192 = vpop.permute.xlu0 %2191
      %vm2193 = vcmp.lt.s32.totalorder %v1506, 127
      %v2194 = vsel %vm2193, %v2190, %v2192
      %v2195 = vsel %vm2193, %v2188, %v2190
      %v2196 = vsel %vm2193, %v2186, %v2188
      %v2197 = vsel %vm2193, %v2192, %v2186
      %s2198 = scalar_lea.vmem %s2, 5
      %v2199 = vld [vmem:[%s2198] ss:$8 sm:$0xf]
      %v2201 = vlaneseq
      %v2202 = vshrl.u32 %v2201, 7
      %v2203 = vsub.s32 0, %v2202
      %v2204 = vrot.slane %v2199, %v2203
      %v2205 = vlaneseq
      %v2206 = vshrl.u32 %v2205, 7
      %v2207 = vsub.s32 1, %v2206
      %v2208 = vrot.slane %v2199, %v2207
      %v2209 = vlaneseq
      %v2210 = vshrl.u32 %v2209, 7
      %v2211 = vsub.s32 2, %v2210
      %v2212 = vrot.slane %v2199, %v2211
      %v2213 = vlaneseq
      %v2214 = vshrl.u32 %v2213, 7
      %v2215 = vsub.s32 3, %v2214
      %v2216 = vrot.slane %v2199, %v2215
      %v2221 = vmul.f32 %v2196, %v2204
      %v2222 = vmul.f32 %v2195, %v2208
      %v2223 = vmul.f32 %v2194, %v2212
      %v2224 = vmul.f32 %v2197, %v2216
      %s2225 = scalar_lea.vmem %s6, 20
      %v2226 = vld [vmem:[%s2225] sm:$0xf]
      %v2227 = vpack.c.bf16 %v2221, %v2221
      %v2228 = vpack.c.bf16 %v2222, %v2222
      %v2229 = vpack.c.bf16 %v2223, %v2223
      %v2230 = vpack.c.bf16 %v2224, %v2224
      %v2232 = vsel %vm1589, %v2226, 0
      %v2235 = vsel %vm946, %v2227, 0
      %v2238 = vsel %vm946, %v2228, 0
      %v2241 = vsel %vm946, %v2229, 0
      %v2244 = vsel %vm946, %v2230, 0
      %2246 = vmatprep.subr.bf16.mxu0 %v2238
      %2247 = vmatpush1.bf16.msra.mxu0 %v2235
      %2248 = vmatprep.subr.bf16.mxu0 0
      %2249 = vmatpush1.bf16.msra.mxu0 0
      %2250 = vmatprep.subr.bf16.mxu0 0
      %2251 = vmatpush1.bf16.msra.mxu0 0
      %2252 = vmatprep.subr.bf16.mxu0 0
      %2253 = vmatpush1.bf16.msra.mxu0 0
      %2254 = vmatprep.subr.bf16.mxu0 0
      %2255 = vmatpush1.bf16.msra.mxu0 0
      %2256 = vmatprep.subr.bf16.mxu0 0
      %2257 = vmatpush1.bf16.msra.mxu0 0
      %2258 = vmatprep.subr.bf16.mxu0 0
      %2259 = vmatpush1.bf16.msra.mxu0 0
      %2260 = vmatprep.subr.bf16.mxu0 0
      %2261 = vmatpush1.bf16.msra.mxu0 0
      %2262 = vmatprep.subr.bf16.mxu0 0
      %2263 = vmatpush1.bf16.msra.mxu0 0
      %2264 = vmatprep.subr.bf16.mxu0 0
      %2265 = vmatpush1.bf16.msra.mxu0 0
      %2266 = vmatprep.subr.bf16.mxu0 0
      %2267 = vmatpush1.bf16.msra.mxu0 0
      %2268 = vmatprep.subr.bf16.mxu0 0
      %2269 = vmatpush1.bf16.msra.mxu0 0
      %2270 = vmatprep.subr.bf16.mxu0 0
      %2271 = vmatpush1.bf16.msra.mxu0 0
      %2272 = vmatprep.subr.bf16.mxu0 0
      %2273 = vmatpush1.bf16.msra.mxu0 0
      %2274 = vmatprep.subr.bf16.mxu0 0
      %2275 = vmatpush1.bf16.msra.mxu0 0
      %2276 = vmatprep.subr.bf16.mxu0 0
      %2277 = vmatpush1.bf16.msra.mxu0 0
      %2278 = vmatprep.mubr.bf16.mxu0 0
      %2279 = vmatmul.mubr.bf16.gmra.mrb[0].mxu0 %v2232
      %v2280 = vpop.f32.mrb[0].mxu0
      %v2281 = vadd.f32 0.0, %v2280
      %v2282 = vpop.f32.mrb[0].mxu0
      %v2283 = vadd.f32 0.0, %v2282
      %v2284 = vpop.f32.mrb[0].mxu0
      %v2285 = vpop.f32.mrb[0].mxu0
      %2286 = vdwg.mxu0
      %2287 = vmatprep.subr.bf16.mxu0 %v2244
      %2288 = vmatpush1.bf16.msra.mxu0 %v2241
      %2289 = vmatprep.subr.bf16.mxu0 0
      %2290 = vmatpush1.bf16.msra.mxu0 0
      %2291 = vmatprep.subr.bf16.mxu0 0
      %2292 = vmatpush1.bf16.msra.mxu0 0
      %2293 = vmatprep.subr.bf16.mxu0 0
      %2294 = vmatpush1.bf16.msra.mxu0 0
      %2295 = vmatprep.subr.bf16.mxu0 0
      %2296 = vmatpush1.bf16.msra.mxu0 0
      %2297 = vmatprep.subr.bf16.mxu0 0
      %2298 = vmatpush1.bf16.msra.mxu0 0
      %2299 = vmatprep.subr.bf16.mxu0 0
      %2300 = vmatpush1.bf16.msra.mxu0 0
      %2301 = vmatprep.subr.bf16.mxu0 0
      %2302 = vmatpush1.bf16.msra.mxu0 0
      %2303 = vmatprep.subr.bf16.mxu0 0
      %2304 = vmatpush1.bf16.msra.mxu0 0
      %2305 = vmatprep.subr.bf16.mxu0 0
      %2306 = vmatpush1.bf16.msra.mxu0 0
      %2307 = vmatprep.subr.bf16.mxu0 0
      %2308 = vmatpush1.bf16.msra.mxu0 0
      %2309 = vmatprep.subr.bf16.mxu0 0
      %2310 = vmatpush1.bf16.msra.mxu0 0
      %2311 = vmatprep.subr.bf16.mxu0 0
      %2312 = vmatpush1.bf16.msra.mxu0 0
      %2313 = vmatprep.subr.bf16.mxu0 0
      %2314 = vmatpush1.bf16.msra.mxu0 0
      %2315 = vmatprep.subr.bf16.mxu0 0
      %2316 = vmatpush1.bf16.msra.mxu0 0
      %2317 = vmatprep.subr.bf16.mxu0 0
      %2318 = vmatpush1.bf16.msra.mxu0 0
      %2319 = vmatprep.mubr.bf16.mxu0 0
      %2320 = vmatmul.mubr.bf16.gmra.mrb[0].mxu0 %v2232
      %v2321 = vpop.f32.mrb[0].mxu0
      %v2322 = vadd.f32 0.0, %v2321
      %v2323 = vpop.f32.mrb[0].mxu0
      %v2324 = vadd.f32 0.0, %v2323
      %v2325 = vpop.f32.mrb[0].mxu0
      %v2326 = vpop.f32.mrb[0].mxu0
      %2327 = vdwg.mxu0
      %v2328 = vadd.f32 %v2181, %v2281
      %v2329 = vadd.f32 %v2182, %v2283
      %v2330 = vadd.f32 %v2183, %v2322
      %v2331 = vadd.f32 %v2184, %v2324
      %2332 = vrot.lane.b32.xlu0 %v1489, 113
      %v2333 = vpop.permute.xlu0 %2332
      %2334 = vrot.lane.b32.xlu0 %v1493, 113
      %v2335 = vpop.permute.xlu0 %2334
      %2336 = vrot.lane.b32.xlu0 %v1490, 113
      %v2337 = vpop.permute.xlu0 %2336
      %2338 = vrot.lane.b32.xlu0 %v1494, 113
      %v2339 = vpop.permute.xlu0 %2338
      %vm2340 = vcmp.lt.s32.totalorder %v1506, 113
      %v2341 = vsel %vm2340, %v2337, %v2339
      %v2342 = vsel %vm2340, %v2335, %v2337
      %v2343 = vsel %vm2340, %v2333, %v2335
      %v2344 = vsel %vm2340, %v2339, %v2333
      %s2345 = scalar_lea.vmem %s2, 6
      %v2346 = vld [vmem:[%s2345] ss:$8 sm:$0xf]
      %v2348 = vlaneseq
      %v2349 = vshrl.u32 %v2348, 7
      %v2350 = vsub.s32 0, %v2349
      %v2351 = vrot.slane %v2346, %v2350
      %v2352 = vlaneseq
      %v2353 = vshrl.u32 %v2352, 7
      %v2354 = vsub.s32 1, %v2353
      %v2355 = vrot.slane %v2346, %v2354
      %v2356 = vlaneseq
      %v2357 = vshrl.u32 %v2356, 7
      %v2358 = vsub.s32 2, %v2357
      %v2359 = vrot.slane %v2346, %v2358
      %v2360 = vlaneseq
      %v2361 = vshrl.u32 %v2360, 7
      %v2362 = vsub.s32 3, %v2361
      %v2363 = vrot.slane %v2346, %v2362
      %v2368 = vmul.f32 %v2343, %v2351
      %v2369 = vmul.f32 %v2342, %v2355
      %v2370 = vmul.f32 %v2341, %v2359
      %v2371 = vmul.f32 %v2344, %v2363
      %s2372 = scalar_lea.vmem %s6, 24
      %v2373 = vld [vmem:[%s2372] sm:$0xf]
      %v2374 = vpack.c.bf16 %v2368, %v2368
      %v2375 = vpack.c.bf16 %v2369, %v2369
      %v2376 = vpack.c.bf16 %v2370, %v2370
      %v2377 = vpack.c.bf16 %v2371, %v2371
      %v2379 = vsel %vm1589, %v2373, 0
      %v2382 = vsel %vm946, %v2374, 0
      %v2385 = vsel %vm946, %v2375, 0
      %v2388 = vsel %vm946, %v2376, 0
      %v2391 = vsel %vm946, %v2377, 0
      %2393 = vmatprep.subr.bf16.mxu0 %v2385
      %2394 = vmatpush1.bf16.msra.mxu0 %v2382
      %2395 = vmatprep.subr.bf16.mxu0 0
      %2396 = vmatpush1.bf16.msra.mxu0 0
      %2397 = vmatprep.subr.bf16.mxu0 0
      %2398 = vmatpush1.bf16.msra.mxu0 0
      %2399 = vmatprep.subr.bf16.mxu0 0
      %2400 = vmatpush1.bf16.msra.mxu0 0
      %2401 = vmatprep.subr.bf16.mxu0 0
      %2402 = vmatpush1.bf16.msra.mxu0 0
      %2403 = vmatprep.subr.bf16.mxu0 0
      %2404 = vmatpush1.bf16.msra.mxu0 0
      %2405 = vmatprep.subr.bf16.mxu0 0
      %2406 = vmatpush1.bf16.msra.mxu0 0
      %2407 = vmatprep.subr.bf16.mxu0 0
      %2408 = vmatpush1.bf16.msra.mxu0 0
      %2409 = vmatprep.subr.bf16.mxu0 0
      %2410 = vmatpush1.bf16.msra.mxu0 0
      %2411 = vmatprep.subr.bf16.mxu0 0
      %2412 = vmatpush1.bf16.msra.mxu0 0
      %2413 = vmatprep.subr.bf16.mxu0 0
      %2414 = vmatpush1.bf16.msra.mxu0 0
      %2415 = vmatprep.subr.bf16.mxu0 0
      %2416 = vmatpush1.bf16.msra.mxu0 0
      %2417 = vmatprep.subr.bf16.mxu0 0
      %2418 = vmatpush1.bf16.msra.mxu0 0
      %2419 = vmatprep.subr.bf16.mxu0 0
      %2420 = vmatpush1.bf16.msra.mxu0 0
      %2421 = vmatprep.subr.bf16.mxu0 0
      %2422 = vmatpush1.bf16.msra.mxu0 0
      %2423 = vmatprep.subr.bf16.mxu0 0
      %2424 = vmatpush1.bf16.msra.mxu0 0
      %2425 = vmatprep.mubr.bf16.mxu0 0
      %2426 = vmatmul.mubr.bf16.gmra.mrb[0].mxu0 %v2379
      %v2427 = vpop.f32.mrb[0].mxu0
      %v2428 = vadd.f32 0.0, %v2427
      %v2429 = vpop.f32.mrb[0].mxu0
      %v2430 = vadd.f32 0.0, %v2429
      %v2431 = vpop.f32.mrb[0].mxu0
      %v2432 = vpop.f32.mrb[0].mxu0
      %2433 = vdwg.mxu0
      %2434 = vmatprep.subr.bf16.mxu0 %v2391
      %2435 = vmatpush1.bf16.msra.mxu0 %v2388
      %2436 = vmatprep.subr.bf16.mxu0 0
      %2437 = vmatpush1.bf16.msra.mxu0 0
      %2438 = vmatprep.subr.bf16.mxu0 0
      %2439 = vmatpush1.bf16.msra.mxu0 0
      %2440 = vmatprep.subr.bf16.mxu0 0
      %2441 = vmatpush1.bf16.msra.mxu0 0
      %2442 = vmatprep.subr.bf16.mxu0 0
      %2443 = vmatpush1.bf16.msra.mxu0 0
      %2444 = vmatprep.subr.bf16.mxu0 0
      %2445 = vmatpush1.bf16.msra.mxu0 0
      %2446 = vmatprep.subr.bf16.mxu0 0
      %2447 = vmatpush1.bf16.msra.mxu0 0
      %2448 = vmatprep.subr.bf16.mxu0 0
      %2449 = vmatpush1.bf16.msra.mxu0 0
      %2450 = vmatprep.subr.bf16.mxu0 0
      %2451 = vmatpush1.bf16.msra.mxu0 0
      %2452 = vmatprep.subr.bf16.mxu0 0
      %2453 = vmatpush1.bf16.msra.mxu0 0
      %2454 = vmatprep.subr.bf16.mxu0 0
      %2455 = vmatpush1.bf16.msra.mxu0 0
      %2456 = vmatprep.subr.bf16.mxu0 0
      %2457 = vmatpush1.bf16.msra.mxu0 0
      %2458 = vmatprep.subr.bf16.mxu0 0
      %2459 = vmatpush1.bf16.msra.mxu0 0
      %2460 = vmatprep.subr.bf16.mxu0 0
      %2461 = vmatpush1.bf16.msra.mxu0 0
      %2462 = vmatprep.subr.bf16.mxu0 0
      %2463 = vmatpush1.bf16.msra.mxu0 0
      %2464 = vmatprep.subr.bf16.mxu0 0
      %2465 = vmatpush1.bf16.msra.mxu0 0
      %2466 = vmatprep.mubr.bf16.mxu0 0
      %2467 = vmatmul.mubr.bf16.gmra.mrb[0].mxu0 %v2379
      %v2468 = vpop.f32.mrb[0].mxu0
      %v2469 = vadd.f32 0.0, %v2468
      %v2470 = vpop.f32.mrb[0].mxu0
      %v2471 = vadd.f32 0.0, %v2470
      %v2472 = vpop.f32.mrb[0].mxu0
      %v2473 = vpop.f32.mrb[0].mxu0
      %2474 = vdwg.mxu0
      %v2475 = vadd.f32 %v2328, %v2428
      %v2476 = vadd.f32 %v2329, %v2430
      %v2477 = vadd.f32 %v2330, %v2469
      %v2478 = vadd.f32 %v2331, %v2471
      %2479 = vrot.lane.b32.xlu0 %v1489, 112
      %v2480 = vpop.permute.xlu0 %2479
      %2481 = vrot.lane.b32.xlu0 %v1493, 112
      %v2482 = vpop.permute.xlu0 %2481
      %2483 = vrot.lane.b32.xlu0 %v1490, 112
      %v2484 = vpop.permute.xlu0 %2483
      %2485 = vrot.lane.b32.xlu0 %v1494, 112
      %v2486 = vpop.permute.xlu0 %2485
      %vm2487 = vcmp.lt.s32.totalorder %v1506, 112
      %v2488 = vsel %vm2487, %v2484, %v2486
      %v2489 = vsel %vm2487, %v2482, %v2484
      %v2490 = vsel %vm2487, %v2480, %v2482
      %v2491 = vsel %vm2487, %v2486, %v2480
      %s2492 = scalar_lea.vmem %s2, 7
      %v2493 = vld [vmem:[%s2492] ss:$8 sm:$0xf]
      %v2495 = vlaneseq
      %v2496 = vshrl.u32 %v2495, 7
      %v2497 = vsub.s32 0, %v2496
      %v2498 = vrot.slane %v2493, %v2497
      %v2499 = vlaneseq
      %v2500 = vshrl.u32 %v2499, 7
      %v2501 = vsub.s32 1, %v2500
      %v2502 = vrot.slane %v2493, %v2501
      %v2503 = vlaneseq
      %v2504 = vshrl.u32 %v2503, 7
      %v2505 = vsub.s32 2, %v2504
      %v2506 = vrot.slane %v2493, %v2505
      %v2507 = vlaneseq
      %v2508 = vshrl.u32 %v2507, 7
      %v2509 = vsub.s32 3, %v2508
      %v2510 = vrot.slane %v2493, %v2509
      %v2515 = vmul.f32 %v2490, %v2498
      %v2516 = vmul.f32 %v2489, %v2502
      %v2517 = vmul.f32 %v2488, %v2506
      %v2518 = vmul.f32 %v2491, %v2510
      %s2519 = scalar_lea.vmem %s6, 28
      %v2520 = vld [vmem:[%s2519] sm:$0xf]
      %v2521 = vpack.c.bf16 %v2515, %v2515
      %v2522 = vpack.c.bf16 %v2516, %v2516
      %v2523 = vpack.c.bf16 %v2517, %v2517
      %v2524 = vpack.c.bf16 %v2518, %v2518
      %v2526 = vsel %vm1589, %v2520, 0
      %v2529 = vsel %vm946, %v2521, 0
      %v2532 = vsel %vm946, %v2522, 0
      %v2535 = vsel %vm946, %v2523, 0
      %v2538 = vsel %vm946, %v2524, 0
      %2540 = vmatprep.subr.bf16.mxu0 %v2532
      %2541 = vmatpush1.bf16.msra.mxu0 %v2529
      %2542 = vmatprep.subr.bf16.mxu0 0
      %2543 = vmatpush1.bf16.msra.mxu0 0
      %2544 = vmatprep.subr.bf16.mxu0 0
      %2545 = vmatpush1.bf16.msra.mxu0 0
      %2546 = vmatprep.subr.bf16.mxu0 0
      %2547 = vmatpush1.bf16.msra.mxu0 0
      %2548 = vmatprep.subr.bf16.mxu0 0
      %2549 = vmatpush1.bf16.msra.mxu0 0
      %2550 = vmatprep.subr.bf16.mxu0 0
      %2551 = vmatpush1.bf16.msra.mxu0 0
      %2552 = vmatprep.subr.bf16.mxu0 0
      %2553 = vmatpush1.bf16.msra.mxu0 0
      %2554 = vmatprep.subr.bf16.mxu0 0
      %2555 = vmatpush1.bf16.msra.mxu0 0
      %2556 = vmatprep.subr.bf16.mxu0 0
      %2557 = vmatpush1.bf16.msra.mxu0 0
      %2558 = vmatprep.subr.bf16.mxu0 0
      %2559 = vmatpush1.bf16.msra.mxu0 0
      %2560 = vmatprep.subr.bf16.mxu0 0
      %2561 = vmatpush1.bf16.msra.mxu0 0
      %2562 = vmatprep.subr.bf16.mxu0 0
      %2563 = vmatpush1.bf16.msra.mxu0 0
      %2564 = vmatprep.subr.bf16.mxu0 0
      %2565 = vmatpush1.bf16.msra.mxu0 0
      %2566 = vmatprep.subr.bf16.mxu0 0
      %2567 = vmatpush1.bf16.msra.mxu0 0
      %2568 = vmatprep.subr.bf16.mxu0 0
      %2569 = vmatpush1.bf16.msra.mxu0 0
      %2570 = vmatprep.subr.bf16.mxu0 0
      %2571 = vmatpush1.bf16.msra.mxu0 0
      %2572 = vmatprep.mubr.bf16.mxu0 0
      %2573 = vmatmul.mubr.bf16.gmra.mrb[0].mxu0 %v2526
      %v2574 = vpop.f32.mrb[0].mxu0
      %v2575 = vadd.f32 0.0, %v2574
      %v2576 = vpop.f32.mrb[0].mxu0
      %v2577 = vadd.f32 0.0, %v2576
      %v2578 = vpop.f32.mrb[0].mxu0
      %v2579 = vpop.f32.mrb[0].mxu0
      %2580 = vdwg.mxu0
      %2581 = vmatprep.subr.bf16.mxu0 %v2538
      %2582 = vmatpush1.bf16.msra.mxu0 %v2535
      %2583 = vmatprep.subr.bf16.mxu0 0
      %2584 = vmatpush1.bf16.msra.mxu0 0
      %2585 = vmatprep.subr.bf16.mxu0 0
      %2586 = vmatpush1.bf16.msra.mxu0 0
      %2587 = vmatprep.subr.bf16.mxu0 0
      %2588 = vmatpush1.bf16.msra.mxu0 0
      %2589 = vmatprep.subr.bf16.mxu0 0
      %2590 = vmatpush1.bf16.msra.mxu0 0
      %2591 = vmatprep.subr.bf16.mxu0 0
      %2592 = vmatpush1.bf16.msra.mxu0 0
      %2593 = vmatprep.subr.bf16.mxu0 0
      %2594 = vmatpush1.bf16.msra.mxu0 0
      %2595 = vmatprep.subr.bf16.mxu0 0
      %2596 = vmatpush1.bf16.msra.mxu0 0
      %2597 = vmatprep.subr.bf16.mxu0 0
      %2598 = vmatpush1.bf16.msra.mxu0 0
      %2599 = vmatprep.subr.bf16.mxu0 0
      %2600 = vmatpush1.bf16.msra.mxu0 0
      %2601 = vmatprep.subr.bf16.mxu0 0
      %2602 = vmatpush1.bf16.msra.mxu0 0
      %2603 = vmatprep.subr.bf16.mxu0 0
      %2604 = vmatpush1.bf16.msra.mxu0 0
      %2605 = vmatprep.subr.bf16.mxu0 0
      %2606 = vmatpush1.bf16.msra.mxu0 0
      %2607 = vmatprep.subr.bf16.mxu0 0
      %2608 = vmatpush1.bf16.msra.mxu0 0
      %2609 = vmatprep.subr.bf16.mxu0 0
      %2610 = vmatpush1.bf16.msra.mxu0 0
      %2611 = vmatprep.subr.bf16.mxu0 0
      %2612 = vmatpush1.bf16.msra.mxu0 0
      %2613 = vmatprep.mubr.bf16.mxu0 0
      %2614 = vmatmul.mubr.bf16.gmra.mrb[0].mxu0 %v2526
      %v2615 = vpop.f32.mrb[0].mxu0
      %v2616 = vadd.f32 0.0, %v2615
      %v2617 = vpop.f32.mrb[0].mxu0
      %v2618 = vadd.f32 0.0, %v2617
      %v2619 = vpop.f32.mrb[0].mxu0
      %v2620 = vpop.f32.mrb[0].mxu0
      %2621 = vdwg.mxu0
      %v2622 = vadd.f32 %v2475, %v2575
      %v2623 = vadd.f32 %v2476, %v2577
      %v2624 = vadd.f32 %v2477, %v2616
      %v2625 = vadd.f32 %v2478, %v2618
      %2626 = vrot.lane.b32.xlu0 %v1489, 111
      %v2627 = vpop.permute.xlu0 %2626
      %2628 = vrot.lane.b32.xlu0 %v1493, 111
      %v2629 = vpop.permute.xlu0 %2628
      %2630 = vrot.lane.b32.xlu0 %v1490, 111
      %v2631 = vpop.permute.xlu0 %2630
      %2632 = vrot.lane.b32.xlu0 %v1494, 111
      %v2633 = vpop.permute.xlu0 %2632
      %vm2634 = vcmp.lt.s32.totalorder %v1506, 111
      %v2635 = vsel %vm2634, %v2631, %v2633
      %v2636 = vsel %vm2634, %v2629, %v2631
      %v2637 = vsel %vm2634, %v2627, %v2629
      %v2638 = vsel %vm2634, %v2633, %v2627
      %s2639 = scalar_lea.vmem %s2, 32
      %v2640 = vld [vmem:[%s2639] ss:$8 sm:$0xf]
      %v2642 = vlaneseq
      %v2643 = vshrl.u32 %v2642, 7
      %v2644 = vsub.s32 0, %v2643
      %v2645 = vrot.slane %v2640, %v2644
      %v2646 = vlaneseq
      %v2647 = vshrl.u32 %v2646, 7
      %v2648 = vsub.s32 1, %v2647
      %v2649 = vrot.slane %v2640, %v2648
      %v2650 = vlaneseq
      %v2651 = vshrl.u32 %v2650, 7
      %v2652 = vsub.s32 2, %v2651
      %v2653 = vrot.slane %v2640, %v2652
      %v2654 = vlaneseq
      %v2655 = vshrl.u32 %v2654, 7
      %v2656 = vsub.s32 3, %v2655
      %v2657 = vrot.slane %v2640, %v2656
      %v2662 = vmul.f32 %v2637, %v2645
      %v2663 = vmul.f32 %v2636, %v2649
      %v2664 = vmul.f32 %v2635, %v2653
      %v2665 = vmul.f32 %v2638, %v2657
      %s2666 = scalar_lea.vmem %s6, 32
      %v2667 = vld [vmem:[%s2666] sm:$0xf]
      %v2668 = vpack.c.bf16 %v2662, %v2662
      %v2669 = vpack.c.bf16 %v2663, %v2663
      %v2670 = vpack.c.bf16 %v2664, %v2664
      %v2671 = vpack.c.bf16 %v2665, %v2665
      %v2673 = vsel %vm1589, %v2667, 0
      %v2676 = vsel %vm946, %v2668, 0
      %v2679 = vsel %vm946, %v2669, 0
      %v2682 = vsel %vm946, %v2670, 0
      %v2685 = vsel %vm946, %v2671, 0
      %2687 = vmatprep.subr.bf16.mxu0 %v2679
      %2688 = vmatpush1.bf16.msra.mxu0 %v2676
      %2689 = vmatprep.subr.bf16.mxu0 0
      %2690 = vmatpush1.bf16.msra.mxu0 0
      %2691 = vmatprep.subr.bf16.mxu0 0
      %2692 = vmatpush1.bf16.msra.mxu0 0
      %2693 = vmatprep.subr.bf16.mxu0 0
      %2694 = vmatpush1.bf16.msra.mxu0 0
      %2695 = vmatprep.subr.bf16.mxu0 0
      %2696 = vmatpush1.bf16.msra.mxu0 0
      %2697 = vmatprep.subr.bf16.mxu0 0
      %2698 = vmatpush1.bf16.msra.mxu0 0
      %2699 = vmatprep.subr.bf16.mxu0 0
      %2700 = vmatpush1.bf16.msra.mxu0 0
      %2701 = vmatprep.subr.bf16.mxu0 0
      %2702 = vmatpush1.bf16.msra.mxu0 0
      %2703 = vmatprep.subr.bf16.mxu0 0
      %2704 = vmatpush1.bf16.msra.mxu0 0
      %2705 = vmatprep.subr.bf16.mxu0 0
      %2706 = vmatpush1.bf16.msra.mxu0 0
      %2707 = vmatprep.subr.bf16.mxu0 0
      %2708 = vmatpush1.bf16.msra.mxu0 0
      %2709 = vmatprep.subr.bf16.mxu0 0
      %2710 = vmatpush1.bf16.msra.mxu0 0
      %2711 = vmatprep.subr.bf16.mxu0 0
      %2712 = vmatpush1.bf16.msra.mxu0 0
      %2713 = vmatprep.subr.bf16.mxu0 0
      %2714 = vmatpush1.bf16.msra.mxu0 0
      %2715 = vmatprep.subr.bf16.mxu0 0
      %2716 = vmatpush1.bf16.msra.mxu0 0
      %2717 = vmatprep.subr.bf16.mxu0 0
      %2718 = vmatpush1.bf16.msra.mxu0 0
      %2719 = vmatprep.mubr.bf16.mxu0 0
      %2720 = vmatmul.mubr.bf16.gmra.mrb[0].mxu0 %v2673
      %v2721 = vpop.f32.mrb[0].mxu0
      %v2722 = vadd.f32 0.0, %v2721
      %v2723 = vpop.f32.mrb[0].mxu0
      %v2724 = vadd.f32 0.0, %v2723
      %v2725 = vpop.f32.mrb[0].mxu0
      %v2726 = vpop.f32.mrb[0].mxu0
      %2727 = vdwg.mxu0
      %2728 = vmatprep.subr.bf16.mxu0 %v2685
      %2729 = vmatpush1.bf16.msra.mxu0 %v2682
      %2730 = vmatprep.subr.bf16.mxu0 0
      %2731 = vmatpush1.bf16.msra.mxu0 0
      %2732 = vmatprep.subr.bf16.mxu0 0
      %2733 = vmatpush1.bf16.msra.mxu0 0
      %2734 = vmatprep.subr.bf16.mxu0 0
      %2735 = vmatpush1.bf16.msra.mxu0 0
      %2736 = vmatprep.subr.bf16.mxu0 0
      %2737 = vmatpush1.bf16.msra.mxu0 0
      %2738 = vmatprep.subr.bf16.mxu0 0
      %2739 = vmatpush1.bf16.msra.mxu0 0
      %2740 = vmatprep.subr.bf16.mxu0 0
      %2741 = vmatpush1.bf16.msra.mxu0 0
      %2742 = vmatprep.subr.bf16.mxu0 0
      %2743 = vmatpush1.bf16.msra.mxu0 0
      %2744 = vmatprep.subr.bf16.mxu0 0
      %2745 = vmatpush1.bf16.msra.mxu0 0
      %2746 = vmatprep.subr.bf16.mxu0 0
      %2747 = vmatpush1.bf16.msra.mxu0 0
      %2748 = vmatprep.subr.bf16.mxu0 0
      %2749 = vmatpush1.bf16.msra.mxu0 0
      %2750 = vmatprep.subr.bf16.mxu0 0
      %2751 = vmatpush1.bf16.msra.mxu0 0
      %2752 = vmatprep.subr.bf16.mxu0 0
      %2753 = vmatpush1.bf16.msra.mxu0 0
      %2754 = vmatprep.subr.bf16.mxu0 0
      %2755 = vmatpush1.bf16.msra.mxu0 0
      %2756 = vmatprep.subr.bf16.mxu0 0
      %2757 = vmatpush1.bf16.msra.mxu0 0
      %2758 = vmatprep.subr.bf16.mxu0 0
      %2759 = vmatpush1.bf16.msra.mxu0 0
      %2760 = vmatprep.mubr.bf16.mxu0 0
      %2761 = vmatmul.mubr.bf16.gmra.mrb[0].mxu0 %v2673
      %v2762 = vpop.f32.mrb[0].mxu0
      %v2763 = vadd.f32 0.0, %v2762
      %v2764 = vpop.f32.mrb[0].mxu0
      %v2765 = vadd.f32 0.0, %v2764
      %v2766 = vpop.f32.mrb[0].mxu0
      %v2767 = vpop.f32.mrb[0].mxu0
      %2768 = vdwg.mxu0
      %v2769 = vadd.f32 %v2622, %v2722
      %v2770 = vadd.f32 %v2623, %v2724
      %v2771 = vadd.f32 %v2624, %v2763
      %v2772 = vadd.f32 %v2625, %v2765
      %v2773 = vld [vmem:[%s728] sm:$0xff]
      %v2774 = vld [vmem:[%s728 + $0x8] sm:$0xff]
      %v2775 = vld [vmem:[%s728 + $0x10] sm:$0xff]
      %v2776 = vld [vmem:[%s728 + $0x18] sm:$0xff]
      %v2777 = vadd.f32 %v2769, %v2773
      %v2778 = vadd.f32 %v2770, %v2774
      %v2779 = vadd.f32 %v2771, %v2775
      %v2780 = vadd.f32 %v2772, %v2776
      %v2781 = vld [vmem:[%s7] sm:$0xff]
      %v2782 = vld [vmem:[%s7 + $0x8] sm:$0xff]
      %v2783 = vld [vmem:[%s7 + $0x10] sm:$0xff]
      %v2784 = vld [vmem:[%s7 + $0x18] sm:$0xff]
      %v2785 = vld [vmem:[%s8] sm:$0xff]
      %v2786 = vld [vmem:[%s8 + $0x8] sm:$0xff]
      %v2787 = vld [vmem:[%s8 + $0x10] sm:$0xff]
      %v2788 = vld [vmem:[%s8 + $0x18] sm:$0xff]
      %v2789 = vrot.slane %v2777, 4
      %v2790 = vadd.f32 %v2777, %v2789
      %v2791 = vrot.slane %v2790, 2
      %v2792 = vadd.f32 %v2790, %v2791
      %v2793 = vrot.slane %v2792, 1
      %v2794 = vadd.f32 %v2792, %v2793
      %v2795 = vrot.slane %v2778, 4
      %v2796 = vadd.f32 %v2778, %v2795
      %v2797 = vrot.slane %v2796, 2
      %v2798 = vadd.f32 %v2796, %v2797
      %v2799 = vrot.slane %v2798, 1
      %v2800 = vadd.f32 %v2798, %v2799
      %v2801 = vrot.slane %v2779, 4
      %v2802 = vadd.f32 %v2779, %v2801
      %v2803 = vrot.slane %v2802, 2
      %v2804 = vadd.f32 %v2802, %v2803
      %v2805 = vrot.slane %v2804, 1
      %v2806 = vadd.f32 %v2804, %v2805
      %v2807 = vrot.slane %v2780, 4
      %v2808 = vadd.f32 %v2780, %v2807
      %v2809 = vrot.slane %v2808, 2
      %v2810 = vadd.f32 %v2808, %v2809
      %v2811 = vrot.slane %v2810, 1
      %v2812 = vadd.f32 %v2810, %v2811
      %2813 = vmatprep.subr.mxu0 %v795
      %2814 = vmatpush1.xpose.msra.mxu0 %v787
      %2815 = vmatprep.subr.mxu0 0.0
      %2816 = vmatpush1.xpose.msra.mxu0 0.0
      %2817 = vmatprep.subr.mxu0 0.0
      %2818 = vmatpush1.xpose.msra.mxu0 0.0
      %2819 = vmatprep.subr.mxu0 0.0
      %2820 = vmatpush1.xpose.msra.mxu0 0.0
      %2821 = vmatprep.subr.mxu0 0.0
      %2822 = vmatpush1.xpose.msra.mxu0 0.0
      %2823 = vmatprep.subr.mxu0 0.0
      %2824 = vmatpush1.xpose.msra.mxu0 0.0
      %2825 = vmatprep.subr.mxu0 0.0
      %2826 = vmatpush1.xpose.msra.mxu0 0.0
      %2827 = vmatprep.subr.mxu0 0.0
      %2828 = vmatpush1.xpose.msra.mxu0 0.0
      %2829 = vmatprep.subr.mxu0 0.0
      %2830 = vmatpush1.xpose.msra.mxu0 0.0
      %2831 = vmatprep.subr.mxu0 0.0
      %2832 = vmatpush1.xpose.msra.mxu0 0.0
      %2833 = vmatprep.subr.mxu0 0.0
      %2834 = vmatpush1.xpose.msra.mxu0 0.0
      %2835 = vmatprep.subr.mxu0 0.0
      %2836 = vmatpush1.xpose.msra.mxu0 0.0
      %2837 = vmatprep.subr.mxu0 0.0
      %2838 = vmatpush1.xpose.msra.mxu0 0.0
      %2839 = vmatprep.subr.mxu0 0.0
      %2840 = vmatpush1.xpose.msra.mxu0 0.0
      %2841 = vmatprep.subr.mxu0 0.0
      %2842 = vmatpush1.xpose.msra.mxu0 0.0
      %2843 = vmatprep.subr.mxu0 0.0
      %2844 = vmatpush1.xpose.msra.mxu0 0.0
      %2845 = vmatprep.subr.mxu0 0.0
      %2846 = vmatpush1.xpose.msra.mxu0 0.0
      %2847 = vmatprep.subr.mxu0 0.0
      %2848 = vmatpush1.xpose.msra.mxu0 0.0
      %2849 = vmatprep.subr.mxu0 0.0
      %2850 = vmatpush1.xpose.msra.mxu0 0.0
      %2851 = vmatprep.subr.mxu0 0.0
      %2852 = vmatpush1.xpose.msra.mxu0 0.0
      %2853 = vmatprep.subr.mxu0 0.0
      %2854 = vmatpush1.xpose.msra.mxu0 0.0
      %2855 = vmatprep.subr.mxu0 0.0
      %2856 = vmatpush1.xpose.msra.mxu0 0.0
      %2857 = vmatprep.subr.mxu0 0.0
      %2858 = vmatpush1.xpose.msra.mxu0 0.0
      %2859 = vmatprep.subr.mxu0 0.0
      %2860 = vmatpush1.xpose.msra.mxu0 0.0
      %2861 = vmatprep.subr.mxu0 0.0
      %2862 = vmatpush1.xpose.msra.mxu0 0.0
      %2863 = vmatprep.subr.mxu0 0.0
      %2864 = vmatpush1.xpose.msra.mxu0 0.0
      %2865 = vmatprep.subr.mxu0 0.0
      %2866 = vmatpush1.xpose.msra.mxu0 0.0
      %2867 = vmatprep.subr.mxu0 0.0
      %2868 = vmatpush1.xpose.msra.mxu0 0.0
      %2869 = vmatprep.subr.mxu0 0.0
      %2870 = vmatpush1.xpose.msra.mxu0 0.0
      %2871 = vmatprep.subr.mxu0 0.0
      %2872 = vmatpush1.xpose.msra.mxu0 0.0
      %2873 = vmatprep.subr.mxu0 0.0
      %2874 = vmatpush1.xpose.msra.mxu0 0.0
      %2875 = vmatprep.subr.mxu0 0.0
      %2876 = vmatpush1.xpose.msra.mxu0 0.0
      %2877 = vmatprep.mubr.f32.mxu0 %v2800
      %2878 = vmatmul.mubr.f32.gmra.mrb[0].mxu0 %v2794
      %v2879 = vpop.f32.mrb[0].mxu0
      %v2880 = vadd.f32 0.0, %v2879
      %v2881 = vpop.f32.mrb[0].mxu0
      %2882 = vdwg.mxu0
      %2883 = vmatprep.subr.mxu0 %v796
      %2884 = vmatpush1.xpose.msra.mxu0 %v794
      %2885 = vmatprep.subr.mxu0 0.0
      %2886 = vmatpush1.xpose.msra.mxu0 0.0
      %2887 = vmatprep.subr.mxu0 0.0
      %2888 = vmatpush1.xpose.msra.mxu0 0.0
      %2889 = vmatprep.subr.mxu0 0.0
      %2890 = vmatpush1.xpose.msra.mxu0 0.0
      %2891 = vmatprep.subr.mxu0 0.0
      %2892 = vmatpush1.xpose.msra.mxu0 0.0
      %2893 = vmatprep.subr.mxu0 0.0
      %2894 = vmatpush1.xpose.msra.mxu0 0.0
      %2895 = vmatprep.subr.mxu0 0.0
      %2896 = vmatpush1.xpose.msra.mxu0 0.0
      %2897 = vmatprep.subr.mxu0 0.0
      %2898 = vmatpush1.xpose.msra.mxu0 0.0
      %2899 = vmatprep.subr.mxu0 0.0
      %2900 = vmatpush1.xpose.msra.mxu0 0.0
      %2901 = vmatprep.subr.mxu0 0.0
      %2902 = vmatpush1.xpose.msra.mxu0 0.0
      %2903 = vmatprep.subr.mxu0 0.0
      %2904 = vmatpush1.xpose.msra.mxu0 0.0
      %2905 = vmatprep.subr.mxu0 0.0
      %2906 = vmatpush1.xpose.msra.mxu0 0.0
      %2907 = vmatprep.subr.mxu0 0.0
      %2908 = vmatpush1.xpose.msra.mxu0 0.0
      %2909 = vmatprep.subr.mxu0 0.0
      %2910 = vmatpush1.xpose.msra.mxu0 0.0
      %2911 = vmatprep.subr.mxu0 0.0
      %2912 = vmatpush1.xpose.msra.mxu0 0.0
      %2913 = vmatprep.subr.mxu0 0.0
      %2914 = vmatpush1.xpose.msra.mxu0 0.0
      %2915 = vmatprep.subr.mxu0 0.0
      %2916 = vmatpush1.xpose.msra.mxu0 0.0
      %2917 = vmatprep.subr.mxu0 0.0
      %2918 = vmatpush1.xpose.msra.mxu0 0.0
      %2919 = vmatprep.subr.mxu0 0.0
      %2920 = vmatpush1.xpose.msra.mxu0 0.0
      %2921 = vmatprep.subr.mxu0 0.0
      %2922 = vmatpush1.xpose.msra.mxu0 0.0
      %2923 = vmatprep.subr.mxu0 0.0
      %2924 = vmatpush1.xpose.msra.mxu0 0.0
      %2925 = vmatprep.subr.mxu0 0.0
      %2926 = vmatpush1.xpose.msra.mxu0 0.0
      %2927 = vmatprep.subr.mxu0 0.0
      %2928 = vmatpush1.xpose.msra.mxu0 0.0
      %2929 = vmatprep.subr.mxu0 0.0
      %2930 = vmatpush1.xpose.msra.mxu0 0.0
      %2931 = vmatprep.subr.mxu0 0.0
      %2932 = vmatpush1.xpose.msra.mxu0 0.0
      %2933 = vmatprep.subr.mxu0 0.0
      %2934 = vmatpush1.xpose.msra.mxu0 0.0
      %2935 = vmatprep.subr.mxu0 0.0
      %2936 = vmatpush1.xpose.msra.mxu0 0.0
      %2937 = vmatprep.subr.mxu0 0.0
      %2938 = vmatpush1.xpose.msra.mxu0 0.0
      %2939 = vmatprep.subr.mxu0 0.0
      %2940 = vmatpush1.xpose.msra.mxu0 0.0
      %2941 = vmatprep.subr.mxu0 0.0
      %2942 = vmatpush1.xpose.msra.mxu0 0.0
      %2943 = vmatprep.subr.mxu0 0.0
      %2944 = vmatpush1.xpose.msra.mxu0 0.0
      %2945 = vmatprep.subr.mxu0 0.0
      %2946 = vmatpush1.xpose.msra.mxu0 0.0
      %2947 = vmatprep.mubr.f32.mxu0 %v2812
      %2948 = vmatmul.mubr.f32.gmra.mrb[0].mxu0 %v2806
      %v2949 = vpop.f32.mrb[0].mxu0
      %v2950 = vadd.f32 %v2880, %v2949
      %v2951 = vpop.f32.mrb[0].mxu0
      %2952 = vdwg.mxu0
      %v2953 = vmul.f32 %v2950, 0.00048828125
      %v2955 = vsel %vm942, %v2953, 0
      %2957 = vmatprep.subr.mxu0 %v949
      %2958 = vmatpush1.msra.mxu0 %v947
      %2959 = vmatprep.subr.mxu0 0.0
      %2960 = vmatpush1.msra.mxu0 0.0
      %2961 = vmatprep.subr.mxu0 0.0
      %2962 = vmatpush1.msra.mxu0 0.0
      %2963 = vmatprep.subr.mxu0 0.0
      %2964 = vmatpush1.msra.mxu0 0.0
      %2965 = vmatprep.subr.mxu0 0.0
      %2966 = vmatpush1.msra.mxu0 0.0
      %2967 = vmatprep.subr.mxu0 0.0
      %2968 = vmatpush1.msra.mxu0 0.0
      %2969 = vmatprep.subr.mxu0 0.0
      %2970 = vmatpush1.msra.mxu0 0.0
      %2971 = vmatprep.subr.mxu0 0.0
      %2972 = vmatpush1.msra.mxu0 0.0
      %2973 = vmatprep.subr.mxu0 0.0
      %2974 = vmatpush1.msra.mxu0 0.0
      %2975 = vmatprep.subr.mxu0 0.0
      %2976 = vmatpush1.msra.mxu0 0.0
      %2977 = vmatprep.subr.mxu0 0.0
      %2978 = vmatpush1.msra.mxu0 0.0
      %2979 = vmatprep.subr.mxu0 0.0
      %2980 = vmatpush1.msra.mxu0 0.0
      %2981 = vmatprep.subr.mxu0 0.0
      %2982 = vmatpush1.msra.mxu0 0.0
      %2983 = vmatprep.subr.mxu0 0.0
      %2984 = vmatpush1.msra.mxu0 0.0
      %2985 = vmatprep.subr.mxu0 0.0
      %2986 = vmatpush1.msra.mxu0 0.0
      %2987 = vmatprep.subr.mxu0 0.0
      %2988 = vmatpush1.msra.mxu0 0.0
      %2989 = vmatprep.subr.mxu0 0.0
      %2990 = vmatpush1.msra.mxu0 0.0
      %2991 = vmatprep.subr.mxu0 0.0
      %2992 = vmatpush1.msra.mxu0 0.0
      %2993 = vmatprep.subr.mxu0 0.0
      %2994 = vmatpush1.msra.mxu0 0.0
      %2995 = vmatprep.subr.mxu0 0.0
      %2996 = vmatpush1.msra.mxu0 0.0
      %2997 = vmatprep.subr.mxu0 0.0
      %2998 = vmatpush1.msra.mxu0 0.0
      %2999 = vmatprep.subr.mxu0 0.0
      %3000 = vmatpush1.msra.mxu0 0.0
      %3001 = vmatprep.subr.mxu0 0.0
      %3002 = vmatpush1.msra.mxu0 0.0
      %3003 = vmatprep.subr.mxu0 0.0
      %3004 = vmatpush1.msra.mxu0 0.0
      %3005 = vmatprep.subr.mxu0 0.0
      %3006 = vmatpush1.msra.mxu0 0.0
      %3007 = vmatprep.subr.mxu0 0.0
      %3008 = vmatpush1.msra.mxu0 0.0
      %3009 = vmatprep.subr.mxu0 0.0
      %3010 = vmatpush1.msra.mxu0 0.0
      %3011 = vmatprep.subr.mxu0 0.0
      %3012 = vmatpush1.msra.mxu0 0.0
      %3013 = vmatprep.subr.mxu0 0.0
      %3014 = vmatpush1.msra.mxu0 0.0
      %3015 = vmatprep.subr.mxu0 0.0
      %3016 = vmatpush1.msra.mxu0 0.0
      %3017 = vmatprep.subr.mxu0 0.0
      %3018 = vmatpush1.msra.mxu0 0.0
      %3019 = vmatprep.subr.mxu0 0.0
      %3020 = vmatpush1.msra.mxu0 0.0
      %3021 = vmatprep.mubr.f32.mxu0 0.0
      %3022 = vmatmul.mubr.f32.gmra.mrb[0].mxu0 %v2955
      %v3023 = vpop.f32.mrb[0].mxu0
      %v3024 = vadd.f32 0.0, %v3023
      %v3025 = vpop.f32.mrb[0].mxu0
      %v3026 = vadd.f32 0.0, %v3025
      %3027 = vdwg.mxu0
      %3028 = vmatprep.subr.mxu0 %v953
      %3029 = vmatpush1.msra.mxu0 %v951
      %3030 = vmatprep.subr.mxu0 0.0
      %3031 = vmatpush1.msra.mxu0 0.0
      %3032 = vmatprep.subr.mxu0 0.0
      %3033 = vmatpush1.msra.mxu0 0.0
      %3034 = vmatprep.subr.mxu0 0.0
      %3035 = vmatpush1.msra.mxu0 0.0
      %3036 = vmatprep.subr.mxu0 0.0
      %3037 = vmatpush1.msra.mxu0 0.0
      %3038 = vmatprep.subr.mxu0 0.0
      %3039 = vmatpush1.msra.mxu0 0.0
      %3040 = vmatprep.subr.mxu0 0.0
      %3041 = vmatpush1.msra.mxu0 0.0
      %3042 = vmatprep.subr.mxu0 0.0
      %3043 = vmatpush1.msra.mxu0 0.0
      %3044 = vmatprep.subr.mxu0 0.0
      %3045 = vmatpush1.msra.mxu0 0.0
      %3046 = vmatprep.subr.mxu0 0.0
      %3047 = vmatpush1.msra.mxu0 0.0
      %3048 = vmatprep.subr.mxu0 0.0
      %3049 = vmatpush1.msra.mxu0 0.0
      %3050 = vmatprep.subr.mxu0 0.0
      %3051 = vmatpush1.msra.mxu0 0.0
      %3052 = vmatprep.subr.mxu0 0.0
      %3053 = vmatpush1.msra.mxu0 0.0
      %3054 = vmatprep.subr.mxu0 0.0
      %3055 = vmatpush1.msra.mxu0 0.0
      %3056 = vmatprep.subr.mxu0 0.0
      %3057 = vmatpush1.msra.mxu0 0.0
      %3058 = vmatprep.subr.mxu0 0.0
      %3059 = vmatpush1.msra.mxu0 0.0
      %3060 = vmatprep.subr.mxu0 0.0
      %3061 = vmatpush1.msra.mxu0 0.0
      %3062 = vmatprep.subr.mxu0 0.0
      %3063 = vmatpush1.msra.mxu0 0.0
      %3064 = vmatprep.subr.mxu0 0.0
      %3065 = vmatpush1.msra.mxu0 0.0
      %3066 = vmatprep.subr.mxu0 0.0
      %3067 = vmatpush1.msra.mxu0 0.0
      %3068 = vmatprep.subr.mxu0 0.0
      %3069 = vmatpush1.msra.mxu0 0.0
      %3070 = vmatprep.subr.mxu0 0.0
      %3071 = vmatpush1.msra.mxu0 0.0
      %3072 = vmatprep.subr.mxu0 0.0
      %3073 = vmatpush1.msra.mxu0 0.0
      %3074 = vmatprep.subr.mxu0 0.0
      %3075 = vmatpush1.msra.mxu0 0.0
      %3076 = vmatprep.subr.mxu0 0.0
      %3077 = vmatpush1.msra.mxu0 0.0
      %3078 = vmatprep.subr.mxu0 0.0
      %3079 = vmatpush1.msra.mxu0 0.0
      %3080 = vmatprep.subr.mxu0 0.0
      %3081 = vmatpush1.msra.mxu0 0.0
      %3082 = vmatprep.subr.mxu0 0.0
      %3083 = vmatpush1.msra.mxu0 0.0
      %3084 = vmatprep.subr.mxu0 0.0
      %3085 = vmatpush1.msra.mxu0 0.0
      %3086 = vmatprep.subr.mxu0 0.0
      %3087 = vmatpush1.msra.mxu0 0.0
      %3088 = vmatprep.subr.mxu0 0.0
      %3089 = vmatpush1.msra.mxu0 0.0
      %3090 = vmatprep.subr.mxu0 0.0
      %3091 = vmatpush1.msra.mxu0 0.0
      %3092 = vmatprep.mubr.f32.mxu0 0.0
      %3093 = vmatmul.mubr.f32.gmra.mrb[0].mxu0 %v2955
      %v3094 = vpop.f32.mrb[0].mxu0
      %v3095 = vadd.f32 0.0, %v3094
      %v3096 = vpop.f32.mrb[0].mxu0
      %v3097 = vadd.f32 0.0, %v3096
      %3098 = vdwg.mxu0
      %v3099 = vlaneseq
      %v3100 = vshrl.u32 %v3099, 7
      %v3101 = vsub.s32 0, %v3100
      %v3102 = vrot.slane %v3024, %v3101
      %v3103 = vlaneseq
      %v3104 = vshrl.u32 %v3103, 7
      %v3105 = vsub.s32 0, %v3104
      %v3106 = vrot.slane %v3026, %v3105
      %v3107 = vlaneseq
      %v3108 = vshrl.u32 %v3107, 7
      %v3109 = vsub.s32 0, %v3108
      %v3110 = vrot.slane %v3095, %v3109
      %v3111 = vlaneseq
      %v3112 = vshrl.u32 %v3111, 7
      %v3113 = vsub.s32 0, %v3112
      %v3114 = vrot.slane %v3097, %v3113
      %v3115 = vsub.f32 %v2777, %v3102
      %v3116 = vsub.f32 %v2778, %v3106
      %v3117 = vsub.f32 %v2779, %v3110
      %v3118 = vsub.f32 %v2780, %v3114
      %v3119 = vmul.f32 %v3115, %v3115
      %v3120 = vmul.f32 %v3116, %v3116
      %v3121 = vmul.f32 %v3117, %v3117
      %v3122 = vmul.f32 %v3118, %v3118
      %v3123 = vrot.slane %v3119, 4
      %v3124 = vadd.f32 %v3119, %v3123
      %v3125 = vrot.slane %v3124, 2
      %v3126 = vadd.f32 %v3124, %v3125
      %v3127 = vrot.slane %v3126, 1
      %v3128 = vadd.f32 %v3126, %v3127
      %v3129 = vrot.slane %v3120, 4
      %v3130 = vadd.f32 %v3120, %v3129
      %v3131 = vrot.slane %v3130, 2
      %v3132 = vadd.f32 %v3130, %v3131
      %v3133 = vrot.slane %v3132, 1
      %v3134 = vadd.f32 %v3132, %v3133
      %v3135 = vrot.slane %v3121, 4
      %v3136 = vadd.f32 %v3121, %v3135
      %v3137 = vrot.slane %v3136, 2
      %v3138 = vadd.f32 %v3136, %v3137
      %v3139 = vrot.slane %v3138, 1
      %v3140 = vadd.f32 %v3138, %v3139
      %v3141 = vrot.slane %v3122, 4
      %v3142 = vadd.f32 %v3122, %v3141
      %v3143 = vrot.slane %v3142, 2
      %v3144 = vadd.f32 %v3142, %v3143
      %v3145 = vrot.slane %v3144, 1
      %v3146 = vadd.f32 %v3144, %v3145
      %3147 = vmatprep.subr.mxu0 %v795
      %3148 = vmatpush1.xpose.msra.mxu0 %v787
      %3149 = vmatprep.subr.mxu0 0.0
      %3150 = vmatpush1.xpose.msra.mxu0 0.0
      %3151 = vmatprep.subr.mxu0 0.0
      %3152 = vmatpush1.xpose.msra.mxu0 0.0
      %3153 = vmatprep.subr.mxu0 0.0
      %3154 = vmatpush1.xpose.msra.mxu0 0.0
      %3155 = vmatprep.subr.mxu0 0.0
      %3156 = vmatpush1.xpose.msra.mxu0 0.0
      %3157 = vmatprep.subr.mxu0 0.0
      %3158 = vmatpush1.xpose.msra.mxu0 0.0
      %3159 = vmatprep.subr.mxu0 0.0
      %3160 = vmatpush1.xpose.msra.mxu0 0.0
      %3161 = vmatprep.subr.mxu0 0.0
      %3162 = vmatpush1.xpose.msra.mxu0 0.0
      %3163 = vmatprep.subr.mxu0 0.0
      %3164 = vmatpush1.xpose.msra.mxu0 0.0
      %3165 = vmatprep.subr.mxu0 0.0
      %3166 = vmatpush1.xpose.msra.mxu0 0.0
      %3167 = vmatprep.subr.mxu0 0.0
      %3168 = vmatpush1.xpose.msra.mxu0 0.0
      %3169 = vmatprep.subr.mxu0 0.0
      %3170 = vmatpush1.xpose.msra.mxu0 0.0
      %3171 = vmatprep.subr.mxu0 0.0
      %3172 = vmatpush1.xpose.msra.mxu0 0.0
      %3173 = vmatprep.subr.mxu0 0.0
      %3174 = vmatpush1.xpose.msra.mxu0 0.0
      %3175 = vmatprep.subr.mxu0 0.0
      %3176 = vmatpush1.xpose.msra.mxu0 0.0
      %3177 = vmatprep.subr.mxu0 0.0
      %3178 = vmatpush1.xpose.msra.mxu0 0.0
      %3179 = vmatprep.subr.mxu0 0.0
      %3180 = vmatpush1.xpose.msra.mxu0 0.0
      %3181 = vmatprep.subr.mxu0 0.0
      %3182 = vmatpush1.xpose.msra.mxu0 0.0
      %3183 = vmatprep.subr.mxu0 0.0
      %3184 = vmatpush1.xpose.msra.mxu0 0.0
      %3185 = vmatprep.subr.mxu0 0.0
      %3186 = vmatpush1.xpose.msra.mxu0 0.0
      %3187 = vmatprep.subr.mxu0 0.0
      %3188 = vmatpush1.xpose.msra.mxu0 0.0
      %3189 = vmatprep.subr.mxu0 0.0
      %3190 = vmatpush1.xpose.msra.mxu0 0.0
      %3191 = vmatprep.subr.mxu0 0.0
      %3192 = vmatpush1.xpose.msra.mxu0 0.0
      %3193 = vmatprep.subr.mxu0 0.0
      %3194 = vmatpush1.xpose.msra.mxu0 0.0
      %3195 = vmatprep.subr.mxu0 0.0
      %3196 = vmatpush1.xpose.msra.mxu0 0.0
      %3197 = vmatprep.subr.mxu0 0.0
      %3198 = vmatpush1.xpose.msra.mxu0 0.0
      %3199 = vmatprep.subr.mxu0 0.0
      %3200 = vmatpush1.xpose.msra.mxu0 0.0
      %3201 = vmatprep.subr.mxu0 0.0
      %3202 = vmatpush1.xpose.msra.mxu0 0.0
      %3203 = vmatprep.subr.mxu0 0.0
      %3204 = vmatpush1.xpose.msra.mxu0 0.0
      %3205 = vmatprep.subr.mxu0 0.0
      %3206 = vmatpush1.xpose.msra.mxu0 0.0
      %3207 = vmatprep.subr.mxu0 0.0
      %3208 = vmatpush1.xpose.msra.mxu0 0.0
      %3209 = vmatprep.subr.mxu0 0.0
      %3210 = vmatpush1.xpose.msra.mxu0 0.0
      %3211 = vmatprep.mubr.f32.mxu0 %v3134
      %3212 = vmatmul.mubr.f32.gmra.mrb[0].mxu0 %v3128
      %v3213 = vpop.f32.mrb[0].mxu0
      %v3214 = vadd.f32 0.0, %v3213
      %v3215 = vpop.f32.mrb[0].mxu0
      %3216 = vdwg.mxu0
      %3217 = vmatprep.subr.mxu0 %v796
      %3218 = vmatpush1.xpose.msra.mxu0 %v794
      %3219 = vmatprep.subr.mxu0 0.0
      %3220 = vmatpush1.xpose.msra.mxu0 0.0
      %3221 = vmatprep.subr.mxu0 0.0
      %3222 = vmatpush1.xpose.msra.mxu0 0.0
      %3223 = vmatprep.subr.mxu0 0.0
      %3224 = vmatpush1.xpose.msra.mxu0 0.0
      %3225 = vmatprep.subr.mxu0 0.0
      %3226 = vmatpush1.xpose.msra.mxu0 0.0
      %3227 = vmatprep.subr.mxu0 0.0
      %3228 = vmatpush1.xpose.msra.mxu0 0.0
      %3229 = vmatprep.subr.mxu0 0.0
      %3230 = vmatpush1.xpose.msra.mxu0 0.0
      %3231 = vmatprep.subr.mxu0 0.0
      %3232 = vmatpush1.xpose.msra.mxu0 0.0
      %3233 = vmatprep.subr.mxu0 0.0
      %3234 = vmatpush1.xpose.msra.mxu0 0.0
      %3235 = vmatprep.subr.mxu0 0.0
      %3236 = vmatpush1.xpose.msra.mxu0 0.0
      %3237 = vmatprep.subr.mxu0 0.0
      %3238 = vmatpush1.xpose.msra.mxu0 0.0
      %3239 = vmatprep.subr.mxu0 0.0
      %3240 = vmatpush1.xpose.msra.mxu0 0.0
      %3241 = vmatprep.subr.mxu0 0.0
      %3242 = vmatpush1.xpose.msra.mxu0 0.0
      %3243 = vmatprep.subr.mxu0 0.0
      %3244 = vmatpush1.xpose.msra.mxu0 0.0
      %3245 = vmatprep.subr.mxu0 0.0
      %3246 = vmatpush1.xpose.msra.mxu0 0.0
      %3247 = vmatprep.subr.mxu0 0.0
      %3248 = vmatpush1.xpose.msra.mxu0 0.0
      %3249 = vmatprep.subr.mxu0 0.0
      %3250 = vmatpush1.xpose.msra.mxu0 0.0
      %3251 = vmatprep.subr.mxu0 0.0
      %3252 = vmatpush1.xpose.msra.mxu0 0.0
      %3253 = vmatprep.subr.mxu0 0.0
      %3254 = vmatpush1.xpose.msra.mxu0 0.0
      %3255 = vmatprep.subr.mxu0 0.0
      %3256 = vmatpush1.xpose.msra.mxu0 0.0
      %3257 = vmatprep.subr.mxu0 0.0
      %3258 = vmatpush1.xpose.msra.mxu0 0.0
      %3259 = vmatprep.subr.mxu0 0.0
      %3260 = vmatpush1.xpose.msra.mxu0 0.0
      %3261 = vmatprep.subr.mxu0 0.0
      %3262 = vmatpush1.xpose.msra.mxu0 0.0
      %3263 = vmatprep.subr.mxu0 0.0
      %3264 = vmatpush1.xpose.msra.mxu0 0.0
      %3265 = vmatprep.subr.mxu0 0.0
      %3266 = vmatpush1.xpose.msra.mxu0 0.0
      %3267 = vmatprep.subr.mxu0 0.0
      %3268 = vmatpush1.xpose.msra.mxu0 0.0
      %3269 = vmatprep.subr.mxu0 0.0
      %3270 = vmatpush1.xpose.msra.mxu0 0.0
      %3271 = vmatprep.subr.mxu0 0.0
      %3272 = vmatpush1.xpose.msra.mxu0 0.0
      %3273 = vmatprep.subr.mxu0 0.0
      %3274 = vmatpush1.xpose.msra.mxu0 0.0
      %3275 = vmatprep.subr.mxu0 0.0
      %3276 = vmatpush1.xpose.msra.mxu0 0.0
      %3277 = vmatprep.subr.mxu0 0.0
      %3278 = vmatpush1.xpose.msra.mxu0 0.0
      %3279 = vmatprep.subr.mxu0 0.0
      %3280 = vmatpush1.xpose.msra.mxu0 0.0
      %3281 = vmatprep.mubr.f32.mxu0 %v3146
      %3282 = vmatmul.mubr.f32.gmra.mrb[0].mxu0 %v3140
      %v3283 = vpop.f32.mrb[0].mxu0
      %v3284 = vadd.f32 %v3214, %v3283
      %v3285 = vpop.f32.mrb[0].mxu0
      %3286 = vdwg.mxu0
      %v3287 = vmul.f32 %v3284, 0.00048828125
      %v3288 = vadd.f32 %v3287, 1e-05
      %v3289 = vrsqrt.pop %v3288
      %v3291 = vsel %vm942, %v3289, 0
      %3293 = vmatprep.subr.mxu0 %v949
      %3294 = vmatpush1.msra.mxu0 %v947
      %3295 = vmatprep.subr.mxu0 0.0
      %3296 = vmatpush1.msra.mxu0 0.0
      %3297 = vmatprep.subr.mxu0 0.0
      %3298 = vmatpush1.msra.mxu0 0.0
      %3299 = vmatprep.subr.mxu0 0.0
      %3300 = vmatpush1.msra.mxu0 0.0
      %3301 = vmatprep.subr.mxu0 0.0
      %3302 = vmatpush1.msra.mxu0 0.0
      %3303 = vmatprep.subr.mxu0 0.0
      %3304 = vmatpush1.msra.mxu0 0.0
      %3305 = vmatprep.subr.mxu0 0.0
      %3306 = vmatpush1.msra.mxu0 0.0
      %3307 = vmatprep.subr.mxu0 0.0
      %3308 = vmatpush1.msra.mxu0 0.0
      %3309 = vmatprep.subr.mxu0 0.0
      %3310 = vmatpush1.msra.mxu0 0.0
      %3311 = vmatprep.subr.mxu0 0.0
      %3312 = vmatpush1.msra.mxu0 0.0
      %3313 = vmatprep.subr.mxu0 0.0
      %3314 = vmatpush1.msra.mxu0 0.0
      %3315 = vmatprep.subr.mxu0 0.0
      %3316 = vmatpush1.msra.mxu0 0.0
      %3317 = vmatprep.subr.mxu0 0.0
      %3318 = vmatpush1.msra.mxu0 0.0
      %3319 = vmatprep.subr.mxu0 0.0
      %3320 = vmatpush1.msra.mxu0 0.0
      %3321 = vmatprep.subr.mxu0 0.0
      %3322 = vmatpush1.msra.mxu0 0.0
      %3323 = vmatprep.subr.mxu0 0.0
      %3324 = vmatpush1.msra.mxu0 0.0
      %3325 = vmatprep.subr.mxu0 0.0
      %3326 = vmatpush1.msra.mxu0 0.0
      %3327 = vmatprep.subr.mxu0 0.0
      %3328 = vmatpush1.msra.mxu0 0.0
      %3329 = vmatprep.subr.mxu0 0.0
      %3330 = vmatpush1.msra.mxu0 0.0
      %3331 = vmatprep.subr.mxu0 0.0
      %3332 = vmatpush1.msra.mxu0 0.0
      %3333 = vmatprep.subr.mxu0 0.0
      %3334 = vmatpush1.msra.mxu0 0.0
      %3335 = vmatprep.subr.mxu0 0.0
      %3336 = vmatpush1.msra.mxu0 0.0
      %3337 = vmatprep.subr.mxu0 0.0
      %3338 = vmatpush1.msra.mxu0 0.0
      %3339 = vmatprep.subr.mxu0 0.0
      %3340 = vmatpush1.msra.mxu0 0.0
      %3341 = vmatprep.subr.mxu0 0.0
      %3342 = vmatpush1.msra.mxu0 0.0
      %3343 = vmatprep.subr.mxu0 0.0
      %3344 = vmatpush1.msra.mxu0 0.0
      %3345 = vmatprep.subr.mxu0 0.0
      %3346 = vmatpush1.msra.mxu0 0.0
      %3347 = vmatprep.subr.mxu0 0.0
      %3348 = vmatpush1.msra.mxu0 0.0
      %3349 = vmatprep.subr.mxu0 0.0
      %3350 = vmatpush1.msra.mxu0 0.0
      %3351 = vmatprep.subr.mxu0 0.0
      %3352 = vmatpush1.msra.mxu0 0.0
      %3353 = vmatprep.subr.mxu0 0.0
      %3354 = vmatpush1.msra.mxu0 0.0
      %3355 = vmatprep.subr.mxu0 0.0
      %3356 = vmatpush1.msra.mxu0 0.0
      %3357 = vmatprep.mubr.f32.mxu0 0.0
      %3358 = vmatmul.mubr.f32.gmra.mrb[0].mxu0 %v3291
      %v3359 = vpop.f32.mrb[0].mxu0
      %v3360 = vadd.f32 0.0, %v3359
      %v3361 = vpop.f32.mrb[0].mxu0
      %v3362 = vadd.f32 0.0, %v3361
      %3363 = vdwg.mxu0
      %3364 = vmatprep.subr.mxu0 %v953
      %3365 = vmatpush1.msra.mxu0 %v951
      %3366 = vmatprep.subr.mxu0 0.0
      %3367 = vmatpush1.msra.mxu0 0.0
      %3368 = vmatprep.subr.mxu0 0.0
      %3369 = vmatpush1.msra.mxu0 0.0
      %3370 = vmatprep.subr.mxu0 0.0
      %3371 = vmatpush1.msra.mxu0 0.0
      %3372 = vmatprep.subr.mxu0 0.0
      %3373 = vmatpush1.msra.mxu0 0.0
      %3374 = vmatprep.subr.mxu0 0.0
      %3375 = vmatpush1.msra.mxu0 0.0
      %3376 = vmatprep.subr.mxu0 0.0
      %3377 = vmatpush1.msra.mxu0 0.0
      %3378 = vmatprep.subr.mxu0 0.0
      %3379 = vmatpush1.msra.mxu0 0.0
      %3380 = vmatprep.subr.mxu0 0.0
      %3381 = vmatpush1.msra.mxu0 0.0
      %3382 = vmatprep.subr.mxu0 0.0
      %3383 = vmatpush1.msra.mxu0 0.0
      %3384 = vmatprep.subr.mxu0 0.0
      %3385 = vmatpush1.msra.mxu0 0.0
      %3386 = vmatprep.subr.mxu0 0.0
      %3387 = vmatpush1.msra.mxu0 0.0
      %3388 = vmatprep.subr.mxu0 0.0
      %3389 = vmatpush1.msra.mxu0 0.0
      %3390 = vmatprep.subr.mxu0 0.0
      %3391 = vmatpush1.msra.mxu0 0.0
      %3392 = vmatprep.subr.mxu0 0.0
      %3393 = vmatpush1.msra.mxu0 0.0
      %3394 = vmatprep.subr.mxu0 0.0
      %3395 = vmatpush1.msra.mxu0 0.0
      %3396 = vmatprep.subr.mxu0 0.0
      %3397 = vmatpush1.msra.mxu0 0.0
      %3398 = vmatprep.subr.mxu0 0.0
      %3399 = vmatpush1.msra.mxu0 0.0
      %3400 = vmatprep.subr.mxu0 0.0
      %3401 = vmatpush1.msra.mxu0 0.0
      %3402 = vmatprep.subr.mxu0 0.0
      %3403 = vmatpush1.msra.mxu0 0.0
      %3404 = vmatprep.subr.mxu0 0.0
      %3405 = vmatpush1.msra.mxu0 0.0
      %3406 = vmatprep.subr.mxu0 0.0
      %3407 = vmatpush1.msra.mxu0 0.0
      %3408 = vmatprep.subr.mxu0 0.0
      %3409 = vmatpush1.msra.mxu0 0.0
      %3410 = vmatprep.subr.mxu0 0.0
      %3411 = vmatpush1.msra.mxu0 0.0
      %3412 = vmatprep.subr.mxu0 0.0
      %3413 = vmatpush1.msra.mxu0 0.0
      %3414 = vmatprep.subr.mxu0 0.0
      %3415 = vmatpush1.msra.mxu0 0.0
      %3416 = vmatprep.subr.mxu0 0.0
      %3417 = vmatpush1.msra.mxu0 0.0
      %3418 = vmatprep.subr.mxu0 0.0
      %3419 = vmatpush1.msra.mxu0 0.0
      %3420 = vmatprep.subr.mxu0 0.0
      %3421 = vmatpush1.msra.mxu0 0.0
      %3422 = vmatprep.subr.mxu0 0.0
      %3423 = vmatpush1.msra.mxu0 0.0
      %3424 = vmatprep.subr.mxu0 0.0
      %3425 = vmatpush1.msra.mxu0 0.0
      %3426 = vmatprep.subr.mxu0 0.0
      %3427 = vmatpush1.msra.mxu0 0.0
      %3428 = vmatprep.mubr.f32.mxu0 0.0
      %3429 = vmatmul.mubr.f32.gmra.mrb[0].mxu0 %v3291
      %v3430 = vpop.f32.mrb[0].mxu0
      %v3431 = vadd.f32 0.0, %v3430
      %v3432 = vpop.f32.mrb[0].mxu0
      %v3433 = vadd.f32 0.0, %v3432
      %3434 = vdwg.mxu0
      %v3435 = vlaneseq
      %v3436 = vshrl.u32 %v3435, 7
      %v3437 = vsub.s32 0, %v3436
      %v3438 = vrot.slane %v3360, %v3437
      %v3439 = vlaneseq
      %v3440 = vshrl.u32 %v3439, 7
      %v3441 = vsub.s32 0, %v3440
      %v3442 = vrot.slane %v3362, %v3441
      %v3443 = vlaneseq
      %v3444 = vshrl.u32 %v3443, 7
      %v3445 = vsub.s32 0, %v3444
      %v3446 = vrot.slane %v3431, %v3445
      %v3447 = vlaneseq
      %v3448 = vshrl.u32 %v3447, 7
      %v3449 = vsub.s32 0, %v3448
      %v3450 = vrot.slane %v3433, %v3449
      %v3451 = vmul.f32 %v3115, %v3438
      %v3452 = vmul.f32 %v3116, %v3442
      %v3453 = vmul.f32 %v3117, %v3446
      %v3454 = vmul.f32 %v3118, %v3450
      %v3455 = vmul.f32 %v3451, %v2781
      %v3456 = vmul.f32 %v3452, %v2782
      %v3457 = vmul.f32 %v3453, %v2783
      %v3458 = vmul.f32 %v3454, %v2784
      %v3459 = vadd.f32 %v3455, %v2785
      %v3460 = vadd.f32 %v3456, %v2786
      %v3461 = vadd.f32 %v3457, %v2787
      %v3462 = vadd.f32 %v3458, %v2788
      %v3463 = vxor.u32 %v3459, 2147483648
      %v3464 = vxor.u32 %v3460, 2147483648
      %v3465 = vxor.u32 %v3461, 2147483648
      %v3466 = vxor.u32 %v3462, 2147483648
      %v3467 = vmul.f32 %v3463, 1.442695
      %v3468 = vpow.pop %v3467
      %v3469 = vmul.f32 %v3464, 1.442695
      %v3470 = vpow.pop %v3469
      %v3471 = vmul.f32 %v3465, 1.442695
      %v3472 = vpow.pop %v3471
      %v3473 = vmul.f32 %v3466, 1.442695
      %v3474 = vpow.pop %v3473
      %v3475 = vadd.f32 %v3468, 1.0
      %v3476 = vadd.f32 %v3470, 1.0
      %v3477 = vadd.f32 %v3472, 1.0
      %v3478 = vadd.f32 %v3474, 1.0
      %v3479 = vrcp.pop %v3475
      %v3480 = vmul.f32 1.0, %v3479
      %v3481 = vrcp.pop %v3476
      %v3482 = vmul.f32 1.0, %v3481
      %v3483 = vrcp.pop %v3477
      %v3484 = vmul.f32 1.0, %v3483
      %v3485 = vrcp.pop %v3478
      %v3486 = vmul.f32 1.0, %v3485
      %v3487 = vmul.f32 %v3459, %v3480
      %v3488 = vmul.f32 %v3460, %v3482
      %v3489 = vmul.f32 %v3461, %v3484
      %v3490 = vmul.f32 %v3462, %v3486
      %3491 = vrot.lane.b32.xlu0 %v3487, 17
      %v3492 = vpop.permute.xlu0 %3491
      %3493 = vrot.lane.b32.xlu0 %v3488, 17
      %v3494 = vpop.permute.xlu0 %3493
      %3495 = vrot.lane.b32.xlu0 %v3489, 17
      %v3496 = vpop.permute.xlu0 %3495
      %3497 = vrot.lane.b32.xlu0 %v3490, 17
      %v3498 = vpop.permute.xlu0 %3497
      %v3499 = vsel %vm1507, %v3496, %v3498
      %v3500 = vsel %vm1507, %v3494, %v3496
      %v3501 = vsel %vm1507, %v3492, %v3494
      %v3502 = vsel %vm1507, %v3498, %v3492
      %v3503 = vmul.f32 %v3502, %v1517
      %v3504 = vmul.f32 %v3501, %v1521
      %v3505 = vmul.f32 %v3500, %v1525
      %v3506 = vmul.f32 %v3499, %v1529
      %v3507 = vld [vmem:[%s9] sm:$0xf]
      %v3508 = vpack.c.bf16 %v3503, %v3503
      %v3509 = vpack.c.bf16 %v3504, %v3504
      %v3510 = vpack.c.bf16 %v3505, %v3505
      %v3511 = vpack.c.bf16 %v3506, %v3506
      %3512 = vrot.lane.b32.xlu0 %v3487, 16
      %v3513 = vpop.permute.xlu0 %3512
      %3514 = vrot.lane.b32.xlu0 %v3488, 16
      %v3515 = vpop.permute.xlu0 %3514
      %3516 = vrot.lane.b32.xlu0 %v3489, 16
      %v3517 = vpop.permute.xlu0 %3516
      %3518 = vrot.lane.b32.xlu0 %v3490, 16
      %v3519 = vpop.permute.xlu0 %3518
      %v3520 = vsel %vm1551, %v3517, %v3519
      %v3521 = vsel %vm1551, %v3515, %v3517
      %v3522 = vsel %vm1551, %v3513, %v3515
      %v3523 = vsel %vm1551, %v3519, %v3513
      %v3524 = vmul.f32 %v3523, %v1562
      %v3525 = vmul.f32 %v3522, %v1566
      %v3526 = vmul.f32 %v3521, %v1570
      %v3527 = vmul.f32 %v3520, %v1574
      %s3528 = scalar_lea.vmem %s9, 4
      %v3529 = vld [vmem:[%s3528] sm:$0xf]
      %v3530 = vpack.c.bf16 %v3524, %v3524
      %v3531 = vpack.c.bf16 %v3525, %v3525
      %v3532 = vpack.c.bf16 %v3526, %v3526
      %v3533 = vpack.c.bf16 %v3527, %v3527
      %vm3534 = vcmask 64512
      %v3536 = vsel %vm3534, %v3529, 0
      %v3539 = vsel %vm750, %v3530, 0
      %v3542 = vsel %vm750, %v3531, 0
      %v3545 = vsel %vm750, %v3532, 0
      %v3548 = vsel %vm750, %v3533, 0
      %3550 = vmatprep.subr.bf16.mxu0 %v3542
      %3551 = vmatpush1.bf16.msra.mxu0 %v3539
      %3552 = vmatprep.subr.bf16.mxu0 0
      %3553 = vmatpush1.bf16.msra.mxu0 0
      %3554 = vmatprep.subr.bf16.mxu0 0
      %3555 = vmatpush1.bf16.msra.mxu0 0
      %3556 = vmatprep.subr.bf16.mxu0 0
      %3557 = vmatpush1.bf16.msra.mxu0 0
      %3558 = vmatprep.subr.bf16.mxu0 0
      %3559 = vmatpush1.bf16.msra.mxu0 0
      %3560 = vmatprep.subr.bf16.mxu0 0
      %3561 = vmatpush1.bf16.msra.mxu0 0
      %3562 = vmatprep.subr.bf16.mxu0 0
      %3563 = vmatpush1.bf16.msra.mxu0 0
      %3564 = vmatprep.subr.bf16.mxu0 0
      %3565 = vmatpush1.bf16.msra.mxu0 0
      %3566 = vmatprep.subr.bf16.mxu0 0
      %3567 = vmatpush1.bf16.msra.mxu0 0
      %3568 = vmatprep.subr.bf16.mxu0 0
      %3569 = vmatpush1.bf16.msra.mxu0 0
      %3570 = vmatprep.subr.bf16.mxu0 0
      %3571 = vmatpush1.bf16.msra.mxu0 0
      %3572 = vmatprep.subr.bf16.mxu0 0
      %3573 = vmatpush1.bf16.msra.mxu0 0
      %3574 = vmatprep.subr.bf16.mxu0 0
      %3575 = vmatpush1.bf16.msra.mxu0 0
      %3576 = vmatprep.subr.bf16.mxu0 0
      %3577 = vmatpush1.bf16.msra.mxu0 0
      %3578 = vmatprep.subr.bf16.mxu0 0
      %3579 = vmatpush1.bf16.msra.mxu0 0
      %3580 = vmatprep.subr.bf16.mxu0 0
      %3581 = vmatpush1.bf16.msra.mxu0 0
      %3582 = vmatprep.mubr.bf16.mxu0 0
      %3583 = vmatmul.mubr.bf16.gmra.mrb[0].mxu0 %v3536
      %v3584 = vpop.f32.mrb[0].mxu0
      %v3585 = vadd.f32 0.0, %v3584
      %v3586 = vpop.f32.mrb[0].mxu0
      %v3587 = vadd.f32 0.0, %v3586
      %v3588 = vpop.f32.mrb[0].mxu0
      %v3589 = vpop.f32.mrb[0].mxu0
      %3590 = vdwg.mxu0
      %3591 = vmatprep.subr.bf16.mxu0 %v3548
      %3592 = vmatpush1.bf16.msra.mxu0 %v3545
      %3593 = vmatprep.subr.bf16.mxu0 0
      %3594 = vmatpush1.bf16.msra.mxu0 0
      %3595 = vmatprep.subr.bf16.mxu0 0
      %3596 = vmatpush1.bf16.msra.mxu0 0
      %3597 = vmatprep.subr.bf16.mxu0 0
      %3598 = vmatpush1.bf16.msra.mxu0 0
      %3599 = vmatprep.subr.bf16.mxu0 0
      %3600 = vmatpush1.bf16.msra.mxu0 0
      %3601 = vmatprep.subr.bf16.mxu0 0
      %3602 = vmatpush1.bf16.msra.mxu0 0
      %3603 = vmatprep.subr.bf16.mxu0 0
      %3604 = vmatpush1.bf16.msra.mxu0 0
      %3605 = vmatprep.subr.bf16.mxu0 0
      %3606 = vmatpush1.bf16.msra.mxu0 0
      %3607 = vmatprep.subr.bf16.mxu0 0
      %3608 = vmatpush1.bf16.msra.mxu0 0
      %3609 = vmatprep.subr.bf16.mxu0 0
      %3610 = vmatpush1.bf16.msra.mxu0 0
      %3611 = vmatprep.subr.bf16.mxu0 0
      %3612 = vmatpush1.bf16.msra.mxu0 0
      %3613 = vmatprep.subr.bf16.mxu0 0
      %3614 = vmatpush1.bf16.msra.mxu0 0
      %3615 = vmatprep.subr.bf16.mxu0 0
      %3616 = vmatpush1.bf16.msra.mxu0 0
      %3617 = vmatprep.subr.bf16.mxu0 0
      %3618 = vmatpush1.bf16.msra.mxu0 0
      %3619 = vmatprep.subr.bf16.mxu0 0
      %3620 = vmatpush1.bf16.msra.mxu0 0
      %3621 = vmatprep.subr.bf16.mxu0 0
      %3622 = vmatpush1.bf16.msra.mxu0 0
      %3623 = vmatprep.mubr.bf16.mxu0 0
      %3624 = vmatmul.mubr.bf16.gmra.mrb[0].mxu0 %v3536
      %v3625 = vpop.f32.mrb[0].mxu0
      %v3626 = vadd.f32 0.0, %v3625
      %v3627 = vpop.f32.mrb[0].mxu0
      %v3628 = vadd.f32 0.0, %v3627
      %v3629 = vpop.f32.mrb[0].mxu0
      %v3630 = vpop.f32.mrb[0].mxu0
      %3631 = vdwg.mxu0
      %v3633 = vsel %vm3534, %v3507, 0
      %v3636 = vsel %vm750, %v3508, 0
      %v3639 = vsel %vm750, %v3509, 0
      %v3642 = vsel %vm750, %v3510, 0
      %v3645 = vsel %vm750, %v3511, 0
      %3647 = vmatprep.subr.bf16.mxu0 %v3639
      %3648 = vmatpush1.bf16.msra.mxu0 %v3636
      %3649 = vmatprep.subr.bf16.mxu0 0
      %3650 = vmatpush1.bf16.msra.mxu0 0
      %3651 = vmatprep.subr.bf16.mxu0 0
      %3652 = vmatpush1.bf16.msra.mxu0 0
      %3653 = vmatprep.subr.bf16.mxu0 0
      %3654 = vmatpush1.bf16.msra.mxu0 0
      %3655 = vmatprep.subr.bf16.mxu0 0
      %3656 = vmatpush1.bf16.msra.mxu0 0
      %3657 = vmatprep.subr.bf16.mxu0 0
      %3658 = vmatpush1.bf16.msra.mxu0 0
      %3659 = vmatprep.subr.bf16.mxu0 0
      %3660 = vmatpush1.bf16.msra.mxu0 0
      %3661 = vmatprep.subr.bf16.mxu0 0
      %3662 = vmatpush1.bf16.msra.mxu0 0
      %3663 = vmatprep.subr.bf16.mxu0 0
      %3664 = vmatpush1.bf16.msra.mxu0 0
      %3665 = vmatprep.subr.bf16.mxu0 0
      %3666 = vmatpush1.bf16.msra.mxu0 0
      %3667 = vmatprep.subr.bf16.mxu0 0
      %3668 = vmatpush1.bf16.msra.mxu0 0
      %3669 = vmatprep.subr.bf16.mxu0 0
      %3670 = vmatpush1.bf16.msra.mxu0 0
      %3671 = vmatprep.subr.bf16.mxu0 0
      %3672 = vmatpush1.bf16.msra.mxu0 0
      %3673 = vmatprep.subr.bf16.mxu0 0
      %3674 = vmatpush1.bf16.msra.mxu0 0
      %3675 = vmatprep.subr.bf16.mxu0 0
      %3676 = vmatpush1.bf16.msra.mxu0 0
      %3677 = vmatprep.subr.bf16.mxu0 0
      %3678 = vmatpush1.bf16.msra.mxu0 0
      %3679 = vmatprep.mubr.bf16.mxu0 0
      %3680 = vmatmul.mubr.bf16.gmra.mrb[0].mxu0 %v3633
      %v3681 = vpop.f32.mrb[0].mxu0
      %v3682 = vadd.f32 %v3585, %v3681
      %v3683 = vpop.f32.mrb[0].mxu0
      %v3684 = vadd.f32 %v3587, %v3683
      %v3685 = vpop.f32.mrb[0].mxu0
      %v3686 = vpop.f32.mrb[0].mxu0
      %3687 = vdwg.mxu0
      %3688 = vmatprep.subr.bf16.mxu0 %v3645
      %3689 = vmatpush1.bf16.msra.mxu0 %v3642
      %3690 = vmatprep.subr.bf16.mxu0 0
      %3691 = vmatpush1.bf16.msra.mxu0 0
      %3692 = vmatprep.subr.bf16.mxu0 0
      %3693 = vmatpush1.bf16.msra.mxu0 0
      %3694 = vmatprep.subr.bf16.mxu0 0
      %3695 = vmatpush1.bf16.msra.mxu0 0
      %3696 = vmatprep.subr.bf16.mxu0 0
      %3697 = vmatpush1.bf16.msra.mxu0 0
      %3698 = vmatprep.subr.bf16.mxu0 0
      %3699 = vmatpush1.bf16.msra.mxu0 0
      %3700 = vmatprep.subr.bf16.mxu0 0
      %3701 = vmatpush1.bf16.msra.mxu0 0
      %3702 = vmatprep.subr.bf16.mxu0 0
      %3703 = vmatpush1.bf16.msra.mxu0 0
      %3704 = vmatprep.subr.bf16.mxu0 0
      %3705 = vmatpush1.bf16.msra.mxu0 0
      %3706 = vmatprep.subr.bf16.mxu0 0
      %3707 = vmatpush1.bf16.msra.mxu0 0
      %3708 = vmatprep.subr.bf16.mxu0 0
      %3709 = vmatpush1.bf16.msra.mxu0 0
      %3710 = vmatprep.subr.bf16.mxu0 0
      %3711 = vmatpush1.bf16.msra.mxu0 0
      %3712 = vmatprep.subr.bf16.mxu0 0
      %3713 = vmatpush1.bf16.msra.mxu0 0
      %3714 = vmatprep.subr.bf16.mxu0 0
      %3715 = vmatpush1.bf16.msra.mxu0 0
      %3716 = vmatprep.subr.bf16.mxu0 0
      %3717 = vmatpush1.bf16.msra.mxu0 0
      %3718 = vmatprep.subr.bf16.mxu0 0
      %3719 = vmatpush1.bf16.msra.mxu0 0
      %3720 = vmatprep.mubr.bf16.mxu0 0
      %3721 = vmatmul.mubr.bf16.gmra.mrb[0].mxu0 %v3633
      %v3722 = vpop.f32.mrb[0].mxu0
      %v3723 = vadd.f32 %v3626, %v3722
      %v3724 = vpop.f32.mrb[0].mxu0
      %v3725 = vadd.f32 %v3628, %v3724
      %v3726 = vpop.f32.mrb[0].mxu0
      %v3727 = vpop.f32.mrb[0].mxu0
      %3728 = vdwg.mxu0
      %3729 = vrot.lane.b32.xlu0 %v3487, 15
      %v3730 = vpop.permute.xlu0 %3729
      %3731 = vrot.lane.b32.xlu0 %v3488, 15
      %v3732 = vpop.permute.xlu0 %3731
      %3733 = vrot.lane.b32.xlu0 %v3489, 15
      %v3734 = vpop.permute.xlu0 %3733
      %3735 = vrot.lane.b32.xlu0 %v3490, 15
      %v3736 = vpop.permute.xlu0 %3735
      %v3737 = vsel %vm1792, %v3734, %v3736
      %v3738 = vsel %vm1792, %v3732, %v3734
      %v3739 = vsel %vm1792, %v3730, %v3732
      %v3740 = vsel %vm1792, %v3736, %v3730
      %v3741 = vmul.f32 %v3740, %v1803
      %v3742 = vmul.f32 %v3739, %v1807
      %v3743 = vmul.f32 %v3738, %v1811
      %v3744 = vmul.f32 %v3737, %v1815
      %s3745 = scalar_lea.vmem %s9, 8
      %v3746 = vld [vmem:[%s3745] sm:$0xf]
      %v3747 = vpack.c.bf16 %v3741, %v3741
      %v3748 = vpack.c.bf16 %v3742, %v3742
      %v3749 = vpack.c.bf16 %v3743, %v3743
      %v3750 = vpack.c.bf16 %v3744, %v3744
      %v3752 = vsel %vm3534, %v3746, 0
      %v3755 = vsel %vm750, %v3747, 0
      %v3758 = vsel %vm750, %v3748, 0
      %v3761 = vsel %vm750, %v3749, 0
      %v3764 = vsel %vm750, %v3750, 0
      %3766 = vmatprep.subr.bf16.mxu0 %v3758
      %3767 = vmatpush1.bf16.msra.mxu0 %v3755
      %3768 = vmatprep.subr.bf16.mxu0 0
      %3769 = vmatpush1.bf16.msra.mxu0 0
      %3770 = vmatprep.subr.bf16.mxu0 0
      %3771 = vmatpush1.bf16.msra.mxu0 0
      %3772 = vmatprep.subr.bf16.mxu0 0
      %3773 = vmatpush1.bf16.msra.mxu0 0
      %3774 = vmatprep.subr.bf16.mxu0 0
      %3775 = vmatpush1.bf16.msra.mxu0 0
      %3776 = vmatprep.subr.bf16.mxu0 0
      %3777 = vmatpush1.bf16.msra.mxu0 0
      %3778 = vmatprep.subr.bf16.mxu0 0
      %3779 = vmatpush1.bf16.msra.mxu0 0
      %3780 = vmatprep.subr.bf16.mxu0 0
      %3781 = vmatpush1.bf16.msra.mxu0 0
      %3782 = vmatprep.subr.bf16.mxu0 0
      %3783 = vmatpush1.bf16.msra.mxu0 0
      %3784 = vmatprep.subr.bf16.mxu0 0
      %3785 = vmatpush1.bf16.msra.mxu0 0
      %3786 = vmatprep.subr.bf16.mxu0 0
      %3787 = vmatpush1.bf16.msra.mxu0 0
      %3788 = vmatprep.subr.bf16.mxu0 0
      %3789 = vmatpush1.bf16.msra.mxu0 0
      %3790 = vmatprep.subr.bf16.mxu0 0
      %3791 = vmatpush1.bf16.msra.mxu0 0
      %3792 = vmatprep.subr.bf16.mxu0 0
      %3793 = vmatpush1.bf16.msra.mxu0 0
      %3794 = vmatprep.subr.bf16.mxu0 0
      %3795 = vmatpush1.bf16.msra.mxu0 0
      %3796 = vmatprep.subr.bf16.mxu0 0
      %3797 = vmatpush1.bf16.msra.mxu0 0
      %3798 = vmatprep.mubr.bf16.mxu0 0
      %3799 = vmatmul.mubr.bf16.gmra.mrb[0].mxu0 %v3752
      %v3800 = vpop.f32.mrb[0].mxu0
      %v3801 = vadd.f32 0.0, %v3800
      %v3802 = vpop.f32.mrb[0].mxu0
      %v3803 = vadd.f32 0.0, %v3802
      %v3804 = vpop.f32.mrb[0].mxu0
      %v3805 = vpop.f32.mrb[0].mxu0
      %3806 = vdwg.mxu0
      %3807 = vmatprep.subr.bf16.mxu0 %v3764
      %3808 = vmatpush1.bf16.msra.mxu0 %v3761
      %3809 = vmatprep.subr.bf16.mxu0 0
      %3810 = vmatpush1.bf16.msra.mxu0 0
      %3811 = vmatprep.subr.bf16.mxu0 0
      %3812 = vmatpush1.bf16.msra.mxu0 0
      %3813 = vmatprep.subr.bf16.mxu0 0
      %3814 = vmatpush1.bf16.msra.mxu0 0
      %3815 = vmatprep.subr.bf16.mxu0 0
      %3816 = vmatpush1.bf16.msra.mxu0 0
      %3817 = vmatprep.subr.bf16.mxu0 0
      %3818 = vmatpush1.bf16.msra.mxu0 0
      %3819 = vmatprep.subr.bf16.mxu0 0
      %3820 = vmatpush1.bf16.msra.mxu0 0
      %3821 = vmatprep.subr.bf16.mxu0 0
      %3822 = vmatpush1.bf16.msra.mxu0 0
      %3823 = vmatprep.subr.bf16.mxu0 0
      %3824 = vmatpush1.bf16.msra.mxu0 0
      %3825 = vmatprep.subr.bf16.mxu0 0
      %3826 = vmatpush1.bf16.msra.mxu0 0
      %3827 = vmatprep.subr.bf16.mxu0 0
      %3828 = vmatpush1.bf16.msra.mxu0 0
      %3829 = vmatprep.subr.bf16.mxu0 0
      %3830 = vmatpush1.bf16.msra.mxu0 0
      %3831 = vmatprep.subr.bf16.mxu0 0
      %3832 = vmatpush1.bf16.msra.mxu0 0
      %3833 = vmatprep.subr.bf16.mxu0 0
      %3834 = vmatpush1.bf16.msra.mxu0 0
      %3835 = vmatprep.subr.bf16.mxu0 0
      %3836 = vmatpush1.bf16.msra.mxu0 0
      %3837 = vmatprep.subr.bf16.mxu0 0
      %3838 = vmatpush1.bf16.msra.mxu0 0
      %3839 = vmatprep.mubr.bf16.mxu0 0
      %3840 = vmatmul.mubr.bf16.gmra.mrb[0].mxu0 %v3752
      %v3841 = vpop.f32.mrb[0].mxu0
      %v3842 = vadd.f32 0.0, %v3841
      %v3843 = vpop.f32.mrb[0].mxu0
      %v3844 = vadd.f32 0.0, %v3843
      %v3845 = vpop.f32.mrb[0].mxu0
      %v3846 = vpop.f32.mrb[0].mxu0
      %3847 = vdwg.mxu0
      %v3848 = vadd.f32 %v3682, %v3801
      %v3849 = vadd.f32 %v3684, %v3803
      %v3850 = vadd.f32 %v3723, %v3842
      %v3851 = vadd.f32 %v3725, %v3844
      %3852 = vrot.lane.b32.xlu0 %v3487, 1
      %v3853 = vpop.permute.xlu0 %3852
      %3854 = vrot.lane.b32.xlu0 %v3488, 1
      %v3855 = vpop.permute.xlu0 %3854
      %3856 = vrot.lane.b32.xlu0 %v3489, 1
      %v3857 = vpop.permute.xlu0 %3856
      %3858 = vrot.lane.b32.xlu0 %v3490, 1
      %v3859 = vpop.permute.xlu0 %3858
      %v3860 = vsel %vm1939, %v3857, %v3859
      %v3861 = vsel %vm1939, %v3855, %v3857
      %v3862 = vsel %vm1939, %v3853, %v3855
      %v3863 = vsel %vm1939, %v3859, %v3853
      %v3864 = vmul.f32 %v3863, %v1950
      %v3865 = vmul.f32 %v3862, %v1954
      %v3866 = vmul.f32 %v3861, %v1958
      %v3867 = vmul.f32 %v3860, %v1962
      %s3868 = scalar_lea.vmem %s9, 12
      %v3869 = vld [vmem:[%s3868] sm:$0xf]
      %v3870 = vpack.c.bf16 %v3864, %v3864
      %v3871 = vpack.c.bf16 %v3865, %v3865
      %v3872 = vpack.c.bf16 %v3866, %v3866
      %v3873 = vpack.c.bf16 %v3867, %v3867
      %v3875 = vsel %vm3534, %v3869, 0
      %v3878 = vsel %vm750, %v3870, 0
      %v3881 = vsel %vm750, %v3871, 0
      %v3884 = vsel %vm750, %v3872, 0
      %v3887 = vsel %vm750, %v3873, 0
      %3889 = vmatprep.subr.bf16.mxu0 %v3881
      %3890 = vmatpush1.bf16.msra.mxu0 %v3878
      %3891 = vmatprep.subr.bf16.mxu0 0
      %3892 = vmatpush1.bf16.msra.mxu0 0
      %3893 = vmatprep.subr.bf16.mxu0 0
      %3894 = vmatpush1.bf16.msra.mxu0 0
      %3895 = vmatprep.subr.bf16.mxu0 0
      %3896 = vmatpush1.bf16.msra.mxu0 0
      %3897 = vmatprep.subr.bf16.mxu0 0
      %3898 = vmatpush1.bf16.msra.mxu0 0
      %3899 = vmatprep.subr.bf16.mxu0 0
      %3900 = vmatpush1.bf16.msra.mxu0 0
      %3901 = vmatprep.subr.bf16.mxu0 0
      %3902 = vmatpush1.bf16.msra.mxu0 0
      %3903 = vmatprep.subr.bf16.mxu0 0
      %3904 = vmatpush1.bf16.msra.mxu0 0
      %3905 = vmatprep.subr.bf16.mxu0 0
      %3906 = vmatpush1.bf16.msra.mxu0 0
      %3907 = vmatprep.subr.bf16.mxu0 0
      %3908 = vmatpush1.bf16.msra.mxu0 0
      %3909 = vmatprep.subr.bf16.mxu0 0
      %3910 = vmatpush1.bf16.msra.mxu0 0
      %3911 = vmatprep.subr.bf16.mxu0 0
      %3912 = vmatpush1.bf16.msra.mxu0 0
      %3913 = vmatprep.subr.bf16.mxu0 0
      %3914 = vmatpush1.bf16.msra.mxu0 0
      %3915 = vmatprep.subr.bf16.mxu0 0
      %3916 = vmatpush1.bf16.msra.mxu0 0
      %3917 = vmatprep.subr.bf16.mxu0 0
      %3918 = vmatpush1.bf16.msra.mxu0 0
      %3919 = vmatprep.subr.bf16.mxu0 0
      %3920 = vmatpush1.bf16.msra.mxu0 0
      %3921 = vmatprep.mubr.bf16.mxu0 0
      %3922 = vmatmul.mubr.bf16.gmra.mrb[0].mxu0 %v3875
      %v3923 = vpop.f32.mrb[0].mxu0
      %v3924 = vadd.f32 0.0, %v3923
      %v3925 = vpop.f32.mrb[0].mxu0
      %v3926 = vadd.f32 0.0, %v3925
      %v3927 = vpop.f32.mrb[0].mxu0
      %v3928 = vpop.f32.mrb[0].mxu0
      %3929 = vdwg.mxu0
      %3930 = vmatprep.subr.bf16.mxu0 %v3887
      %3931 = vmatpush1.bf16.msra.mxu0 %v3884
      %3932 = vmatprep.subr.bf16.mxu0 0
      %3933 = vmatpush1.bf16.msra.mxu0 0
      %3934 = vmatprep.subr.bf16.mxu0 0
      %3935 = vmatpush1.bf16.msra.mxu0 0
      %3936 = vmatprep.subr.bf16.mxu0 0
      %3937 = vmatpush1.bf16.msra.mxu0 0
      %3938 = vmatprep.subr.bf16.mxu0 0
      %3939 = vmatpush1.bf16.msra.mxu0 0
      %3940 = vmatprep.subr.bf16.mxu0 0
      %3941 = vmatpush1.bf16.msra.mxu0 0
      %3942 = vmatprep.subr.bf16.mxu0 0
      %3943 = vmatpush1.bf16.msra.mxu0 0
      %3944 = vmatprep.subr.bf16.mxu0 0
      %3945 = vmatpush1.bf16.msra.mxu0 0
      %3946 = vmatprep.subr.bf16.mxu0 0
      %3947 = vmatpush1.bf16.msra.mxu0 0
      %3948 = vmatprep.subr.bf16.mxu0 0
      %3949 = vmatpush1.bf16.msra.mxu0 0
      %3950 = vmatprep.subr.bf16.mxu0 0
      %3951 = vmatpush1.bf16.msra.mxu0 0
      %3952 = vmatprep.subr.bf16.mxu0 0
      %3953 = vmatpush1.bf16.msra.mxu0 0
      %3954 = vmatprep.subr.bf16.mxu0 0
      %3955 = vmatpush1.bf16.msra.mxu0 0
      %3956 = vmatprep.subr.bf16.mxu0 0
      %3957 = vmatpush1.bf16.msra.mxu0 0
      %3958 = vmatprep.subr.bf16.mxu0 0
      %3959 = vmatpush1.bf16.msra.mxu0 0
      %3960 = vmatprep.subr.bf16.mxu0 0
      %3961 = vmatpush1.bf16.msra.mxu0 0
      %3962 = vmatprep.mubr.bf16.mxu0 0
      %3963 = vmatmul.mubr.bf16.gmra.mrb[0].mxu0 %v3875
      %v3964 = vpop.f32.mrb[0].mxu0
      %v3965 = vadd.f32 0.0, %v3964
      %v3966 = vpop.f32.mrb[0].mxu0
      %v3967 = vadd.f32 0.0, %v3966
      %v3968 = vpop.f32.mrb[0].mxu0
      %v3969 = vpop.f32.mrb[0].mxu0
      %3970 = vdwg.mxu0
      %v3971 = vadd.f32 %v3848, %v3924
      %v3972 = vadd.f32 %v3849, %v3926
      %v3973 = vadd.f32 %v3850, %v3965
      %v3974 = vadd.f32 %v3851, %v3967
      %s3975 = scalar_lea.vmem %s9, 16
      %v3976 = vld [vmem:[%s3975] sm:$0xf]
      %v3977 = vpack.c.bf16 %v3487, %v3487
      %v3978 = vpack.c.bf16 %v3488, %v3488
      %v3979 = vpack.c.bf16 %v3489, %v3489
      %v3980 = vpack.c.bf16 %v3490, %v3490
      %v3982 = vsel %vm3534, %v3976, 0
      %v3985 = vsel %vm750, %v3977, 0
      %v3988 = vsel %vm750, %v3978, 0
      %v3991 = vsel %vm750, %v3979, 0
      %v3994 = vsel %vm750, %v3980, 0
      %3996 = vmatprep.subr.bf16.mxu0 %v3988
      %3997 = vmatpush1.bf16.msra.mxu0 %v3985
      %3998 = vmatprep.subr.bf16.mxu0 0
      %3999 = vmatpush1.bf16.msra.mxu0 0
      %4000 = vmatprep.subr.bf16.mxu0 0
      %4001 = vmatpush1.bf16.msra.mxu0 0
      %4002 = vmatprep.subr.bf16.mxu0 0
      %4003 = vmatpush1.bf16.msra.mxu0 0
      %4004 = vmatprep.subr.bf16.mxu0 0
      %4005 = vmatpush1.bf16.msra.mxu0 0
      %4006 = vmatprep.subr.bf16.mxu0 0
      %4007 = vmatpush1.bf16.msra.mxu0 0
      %4008 = vmatprep.subr.bf16.mxu0 0
      %4009 = vmatpush1.bf16.msra.mxu0 0
      %4010 = vmatprep.subr.bf16.mxu0 0
      %4011 = vmatpush1.bf16.msra.mxu0 0
      %4012 = vmatprep.subr.bf16.mxu0 0
      %4013 = vmatpush1.bf16.msra.mxu0 0
      %4014 = vmatprep.subr.bf16.mxu0 0
      %4015 = vmatpush1.bf16.msra.mxu0 0
      %4016 = vmatprep.subr.bf16.mxu0 0
      %4017 = vmatpush1.bf16.msra.mxu0 0
      %4018 = vmatprep.subr.bf16.mxu0 0
      %4019 = vmatpush1.bf16.msra.mxu0 0
      %4020 = vmatprep.subr.bf16.mxu0 0
      %4021 = vmatpush1.bf16.msra.mxu0 0
      %4022 = vmatprep.subr.bf16.mxu0 0
      %4023 = vmatpush1.bf16.msra.mxu0 0
      %4024 = vmatprep.subr.bf16.mxu0 0
      %4025 = vmatpush1.bf16.msra.mxu0 0
      %4026 = vmatprep.subr.bf16.mxu0 0
      %4027 = vmatpush1.bf16.msra.mxu0 0
      %4028 = vmatprep.mubr.bf16.mxu0 0
      %4029 = vmatmul.mubr.bf16.gmra.mrb[0].mxu0 %v3982
      %v4030 = vpop.f32.mrb[0].mxu0
      %v4031 = vadd.f32 0.0, %v4030
      %v4032 = vpop.f32.mrb[0].mxu0
      %v4033 = vadd.f32 0.0, %v4032
      %v4034 = vpop.f32.mrb[0].mxu0
      %v4035 = vpop.f32.mrb[0].mxu0
      %4036 = vdwg.mxu0
      %4037 = vmatprep.subr.bf16.mxu0 %v3994
      %4038 = vmatpush1.bf16.msra.mxu0 %v3991
      %4039 = vmatprep.subr.bf16.mxu0 0
      %4040 = vmatpush1.bf16.msra.mxu0 0
      %4041 = vmatprep.subr.bf16.mxu0 0
      %4042 = vmatpush1.bf16.msra.mxu0 0
      %4043 = vmatprep.subr.bf16.mxu0 0
      %4044 = vmatpush1.bf16.msra.mxu0 0
      %4045 = vmatprep.subr.bf16.mxu0 0
      %4046 = vmatpush1.bf16.msra.mxu0 0
      %4047 = vmatprep.subr.bf16.mxu0 0
      %4048 = vmatpush1.bf16.msra.mxu0 0
      %4049 = vmatprep.subr.bf16.mxu0 0
      %4050 = vmatpush1.bf16.msra.mxu0 0
      %4051 = vmatprep.subr.bf16.mxu0 0
      %4052 = vmatpush1.bf16.msra.mxu0 0
      %4053 = vmatprep.subr.bf16.mxu0 0
      %4054 = vmatpush1.bf16.msra.mxu0 0
      %4055 = vmatprep.subr.bf16.mxu0 0
      %4056 = vmatpush1.bf16.msra.mxu0 0
      %4057 = vmatprep.subr.bf16.mxu0 0
      %4058 = vmatpush1.bf16.msra.mxu0 0
      %4059 = vmatprep.subr.bf16.mxu0 0
      %4060 = vmatpush1.bf16.msra.mxu0 0
      %4061 = vmatprep.subr.bf16.mxu0 0
      %4062 = vmatpush1.bf16.msra.mxu0 0
      %4063 = vmatprep.subr.bf16.mxu0 0
      %4064 = vmatpush1.bf16.msra.mxu0 0
      %4065 = vmatprep.subr.bf16.mxu0 0
      %4066 = vmatpush1.bf16.msra.mxu0 0
      %4067 = vmatprep.subr.bf16.mxu0 0
      %4068 = vmatpush1.bf16.msra.mxu0 0
      %4069 = vmatprep.mubr.bf16.mxu0 0
      %4070 = vmatmul.mubr.bf16.gmra.mrb[0].mxu0 %v3982
      %v4071 = vpop.f32.mrb[0].mxu0
      %v4072 = vadd.f32 0.0, %v4071
      %v4073 = vpop.f32.mrb[0].mxu0
      %v4074 = vadd.f32 0.0, %v4073
      %v4075 = vpop.f32.mrb[0].mxu0
      %v4076 = vpop.f32.mrb[0].mxu0
      %4077 = vdwg.mxu0
      %v4078 = vadd.f32 %v3971, %v4031
      %v4079 = vadd.f32 %v3972, %v4033
      %v4080 = vadd.f32 %v3973, %v4072
      %v4081 = vadd.f32 %v3974, %v4074
      %4082 = vrot.lane.b32.xlu0 %v3487, 127
      %v4083 = vpop.permute.xlu0 %4082
      %4084 = vrot.lane.b32.xlu0 %v3488, 127
      %v4085 = vpop.permute.xlu0 %4084
      %4086 = vrot.lane.b32.xlu0 %v3489, 127
      %v4087 = vpop.permute.xlu0 %4086
      %4088 = vrot.lane.b32.xlu0 %v3490, 127
      %v4089 = vpop.permute.xlu0 %4088
      %v4090 = vsel %vm2193, %v4087, %v4089
      %v4091 = vsel %vm2193, %v4085, %v4087
      %v4092 = vsel %vm2193, %v4083, %v4085
      %v4093 = vsel %vm2193, %v4089, %v4083
      %v4094 = vmul.f32 %v4092, %v2204
      %v4095 = vmul.f32 %v4091, %v2208
      %v4096 = vmul.f32 %v4090, %v2212
      %v4097 = vmul.f32 %v4093, %v2216
      %s4098 = scalar_lea.vmem %s9, 20
      %v4099 = vld [vmem:[%s4098] sm:$0xf]
      %v4100 = vpack.c.bf16 %v4094, %v4094
      %v4101 = vpack.c.bf16 %v4095, %v4095
      %v4102 = vpack.c.bf16 %v4096, %v4096
      %v4103 = vpack.c.bf16 %v4097, %v4097
      %v4105 = vsel %vm3534, %v4099, 0
      %v4108 = vsel %vm750, %v4100, 0
      %v4111 = vsel %vm750, %v4101, 0
      %v4114 = vsel %vm750, %v4102, 0
      %v4117 = vsel %vm750, %v4103, 0
      %4119 = vmatprep.subr.bf16.mxu0 %v4111
      %4120 = vmatpush1.bf16.msra.mxu0 %v4108
      %4121 = vmatprep.subr.bf16.mxu0 0
      %4122 = vmatpush1.bf16.msra.mxu0 0
      %4123 = vmatprep.subr.bf16.mxu0 0
      %4124 = vmatpush1.bf16.msra.mxu0 0
      %4125 = vmatprep.subr.bf16.mxu0 0
      %4126 = vmatpush1.bf16.msra.mxu0 0
      %4127 = vmatprep.subr.bf16.mxu0 0
      %4128 = vmatpush1.bf16.msra.mxu0 0
      %4129 = vmatprep.subr.bf16.mxu0 0
      %4130 = vmatpush1.bf16.msra.mxu0 0
      %4131 = vmatprep.subr.bf16.mxu0 0
      %4132 = vmatpush1.bf16.msra.mxu0 0
      %4133 = vmatprep.subr.bf16.mxu0 0
      %4134 = vmatpush1.bf16.msra.mxu0 0
      %4135 = vmatprep.subr.bf16.mxu0 0
      %4136 = vmatpush1.bf16.msra.mxu0 0
      %4137 = vmatprep.subr.bf16.mxu0 0
      %4138 = vmatpush1.bf16.msra.mxu0 0
      %4139 = vmatprep.subr.bf16.mxu0 0
      %4140 = vmatpush1.bf16.msra.mxu0 0
      %4141 = vmatprep.subr.bf16.mxu0 0
      %4142 = vmatpush1.bf16.msra.mxu0 0
      %4143 = vmatprep.subr.bf16.mxu0 0
      %4144 = vmatpush1.bf16.msra.mxu0 0
      %4145 = vmatprep.subr.bf16.mxu0 0
      %4146 = vmatpush1.bf16.msra.mxu0 0
      %4147 = vmatprep.subr.bf16.mxu0 0
      %4148 = vmatpush1.bf16.msra.mxu0 0
      %4149 = vmatprep.subr.bf16.mxu0 0
      %4150 = vmatpush1.bf16.msra.mxu0 0
      %4151 = vmatprep.mubr.bf16.mxu0 0
      %4152 = vmatmul.mubr.bf16.gmra.mrb[0].mxu0 %v4105
      %v4153 = vpop.f32.mrb[0].mxu0
      %v4154 = vadd.f32 0.0, %v4153
      %v4155 = vpop.f32.mrb[0].mxu0
      %v4156 = vadd.f32 0.0, %v4155
      %v4157 = vpop.f32.mrb[0].mxu0
      %v4158 = vpop.f32.mrb[0].mxu0
      %4159 = vdwg.mxu0
      %4160 = vmatprep.subr.bf16.mxu0 %v4117
      %4161 = vmatpush1.bf16.msra.mxu0 %v4114
      %4162 = vmatprep.subr.bf16.mxu0 0
      %4163 = vmatpush1.bf16.msra.mxu0 0
      %4164 = vmatprep.subr.bf16.mxu0 0
      %4165 = vmatpush1.bf16.msra.mxu0 0
      %4166 = vmatprep.subr.bf16.mxu0 0
      %4167 = vmatpush1.bf16.msra.mxu0 0
      %4168 = vmatprep.subr.bf16.mxu0 0
      %4169 = vmatpush1.bf16.msra.mxu0 0
      %4170 = vmatprep.subr.bf16.mxu0 0
      %4171 = vmatpush1.bf16.msra.mxu0 0
      %4172 = vmatprep.subr.bf16.mxu0 0
      %4173 = vmatpush1.bf16.msra.mxu0 0
      %4174 = vmatprep.subr.bf16.mxu0 0
      %4175 = vmatpush1.bf16.msra.mxu0 0
      %4176 = vmatprep.subr.bf16.mxu0 0
      %4177 = vmatpush1.bf16.msra.mxu0 0
      %4178 = vmatprep.subr.bf16.mxu0 0
      %4179 = vmatpush1.bf16.msra.mxu0 0
      %4180 = vmatprep.subr.bf16.mxu0 0
      %4181 = vmatpush1.bf16.msra.mxu0 0
      %4182 = vmatprep.subr.bf16.mxu0 0
      %4183 = vmatpush1.bf16.msra.mxu0 0
      %4184 = vmatprep.subr.bf16.mxu0 0
      %4185 = vmatpush1.bf16.msra.mxu0 0
      %4186 = vmatprep.subr.bf16.mxu0 0
      %4187 = vmatpush1.bf16.msra.mxu0 0
      %4188 = vmatprep.subr.bf16.mxu0 0
      %4189 = vmatpush1.bf16.msra.mxu0 0
      %4190 = vmatprep.subr.bf16.mxu0 0
      %4191 = vmatpush1.bf16.msra.mxu0 0
      %4192 = vmatprep.mubr.bf16.mxu0 0
      %4193 = vmatmul.mubr.bf16.gmra.mrb[0].mxu0 %v4105
      %v4194 = vpop.f32.mrb[0].mxu0
      %v4195 = vadd.f32 0.0, %v4194
      %v4196 = vpop.f32.mrb[0].mxu0
      %v4197 = vadd.f32 0.0, %v4196
      %v4198 = vpop.f32.mrb[0].mxu0
      %v4199 = vpop.f32.mrb[0].mxu0
      %4200 = vdwg.mxu0
      %v4201 = vadd.f32 %v4078, %v4154
      %v4202 = vadd.f32 %v4079, %v4156
      %v4203 = vadd.f32 %v4080, %v4195
      %v4204 = vadd.f32 %v4081, %v4197
      %4205 = vrot.lane.b32.xlu0 %v3487, 113
      %v4206 = vpop.permute.xlu0 %4205
      %4207 = vrot.lane.b32.xlu0 %v3488, 113
      %v4208 = vpop.permute.xlu0 %4207
      %4209 = vrot.lane.b32.xlu0 %v3489, 113
      %v4210 = vpop.permute.xlu0 %4209
      %4211 = vrot.lane.b32.xlu0 %v3490, 113
      %v4212 = vpop.permute.xlu0 %4211
      %v4213 = vsel %vm2340, %v4210, %v4212
      %v4214 = vsel %vm2340, %v4208, %v4210
      %v4215 = vsel %vm2340, %v4206, %v4208
      %v4216 = vsel %vm2340, %v4212, %v4206
      %v4217 = vmul.f32 %v4215, %v2351
      %v4218 = vmul.f32 %v4214, %v2355
      %v4219 = vmul.f32 %v4213, %v2359
      %v4220 = vmul.f32 %v4216, %v2363
      %s4221 = scalar_lea.vmem %s9, 24
      %v4222 = vld [vmem:[%s4221] sm:$0xf]
      %v4223 = vpack.c.bf16 %v4217, %v4217
      %v4224 = vpack.c.bf16 %v4218, %v4218
      %v4225 = vpack.c.bf16 %v4219, %v4219
      %v4226 = vpack.c.bf16 %v4220, %v4220
      %v4228 = vsel %vm3534, %v4222, 0
      %v4231 = vsel %vm750, %v4223, 0
      %v4234 = vsel %vm750, %v4224, 0
      %v4237 = vsel %vm750, %v4225, 0
      %v4240 = vsel %vm750, %v4226, 0
      %4242 = vmatprep.subr.bf16.mxu0 %v4234
      %4243 = vmatpush1.bf16.msra.mxu0 %v4231
      %4244 = vmatprep.subr.bf16.mxu0 0
      %4245 = vmatpush1.bf16.msra.mxu0 0
      %4246 = vmatprep.subr.bf16.mxu0 0
      %4247 = vmatpush1.bf16.msra.mxu0 0
      %4248 = vmatprep.subr.bf16.mxu0 0
      %4249 = vmatpush1.bf16.msra.mxu0 0
      %4250 = vmatprep.subr.bf16.mxu0 0
      %4251 = vmatpush1.bf16.msra.mxu0 0
      %4252 = vmatprep.subr.bf16.mxu0 0
      %4253 = vmatpush1.bf16.msra.mxu0 0
      %4254 = vmatprep.subr.bf16.mxu0 0
      %4255 = vmatpush1.bf16.msra.mxu0 0
      %4256 = vmatprep.subr.bf16.mxu0 0
      %4257 = vmatpush1.bf16.msra.mxu0 0
      %4258 = vmatprep.subr.bf16.mxu0 0
      %4259 = vmatpush1.bf16.msra.mxu0 0
      %4260 = vmatprep.subr.bf16.mxu0 0
      %4261 = vmatpush1.bf16.msra.mxu0 0
      %4262 = vmatprep.subr.bf16.mxu0 0
      %4263 = vmatpush1.bf16.msra.mxu0 0
      %4264 = vmatprep.subr.bf16.mxu0 0
      %4265 = vmatpush1.bf16.msra.mxu0 0
      %4266 = vmatprep.subr.bf16.mxu0 0
      %4267 = vmatpush1.bf16.msra.mxu0 0
      %4268 = vmatprep.subr.bf16.mxu0 0
      %4269 = vmatpush1.bf16.msra.mxu0 0
      %4270 = vmatprep.subr.bf16.mxu0 0
      %4271 = vmatpush1.bf16.msra.mxu0 0
      %4272 = vmatprep.subr.bf16.mxu0 0
      %4273 = vmatpush1.bf16.msra.mxu0 0
      %4274 = vmatprep.mubr.bf16.mxu0 0
      %4275 = vmatmul.mubr.bf16.gmra.mrb[0].mxu0 %v4228
      %v4276 = vpop.f32.mrb[0].mxu0
      %v4277 = vadd.f32 0.0, %v4276
      %v4278 = vpop.f32.mrb[0].mxu0
      %v4279 = vadd.f32 0.0, %v4278
      %v4280 = vpop.f32.mrb[0].mxu0
      %v4281 = vpop.f32.mrb[0].mxu0
      %4282 = vdwg.mxu0
      %4283 = vmatprep.subr.bf16.mxu0 %v4240
      %4284 = vmatpush1.bf16.msra.mxu0 %v4237
      %4285 = vmatprep.subr.bf16.mxu0 0
      %4286 = vmatpush1.bf16.msra.mxu0 0
      %4287 = vmatprep.subr.bf16.mxu0 0
      %4288 = vmatpush1.bf16.msra.mxu0 0
      %4289 = vmatprep.subr.bf16.mxu0 0
      %4290 = vmatpush1.bf16.msra.mxu0 0
      %4291 = vmatprep.subr.bf16.mxu0 0
      %4292 = vmatpush1.bf16.msra.mxu0 0
      %4293 = vmatprep.subr.bf16.mxu0 0
      %4294 = vmatpush1.bf16.msra.mxu0 0
      %4295 = vmatprep.subr.bf16.mxu0 0
      %4296 = vmatpush1.bf16.msra.mxu0 0
      %4297 = vmatprep.subr.bf16.mxu0 0
      %4298 = vmatpush1.bf16.msra.mxu0 0
      %4299 = vmatprep.subr.bf16.mxu0 0
      %4300 = vmatpush1.bf16.msra.mxu0 0
      %4301 = vmatprep.subr.bf16.mxu0 0
      %4302 = vmatpush1.bf16.msra.mxu0 0
      %4303 = vmatprep.subr.bf16.mxu0 0
      %4304 = vmatpush1.bf16.msra.mxu0 0
      %4305 = vmatprep.subr.bf16.mxu0 0
      %4306 = vmatpush1.bf16.msra.mxu0 0
      %4307 = vmatprep.subr.bf16.mxu0 0
      %4308 = vmatpush1.bf16.msra.mxu0 0
      %4309 = vmatprep.subr.bf16.mxu0 0
      %4310 = vmatpush1.bf16.msra.mxu0 0
      %4311 = vmatprep.subr.bf16.mxu0 0
      %4312 = vmatpush1.bf16.msra.mxu0 0
      %4313 = vmatprep.subr.bf16.mxu0 0
      %4314 = vmatpush1.bf16.msra.mxu0 0
      %4315 = vmatprep.mubr.bf16.mxu0 0
      %4316 = vmatmul.mubr.bf16.gmra.mrb[0].mxu0 %v4228
      %v4317 = vpop.f32.mrb[0].mxu0
      %v4318 = vadd.f32 0.0, %v4317
      %v4319 = vpop.f32.mrb[0].mxu0
      %v4320 = vadd.f32 0.0, %v4319
      %v4321 = vpop.f32.mrb[0].mxu0
      %v4322 = vpop.f32.mrb[0].mxu0
      %4323 = vdwg.mxu0
      %v4324 = vadd.f32 %v4201, %v4277
      %v4325 = vadd.f32 %v4202, %v4279
      %v4326 = vadd.f32 %v4203, %v4318
      %v4327 = vadd.f32 %v4204, %v4320
      %4328 = vrot.lane.b32.xlu0 %v3487, 112
      %v4329 = vpop.permute.xlu0 %4328
      %4330 = vrot.lane.b32.xlu0 %v3488, 112
      %v4331 = vpop.permute.xlu0 %4330
      %4332 = vrot.lane.b32.xlu0 %v3489, 112
      %v4333 = vpop.permute.xlu0 %4332
      %4334 = vrot.lane.b32.xlu0 %v3490, 112
      %v4335 = vpop.permute.xlu0 %4334
      %v4336 = vsel %vm2487, %v4333, %v4335
      %v4337 = vsel %vm2487, %v4331, %v4333
      %v4338 = vsel %vm2487, %v4329, %v4331
      %v4339 = vsel %vm2487, %v4335, %v4329
      %v4340 = vmul.f32 %v4338, %v2498
      %v4341 = vmul.f32 %v4337, %v2502
      %v4342 = vmul.f32 %v4336, %v2506
      %v4343 = vmul.f32 %v4339, %v2510
      %s4344 = scalar_lea.vmem %s9, 28
      %v4345 = vld [vmem:[%s4344] sm:$0xf]
      %v4346 = vpack.c.bf16 %v4340, %v4340
      %v4347 = vpack.c.bf16 %v4341, %v4341
      %v4348 = vpack.c.bf16 %v4342, %v4342
      %v4349 = vpack.c.bf16 %v4343, %v4343
      %v4351 = vsel %vm3534, %v4345, 0
      %v4354 = vsel %vm750, %v4346, 0
      %v4357 = vsel %vm750, %v4347, 0
      %v4360 = vsel %vm750, %v4348, 0
      %v4363 = vsel %vm750, %v4349, 0
      %4365 = vmatprep.subr.bf16.mxu0 %v4357
      %4366 = vmatpush1.bf16.msra.mxu0 %v4354
      %4367 = vmatprep.subr.bf16.mxu0 0
      %4368 = vmatpush1.bf16.msra.mxu0 0
      %4369 = vmatprep.subr.bf16.mxu0 0
      %4370 = vmatpush1.bf16.msra.mxu0 0
      %4371 = vmatprep.subr.bf16.mxu0 0
      %4372 = vmatpush1.bf16.msra.mxu0 0
      %4373 = vmatprep.subr.bf16.mxu0 0
      %4374 = vmatpush1.bf16.msra.mxu0 0
      %4375 = vmatprep.subr.bf16.mxu0 0
      %4376 = vmatpush1.bf16.msra.mxu0 0
      %4377 = vmatprep.subr.bf16.mxu0 0
      %4378 = vmatpush1.bf16.msra.mxu0 0
      %4379 = vmatprep.subr.bf16.mxu0 0
      %4380 = vmatpush1.bf16.msra.mxu0 0
      %4381 = vmatprep.subr.bf16.mxu0 0
      %4382 = vmatpush1.bf16.msra.mxu0 0
      %4383 = vmatprep.subr.bf16.mxu0 0
      %4384 = vmatpush1.bf16.msra.mxu0 0
      %4385 = vmatprep.subr.bf16.mxu0 0
      %4386 = vmatpush1.bf16.msra.mxu0 0
      %4387 = vmatprep.subr.bf16.mxu0 0
      %4388 = vmatpush1.bf16.msra.mxu0 0
      %4389 = vmatprep.subr.bf16.mxu0 0
      %4390 = vmatpush1.bf16.msra.mxu0 0
      %4391 = vmatprep.subr.bf16.mxu0 0
      %4392 = vmatpush1.bf16.msra.mxu0 0
      %4393 = vmatprep.subr.bf16.mxu0 0
      %4394 = vmatpush1.bf16.msra.mxu0 0
      %4395 = vmatprep.subr.bf16.mxu0 0
      %4396 = vmatpush1.bf16.msra.mxu0 0
      %4397 = vmatprep.mubr.bf16.mxu0 0
      %4398 = vmatmul.mubr.bf16.gmra.mrb[0].mxu0 %v4351
      %v4399 = vpop.f32.mrb[0].mxu0
      %v4400 = vadd.f32 0.0, %v4399
      %v4401 = vpop.f32.mrb[0].mxu0
      %v4402 = vadd.f32 0.0, %v4401
      %v4403 = vpop.f32.mrb[0].mxu0
      %v4404 = vpop.f32.mrb[0].mxu0
      %4405 = vdwg.mxu0
      %4406 = vmatprep.subr.bf16.mxu0 %v4363
      %4407 = vmatpush1.bf16.msra.mxu0 %v4360
      %4408 = vmatprep.subr.bf16.mxu0 0
      %4409 = vmatpush1.bf16.msra.mxu0 0
      %4410 = vmatprep.subr.bf16.mxu0 0
      %4411 = vmatpush1.bf16.msra.mxu0 0
      %4412 = vmatprep.subr.bf16.mxu0 0
      %4413 = vmatpush1.bf16.msra.mxu0 0
      %4414 = vmatprep.subr.bf16.mxu0 0
      %4415 = vmatpush1.bf16.msra.mxu0 0
      %4416 = vmatprep.subr.bf16.mxu0 0
      %4417 = vmatpush1.bf16.msra.mxu0 0
      %4418 = vmatprep.subr.bf16.mxu0 0
      %4419 = vmatpush1.bf16.msra.mxu0 0
      %4420 = vmatprep.subr.bf16.mxu0 0
      %4421 = vmatpush1.bf16.msra.mxu0 0
      %4422 = vmatprep.subr.bf16.mxu0 0
      %4423 = vmatpush1.bf16.msra.mxu0 0
      %4424 = vmatprep.subr.bf16.mxu0 0
      %4425 = vmatpush1.bf16.msra.mxu0 0
      %4426 = vmatprep.subr.bf16.mxu0 0
      %4427 = vmatpush1.bf16.msra.mxu0 0
      %4428 = vmatprep.subr.bf16.mxu0 0
      %4429 = vmatpush1.bf16.msra.mxu0 0
      %4430 = vmatprep.subr.bf16.mxu0 0
      %4431 = vmatpush1.bf16.msra.mxu0 0
      %4432 = vmatprep.subr.bf16.mxu0 0
      %4433 = vmatpush1.bf16.msra.mxu0 0
      %4434 = vmatprep.subr.bf16.mxu0 0
      %4435 = vmatpush1.bf16.msra.mxu0 0
      %4436 = vmatprep.subr.bf16.mxu0 0
      %4437 = vmatpush1.bf16.msra.mxu0 0
      %4438 = vmatprep.mubr.bf16.mxu0 0
      %4439 = vmatmul.mubr.bf16.gmra.mrb[0].mxu0 %v4351
      %v4440 = vpop.f32.mrb[0].mxu0
      %v4441 = vadd.f32 0.0, %v4440
      %v4442 = vpop.f32.mrb[0].mxu0
      %v4443 = vadd.f32 0.0, %v4442
      %v4444 = vpop.f32.mrb[0].mxu0
      %v4445 = vpop.f32.mrb[0].mxu0
      %4446 = vdwg.mxu0
      %v4447 = vadd.f32 %v4324, %v4400
      %v4448 = vadd.f32 %v4325, %v4402
      %v4449 = vadd.f32 %v4326, %v4441
      %v4450 = vadd.f32 %v4327, %v4443
      %4451 = vrot.lane.b32.xlu0 %v3487, 111
      %v4452 = vpop.permute.xlu0 %4451
      %4453 = vrot.lane.b32.xlu0 %v3488, 111
      %v4454 = vpop.permute.xlu0 %4453
      %4455 = vrot.lane.b32.xlu0 %v3489, 111
      %v4456 = vpop.permute.xlu0 %4455
      %4457 = vrot.lane.b32.xlu0 %v3490, 111
      %v4458 = vpop.permute.xlu0 %4457
      %v4459 = vsel %vm2634, %v4456, %v4458
      %v4460 = vsel %vm2634, %v4454, %v4456
      %v4461 = vsel %vm2634, %v4452, %v4454
      %v4462 = vsel %vm2634, %v4458, %v4452
      %v4463 = vmul.f32 %v4461, %v2645
      %v4464 = vmul.f32 %v4460, %v2649
      %v4465 = vmul.f32 %v4459, %v2653
      %v4466 = vmul.f32 %v4462, %v2657
      %s4467 = scalar_lea.vmem %s9, 32
      %v4468 = vld [vmem:[%s4467] sm:$0xf]
      %v4469 = vpack.c.bf16 %v4463, %v4463
      %v4470 = vpack.c.bf16 %v4464, %v4464
      %v4471 = vpack.c.bf16 %v4465, %v4465
      %v4472 = vpack.c.bf16 %v4466, %v4466
      %v4474 = vsel %vm3534, %v4468, 0
      %v4477 = vsel %vm750, %v4469, 0
      %v4480 = vsel %vm750, %v4470, 0
      %v4483 = vsel %vm750, %v4471, 0
      %v4486 = vsel %vm750, %v4472, 0
      %4488 = vmatprep.subr.bf16.mxu0 %v4480
      %4489 = vmatpush1.bf16.msra.mxu0 %v4477
      %4490 = vmatprep.subr.bf16.mxu0 0
      %4491 = vmatpush1.bf16.msra.mxu0 0
      %4492 = vmatprep.subr.bf16.mxu0 0
      %4493 = vmatpush1.bf16.msra.mxu0 0
      %4494 = vmatprep.subr.bf16.mxu0 0
      %4495 = vmatpush1.bf16.msra.mxu0 0
      %4496 = vmatprep.subr.bf16.mxu0 0
      %4497 = vmatpush1.bf16.msra.mxu0 0
      %4498 = vmatprep.subr.bf16.mxu0 0
      %4499 = vmatpush1.bf16.msra.mxu0 0
      %4500 = vmatprep.subr.bf16.mxu0 0
      %4501 = vmatpush1.bf16.msra.mxu0 0
      %4502 = vmatprep.subr.bf16.mxu0 0
      %4503 = vmatpush1.bf16.msra.mxu0 0
      %4504 = vmatprep.subr.bf16.mxu0 0
      %4505 = vmatpush1.bf16.msra.mxu0 0
      %4506 = vmatprep.subr.bf16.mxu0 0
      %4507 = vmatpush1.bf16.msra.mxu0 0
      %4508 = vmatprep.subr.bf16.mxu0 0
      %4509 = vmatpush1.bf16.msra.mxu0 0
      %4510 = vmatprep.subr.bf16.mxu0 0
      %4511 = vmatpush1.bf16.msra.mxu0 0
      %4512 = vmatprep.subr.bf16.mxu0 0
      %4513 = vmatpush1.bf16.msra.mxu0 0
      %4514 = vmatprep.subr.bf16.mxu0 0
      %4515 = vmatpush1.bf16.msra.mxu0 0
      %4516 = vmatprep.subr.bf16.mxu0 0
      %4517 = vmatpush1.bf16.msra.mxu0 0
      %4518 = vmatprep.subr.bf16.mxu0 0
      %4519 = vmatpush1.bf16.msra.mxu0 0
      %4520 = vmatprep.mubr.bf16.mxu0 0
      %4521 = vmatmul.mubr.bf16.gmra.mrb[0].mxu0 %v4474
      %v4522 = vpop.f32.mrb[0].mxu0
      %v4523 = vadd.f32 0.0, %v4522
      %v4524 = vpop.f32.mrb[0].mxu0
      %v4525 = vadd.f32 0.0, %v4524
      %v4526 = vpop.f32.mrb[0].mxu0
      %v4527 = vpop.f32.mrb[0].mxu0
      %4528 = vdwg.mxu0
      %4529 = vmatprep.subr.bf16.mxu0 %v4486
      %4530 = vmatpush1.bf16.msra.mxu0 %v4483
      %4531 = vmatprep.subr.bf16.mxu0 0
      %4532 = vmatpush1.bf16.msra.mxu0 0
      %4533 = vmatprep.subr.bf16.mxu0 0
      %4534 = vmatpush1.bf16.msra.mxu0 0
      %4535 = vmatprep.subr.bf16.mxu0 0
      %4536 = vmatpush1.bf16.msra.mxu0 0
      %4537 = vmatprep.subr.bf16.mxu0 0
      %4538 = vmatpush1.bf16.msra.mxu0 0
      %4539 = vmatprep.subr.bf16.mxu0 0
      %4540 = vmatpush1.bf16.msra.mxu0 0
      %4541 = vmatprep.subr.bf16.mxu0 0
      %4542 = vmatpush1.bf16.msra.mxu0 0
      %4543 = vmatprep.subr.bf16.mxu0 0
      %4544 = vmatpush1.bf16.msra.mxu0 0
      %4545 = vmatprep.subr.bf16.mxu0 0
      %4546 = vmatpush1.bf16.msra.mxu0 0
      %4547 = vmatprep.subr.bf16.mxu0 0
      %4548 = vmatpush1.bf16.msra.mxu0 0
      %4549 = vmatprep.subr.bf16.mxu0 0
      %4550 = vmatpush1.bf16.msra.mxu0 0
      %4551 = vmatprep.subr.bf16.mxu0 0
      %4552 = vmatpush1.bf16.msra.mxu0 0
      %4553 = vmatprep.subr.bf16.mxu0 0
      %4554 = vmatpush1.bf16.msra.mxu0 0
      %4555 = vmatprep.subr.bf16.mxu0 0
      %4556 = vmatpush1.bf16.msra.mxu0 0
      %4557 = vmatprep.subr.bf16.mxu0 0
      %4558 = vmatpush1.bf16.msra.mxu0 0
      %4559 = vmatprep.subr.bf16.mxu0 0
      %4560 = vmatpush1.bf16.msra.mxu0 0
      %4561 = vmatprep.mubr.bf16.mxu0 0
      %4562 = vmatmul.mubr.bf16.gmra.mrb[0].mxu0 %v4474
      %v4563 = vpop.f32.mrb[0].mxu0
      %v4564 = vadd.f32 0.0, %v4563
      %v4565 = vpop.f32.mrb[0].mxu0
      %v4566 = vadd.f32 0.0, %v4565
      %v4567 = vpop.f32.mrb[0].mxu0
      %v4568 = vpop.f32.mrb[0].mxu0
      %4569 = vdwg.mxu0
      %v4570 = vadd.f32 %v4447, %v4523
      %v4571 = vadd.f32 %v4448, %v4525
      %v4572 = vadd.f32 %v4449, %v4564
      %v4573 = vadd.f32 %v4450, %v4566
      %v4574 = vld [vmem:[%s10] sm:$0xff]
      %4576 = vset.pattern.permute.xlu0 0
      %4577 = vperm.xlu0 %4576, %v4574
      %v4578 = vpop.permute.xlu0 %4577
      %v4580 = vadd.f32 %v4570, %v4578
      %v4581 = vadd.f32 %v4571, %v4578
      %v4582 = vadd.f32 %v4572, %v4578
      %v4583 = vadd.f32 %v4573, %v4578
      %v4584 = vld [vmem:[%s11] sm:$0xf]
      %v4585 = vpack.c.bf16 %v738, %v738
      %v4586 = vpack.c.bf16 %v746, %v746
      %v4587 = vpack.c.bf16 %v739, %v739
      %v4588 = vpack.c.bf16 %v747, %v747
      %v4589 = vld [vmem:[%s12] sm:$0xff]
      %4591 = vset.pattern.permute.xlu0 0
      %4592 = vperm.xlu0 %4591, %v4589
      %v4593 = vpop.permute.xlu0 %4592
      %v4596 = vsel %vm1589, %v4584, 0
      %v4599 = vsel %vm946, %v4585, 0
      %v4602 = vsel %vm946, %v4586, 0
      %v4605 = vsel %vm946, %v4587, 0
      %v4608 = vsel %vm946, %v4588, 0
      %4610 = vmatprep.subr.bf16.mxu0 %v4602
      %4611 = vmatpush1.bf16.msra.mxu0 %v4599
      %4612 = vmatprep.subr.bf16.mxu0 0
      %4613 = vmatpush1.bf16.msra.mxu0 0
      %4614 = vmatprep.subr.bf16.mxu0 0
      %4615 = vmatpush1.bf16.msra.mxu0 0
      %4616 = vmatprep.subr.bf16.mxu0 0
      %4617 = vmatpush1.bf16.msra.mxu0 0
      %4618 = vmatprep.subr.bf16.mxu0 0
      %4619 = vmatpush1.bf16.msra.mxu0 0
      %4620 = vmatprep.subr.bf16.mxu0 0
      %4621 = vmatpush1.bf16.msra.mxu0 0
      %4622 = vmatprep.subr.bf16.mxu0 0
      %4623 = vmatpush1.bf16.msra.mxu0 0
      %4624 = vmatprep.subr.bf16.mxu0 0
      %4625 = vmatpush1.bf16.msra.mxu0 0
      %4626 = vmatprep.subr.bf16.mxu0 0
      %4627 = vmatpush1.bf16.msra.mxu0 0
      %4628 = vmatprep.subr.bf16.mxu0 0
      %4629 = vmatpush1.bf16.msra.mxu0 0
      %4630 = vmatprep.subr.bf16.mxu0 0
      %4631 = vmatpush1.bf16.msra.mxu0 0
      %4632 = vmatprep.subr.bf16.mxu0 0
      %4633 = vmatpush1.bf16.msra.mxu0 0
      %4634 = vmatprep.subr.bf16.mxu0 0
      %4635 = vmatpush1.bf16.msra.mxu0 0
      %4636 = vmatprep.subr.bf16.mxu0 0
      %4637 = vmatpush1.bf16.msra.mxu0 0
      %4638 = vmatprep.subr.bf16.mxu0 0
      %4639 = vmatpush1.bf16.msra.mxu0 0
      %4640 = vmatprep.subr.bf16.mxu0 0
      %4641 = vmatpush1.bf16.msra.mxu0 0
      %4642 = vmatprep.mubr.bf16.mxu0 0
      %4643 = vmatmul.mubr.bf16.gmra.mrb[0].mxu0 %v4596
      %v4644 = vpop.f32.mrb[0].mxu0
      %v4645 = vadd.f32 %v4593, %v4644
      %v4646 = vpop.f32.mrb[0].mxu0
      %v4647 = vadd.f32 %v4593, %v4646
      %v4648 = vpop.f32.mrb[0].mxu0
      %v4649 = vpop.f32.mrb[0].mxu0
      %4650 = vdwg.mxu0
      %4651 = vmatprep.subr.bf16.mxu0 %v4608
      %4652 = vmatpush1.bf16.msra.mxu0 %v4605
      %4653 = vmatprep.subr.bf16.mxu0 0
      %4654 = vmatpush1.bf16.msra.mxu0 0
      %4655 = vmatprep.subr.bf16.mxu0 0
      %4656 = vmatpush1.bf16.msra.mxu0 0
      %4657 = vmatprep.subr.bf16.mxu0 0
      %4658 = vmatpush1.bf16.msra.mxu0 0
      %4659 = vmatprep.subr.bf16.mxu0 0
      %4660 = vmatpush1.bf16.msra.mxu0 0
      %4661 = vmatprep.subr.bf16.mxu0 0
      %4662 = vmatpush1.bf16.msra.mxu0 0
      %4663 = vmatprep.subr.bf16.mxu0 0
      %4664 = vmatpush1.bf16.msra.mxu0 0
      %4665 = vmatprep.subr.bf16.mxu0 0
      %4666 = vmatpush1.bf16.msra.mxu0 0
      %4667 = vmatprep.subr.bf16.mxu0 0
      %4668 = vmatpush1.bf16.msra.mxu0 0
      %4669 = vmatprep.subr.bf16.mxu0 0
      %4670 = vmatpush1.bf16.msra.mxu0 0
      %4671 = vmatprep.subr.bf16.mxu0 0
      %4672 = vmatpush1.bf16.msra.mxu0 0
      %4673 = vmatprep.subr.bf16.mxu0 0
      %4674 = vmatpush1.bf16.msra.mxu0 0
      %4675 = vmatprep.subr.bf16.mxu0 0
      %4676 = vmatpush1.bf16.msra.mxu0 0
      %4677 = vmatprep.subr.bf16.mxu0 0
      %4678 = vmatpush1.bf16.msra.mxu0 0
      %4679 = vmatprep.subr.bf16.mxu0 0
      %4680 = vmatpush1.bf16.msra.mxu0 0
      %4681 = vmatprep.subr.bf16.mxu0 0
      %4682 = vmatpush1.bf16.msra.mxu0 0
      %4683 = vmatprep.mubr.bf16.mxu0 0
      %4684 = vmatmul.mubr.bf16.gmra.mrb[0].mxu0 %v4596
      %v4685 = vpop.f32.mrb[0].mxu0
      %v4686 = vadd.f32 %v4593, %v4685
      %v4687 = vpop.f32.mrb[0].mxu0
      %v4688 = vadd.f32 %v4593, %v4687
      %v4689 = vpop.f32.mrb[0].mxu0
      %v4690 = vpop.f32.mrb[0].mxu0
      %4691 = vdwg.mxu0
      %v4692 = vadd.f32 %v4580, %v4645
      %v4693 = vadd.f32 %v4581, %v4647
      %v4694 = vadd.f32 %v4582, %v4686
      %v4695 = vadd.f32 %v4583, %v4688
      %v4696 = vld [vmem:[%s13] sm:$0xff]
      %v4697 = vld [vmem:[%s13 + $0x8] sm:$0xff]
      %v4698 = vld [vmem:[%s13 + $0x10] sm:$0xff]
      %v4699 = vld [vmem:[%s13 + $0x18] sm:$0xff]
      %v4700 = vld [vmem:[%s14] sm:$0xff]
      %v4701 = vld [vmem:[%s14 + $0x8] sm:$0xff]
      %v4702 = vld [vmem:[%s14 + $0x10] sm:$0xff]
      %v4703 = vld [vmem:[%s14 + $0x18] sm:$0xff]
      %v4704 = vrot.slane %v4692, 4
      %v4705 = vadd.f32 %v4692, %v4704
      %v4706 = vrot.slane %v4705, 2
      %v4707 = vadd.f32 %v4705, %v4706
      %v4708 = vrot.slane %v4707, 1
      %v4709 = vadd.f32 %v4707, %v4708
      %v4710 = vrot.slane %v4693, 4
      %v4711 = vadd.f32 %v4693, %v4710
      %v4712 = vrot.slane %v4711, 2
      %v4713 = vadd.f32 %v4711, %v4712
      %v4714 = vrot.slane %v4713, 1
      %v4715 = vadd.f32 %v4713, %v4714
      %v4716 = vrot.slane %v4694, 4
      %v4717 = vadd.f32 %v4694, %v4716
      %v4718 = vrot.slane %v4717, 2
      %v4719 = vadd.f32 %v4717, %v4718
      %v4720 = vrot.slane %v4719, 1
      %v4721 = vadd.f32 %v4719, %v4720
      %v4722 = vrot.slane %v4695, 4
      %v4723 = vadd.f32 %v4695, %v4722
      %v4724 = vrot.slane %v4723, 2
      %v4725 = vadd.f32 %v4723, %v4724
      %v4726 = vrot.slane %v4725, 1
      %v4727 = vadd.f32 %v4725, %v4726
      %4728 = vmatprep.subr.mxu0 %v795
      %4729 = vmatpush1.xpose.msra.mxu0 %v787
      %4730 = vmatprep.subr.mxu0 0.0
      %4731 = vmatpush1.xpose.msra.mxu0 0.0
      %4732 = vmatprep.subr.mxu0 0.0
      %4733 = vmatpush1.xpose.msra.mxu0 0.0
      %4734 = vmatprep.subr.mxu0 0.0
      %4735 = vmatpush1.xpose.msra.mxu0 0.0
      %4736 = vmatprep.subr.mxu0 0.0
      %4737 = vmatpush1.xpose.msra.mxu0 0.0
      %4738 = vmatprep.subr.mxu0 0.0
      %4739 = vmatpush1.xpose.msra.mxu0 0.0
      %4740 = vmatprep.subr.mxu0 0.0
      %4741 = vmatpush1.xpose.msra.mxu0 0.0
      %4742 = vmatprep.subr.mxu0 0.0
      %4743 = vmatpush1.xpose.msra.mxu0 0.0
      %4744 = vmatprep.subr.mxu0 0.0
      %4745 = vmatpush1.xpose.msra.mxu0 0.0
      %4746 = vmatprep.subr.mxu0 0.0
      %4747 = vmatpush1.xpose.msra.mxu0 0.0
      %4748 = vmatprep.subr.mxu0 0.0
      %4749 = vmatpush1.xpose.msra.mxu0 0.0
      %4750 = vmatprep.subr.mxu0 0.0
      %4751 = vmatpush1.xpose.msra.mxu0 0.0
      %4752 = vmatprep.subr.mxu0 0.0
      %4753 = vmatpush1.xpose.msra.mxu0 0.0
      %4754 = vmatprep.subr.mxu0 0.0
      %4755 = vmatpush1.xpose.msra.mxu0 0.0
      %4756 = vmatprep.subr.mxu0 0.0
      %4757 = vmatpush1.xpose.msra.mxu0 0.0
      %4758 = vmatprep.subr.mxu0 0.0
      %4759 = vmatpush1.xpose.msra.mxu0 0.0
      %4760 = vmatprep.subr.mxu0 0.0
      %4761 = vmatpush1.xpose.msra.mxu0 0.0
      %4762 = vmatprep.subr.mxu0 0.0
      %4763 = vmatpush1.xpose.msra.mxu0 0.0
      %4764 = vmatprep.subr.mxu0 0.0
      %4765 = vmatpush1.xpose.msra.mxu0 0.0
      %4766 = vmatprep.subr.mxu0 0.0
      %4767 = vmatpush1.xpose.msra.mxu0 0.0
      %4768 = vmatprep.subr.mxu0 0.0
      %4769 = vmatpush1.xpose.msra.mxu0 0.0
      %4770 = vmatprep.subr.mxu0 0.0
      %4771 = vmatpush1.xpose.msra.mxu0 0.0
      %4772 = vmatprep.subr.mxu0 0.0
      %4773 = vmatpush1.xpose.msra.mxu0 0.0
      %4774 = vmatprep.subr.mxu0 0.0
      %4775 = vmatpush1.xpose.msra.mxu0 0.0
      %4776 = vmatprep.subr.mxu0 0.0
      %4777 = vmatpush1.xpose.msra.mxu0 0.0
      %4778 = vmatprep.subr.mxu0 0.0
      %4779 = vmatpush1.xpose.msra.mxu0 0.0
      %4780 = vmatprep.subr.mxu0 0.0
      %4781 = vmatpush1.xpose.msra.mxu0 0.0
      %4782 = vmatprep.subr.mxu0 0.0
      %4783 = vmatpush1.xpose.msra.mxu0 0.0
      %4784 = vmatprep.subr.mxu0 0.0
      %4785 = vmatpush1.xpose.msra.mxu0 0.0
      %4786 = vmatprep.subr.mxu0 0.0
      %4787 = vmatpush1.xpose.msra.mxu0 0.0
      %4788 = vmatprep.subr.mxu0 0.0
      %4789 = vmatpush1.xpose.msra.mxu0 0.0
      %4790 = vmatprep.subr.mxu0 0.0
      %4791 = vmatpush1.xpose.msra.mxu0 0.0
      %4792 = vmatprep.mubr.f32.mxu0 %v4715
      %4793 = vmatmul.mubr.f32.gmra.mrb[0].mxu0 %v4709
      %v4794 = vpop.f32.mrb[0].mxu0
      %v4795 = vadd.f32 0.0, %v4794
      %v4796 = vpop.f32.mrb[0].mxu0
      %4797 = vdwg.mxu0
      %4798 = vmatprep.subr.mxu0 %v796
      %4799 = vmatpush1.xpose.msra.mxu0 %v794
      %4800 = vmatprep.subr.mxu0 0.0
      %4801 = vmatpush1.xpose.msra.mxu0 0.0
      %4802 = vmatprep.subr.mxu0 0.0
      %4803 = vmatpush1.xpose.msra.mxu0 0.0
      %4804 = vmatprep.subr.mxu0 0.0
      %4805 = vmatpush1.xpose.msra.mxu0 0.0
      %4806 = vmatprep.subr.mxu0 0.0
      %4807 = vmatpush1.xpose.msra.mxu0 0.0
      %4808 = vmatprep.subr.mxu0 0.0
      %4809 = vmatpush1.xpose.msra.mxu0 0.0
      %4810 = vmatprep.subr.mxu0 0.0
      %4811 = vmatpush1.xpose.msra.mxu0 0.0
      %4812 = vmatprep.subr.mxu0 0.0
      %4813 = vmatpush1.xpose.msra.mxu0 0.0
      %4814 = vmatprep.subr.mxu0 0.0
      %4815 = vmatpush1.xpose.msra.mxu0 0.0
      %4816 = vmatprep.subr.mxu0 0.0
      %4817 = vmatpush1.xpose.msra.mxu0 0.0
      %4818 = vmatprep.subr.mxu0 0.0
      %4819 = vmatpush1.xpose.msra.mxu0 0.0
      %4820 = vmatprep.subr.mxu0 0.0
      %4821 = vmatpush1.xpose.msra.mxu0 0.0
      %4822 = vmatprep.subr.mxu0 0.0
      %4823 = vmatpush1.xpose.msra.mxu0 0.0
      %4824 = vmatprep.subr.mxu0 0.0
      %4825 = vmatpush1.xpose.msra.mxu0 0.0
      %4826 = vmatprep.subr.mxu0 0.0
      %4827 = vmatpush1.xpose.msra.mxu0 0.0
      %4828 = vmatprep.subr.mxu0 0.0
      %4829 = vmatpush1.xpose.msra.mxu0 0.0
      %4830 = vmatprep.subr.mxu0 0.0
      %4831 = vmatpush1.xpose.msra.mxu0 0.0
      %4832 = vmatprep.subr.mxu0 0.0
      %4833 = vmatpush1.xpose.msra.mxu0 0.0
      %4834 = vmatprep.subr.mxu0 0.0
      %4835 = vmatpush1.xpose.msra.mxu0 0.0
      %4836 = vmatprep.subr.mxu0 0.0
      %4837 = vmatpush1.xpose.msra.mxu0 0.0
      %4838 = vmatprep.subr.mxu0 0.0
      %4839 = vmatpush1.xpose.msra.mxu0 0.0
      %4840 = vmatprep.subr.mxu0 0.0
      %4841 = vmatpush1.xpose.msra.mxu0 0.0
      %4842 = vmatprep.subr.mxu0 0.0
      %4843 = vmatpush1.xpose.msra.mxu0 0.0
      %4844 = vmatprep.subr.mxu0 0.0
      %4845 = vmatpush1.xpose.msra.mxu0 0.0
      %4846 = vmatprep.subr.mxu0 0.0
      %4847 = vmatpush1.xpose.msra.mxu0 0.0
      %4848 = vmatprep.subr.mxu0 0.0
      %4849 = vmatpush1.xpose.msra.mxu0 0.0
      %4850 = vmatprep.subr.mxu0 0.0
      %4851 = vmatpush1.xpose.msra.mxu0 0.0
      %4852 = vmatprep.subr.mxu0 0.0
      %4853 = vmatpush1.xpose.msra.mxu0 0.0
      %4854 = vmatprep.subr.mxu0 0.0
      %4855 = vmatpush1.xpose.msra.mxu0 0.0
      %4856 = vmatprep.subr.mxu0 0.0
      %4857 = vmatpush1.xpose.msra.mxu0 0.0
      %4858 = vmatprep.subr.mxu0 0.0
      %4859 = vmatpush1.xpose.msra.mxu0 0.0
      %4860 = vmatprep.subr.mxu0 0.0
      %4861 = vmatpush1.xpose.msra.mxu0 0.0
      %4862 = vmatprep.mubr.f32.mxu0 %v4727
      %4863 = vmatmul.mubr.f32.gmra.mrb[0].mxu0 %v4721
      %v4864 = vpop.f32.mrb[0].mxu0
      %v4865 = vadd.f32 %v4795, %v4864
      %v4866 = vpop.f32.mrb[0].mxu0
      %4867 = vdwg.mxu0
      %v4868 = vmul.f32 %v4865, 0.00048828125
      %v4870 = vsel %vm942, %v4868, 0
      %4872 = vmatprep.subr.mxu0 %v949
      %4873 = vmatpush1.msra.mxu0 %v947
      %4874 = vmatprep.subr.mxu0 0.0
      %4875 = vmatpush1.msra.mxu0 0.0
      %4876 = vmatprep.subr.mxu0 0.0
      %4877 = vmatpush1.msra.mxu0 0.0
      %4878 = vmatprep.subr.mxu0 0.0
      %4879 = vmatpush1.msra.mxu0 0.0
      %4880 = vmatprep.subr.mxu0 0.0
      %4881 = vmatpush1.msra.mxu0 0.0
      %4882 = vmatprep.subr.mxu0 0.0
      %4883 = vmatpush1.msra.mxu0 0.0
      %4884 = vmatprep.subr.mxu0 0.0
      %4885 = vmatpush1.msra.mxu0 0.0
      %4886 = vmatprep.subr.mxu0 0.0
      %4887 = vmatpush1.msra.mxu0 0.0
      %4888 = vmatprep.subr.mxu0 0.0
      %4889 = vmatpush1.msra.mxu0 0.0
      %4890 = vmatprep.subr.mxu0 0.0
      %4891 = vmatpush1.msra.mxu0 0.0
      %4892 = vmatprep.subr.mxu0 0.0
      %4893 = vmatpush1.msra.mxu0 0.0
      %4894 = vmatprep.subr.mxu0 0.0
      %4895 = vmatpush1.msra.mxu0 0.0
      %4896 = vmatprep.subr.mxu0 0.0
      %4897 = vmatpush1.msra.mxu0 0.0
      %4898 = vmatprep.subr.mxu0 0.0
      %4899 = vmatpush1.msra.mxu0 0.0
      %4900 = vmatprep.subr.mxu0 0.0
      %4901 = vmatpush1.msra.mxu0 0.0
      %4902 = vmatprep.subr.mxu0 0.0
      %4903 = vmatpush1.msra.mxu0 0.0
      %4904 = vmatprep.subr.mxu0 0.0
      %4905 = vmatpush1.msra.mxu0 0.0
      %4906 = vmatprep.subr.mxu0 0.0
      %4907 = vmatpush1.msra.mxu0 0.0
      %4908 = vmatprep.subr.mxu0 0.0
      %4909 = vmatpush1.msra.mxu0 0.0
      %4910 = vmatprep.subr.mxu0 0.0
      %4911 = vmatpush1.msra.mxu0 0.0
      %4912 = vmatprep.subr.mxu0 0.0
      %4913 = vmatpush1.msra.mxu0 0.0
      %4914 = vmatprep.subr.mxu0 0.0
      %4915 = vmatpush1.msra.mxu0 0.0
      %4916 = vmatprep.subr.mxu0 0.0
      %4917 = vmatpush1.msra.mxu0 0.0
      %4918 = vmatprep.subr.mxu0 0.0
      %4919 = vmatpush1.msra.mxu0 0.0
      %4920 = vmatprep.subr.mxu0 0.0
      %4921 = vmatpush1.msra.mxu0 0.0
      %4922 = vmatprep.subr.mxu0 0.0
      %4923 = vmatpush1.msra.mxu0 0.0
      %4924 = vmatprep.subr.mxu0 0.0
      %4925 = vmatpush1.msra.mxu0 0.0
      %4926 = vmatprep.subr.mxu0 0.0
      %4927 = vmatpush1.msra.mxu0 0.0
      %4928 = vmatprep.subr.mxu0 0.0
      %4929 = vmatpush1.msra.mxu0 0.0
      %4930 = vmatprep.subr.mxu0 0.0
      %4931 = vmatpush1.msra.mxu0 0.0
      %4932 = vmatprep.subr.mxu0 0.0
      %4933 = vmatpush1.msra.mxu0 0.0
      %4934 = vmatprep.subr.mxu0 0.0
      %4935 = vmatpush1.msra.mxu0 0.0
      %4936 = vmatprep.mubr.f32.mxu0 0.0
      %4937 = vmatmul.mubr.f32.gmra.mrb[0].mxu0 %v4870
      %v4938 = vpop.f32.mrb[0].mxu0
      %v4939 = vadd.f32 0.0, %v4938
      %v4940 = vpop.f32.mrb[0].mxu0
      %v4941 = vadd.f32 0.0, %v4940
      %4942 = vdwg.mxu0
      %4943 = vmatprep.subr.mxu0 %v953
      %4944 = vmatpush1.msra.mxu0 %v951
      %4945 = vmatprep.subr.mxu0 0.0
      %4946 = vmatpush1.msra.mxu0 0.0
      %4947 = vmatprep.subr.mxu0 0.0
      %4948 = vmatpush1.msra.mxu0 0.0
      %4949 = vmatprep.subr.mxu0 0.0
      %4950 = vmatpush1.msra.mxu0 0.0
      %4951 = vmatprep.subr.mxu0 0.0
      %4952 = vmatpush1.msra.mxu0 0.0
      %4953 = vmatprep.subr.mxu0 0.0
      %4954 = vmatpush1.msra.mxu0 0.0
      %4955 = vmatprep.subr.mxu0 0.0
      %4956 = vmatpush1.msra.mxu0 0.0
      %4957 = vmatprep.subr.mxu0 0.0
      %4958 = vmatpush1.msra.mxu0 0.0
      %4959 = vmatprep.subr.mxu0 0.0
      %4960 = vmatpush1.msra.mxu0 0.0
      %4961 = vmatprep.subr.mxu0 0.0
      %4962 = vmatpush1.msra.mxu0 0.0
      %4963 = vmatprep.subr.mxu0 0.0
      %4964 = vmatpush1.msra.mxu0 0.0
      %4965 = vmatprep.subr.mxu0 0.0
      %4966 = vmatpush1.msra.mxu0 0.0
      %4967 = vmatprep.subr.mxu0 0.0
      %4968 = vmatpush1.msra.mxu0 0.0
      %4969 = vmatprep.subr.mxu0 0.0
      %4970 = vmatpush1.msra.mxu0 0.0
      %4971 = vmatprep.subr.mxu0 0.0
      %4972 = vmatpush1.msra.mxu0 0.0
      %4973 = vmatprep.subr.mxu0 0.0
      %4974 = vmatpush1.msra.mxu0 0.0
      %4975 = vmatprep.subr.mxu0 0.0
      %4976 = vmatpush1.msra.mxu0 0.0
      %4977 = vmatprep.subr.mxu0 0.0
      %4978 = vmatpush1.msra.mxu0 0.0
      %4979 = vmatprep.subr.mxu0 0.0
      %4980 = vmatpush1.msra.mxu0 0.0
      %4981 = vmatprep.subr.mxu0 0.0
      %4982 = vmatpush1.msra.mxu0 0.0
      %4983 = vmatprep.subr.mxu0 0.0
      %4984 = vmatpush1.msra.mxu0 0.0
      %4985 = vmatprep.subr.mxu0 0.0
      %4986 = vmatpush1.msra.mxu0 0.0
      %4987 = vmatprep.subr.mxu0 0.0
      %4988 = vmatpush1.msra.mxu0 0.0
      %4989 = vmatprep.subr.mxu0 0.0
      %4990 = vmatpush1.msra.mxu0 0.0
      %4991 = vmatprep.subr.mxu0 0.0
      %4992 = vmatpush1.msra.mxu0 0.0
      %4993 = vmatprep.subr.mxu0 0.0
      %4994 = vmatpush1.msra.mxu0 0.0
      %4995 = vmatprep.subr.mxu0 0.0
      %4996 = vmatpush1.msra.mxu0 0.0
      %4997 = vmatprep.subr.mxu0 0.0
      %4998 = vmatpush1.msra.mxu0 0.0
      %4999 = vmatprep.subr.mxu0 0.0
      %5000 = vmatpush1.msra.mxu0 0.0
      %5001 = vmatprep.subr.mxu0 0.0
      %5002 = vmatpush1.msra.mxu0 0.0
      %5003 = vmatprep.subr.mxu0 0.0
      %5004 = vmatpush1.msra.mxu0 0.0
      %5005 = vmatprep.subr.mxu0 0.0
      %5006 = vmatpush1.msra.mxu0 0.0
      %5007 = vmatprep.mubr.f32.mxu0 0.0
      %5008 = vmatmul.mubr.f32.gmra.mrb[0].mxu0 %v4870
      %v5009 = vpop.f32.mrb[0].mxu0
      %v5010 = vadd.f32 0.0, %v5009
      %v5011 = vpop.f32.mrb[0].mxu0
      %v5012 = vadd.f32 0.0, %v5011
      %5013 = vdwg.mxu0
      %v5014 = vlaneseq
      %v5015 = vshrl.u32 %v5014, 7
      %v5016 = vsub.s32 0, %v5015
      %v5017 = vrot.slane %v4939, %v5016
      %v5018 = vlaneseq
      %v5019 = vshrl.u32 %v5018, 7
      %v5020 = vsub.s32 0, %v5019
      %v5021 = vrot.slane %v4941, %v5020
      %v5022 = vlaneseq
      %v5023 = vshrl.u32 %v5022, 7
      %v5024 = vsub.s32 0, %v5023
      %v5025 = vrot.slane %v5010, %v5024
      %v5026 = vlaneseq
      %v5027 = vshrl.u32 %v5026, 7
      %v5028 = vsub.s32 0, %v5027
      %v5029 = vrot.slane %v5012, %v5028
      %v5030 = vsub.f32 %v4692, %v5017
      %v5031 = vsub.f32 %v4693, %v5021
      %v5032 = vsub.f32 %v4694, %v5025
      %v5033 = vsub.f32 %v4695, %v5029
      %v5034 = vmul.f32 %v5030, %v5030
      %v5035 = vmul.f32 %v5031, %v5031
      %v5036 = vmul.f32 %v5032, %v5032
      %v5037 = vmul.f32 %v5033, %v5033
      %v5038 = vrot.slane %v5034, 4
      %v5039 = vadd.f32 %v5034, %v5038
      %v5040 = vrot.slane %v5039, 2
      %v5041 = vadd.f32 %v5039, %v5040
      %v5042 = vrot.slane %v5041, 1
      %v5043 = vadd.f32 %v5041, %v5042
      %v5044 = vrot.slane %v5035, 4
      %v5045 = vadd.f32 %v5035, %v5044
      %v5046 = vrot.slane %v5045, 2
      %v5047 = vadd.f32 %v5045, %v5046
      %v5048 = vrot.slane %v5047, 1
      %v5049 = vadd.f32 %v5047, %v5048
      %v5050 = vrot.slane %v5036, 4
      %v5051 = vadd.f32 %v5036, %v5050
      %v5052 = vrot.slane %v5051, 2
      %v5053 = vadd.f32 %v5051, %v5052
      %v5054 = vrot.slane %v5053, 1
      %v5055 = vadd.f32 %v5053, %v5054
      %v5056 = vrot.slane %v5037, 4
      %v5057 = vadd.f32 %v5037, %v5056
      %v5058 = vrot.slane %v5057, 2
      %v5059 = vadd.f32 %v5057, %v5058
      %v5060 = vrot.slane %v5059, 1
      %v5061 = vadd.f32 %v5059, %v5060
      %5062 = vmatprep.subr.mxu0 %v795
      %5063 = vmatpush1.xpose.msra.mxu0 %v787
      %5064 = vmatprep.subr.mxu0 0.0
      %5065 = vmatpush1.xpose.msra.mxu0 0.0
      %5066 = vmatprep.subr.mxu0 0.0
      %5067 = vmatpush1.xpose.msra.mxu0 0.0
      %5068 = vmatprep.subr.mxu0 0.0
      %5069 = vmatpush1.xpose.msra.mxu0 0.0
      %5070 = vmatprep.subr.mxu0 0.0
      %5071 = vmatpush1.xpose.msra.mxu0 0.0
      %5072 = vmatprep.subr.mxu0 0.0
      %5073 = vmatpush1.xpose.msra.mxu0 0.0
      %5074 = vmatprep.subr.mxu0 0.0
      %5075 = vmatpush1.xpose.msra.mxu0 0.0
      %5076 = vmatprep.subr.mxu0 0.0
      %5077 = vmatpush1.xpose.msra.mxu0 0.0
      %5078 = vmatprep.subr.mxu0 0.0
      %5079 = vmatpush1.xpose.msra.mxu0 0.0
      %5080 = vmatprep.subr.mxu0 0.0
      %5081 = vmatpush1.xpose.msra.mxu0 0.0
      %5082 = vmatprep.subr.mxu0 0.0
      %5083 = vmatpush1.xpose.msra.mxu0 0.0
      %5084 = vmatprep.subr.mxu0 0.0
      %5085 = vmatpush1.xpose.msra.mxu0 0.0
      %5086 = vmatprep.subr.mxu0 0.0
      %5087 = vmatpush1.xpose.msra.mxu0 0.0
      %5088 = vmatprep.subr.mxu0 0.0
      %5089 = vmatpush1.xpose.msra.mxu0 0.0
      %5090 = vmatprep.subr.mxu0 0.0
      %5091 = vmatpush1.xpose.msra.mxu0 0.0
      %5092 = vmatprep.subr.mxu0 0.0
      %5093 = vmatpush1.xpose.msra.mxu0 0.0
      %5094 = vmatprep.subr.mxu0 0.0
      %5095 = vmatpush1.xpose.msra.mxu0 0.0
      %5096 = vmatprep.subr.mxu0 0.0
      %5097 = vmatpush1.xpose.msra.mxu0 0.0
      %5098 = vmatprep.subr.mxu0 0.0
      %5099 = vmatpush1.xpose.msra.mxu0 0.0
      %5100 = vmatprep.subr.mxu0 0.0
      %5101 = vmatpush1.xpose.msra.mxu0 0.0
      %5102 = vmatprep.subr.mxu0 0.0
      %5103 = vmatpush1.xpose.msra.mxu0 0.0
      %5104 = vmatprep.subr.mxu0 0.0
      %5105 = vmatpush1.xpose.msra.mxu0 0.0
      %5106 = vmatprep.subr.mxu0 0.0
      %5107 = vmatpush1.xpose.msra.mxu0 0.0
      %5108 = vmatprep.subr.mxu0 0.0
      %5109 = vmatpush1.xpose.msra.mxu0 0.0
      %5110 = vmatprep.subr.mxu0 0.0
      %5111 = vmatpush1.xpose.msra.mxu0 0.0
      %5112 = vmatprep.subr.mxu0 0.0
      %5113 = vmatpush1.xpose.msra.mxu0 0.0
      %5114 = vmatprep.subr.mxu0 0.0
      %5115 = vmatpush1.xpose.msra.mxu0 0.0
      %5116 = vmatprep.subr.mxu0 0.0
      %5117 = vmatpush1.xpose.msra.mxu0 0.0
      %5118 = vmatprep.subr.mxu0 0.0
      %5119 = vmatpush1.xpose.msra.mxu0 0.0
      %5120 = vmatprep.subr.mxu0 0.0
      %5121 = vmatpush1.xpose.msra.mxu0 0.0
      %5122 = vmatprep.subr.mxu0 0.0
      %5123 = vmatpush1.xpose.msra.mxu0 0.0
      %5124 = vmatprep.subr.mxu0 0.0
      %5125 = vmatpush1.xpose.msra.mxu0 0.0
      %5126 = vmatprep.mubr.f32.mxu0 %v5049
      %5127 = vmatmul.mubr.f32.gmra.mrb[0].mxu0 %v5043
      %v5128 = vpop.f32.mrb[0].mxu0
      %v5129 = vadd.f32 0.0, %v5128
      %v5130 = vpop.f32.mrb[0].mxu0
      %5131 = vdwg.mxu0
      %5132 = vmatprep.subr.mxu0 %v796
      %5133 = vmatpush1.xpose.msra.mxu0 %v794
      %5134 = vmatprep.subr.mxu0 0.0
      %5135 = vmatpush1.xpose.msra.mxu0 0.0
      %5136 = vmatprep.subr.mxu0 0.0
      %5137 = vmatpush1.xpose.msra.mxu0 0.0
      %5138 = vmatprep.subr.mxu0 0.0
      %5139 = vmatpush1.xpose.msra.mxu0 0.0
      %5140 = vmatprep.subr.mxu0 0.0
      %5141 = vmatpush1.xpose.msra.mxu0 0.0
      %5142 = vmatprep.subr.mxu0 0.0
      %5143 = vmatpush1.xpose.msra.mxu0 0.0
      %5144 = vmatprep.subr.mxu0 0.0
      %5145 = vmatpush1.xpose.msra.mxu0 0.0
      %5146 = vmatprep.subr.mxu0 0.0
      %5147 = vmatpush1.xpose.msra.mxu0 0.0
      %5148 = vmatprep.subr.mxu0 0.0
      %5149 = vmatpush1.xpose.msra.mxu0 0.0
      %5150 = vmatprep.subr.mxu0 0.0
      %5151 = vmatpush1.xpose.msra.mxu0 0.0
      %5152 = vmatprep.subr.mxu0 0.0
      %5153 = vmatpush1.xpose.msra.mxu0 0.0
      %5154 = vmatprep.subr.mxu0 0.0
      %5155 = vmatpush1.xpose.msra.mxu0 0.0
      %5156 = vmatprep.subr.mxu0 0.0
      %5157 = vmatpush1.xpose.msra.mxu0 0.0
      %5158 = vmatprep.subr.mxu0 0.0
      %5159 = vmatpush1.xpose.msra.mxu0 0.0
      %5160 = vmatprep.subr.mxu0 0.0
      %5161 = vmatpush1.xpose.msra.mxu0 0.0
      %5162 = vmatprep.subr.mxu0 0.0
      %5163 = vmatpush1.xpose.msra.mxu0 0.0
      %5164 = vmatprep.subr.mxu0 0.0
      %5165 = vmatpush1.xpose.msra.mxu0 0.0
      %5166 = vmatprep.subr.mxu0 0.0
      %5167 = vmatpush1.xpose.msra.mxu0 0.0
      %5168 = vmatprep.subr.mxu0 0.0
      %5169 = vmatpush1.xpose.msra.mxu0 0.0
      %5170 = vmatprep.subr.mxu0 0.0
      %5171 = vmatpush1.xpose.msra.mxu0 0.0
      %5172 = vmatprep.subr.mxu0 0.0
      %5173 = vmatpush1.xpose.msra.mxu0 0.0
      %5174 = vmatprep.subr.mxu0 0.0
      %5175 = vmatpush1.xpose.msra.mxu0 0.0
      %5176 = vmatprep.subr.mxu0 0.0
      %5177 = vmatpush1.xpose.msra.mxu0 0.0
      %5178 = vmatprep.subr.mxu0 0.0
      %5179 = vmatpush1.xpose.msra.mxu0 0.0
      %5180 = vmatprep.subr.mxu0 0.0
      %5181 = vmatpush1.xpose.msra.mxu0 0.0
      %5182 = vmatprep.subr.mxu0 0.0
      %5183 = vmatpush1.xpose.msra.mxu0 0.0
      %5184 = vmatprep.subr.mxu0 0.0
      %5185 = vmatpush1.xpose.msra.mxu0 0.0
      %5186 = vmatprep.subr.mxu0 0.0
      %5187 = vmatpush1.xpose.msra.mxu0 0.0
      %5188 = vmatprep.subr.mxu0 0.0
      %5189 = vmatpush1.xpose.msra.mxu0 0.0
      %5190 = vmatprep.subr.mxu0 0.0
      %5191 = vmatpush1.xpose.msra.mxu0 0.0
      %5192 = vmatprep.subr.mxu0 0.0
      %5193 = vmatpush1.xpose.msra.mxu0 0.0
      %5194 = vmatprep.subr.mxu0 0.0
      %5195 = vmatpush1.xpose.msra.mxu0 0.0
      %5196 = vmatprep.mubr.f32.mxu0 %v5061
      %5197 = vmatmul.mubr.f32.gmra.mrb[0].mxu0 %v5055
      %v5198 = vpop.f32.mrb[0].mxu0
      %v5199 = vadd.f32 %v5129, %v5198
      %v5200 = vpop.f32.mrb[0].mxu0
      %5201 = vdwg.mxu0
      %v5202 = vmul.f32 %v5199, 0.00048828125
      %v5203 = vadd.f32 %v5202, 1e-05
      %v5204 = vrsqrt.pop %v5203
      %v5206 = vsel %vm942, %v5204, 0
      %5208 = vmatprep.subr.mxu0 %v949
      %5209 = vmatpush1.msra.mxu0 %v947
      %5210 = vmatprep.subr.mxu0 0.0
      %5211 = vmatpush1.msra.mxu0 0.0
      %5212 = vmatprep.subr.mxu0 0.0
      %5213 = vmatpush1.msra.mxu0 0.0
      %5214 = vmatprep.subr.mxu0 0.0
      %5215 = vmatpush1.msra.mxu0 0.0
      %5216 = vmatprep.subr.mxu0 0.0
      %5217 = vmatpush1.msra.mxu0 0.0
      %5218 = vmatprep.subr.mxu0 0.0
      %5219 = vmatpush1.msra.mxu0 0.0
      %5220 = vmatprep.subr.mxu0 0.0
      %5221 = vmatpush1.msra.mxu0 0.0
      %5222 = vmatprep.subr.mxu0 0.0
      %5223 = vmatpush1.msra.mxu0 0.0
      %5224 = vmatprep.subr.mxu0 0.0
      %5225 = vmatpush1.msra.mxu0 0.0
      %5226 = vmatprep.subr.mxu0 0.0
      %5227 = vmatpush1.msra.mxu0 0.0
      %5228 = vmatprep.subr.mxu0 0.0
      %5229 = vmatpush1.msra.mxu0 0.0
      %5230 = vmatprep.subr.mxu0 0.0
      %5231 = vmatpush1.msra.mxu0 0.0
      %5232 = vmatprep.subr.mxu0 0.0
      %5233 = vmatpush1.msra.mxu0 0.0
      %5234 = vmatprep.subr.mxu0 0.0
      %5235 = vmatpush1.msra.mxu0 0.0
      %5236 = vmatprep.subr.mxu0 0.0
      %5237 = vmatpush1.msra.mxu0 0.0
      %5238 = vmatprep.subr.mxu0 0.0
      %5239 = vmatpush1.msra.mxu0 0.0
      %5240 = vmatprep.subr.mxu0 0.0
      %5241 = vmatpush1.msra.mxu0 0.0
      %5242 = vmatprep.subr.mxu0 0.0
      %5243 = vmatpush1.msra.mxu0 0.0
      %5244 = vmatprep.subr.mxu0 0.0
      %5245 = vmatpush1.msra.mxu0 0.0
      %5246 = vmatprep.subr.mxu0 0.0
      %5247 = vmatpush1.msra.mxu0 0.0
      %5248 = vmatprep.subr.mxu0 0.0
      %5249 = vmatpush1.msra.mxu0 0.0
      %5250 = vmatprep.subr.mxu0 0.0
      %5251 = vmatpush1.msra.mxu0 0.0
      %5252 = vmatprep.subr.mxu0 0.0
      %5253 = vmatpush1.msra.mxu0 0.0
      %5254 = vmatprep.subr.mxu0 0.0
      %5255 = vmatpush1.msra.mxu0 0.0
      %5256 = vmatprep.subr.mxu0 0.0
      %5257 = vmatpush1.msra.mxu0 0.0
      %5258 = vmatprep.subr.mxu0 0.0
      %5259 = vmatpush1.msra.mxu0 0.0
      %5260 = vmatprep.subr.mxu0 0.0
      %5261 = vmatpush1.msra.mxu0 0.0
      %5262 = vmatprep.subr.mxu0 0.0
      %5263 = vmatpush1.msra.mxu0 0.0
      %5264 = vmatprep.subr.mxu0 0.0
      %5265 = vmatpush1.msra.mxu0 0.0
      %5266 = vmatprep.subr.mxu0 0.0
      %5267 = vmatpush1.msra.mxu0 0.0
      %5268 = vmatprep.subr.mxu0 0.0
      %5269 = vmatpush1.msra.mxu0 0.0
      %5270 = vmatprep.subr.mxu0 0.0
      %5271 = vmatpush1.msra.mxu0 0.0
      %5272 = vmatprep.mubr.f32.mxu0 0.0
      %5273 = vmatmul.mubr.f32.gmra.mrb[0].mxu0 %v5206
      %v5274 = vpop.f32.mrb[0].mxu0
      %v5275 = vadd.f32 0.0, %v5274
      %v5276 = vpop.f32.mrb[0].mxu0
      %v5277 = vadd.f32 0.0, %v5276
      %5278 = vdwg.mxu0
      %5279 = vmatprep.subr.mxu0 %v953
      %5280 = vmatpush1.msra.mxu0 %v951
      %5281 = vmatprep.subr.mxu0 0.0
      %5282 = vmatpush1.msra.mxu0 0.0
      %5283 = vmatprep.subr.mxu0 0.0
      %5284 = vmatpush1.msra.mxu0 0.0
      %5285 = vmatprep.subr.mxu0 0.0
      %5286 = vmatpush1.msra.mxu0 0.0
      %5287 = vmatprep.subr.mxu0 0.0
      %5288 = vmatpush1.msra.mxu0 0.0
      %5289 = vmatprep.subr.mxu0 0.0
      %5290 = vmatpush1.msra.mxu0 0.0
      %5291 = vmatprep.subr.mxu0 0.0
      %5292 = vmatpush1.msra.mxu0 0.0
      %5293 = vmatprep.subr.mxu0 0.0
      %5294 = vmatpush1.msra.mxu0 0.0
      %5295 = vmatprep.subr.mxu0 0.0
      %5296 = vmatpush1.msra.mxu0 0.0
      %5297 = vmatprep.subr.mxu0 0.0
      %5298 = vmatpush1.msra.mxu0 0.0
      %5299 = vmatprep.subr.mxu0 0.0
      %5300 = vmatpush1.msra.mxu0 0.0
      %5301 = vmatprep.subr.mxu0 0.0
      %5302 = vmatpush1.msra.mxu0 0.0
      %5303 = vmatprep.subr.mxu0 0.0
      %5304 = vmatpush1.msra.mxu0 0.0
      %5305 = vmatprep.subr.mxu0 0.0
      %5306 = vmatpush1.msra.mxu0 0.0
      %5307 = vmatprep.subr.mxu0 0.0
      %5308 = vmatpush1.msra.mxu0 0.0
      %5309 = vmatprep.subr.mxu0 0.0
      %5310 = vmatpush1.msra.mxu0 0.0
      %5311 = vmatprep.subr.mxu0 0.0
      %5312 = vmatpush1.msra.mxu0 0.0
      %5313 = vmatprep.subr.mxu0 0.0
      %5314 = vmatpush1.msra.mxu0 0.0
      %5315 = vmatprep.subr.mxu0 0.0
      %5316 = vmatpush1.msra.mxu0 0.0
      %5317 = vmatprep.subr.mxu0 0.0
      %5318 = vmatpush1.msra.mxu0 0.0
      %5319 = vmatprep.subr.mxu0 0.0
      %5320 = vmatpush1.msra.mxu0 0.0
      %5321 = vmatprep.subr.mxu0 0.0
      %5322 = vmatpush1.msra.mxu0 0.0
      %5323 = vmatprep.subr.mxu0 0.0
      %5324 = vmatpush1.msra.mxu0 0.0
      %5325 = vmatprep.subr.mxu0 0.0
      %5326 = vmatpush1.msra.mxu0 0.0
      %5327 = vmatprep.subr.mxu0 0.0
      %5328 = vmatpush1.msra.mxu0 0.0
      %5329 = vmatprep.subr.mxu0 0.0
      %5330 = vmatpush1.msra.mxu0 0.0
      %5331 = vmatprep.subr.mxu0 0.0
      %5332 = vmatpush1.msra.mxu0 0.0
      %5333 = vmatprep.subr.mxu0 0.0
      %5334 = vmatpush1.msra.mxu0 0.0
      %5335 = vmatprep.subr.mxu0 0.0
      %5336 = vmatpush1.msra.mxu0 0.0
      %5337 = vmatprep.subr.mxu0 0.0
      %5338 = vmatpush1.msra.mxu0 0.0
      %5339 = vmatprep.subr.mxu0 0.0
      %5340 = vmatpush1.msra.mxu0 0.0
      %5341 = vmatprep.subr.mxu0 0.0
      %5342 = vmatpush1.msra.mxu0 0.0
      %5343 = vmatprep.mubr.f32.mxu0 0.0
      %5344 = vmatmul.mubr.f32.gmra.mrb[0].mxu0 %v5206
      %v5345 = vpop.f32.mrb[0].mxu0
      %v5346 = vadd.f32 0.0, %v5345
      %v5347 = vpop.f32.mrb[0].mxu0
      %v5348 = vadd.f32 0.0, %v5347
      %5349 = vdwg.mxu0
      %v5350 = vlaneseq
      %v5351 = vshrl.u32 %v5350, 7
      %v5352 = vsub.s32 0, %v5351
      %v5353 = vrot.slane %v5275, %v5352
      %v5354 = vlaneseq
      %v5355 = vshrl.u32 %v5354, 7
      %v5356 = vsub.s32 0, %v5355
      %v5357 = vrot.slane %v5277, %v5356
      %v5358 = vlaneseq
      %v5359 = vshrl.u32 %v5358, 7
      %v5360 = vsub.s32 0, %v5359
      %v5361 = vrot.slane %v5346, %v5360
      %v5362 = vlaneseq
      %v5363 = vshrl.u32 %v5362, 7
      %v5364 = vsub.s32 0, %v5363
      %v5365 = vrot.slane %v5348, %v5364
      %v5366 = vmul.f32 %v5030, %v5353
      %v5367 = vmul.f32 %v5031, %v5357
      %v5368 = vmul.f32 %v5032, %v5361
      %v5369 = vmul.f32 %v5033, %v5365
      %v5370 = vmul.f32 %v5366, %v4696
      %v5371 = vmul.f32 %v5367, %v4697
      %v5372 = vmul.f32 %v5368, %v4698
      %v5373 = vmul.f32 %v5369, %v4699
      %v5374 = vadd.f32 %v5370, %v4700
      %v5375 = vadd.f32 %v5371, %v4701
      %v5376 = vadd.f32 %v5372, %v4702
      %v5377 = vadd.f32 %v5373, %v4703
      %v5378 = vpack.c.bf16 %v5374, %v5374
      %v5379 = vpack.c.bf16 %v5375, %v5375
      %v5380 = vpack.c.bf16 %v5376, %v5376
      %v5381 = vpack.c.bf16 %v5377, %v5377
      %v5382 = vld [vmem:[%s15] sm:$0xf]
      %v5383 = vld [vmem:[%s16] sm:$0xff]
      %5385 = vset.pattern.permute.xlu0 0
      %5386 = vperm.xlu0 %5385, %v5383
      %v5387 = vpop.permute.xlu0 %5386
      %v5390 = vsel %vm3534, %v5382, 0
      %v5393 = vsel %vm750, %v5378, 0
      %v5396 = vsel %vm750, %v5379, 0
      %v5399 = vsel %vm750, %v5380, 0
      %v5402 = vsel %vm750, %v5381, 0
      %5404 = vmatprep.subr.bf16.mxu0 %v5396
      %5405 = vmatpush1.bf16.msra.mxu0 %v5393
      %5406 = vmatprep.subr.bf16.mxu0 0
      %5407 = vmatpush1.bf16.msra.mxu0 0
      %5408 = vmatprep.subr.bf16.mxu0 0
      %5409 = vmatpush1.bf16.msra.mxu0 0
      %5410 = vmatprep.subr.bf16.mxu0 0
      %5411 = vmatpush1.bf16.msra.mxu0 0
      %5412 = vmatprep.subr.bf16.mxu0 0
      %5413 = vmatpush1.bf16.msra.mxu0 0
      %5414 = vmatprep.subr.bf16.mxu0 0
      %5415 = vmatpush1.bf16.msra.mxu0 0
      %5416 = vmatprep.subr.bf16.mxu0 0
      %5417 = vmatpush1.bf16.msra.mxu0 0
      %5418 = vmatprep.subr.bf16.mxu0 0
      %5419 = vmatpush1.bf16.msra.mxu0 0
      %5420 = vmatprep.subr.bf16.mxu0 0
      %5421 = vmatpush1.bf16.msra.mxu0 0
      %5422 = vmatprep.subr.bf16.mxu0 0
      %5423 = vmatpush1.bf16.msra.mxu0 0
      %5424 = vmatprep.subr.bf16.mxu0 0
      %5425 = vmatpush1.bf16.msra.mxu0 0
      %5426 = vmatprep.subr.bf16.mxu0 0
      %5427 = vmatpush1.bf16.msra.mxu0 0
      %5428 = vmatprep.subr.bf16.mxu0 0
      %5429 = vmatpush1.bf16.msra.mxu0 0
      %5430 = vmatprep.subr.bf16.mxu0 0
      %5431 = vmatpush1.bf16.msra.mxu0 0
      %5432 = vmatprep.subr.bf16.mxu0 0
      %5433 = vmatpush1.bf16.msra.mxu0 0
      %5434 = vmatprep.subr.bf16.mxu0 0
      %5435 = vmatpush1.bf16.msra.mxu0 0
      %5436 = vmatprep.mubr.bf16.mxu0 0
      %5437 = vmatmul.mubr.bf16.gmra.mrb[0].mxu0 %v5390
      %v5438 = vpop.f32.mrb[0].mxu0
      %v5439 = vadd.f32 %v5387, %v5438
      %v5440 = vpop.f32.mrb[0].mxu0
      %v5441 = vadd.f32 %v5387, %v5440
      %v5442 = vpop.f32.mrb[0].mxu0
      %v5443 = vpop.f32.mrb[0].mxu0
      %5444 = vdwg.mxu0
      %5445 = vmatprep.subr.bf16.mxu0 %v5402
      %5446 = vmatpush1.bf16.msra.mxu0 %v5399
      %5447 = vmatprep.subr.bf16.mxu0 0
      %5448 = vmatpush1.bf16.msra.mxu0 0
      %5449 = vmatprep.subr.bf16.mxu0 0
      %5450 = vmatpush1.bf16.msra.mxu0 0
      %5451 = vmatprep.subr.bf16.mxu0 0
      %5452 = vmatpush1.bf16.msra.mxu0 0
      %5453 = vmatprep.subr.bf16.mxu0 0
      %5454 = vmatpush1.bf16.msra.mxu0 0
      %5455 = vmatprep.subr.bf16.mxu0 0
      %5456 = vmatpush1.bf16.msra.mxu0 0
      %5457 = vmatprep.subr.bf16.mxu0 0
      %5458 = vmatpush1.bf16.msra.mxu0 0
      %5459 = vmatprep.subr.bf16.mxu0 0
      %5460 = vmatpush1.bf16.msra.mxu0 0
      %5461 = vmatprep.subr.bf16.mxu0 0
      %5462 = vmatpush1.bf16.msra.mxu0 0
      %5463 = vmatprep.subr.bf16.mxu0 0
      %5464 = vmatpush1.bf16.msra.mxu0 0
      %5465 = vmatprep.subr.bf16.mxu0 0
      %5466 = vmatpush1.bf16.msra.mxu0 0
      %5467 = vmatprep.subr.bf16.mxu0 0
      %5468 = vmatpush1.bf16.msra.mxu0 0
      %5469 = vmatprep.subr.bf16.mxu0 0
      %5470 = vmatpush1.bf16.msra.mxu0 0
      %5471 = vmatprep.subr.bf16.mxu0 0
      %5472 = vmatpush1.bf16.msra.mxu0 0
      %5473 = vmatprep.subr.bf16.mxu0 0
      %5474 = vmatpush1.bf16.msra.mxu0 0
      %5475 = vmatprep.subr.bf16.mxu0 0
      %5476 = vmatpush1.bf16.msra.mxu0 0
      %5477 = vmatprep.mubr.bf16.mxu0 0
      %5478 = vmatmul.mubr.bf16.gmra.mrb[0].mxu0 %v5390
      %v5479 = vpop.f32.mrb[0].mxu0
      %v5480 = vadd.f32 %v5387, %v5479
      %v5481 = vpop.f32.mrb[0].mxu0
      %v5482 = vadd.f32 %v5387, %v5481
      %v5483 = vpop.f32.mrb[0].mxu0
      %v5484 = vpop.f32.mrb[0].mxu0
      %5485 = vdwg.mxu0
      %v5486 = vpack.c.bf16 %v5439, %v5439
      %v5487 = vpack.c.bf16 %v5441, %v5441
      %v5488 = vpack.c.bf16 %v5480, %v5480
      %v5489 = vpack.c.bf16 %v5482, %v5482
      %v5490 = vld [vmem:[%s17] sm:$0xf]
      %v5491 = vld [vmem:[%s18] sm:$0xff]
      %5493 = vset.pattern.permute.xlu0 0
      %5494 = vperm.xlu0 %5493, %v5491
      %v5495 = vpop.permute.xlu0 %5494
      %v5498 = vsel %vm3534, %v5490, 0
      %5500 = vmatprep.subr.bf16.mxu0 %v5396
      %5501 = vmatpush1.bf16.msra.mxu0 %v5393
      %5502 = vmatprep.subr.bf16.mxu0 0
      %5503 = vmatpush1.bf16.msra.mxu0 0
      %5504 = vmatprep.subr.bf16.mxu0 0
      %5505 = vmatpush1.bf16.msra.mxu0 0
      %5506 = vmatprep.subr.bf16.mxu0 0
      %5507 = vmatpush1.bf16.msra.mxu0 0
      %5508 = vmatprep.subr.bf16.mxu0 0
      %5509 = vmatpush1.bf16.msra.mxu0 0
      %5510 = vmatprep.subr.bf16.mxu0 0
      %5511 = vmatpush1.bf16.msra.mxu0 0
      %5512 = vmatprep.subr.bf16.mxu0 0
      %5513 = vmatpush1.bf16.msra.mxu0 0
      %5514 = vmatprep.subr.bf16.mxu0 0
      %5515 = vmatpush1.bf16.msra.mxu0 0
      %5516 = vmatprep.subr.bf16.mxu0 0
      %5517 = vmatpush1.bf16.msra.mxu0 0
      %5518 = vmatprep.subr.bf16.mxu0 0
      %5519 = vmatpush1.bf16.msra.mxu0 0
      %5520 = vmatprep.subr.bf16.mxu0 0
      %5521 = vmatpush1.bf16.msra.mxu0 0
      %5522 = vmatprep.subr.bf16.mxu0 0
      %5523 = vmatpush1.bf16.msra.mxu0 0
      %5524 = vmatprep.subr.bf16.mxu0 0
      %5525 = vmatpush1.bf16.msra.mxu0 0
      %5526 = vmatprep.subr.bf16.mxu0 0
      %5527 = vmatpush1.bf16.msra.mxu0 0
      %5528 = vmatprep.subr.bf16.mxu0 0
      %5529 = vmatpush1.bf16.msra.mxu0 0
      %5530 = vmatprep.subr.bf16.mxu0 0
      %5531 = vmatpush1.bf16.msra.mxu0 0
      %5532 = vmatprep.mubr.bf16.mxu0 0
      %5533 = vmatmul.mubr.bf16.gmra.mrb[0].mxu0 %v5498
      %v5534 = vpop.f32.mrb[0].mxu0
      %v5535 = vadd.f32 %v5495, %v5534
      %v5536 = vpop.f32.mrb[0].mxu0
      %v5537 = vadd.f32 %v5495, %v5536
      %v5538 = vpop.f32.mrb[0].mxu0
      %v5539 = vpop.f32.mrb[0].mxu0
      %5540 = vdwg.mxu0
      %5541 = vmatprep.subr.bf16.mxu0 %v5402
      %5542 = vmatpush1.bf16.msra.mxu0 %v5399
      %5543 = vmatprep.subr.bf16.mxu0 0
      %5544 = vmatpush1.bf16.msra.mxu0 0
      %5545 = vmatprep.subr.bf16.mxu0 0
      %5546 = vmatpush1.bf16.msra.mxu0 0
      %5547 = vmatprep.subr.bf16.mxu0 0
      %5548 = vmatpush1.bf16.msra.mxu0 0
      %5549 = vmatprep.subr.bf16.mxu0 0
      %5550 = vmatpush1.bf16.msra.mxu0 0
      %5551 = vmatprep.subr.bf16.mxu0 0
      %5552 = vmatpush1.bf16.msra.mxu0 0
      %5553 = vmatprep.subr.bf16.mxu0 0
      %5554 = vmatpush1.bf16.msra.mxu0 0
      %5555 = vmatprep.subr.bf16.mxu0 0
      %5556 = vmatpush1.bf16.msra.mxu0 0
      %5557 = vmatprep.subr.bf16.mxu0 0
      %5558 = vmatpush1.bf16.msra.mxu0 0
      %5559 = vmatprep.subr.bf16.mxu0 0
      %5560 = vmatpush1.bf16.msra.mxu0 0
      %5561 = vmatprep.subr.bf16.mxu0 0
      %5562 = vmatpush1.bf16.msra.mxu0 0
      %5563 = vmatprep.subr.bf16.mxu0 0
      %5564 = vmatpush1.bf16.msra.mxu0 0
      %5565 = vmatprep.subr.bf16.mxu0 0
      %5566 = vmatpush1.bf16.msra.mxu0 0
      %5567 = vmatprep.subr.bf16.mxu0 0
      %5568 = vmatpush1.bf16.msra.mxu0 0
      %5569 = vmatprep.subr.bf16.mxu0 0
      %5570 = vmatpush1.bf16.msra.mxu0 0
      %5571 = vmatprep.subr.bf16.mxu0 0
      %5572 = vmatpush1.bf16.msra.mxu0 0
      %5573 = vmatprep.mubr.bf16.mxu0 0
      %5574 = vmatmul.mubr.bf16.gmra.mrb[0].mxu0 %v5498
      %v5575 = vpop.f32.mrb[0].mxu0
      %v5576 = vadd.f32 %v5495, %v5575
      %v5577 = vpop.f32.mrb[0].mxu0
      %v5578 = vadd.f32 %v5495, %v5577
      %v5579 = vpop.f32.mrb[0].mxu0
      %v5580 = vpop.f32.mrb[0].mxu0
      %5581 = vdwg.mxu0
      %v5582 = vpack.c.bf16 %v5535, %v5535
      %v5583 = vpack.c.bf16 %v5537, %v5537
      %v5584 = vpack.c.bf16 %v5576, %v5576
      %v5585 = vpack.c.bf16 %v5578, %v5578
      %v5586 = vld [vmem:[%s19] sm:$0xf]
      %v5587 = vld [vmem:[%s20] sm:$0xff]
      %5589 = vset.pattern.permute.xlu0 0
      %5590 = vperm.xlu0 %5589, %v5587
      %v5591 = vpop.permute.xlu0 %5590
      %v5594 = vsel %vm3534, %v5586, 0
      %5596 = vmatprep.subr.bf16.mxu0 %v5396
      %5597 = vmatpush1.bf16.msra.mxu0 %v5393
      %5598 = vmatprep.subr.bf16.mxu0 0
      %5599 = vmatpush1.bf16.msra.mxu0 0
      %5600 = vmatprep.subr.bf16.mxu0 0
      %5601 = vmatpush1.bf16.msra.mxu0 0
      %5602 = vmatprep.subr.bf16.mxu0 0
      %5603 = vmatpush1.bf16.msra.mxu0 0
      %5604 = vmatprep.subr.bf16.mxu0 0
      %5605 = vmatpush1.bf16.msra.mxu0 0
      %5606 = vmatprep.subr.bf16.mxu0 0
      %5607 = vmatpush1.bf16.msra.mxu0 0
      %5608 = vmatprep.subr.bf16.mxu0 0
      %5609 = vmatpush1.bf16.msra.mxu0 0
      %5610 = vmatprep.subr.bf16.mxu0 0
      %5611 = vmatpush1.bf16.msra.mxu0 0
      %5612 = vmatprep.subr.bf16.mxu0 0
      %5613 = vmatpush1.bf16.msra.mxu0 0
      %5614 = vmatprep.subr.bf16.mxu0 0
      %5615 = vmatpush1.bf16.msra.mxu0 0
      %5616 = vmatprep.subr.bf16.mxu0 0
      %5617 = vmatpush1.bf16.msra.mxu0 0
      %5618 = vmatprep.subr.bf16.mxu0 0
      %5619 = vmatpush1.bf16.msra.mxu0 0
      %5620 = vmatprep.subr.bf16.mxu0 0
      %5621 = vmatpush1.bf16.msra.mxu0 0
      %5622 = vmatprep.subr.bf16.mxu0 0
      %5623 = vmatpush1.bf16.msra.mxu0 0
      %5624 = vmatprep.subr.bf16.mxu0 0
      %5625 = vmatpush1.bf16.msra.mxu0 0
      %5626 = vmatprep.subr.bf16.mxu0 0
      %5627 = vmatpush1.bf16.msra.mxu0 0
      %5628 = vmatprep.mubr.bf16.mxu0 0
      %5629 = vmatmul.mubr.bf16.gmra.mrb[0].mxu0 %v5594
      %v5630 = vpop.f32.mrb[0].mxu0
      %v5631 = vadd.f32 %v5591, %v5630
      %v5632 = vpop.f32.mrb[0].mxu0
      %v5633 = vadd.f32 %v5591, %v5632
      %v5634 = vpop.f32.mrb[0].mxu0
      %v5635 = vpop.f32.mrb[0].mxu0
      %5636 = vdwg.mxu0
      %5637 = vmatprep.subr.bf16.mxu0 %v5402
      %5638 = vmatpush1.bf16.msra.mxu0 %v5399
      %5639 = vmatprep.subr.bf16.mxu0 0
      %5640 = vmatpush1.bf16.msra.mxu0 0
      %5641 = vmatprep.subr.bf16.mxu0 0
      %5642 = vmatpush1.bf16.msra.mxu0 0
      %5643 = vmatprep.subr.bf16.mxu0 0
      %5644 = vmatpush1.bf16.msra.mxu0 0
      %5645 = vmatprep.subr.bf16.mxu0 0
      %5646 = vmatpush1.bf16.msra.mxu0 0
      %5647 = vmatprep.subr.bf16.mxu0 0
      %5648 = vmatpush1.bf16.msra.mxu0 0
      %5649 = vmatprep.subr.bf16.mxu0 0
      %5650 = vmatpush1.bf16.msra.mxu0 0
      %5651 = vmatprep.subr.bf16.mxu0 0
      %5652 = vmatpush1.bf16.msra.mxu0 0
      %5653 = vmatprep.subr.bf16.mxu0 0
      %5654 = vmatpush1.bf16.msra.mxu0 0
      %5655 = vmatprep.subr.bf16.mxu0 0
      %5656 = vmatpush1.bf16.msra.mxu0 0
      %5657 = vmatprep.subr.bf16.mxu0 0
      %5658 = vmatpush1.bf16.msra.mxu0 0
      %5659 = vmatprep.subr.bf16.mxu0 0
      %5660 = vmatpush1.bf16.msra.mxu0 0
      %5661 = vmatprep.subr.bf16.mxu0 0
      %5662 = vmatpush1.bf16.msra.mxu0 0
      %5663 = vmatprep.subr.bf16.mxu0 0
      %5664 = vmatpush1.bf16.msra.mxu0 0
      %5665 = vmatprep.subr.bf16.mxu0 0
      %5666 = vmatpush1.bf16.msra.mxu0 0
      %5667 = vmatprep.subr.bf16.mxu0 0
      %5668 = vmatpush1.bf16.msra.mxu0 0
      %5669 = vmatprep.mubr.bf16.mxu0 0
      %5670 = vmatmul.mubr.bf16.gmra.mrb[0].mxu0 %v5594
      %v5671 = vpop.f32.mrb[0].mxu0
      %v5672 = vadd.f32 %v5591, %v5671
      %v5673 = vpop.f32.mrb[0].mxu0
      %v5674 = vadd.f32 %v5591, %v5673
      %v5675 = vpop.f32.mrb[0].mxu0
      %v5676 = vpop.f32.mrb[0].mxu0
      %5677 = vdwg.mxu0
      %v5678 = vpack.c.bf16 %v5631, %v5631
      %v5679 = vpack.c.bf16 %v5633, %v5633
      %v5680 = vpack.c.bf16 %v5672, %v5672
      %v5681 = vpack.c.bf16 %v5674, %v5674
      %v5682 = vld [vmem:[%s21] sm:$0xf]
      %5683 = vxpose.xlu0.c.b16.start [1/8] %v5486, 128
      %5684 = vxpose.xlu0.c.b16.cont [2/8] 0, 128
      %5685 = vxpose.xlu0.c.b16.cont [3/8] 0, 128
      %5686 = vxpose.xlu0.c.b16.cont [4/8] 0, 128
      %5687 = vxpose.xlu0.c.b16.cont [5/8] 0, 128
      %5688 = vxpose.xlu0.c.b16.cont [6/8] 0, 128
      %5689 = vxpose.xlu0.c.b16.cont [7/8] 0, 128
      %5690 = vxpose.xlu0.c.b16.end [8/8] 0, 128
      %v5691 = vpop.trf.xlu0
      %v5692 = vpop.trf.xlu0
      %v5693 = vpop.trf.xlu0
      %v5694 = vpop.trf.xlu0
      %v5695 = vpop.trf.xlu0
      %v5696 = vpop.trf.xlu0
      %v5697 = vpop.trf.xlu0
      %v5698 = vpop.trf.xlu0
      %v5700 = vsel %vm3534, %v5691, 0
      %v5703 = vsel %vm3534, %v5692, 0
      %v5706 = vsel %vm3534, %v5693, 0
      %v5709 = vsel %vm3534, %v5694, 0
      %v5712 = vsel %vm3534, %v5695, 0
      %v5715 = vsel %vm3534, %v5696, 0
      %v5718 = vsel %vm3534, %v5697, 0
      %v5721 = vsel %vm3534, %v5698, 0
      %v5724 = vsel %vm750, %v5582, 0
      %v5727 = vsel %vm750, %v5583, 0
      %5729 = vmatprep.subr.bf16.mxu0 %v5727
      %5730 = vmatpush1.bf16.msra.mxu0 %v5724
      %5731 = vmatprep.subr.bf16.mxu0 0
      %5732 = vmatpush1.bf16.msra.mxu0 0
      %5733 = vmatprep.subr.bf16.mxu0 0
      %5734 = vmatpush1.bf16.msra.mxu0 0
      %5735 = vmatprep.subr.bf16.mxu0 0
      %5736 = vmatpush1.bf16.msra.mxu0 0
      %5737 = vmatprep.subr.bf16.mxu0 0
      %5738 = vmatpush1.bf16.msra.mxu0 0
      %5739 = vmatprep.subr.bf16.mxu0 0
      %5740 = vmatpush1.bf16.msra.mxu0 0
      %5741 = vmatprep.subr.bf16.mxu0 0
      %5742 = vmatpush1.bf16.msra.mxu0 0
      %5743 = vmatprep.subr.bf16.mxu0 0
      %5744 = vmatpush1.bf16.msra.mxu0 0
      %5745 = vmatprep.subr.bf16.mxu0 0
      %5746 = vmatpush1.bf16.msra.mxu0 0
      %5747 = vmatprep.subr.bf16.mxu0 0
      %5748 = vmatpush1.bf16.msra.mxu0 0
      %5749 = vmatprep.subr.bf16.mxu0 0
      %5750 = vmatpush1.bf16.msra.mxu0 0
      %5751 = vmatprep.subr.bf16.mxu0 0
      %5752 = vmatpush1.bf16.msra.mxu0 0
      %5753 = vmatprep.subr.bf16.mxu0 0
      %5754 = vmatpush1.bf16.msra.mxu0 0
      %5755 = vmatprep.subr.bf16.mxu0 0
      %5756 = vmatpush1.bf16.msra.mxu0 0
      %5757 = vmatprep.subr.bf16.mxu0 0
      %5758 = vmatpush1.bf16.msra.mxu0 0
      %5759 = vmatprep.subr.bf16.mxu0 0
      %5760 = vmatpush1.bf16.msra.mxu0 0
      %5761 = vmatprep.mubr.bf16.mxu0 0
      %5762 = vmatmul.mubr.bf16.gmra.mrb[0].mxu0 %v5700
      %v5763 = vpop.f32.mrb[0].mxu0
      %v5764 = vadd.f32 0.0, %v5763
      %v5765 = vpop.f32.mrb[0].mxu0
      %v5766 = vadd.f32 0.0, %v5765
      %v5767 = vpop.f32.mrb[0].mxu0
      %v5768 = vadd.f32 0.0, %v5767
      %v5769 = vpop.f32.mrb[0].mxu0
      %v5770 = vadd.f32 0.0, %v5769
      %5771 = vmatprep.mubr.bf16.mxu0 0
      %5772 = vmatmul.mubr.bf16.gmra.mrb[0].mxu0 %v5703
      %v5773 = vpop.f32.mrb[0].mxu0
      %v5774 = vadd.f32 0.0, %v5773
      %v5775 = vpop.f32.mrb[0].mxu0
      %v5776 = vadd.f32 0.0, %v5775
      %v5777 = vpop.f32.mrb[0].mxu0
      %v5778 = vadd.f32 0.0, %v5777
      %v5779 = vpop.f32.mrb[0].mxu0
      %v5780 = vadd.f32 0.0, %v5779
      %5781 = vmatprep.mubr.bf16.mxu0 0
      %5782 = vmatmul.mubr.bf16.gmra.mrb[0].mxu0 %v5706
      %v5783 = vpop.f32.mrb[0].mxu0
      %v5784 = vadd.f32 0.0, %v5783
      %v5785 = vpop.f32.mrb[0].mxu0
      %v5786 = vadd.f32 0.0, %v5785
      %v5787 = vpop.f32.mrb[0].mxu0
      %v5788 = vadd.f32 0.0, %v5787
      %v5789 = vpop.f32.mrb[0].mxu0
      %v5790 = vadd.f32 0.0, %v5789
      %5791 = vmatprep.mubr.bf16.mxu0 0
      %5792 = vmatmul.mubr.bf16.gmra.mrb[0].mxu0 %v5709
      %v5793 = vpop.f32.mrb[0].mxu0
      %v5794 = vadd.f32 0.0, %v5793
      %v5795 = vpop.f32.mrb[0].mxu0
      %v5796 = vadd.f32 0.0, %v5795
      %v5797 = vpop.f32.mrb[0].mxu0
      %v5798 = vadd.f32 0.0, %v5797
      %v5799 = vpop.f32.mrb[0].mxu0
      %v5800 = vadd.f32 0.0, %v5799
      %5801 = vmatprep.mubr.bf16.mxu0 0
      %5802 = vmatmul.mubr.bf16.gmra.mrb[0].mxu0 %v5712
      %v5803 = vpop.f32.mrb[0].mxu0
      %v5804 = vadd.f32 0.0, %v5803
      %v5805 = vpop.f32.mrb[0].mxu0
      %v5806 = vadd.f32 0.0, %v5805
      %v5807 = vpop.f32.mrb[0].mxu0
      %v5808 = vadd.f32 0.0, %v5807
      %v5809 = vpop.f32.mrb[0].mxu0
      %v5810 = vadd.f32 0.0, %v5809
      %5811 = vmatprep.mubr.bf16.mxu0 0
      %5812 = vmatmul.mubr.bf16.gmra.mrb[0].mxu0 %v5715
      %v5813 = vpop.f32.mrb[0].mxu0
      %v5814 = vadd.f32 0.0, %v5813
      %v5815 = vpop.f32.mrb[0].mxu0
      %v5816 = vadd.f32 0.0, %v5815
      %v5817 = vpop.f32.mrb[0].mxu0
      %v5818 = vadd.f32 0.0, %v5817
      %v5819 = vpop.f32.mrb[0].mxu0
      %v5820 = vadd.f32 0.0, %v5819
      %5821 = vmatprep.mubr.bf16.mxu0 0
      %5822 = vmatmul.mubr.bf16.gmra.mrb[0].mxu0 %v5718
      %v5823 = vpop.f32.mrb[0].mxu0
      %v5824 = vadd.f32 0.0, %v5823
      %v5825 = vpop.f32.mrb[0].mxu0
      %v5826 = vadd.f32 0.0, %v5825
      %v5827 = vpop.f32.mrb[0].mxu0
      %v5828 = vadd.f32 0.0, %v5827
      %v5829 = vpop.f32.mrb[0].mxu0
      %v5830 = vadd.f32 0.0, %v5829
      %5831 = vmatprep.mubr.bf16.mxu0 0
      %5832 = vmatmul.mubr.bf16.gmra.mrb[0].mxu0 %v5721
      %v5833 = vpop.f32.mrb[0].mxu0
      %v5834 = vadd.f32 0.0, %v5833
      %v5835 = vpop.f32.mrb[0].mxu0
      %v5836 = vadd.f32 0.0, %v5835
      %v5837 = vpop.f32.mrb[0].mxu0
      %v5838 = vadd.f32 0.0, %v5837
      %v5839 = vpop.f32.mrb[0].mxu0
      %v5840 = vadd.f32 0.0, %v5839
      %5841 = vdwg.mxu0
      %v5842 = vmax.f32 %v5764, %v5766
      %5843 = vmax.xlane.f32.xlu0 %v5842
      %v5844 = vpop.xlane.xlu0 %5843
      %v5845 = vmax.f32 %v5768, %v5770
      %5846 = vmax.xlane.f32.xlu0 %v5845
      %v5847 = vpop.xlane.xlu0 %5846
      %v5848 = vmax.f32 %v5774, %v5776
      %5849 = vmax.xlane.f32.xlu0 %v5848
      %v5850 = vpop.xlane.xlu0 %5849
      %v5851 = vmax.f32 %v5778, %v5780
      %5852 = vmax.xlane.f32.xlu0 %v5851
      %v5853 = vpop.xlane.xlu0 %5852
      %v5854 = vmax.f32 %v5784, %v5786
      %5855 = vmax.xlane.f32.xlu0 %v5854
      %v5856 = vpop.xlane.xlu0 %5855
      %v5857 = vmax.f32 %v5788, %v5790
      %5858 = vmax.xlane.f32.xlu0 %v5857
      %v5859 = vpop.xlane.xlu0 %5858
      %v5860 = vmax.f32 %v5794, %v5796
      %5861 = vmax.xlane.f32.xlu0 %v5860
      %v5862 = vpop.xlane.xlu0 %5861
      %v5863 = vmax.f32 %v5798, %v5800
      %5864 = vmax.xlane.f32.xlu0 %v5863
      %v5865 = vpop.xlane.xlu0 %5864
      %v5866 = vmax.f32 %v5804, %v5806
      %5867 = vmax.xlane.f32.xlu0 %v5866
      %v5868 = vpop.xlane.xlu0 %5867
      %v5869 = vmax.f32 %v5808, %v5810
      %5870 = vmax.xlane.f32.xlu0 %v5869
      %v5871 = vpop.xlane.xlu0 %5870
      %v5872 = vmax.f32 %v5814, %v5816
      %5873 = vmax.xlane.f32.xlu0 %v5872
      %v5874 = vpop.xlane.xlu0 %5873
      %v5875 = vmax.f32 %v5818, %v5820
      %5876 = vmax.xlane.f32.xlu0 %v5875
      %v5877 = vpop.xlane.xlu0 %5876
      %v5878 = vmax.f32 %v5824, %v5826
      %5879 = vmax.xlane.f32.xlu0 %v5878
      %v5880 = vpop.xlane.xlu0 %5879
      %v5881 = vmax.f32 %v5828, %v5830
      %5882 = vmax.xlane.f32.xlu0 %v5881
      %v5883 = vpop.xlane.xlu0 %5882
      %v5884 = vmax.f32 %v5834, %v5836
      %5885 = vmax.xlane.f32.xlu0 %v5884
      %v5886 = vpop.xlane.xlu0 %5885
      %v5887 = vmax.f32 %v5838, %v5840
      %5888 = vmax.xlane.f32.xlu0 %v5887
      %v5889 = vpop.xlane.xlu0 %5888
      %v5890 = vsub.f32 %v5764, %v5844
      %v5891 = vsub.f32 %v5766, %v5844
      %v5892 = vsub.f32 %v5768, %v5847
      %v5893 = vsub.f32 %v5770, %v5847
      %v5894 = vsub.f32 %v5774, %v5850
      %v5895 = vsub.f32 %v5776, %v5850
      %v5896 = vsub.f32 %v5778, %v5853
      %v5897 = vsub.f32 %v5780, %v5853
      %v5898 = vsub.f32 %v5784, %v5856
      %v5899 = vsub.f32 %v5786, %v5856
      %v5900 = vsub.f32 %v5788, %v5859
      %v5901 = vsub.f32 %v5790, %v5859
      %v5902 = vsub.f32 %v5794, %v5862
      %v5903 = vsub.f32 %v5796, %v5862
      %v5904 = vsub.f32 %v5798, %v5865
      %v5905 = vsub.f32 %v5800, %v5865
      %v5906 = vsub.f32 %v5804, %v5868
      %v5907 = vsub.f32 %v5806, %v5868
      %v5908 = vsub.f32 %v5808, %v5871
      %v5909 = vsub.f32 %v5810, %v5871
      %v5910 = vsub.f32 %v5814, %v5874
      %v5911 = vsub.f32 %v5816, %v5874
      %v5912 = vsub.f32 %v5818, %v5877
      %v5913 = vsub.f32 %v5820, %v5877
      %v5914 = vsub.f32 %v5824, %v5880
      %v5915 = vsub.f32 %v5826, %v5880
      %v5916 = vsub.f32 %v5828, %v5883
      %v5917 = vsub.f32 %v5830, %v5883
      %v5918 = vsub.f32 %v5834, %v5886
      %v5919 = vsub.f32 %v5836, %v5886
      %v5920 = vsub.f32 %v5838, %v5889
      %v5921 = vsub.f32 %v5840, %v5889
      %v5922 = vmul.f32 %v5890, 1.442695
      %v5923 = vpow.pop %v5922
      %v5924 = vmul.f32 %v5891, 1.442695
      %v5925 = vpow.pop %v5924
      %v5926 = vmul.f32 %v5892, 1.442695
      %v5927 = vpow.pop %v5926
      %v5928 = vmul.f32 %v5893, 1.442695
      %v5929 = vpow.pop %v5928
      %v5930 = vmul.f32 %v5894, 1.442695
      %v5931 = vpow.pop %v5930
      %v5932 = vmul.f32 %v5895, 1.442695
      %v5933 = vpow.pop %v5932
      %v5934 = vmul.f32 %v5896, 1.442695
      %v5935 = vpow.pop %v5934
      %v5936 = vmul.f32 %v5897, 1.442695
      %v5937 = vpow.pop %v5936
      %v5938 = vmul.f32 %v5898, 1.442695
      %v5939 = vpow.pop %v5938
      %v5940 = vmul.f32 %v5899, 1.442695
      %v5941 = vpow.pop %v5940
      %v5942 = vmul.f32 %v5900, 1.442695
      %v5943 = vpow.pop %v5942
      %v5944 = vmul.f32 %v5901, 1.442695
      %v5945 = vpow.pop %v5944
      %v5946 = vmul.f32 %v5902, 1.442695
      %v5947 = vpow.pop %v5946
      %v5948 = vmul.f32 %v5903, 1.442695
      %v5949 = vpow.pop %v5948
      %v5950 = vmul.f32 %v5904, 1.442695
      %v5951 = vpow.pop %v5950
      %v5952 = vmul.f32 %v5905, 1.442695
      %v5953 = vpow.pop %v5952
      %v5954 = vmul.f32 %v5906, 1.442695
      %v5955 = vpow.pop %v5954
      %v5956 = vmul.f32 %v5907, 1.442695
      %v5957 = vpow.pop %v5956
      %v5958 = vmul.f32 %v5908, 1.442695
      %v5959 = vpow.pop %v5958
      %v5960 = vmul.f32 %v5909, 1.442695
      %v5961 = vpow.pop %v5960
      %v5962 = vmul.f32 %v5910, 1.442695
      %v5963 = vpow.pop %v5962
      %v5964 = vmul.f32 %v5911, 1.442695
      %v5965 = vpow.pop %v5964
      %v5966 = vmul.f32 %v5912, 1.442695
      %v5967 = vpow.pop %v5966
      %v5968 = vmul.f32 %v5913, 1.442695
      %v5969 = vpow.pop %v5968
      %v5970 = vmul.f32 %v5914, 1.442695
      %v5971 = vpow.pop %v5970
      %v5972 = vmul.f32 %v5915, 1.442695
      %v5973 = vpow.pop %v5972
      %v5974 = vmul.f32 %v5916, 1.442695
      %v5975 = vpow.pop %v5974
      %v5976 = vmul.f32 %v5917, 1.442695
      %v5977 = vpow.pop %v5976
      %v5978 = vmul.f32 %v5918, 1.442695
      %v5979 = vpow.pop %v5978
      %v5980 = vmul.f32 %v5919, 1.442695
      %v5981 = vpow.pop %v5980
      %v5982 = vmul.f32 %v5920, 1.442695
      %v5983 = vpow.pop %v5982
      %v5984 = vmul.f32 %v5921, 1.442695
      %v5985 = vpow.pop %v5984
      %v5986 = vadd.f32 %v5923, %v5925
      %5987 = vadd.xlane.f32.xlu0 %v5986
      %v5988 = vpop.xlane.xlu0 %5987
      %v5989 = vadd.f32 %v5927, %v5929
      %5990 = vadd.xlane.f32.xlu0 %v5989
      %v5991 = vpop.xlane.xlu0 %5990
      %v5992 = vadd.f32 %v5931, %v5933
      %5993 = vadd.xlane.f32.xlu0 %v5992
      %v5994 = vpop.xlane.xlu0 %5993
      %v5995 = vadd.f32 %v5935, %v5937
      %5996 = vadd.xlane.f32.xlu0 %v5995
      %v5997 = vpop.xlane.xlu0 %5996
      %v5998 = vadd.f32 %v5939, %v5941
      %5999 = vadd.xlane.f32.xlu0 %v5998
      %v6000 = vpop.xlane.xlu0 %5999
      %v6001 = vadd.f32 %v5943, %v5945
      %6002 = vadd.xlane.f32.xlu0 %v6001
      %v6003 = vpop.xlane.xlu0 %6002
      %v6004 = vadd.f32 %v5947, %v5949
      %6005 = vadd.xlane.f32.xlu0 %v6004
      %v6006 = vpop.xlane.xlu0 %6005
      %v6007 = vadd.f32 %v5951, %v5953
      %6008 = vadd.xlane.f32.xlu0 %v6007
      %v6009 = vpop.xlane.xlu0 %6008
      %v6010 = vadd.f32 %v5955, %v5957
      %6011 = vadd.xlane.f32.xlu0 %v6010
      %v6012 = vpop.xlane.xlu0 %6011
      %v6013 = vadd.f32 %v5959, %v5961
      %6014 = vadd.xlane.f32.xlu0 %v6013
      %v6015 = vpop.xlane.xlu0 %6014
      %v6016 = vadd.f32 %v5963, %v5965
      %6017 = vadd.xlane.f32.xlu0 %v6016
      %v6018 = vpop.xlane.xlu0 %6017
      %v6019 = vadd.f32 %v5967, %v5969
      %6020 = vadd.xlane.f32.xlu0 %v6019
      %v6021 = vpop.xlane.xlu0 %6020
      %v6022 = vadd.f32 %v5971, %v5973
      %6023 = vadd.xlane.f32.xlu0 %v6022
      %v6024 = vpop.xlane.xlu0 %6023
      %v6025 = vadd.f32 %v5975, %v5977
      %6026 = vadd.xlane.f32.xlu0 %v6025
      %v6027 = vpop.xlane.xlu0 %6026
      %v6028 = vadd.f32 %v5979, %v5981
      %6029 = vadd.xlane.f32.xlu0 %v6028
      %v6030 = vpop.xlane.xlu0 %6029
      %v6031 = vadd.f32 %v5983, %v5985
      %6032 = vadd.xlane.f32.xlu0 %v6031
      %v6033 = vpop.xlane.xlu0 %6032
      %v6034 = vrcp.pop %v5988
      %v6035 = vrcp.pop %v5991
      %v6036 = vrcp.pop %v5994
      %v6037 = vrcp.pop %v5997
      %v6038 = vrcp.pop %v6000
      %v6039 = vrcp.pop %v6003
      %v6040 = vrcp.pop %v6006
      %v6041 = vrcp.pop %v6009
      %v6042 = vrcp.pop %v6012
      %v6043 = vrcp.pop %v6015
      %v6044 = vrcp.pop %v6018
      %v6045 = vrcp.pop %v6021
      %v6046 = vrcp.pop %v6024
      %v6047 = vrcp.pop %v6027
      %v6048 = vrcp.pop %v6030
      %v6049 = vrcp.pop %v6033
      %v6050 = vmul.f32 %v5923, %v6034
      %v6051 = vmul.f32 %v5925, %v6034
      %v6052 = vmul.f32 %v5927, %v6035
      %v6053 = vmul.f32 %v5929, %v6035
      %v6054 = vmul.f32 %v5931, %v6036
      %v6055 = vmul.f32 %v5933, %v6036
      %v6056 = vmul.f32 %v5935, %v6037
      %v6057 = vmul.f32 %v5937, %v6037
      %v6058 = vmul.f32 %v5939, %v6038
      %v6059 = vmul.f32 %v5941, %v6038
      %v6060 = vmul.f32 %v5943, %v6039
      %v6061 = vmul.f32 %v5945, %v6039
      %v6062 = vmul.f32 %v5947, %v6040
      %v6063 = vmul.f32 %v5949, %v6040
      %v6064 = vmul.f32 %v5951, %v6041
      %v6065 = vmul.f32 %v5953, %v6041
      %v6066 = vmul.f32 %v5955, %v6042
      %v6067 = vmul.f32 %v5957, %v6042
      %v6068 = vmul.f32 %v5959, %v6043
      %v6069 = vmul.f32 %v5961, %v6043
      %v6070 = vmul.f32 %v5963, %v6044
      %v6071 = vmul.f32 %v5965, %v6044
      %v6072 = vmul.f32 %v5967, %v6045
      %v6073 = vmul.f32 %v5969, %v6045
      %v6074 = vmul.f32 %v5971, %v6046
      %v6075 = vmul.f32 %v5973, %v6046
      %v6076 = vmul.f32 %v5975, %v6047
      %v6077 = vmul.f32 %v5977, %v6047
      %v6078 = vmul.f32 %v5979, %v6048
      %v6079 = vmul.f32 %v5981, %v6048
      %v6080 = vmul.f32 %v5983, %v6049
      %v6081 = vmul.f32 %v5985, %v6049
      %v6082 = vpack.c.bf16 %v6052, %v6050
      %v6083 = vpack.c.bf16 %v6053, %v6051
      %v6084 = vpack.c.bf16 %v6056, %v6054
      %v6085 = vpack.c.bf16 %v6057, %v6055
      %v6086 = vpack.c.bf16 %v6060, %v6058
      %v6087 = vpack.c.bf16 %v6061, %v6059
      %v6088 = vpack.c.bf16 %v6064, %v6062
      %v6089 = vpack.c.bf16 %v6065, %v6063
      %v6090 = vpack.c.bf16 %v6068, %v6066
      %v6091 = vpack.c.bf16 %v6069, %v6067
      %v6092 = vpack.c.bf16 %v6072, %v6070
      %v6093 = vpack.c.bf16 %v6073, %v6071
      %v6094 = vpack.c.bf16 %v6076, %v6074
      %v6095 = vpack.c.bf16 %v6077, %v6075
      %v6096 = vpack.c.bf16 %v6080, %v6078
      %v6097 = vpack.c.bf16 %v6081, %v6079
      %6098 = vmatprep.subr.bf16.mxu0 %v6083
      %6099 = vmatpush1.bf16.xpose.msra.mxu0 %v6082
      %6100 = vmatprep.subr.bf16.mxu0 %v6085
      %6101 = vmatpush1.bf16.xpose.msra.mxu0 %v6084
      %6102 = vmatprep.subr.bf16.mxu0 %v6087
      %6103 = vmatpush1.bf16.xpose.msra.mxu0 %v6086
      %6104 = vmatprep.subr.bf16.mxu0 %v6089
      %6105 = vmatpush1.bf16.xpose.msra.mxu0 %v6088
      %6106 = vmatprep.subr.bf16.mxu0 %v6091
      %6107 = vmatpush1.bf16.xpose.msra.mxu0 %v6090
      %6108 = vmatprep.subr.bf16.mxu0 %v6093
      %6109 = vmatpush1.bf16.xpose.msra.mxu0 %v6092
      %6110 = vmatprep.subr.bf16.mxu0 %v6095
      %6111 = vmatpush1.bf16.xpose.msra.mxu0 %v6094
      %6112 = vmatprep.subr.bf16.mxu0 %v6097
      %6113 = vmatpush1.bf16.xpose.msra.mxu0 %v6096
      %6114 = vmatprep.subr.bf16.mxu0 0
      %6115 = vmatpush1.bf16.xpose.msra.mxu0 0
      %6116 = vmatprep.subr.bf16.mxu0 0
      %6117 = vmatpush1.bf16.xpose.msra.mxu0 0
      %6118 = vmatprep.subr.bf16.mxu0 0
      %6119 = vmatpush1.bf16.xpose.msra.mxu0 0
      %6120 = vmatprep.subr.bf16.mxu0 0
      %6121 = vmatpush1.bf16.xpose.msra.mxu0 0
      %6122 = vmatprep.subr.bf16.mxu0 0
      %6123 = vmatpush1.bf16.xpose.msra.mxu0 0
      %6124 = vmatprep.subr.bf16.mxu0 0
      %6125 = vmatpush1.bf16.xpose.msra.mxu0 0
      %6126 = vmatprep.subr.bf16.mxu0 0
      %6127 = vmatpush1.bf16.xpose.msra.mxu0 0
      %6128 = vmatprep.subr.bf16.mxu0 0
      %6129 = vmatpush1.bf16.xpose.msra.mxu0 0
      %6130 = vmatprep.mubr.bf16.mxu0 %v5679
      %6131 = vmatmul.mubr.bf16.gmra.mrb[0].mxu0 %v5678
      %v6132 = vpop.f32.mrb[0].mxu0
      %v6133 = vadd.f32 0.0, %v6132
      %v6134 = vpop.f32.mrb[0].mxu0
      %v6135 = vpop.f32.mrb[0].mxu0
      %v6136 = vpop.f32.mrb[0].mxu0
      %6137 = vdwg.mxu0
      %v6138 = vpack.c.bf16 %v6133, %v6133
      %v6139 = vld [vmem:[%s22] sm:$0xff]
      %6141 = vset.pattern.permute.xlu0 0
      %6142 = vperm.xlu0 %6141, %v6139
      %v6143 = vpop.permute.xlu0 %6142
      %v6146 = vsel %vm3534, %v5682, 0
      %v6149 = vsel %vm750, %v6138, 0
      %6151 = vmatprep.subr.bf16.mxu0 0
      %6152 = vmatpush1.bf16.msra.mxu0 %v6149
      %6153 = vmatprep.subr.bf16.mxu0 0
      %6154 = vmatpush1.bf16.msra.mxu0 0
      %6155 = vmatprep.subr.bf16.mxu0 0
      %6156 = vmatpush1.bf16.msra.mxu0 0
      %6157 = vmatprep.subr.bf16.mxu0 0
      %6158 = vmatpush1.bf16.msra.mxu0 0
      %6159 = vmatprep.subr.bf16.mxu0 0
      %6160 = vmatpush1.bf16.msra.mxu0 0
      %6161 = vmatprep.subr.bf16.mxu0 0
      %6162 = vmatpush1.bf16.msra.mxu0 0
      %6163 = vmatprep.subr.bf16.mxu0 0
      %6164 = vmatpush1.bf16.msra.mxu0 0
      %6165 = vmatprep.subr.bf16.mxu0 0
      %6166 = vmatpush1.bf16.msra.mxu0 0
      %6167 = vmatprep.subr.bf16.mxu0 0
      %6168 = vmatpush1.bf16.msra.mxu0 0
      %6169 = vmatprep.subr.bf16.mxu0 0
      %6170 = vmatpush1.bf16.msra.mxu0 0
      %6171 = vmatprep.subr.bf16.mxu0 0
      %6172 = vmatpush1.bf16.msra.mxu0 0
      %6173 = vmatprep.subr.bf16.mxu0 0
      %6174 = vmatpush1.bf16.msra.mxu0 0
      %6175 = vmatprep.subr.bf16.mxu0 0
      %6176 = vmatpush1.bf16.msra.mxu0 0
      %6177 = vmatprep.subr.bf16.mxu0 0
      %6178 = vmatpush1.bf16.msra.mxu0 0
      %6179 = vmatprep.subr.bf16.mxu0 0
      %6180 = vmatpush1.bf16.msra.mxu0 0
      %6181 = vmatprep.subr.bf16.mxu0 0
      %6182 = vmatpush1.bf16.msra.mxu0 0
      %6183 = vmatprep.mubr.bf16.mxu0 0
      %6184 = vmatmul.mubr.bf16.gmra.mrb[0].mxu0 %v6146
      %v6185 = vpop.f32.mrb[0].mxu0
      %v6186 = vadd.f32 %v6143, %v6185
      %v6187 = vpop.f32.mrb[0].mxu0
      %v6188 = vpop.f32.mrb[0].mxu0
      %v6189 = vpop.f32.mrb[0].mxu0
      %6190 = vdwg.mxu0
      %v6191 = vadd.f32 %v4692, %v6186
      %6192 = vst [vmem:[%s734] sm:$0xff] %v6191
      %6193 = vxpose.xlu0.c.b16.start [1/8] %v5487, 128
      %6194 = vxpose.xlu0.c.b16.cont [2/8] 0, 128
      %6195 = vxpose.xlu0.c.b16.cont [3/8] 0, 128
      %6196 = vxpose.xlu0.c.b16.cont [4/8] 0, 128
      %6197 = vxpose.xlu0.c.b16.cont [5/8] 0, 128
      %6198 = vxpose.xlu0.c.b16.cont [6/8] 0, 128
      %6199 = vxpose.xlu0.c.b16.cont [7/8] 0, 128
      %6200 = vxpose.xlu0.c.b16.end [8/8] 0, 128
      %v6201 = vpop.trf.xlu0
      %v6202 = vpop.trf.xlu0
      %v6203 = vpop.trf.xlu0
      %v6204 = vpop.trf.xlu0
      %v6205 = vpop.trf.xlu0
      %v6206 = vpop.trf.xlu0
      %v6207 = vpop.trf.xlu0
      %v6208 = vpop.trf.xlu0
      %v6210 = vsel %vm3534, %v6201, 0
      %v6213 = vsel %vm3534, %v6202, 0
      %v6216 = vsel %vm3534, %v6203, 0
      %v6219 = vsel %vm3534, %v6204, 0
      %v6222 = vsel %vm3534, %v6205, 0
      %v6225 = vsel %vm3534, %v6206, 0
      %v6228 = vsel %vm3534, %v6207, 0
      %v6231 = vsel %vm3534, %v6208, 0
      %6233 = vmatprep.subr.bf16.mxu0 %v5727
      %6234 = vmatpush1.bf16.msra.mxu0 %v5724
      %6235 = vmatprep.subr.bf16.mxu0 0
      %6236 = vmatpush1.bf16.msra.mxu0 0
      %6237 = vmatprep.subr.bf16.mxu0 0
      %6238 = vmatpush1.bf16.msra.mxu0 0
      %6239 = vmatprep.subr.bf16.mxu0 0
      %6240 = vmatpush1.bf16.msra.mxu0 0
      %6241 = vmatprep.subr.bf16.mxu0 0
      %6242 = vmatpush1.bf16.msra.mxu0 0
      %6243 = vmatprep.subr.bf16.mxu0 0
      %6244 = vmatpush1.bf16.msra.mxu0 0
      %6245 = vmatprep.subr.bf16.mxu0 0
      %6246 = vmatpush1.bf16.msra.mxu0 0
      %6247 = vmatprep.subr.bf16.mxu0 0
      %6248 = vmatpush1.bf16.msra.mxu0 0
      %6249 = vmatprep.subr.bf16.mxu0 0
      %6250 = vmatpush1.bf16.msra.mxu0 0
      %6251 = vmatprep.subr.bf16.mxu0 0
      %6252 = vmatpush1.bf16.msra.mxu0 0
      %6253 = vmatprep.subr.bf16.mxu0 0
      %6254 = vmatpush1.bf16.msra.mxu0 0
      %6255 = vmatprep.subr.bf16.mxu0 0
      %6256 = vmatpush1.bf16.msra.mxu0 0
      %6257 = vmatprep.subr.bf16.mxu0 0
      %6258 = vmatpush1.bf16.msra.mxu0 0
      %6259 = vmatprep.subr.bf16.mxu0 0
      %6260 = vmatpush1.bf16.msra.mxu0 0
      %6261 = vmatprep.subr.bf16.mxu0 0
      %6262 = vmatpush1.bf16.msra.mxu0 0
      %6263 = vmatprep.subr.bf16.mxu0 0
      %6264 = vmatpush1.bf16.msra.mxu0 0
      %6265 = vmatprep.mubr.bf16.mxu0 0
      %6266 = vmatmul.mubr.bf16.gmra.mrb[0].mxu0 %v6210
      %v6267 = vpop.f32.mrb[0].mxu0
      %v6268 = vadd.f32 0.0, %v6267
      %v6269 = vpop.f32.mrb[0].mxu0
      %v6270 = vadd.f32 0.0, %v6269
      %v6271 = vpop.f32.mrb[0].mxu0
      %v6272 = vadd.f32 0.0, %v6271
      %v6273 = vpop.f32.mrb[0].mxu0
      %v6274 = vadd.f32 0.0, %v6273
      %6275 = vmatprep.mubr.bf16.mxu0 0
      %6276 = vmatmul.mubr.bf16.gmra.mrb[0].mxu0 %v6213
      %v6277 = vpop.f32.mrb[0].mxu0
      %v6278 = vadd.f32 0.0, %v6277
      %v6279 = vpop.f32.mrb[0].mxu0
      %v6280 = vadd.f32 0.0, %v6279
      %v6281 = vpop.f32.mrb[0].mxu0
      %v6282 = vadd.f32 0.0, %v6281
      %v6283 = vpop.f32.mrb[0].mxu0
      %v6284 = vadd.f32 0.0, %v6283
      %6285 = vmatprep.mubr.bf16.mxu0 0
      %6286 = vmatmul.mubr.bf16.gmra.mrb[0].mxu0 %v6216
      %v6287 = vpop.f32.mrb[0].mxu0
      %v6288 = vadd.f32 0.0, %v6287
      %v6289 = vpop.f32.mrb[0].mxu0
      %v6290 = vadd.f32 0.0, %v6289
      %v6291 = vpop.f32.mrb[0].mxu0
      %v6292 = vadd.f32 0.0, %v6291
      %v6293 = vpop.f32.mrb[0].mxu0
      %v6294 = vadd.f32 0.0, %v6293
      %6295 = vmatprep.mubr.bf16.mxu0 0
      %6296 = vmatmul.mubr.bf16.gmra.mrb[0].mxu0 %v6219
      %v6297 = vpop.f32.mrb[0].mxu0
      %v6298 = vadd.f32 0.0, %v6297
      %v6299 = vpop.f32.mrb[0].mxu0
      %v6300 = vadd.f32 0.0, %v6299
      %v6301 = vpop.f32.mrb[0].mxu0
      %v6302 = vadd.f32 0.0, %v6301
      %v6303 = vpop.f32.mrb[0].mxu0
      %v6304 = vadd.f32 0.0, %v6303
      %6305 = vmatprep.mubr.bf16.mxu0 0
      %6306 = vmatmul.mubr.bf16.gmra.mrb[0].mxu0 %v6222
      %v6307 = vpop.f32.mrb[0].mxu0
      %v6308 = vadd.f32 0.0, %v6307
      %v6309 = vpop.f32.mrb[0].mxu0
      %v6310 = vadd.f32 0.0, %v6309
      %v6311 = vpop.f32.mrb[0].mxu0
      %v6312 = vadd.f32 0.0, %v6311
      %v6313 = vpop.f32.mrb[0].mxu0
      %v6314 = vadd.f32 0.0, %v6313
      %6315 = vmatprep.mubr.bf16.mxu0 0
      %6316 = vmatmul.mubr.bf16.gmra.mrb[0].mxu0 %v6225
      %v6317 = vpop.f32.mrb[0].mxu0
      %v6318 = vadd.f32 0.0, %v6317
      %v6319 = vpop.f32.mrb[0].mxu0
      %v6320 = vadd.f32 0.0, %v6319
      %v6321 = vpop.f32.mrb[0].mxu0
      %v6322 = vadd.f32 0.0, %v6321
      %v6323 = vpop.f32.mrb[0].mxu0
      %v6324 = vadd.f32 0.0, %v6323
      %6325 = vmatprep.mubr.bf16.mxu0 0
      %6326 = vmatmul.mubr.bf16.gmra.mrb[0].mxu0 %v6228
      %v6327 = vpop.f32.mrb[0].mxu0
      %v6328 = vadd.f32 0.0, %v6327
      %v6329 = vpop.f32.mrb[0].mxu0
      %v6330 = vadd.f32 0.0, %v6329
      %v6331 = vpop.f32.mrb[0].mxu0
      %v6332 = vadd.f32 0.0, %v6331
      %v6333 = vpop.f32.mrb[0].mxu0
      %v6334 = vadd.f32 0.0, %v6333
      %6335 = vmatprep.mubr.bf16.mxu0 0
      %6336 = vmatmul.mubr.bf16.gmra.mrb[0].mxu0 %v6231
      %v6337 = vpop.f32.mrb[0].mxu0
      %v6338 = vadd.f32 0.0, %v6337
      %v6339 = vpop.f32.mrb[0].mxu0
      %v6340 = vadd.f32 0.0, %v6339
      %v6341 = vpop.f32.mrb[0].mxu0
      %v6342 = vadd.f32 0.0, %v6341
      %v6343 = vpop.f32.mrb[0].mxu0
      %v6344 = vadd.f32 0.0, %v6343
      %6345 = vdwg.mxu0
      %v6346 = vmax.f32 %v6268, %v6270
      %6347 = vmax.xlane.f32.xlu0 %v6346
      %v6348 = vpop.xlane.xlu0 %6347
      %v6349 = vmax.f32 %v6272, %v6274
      %6350 = vmax.xlane.f32.xlu0 %v6349
      %v6351 = vpop.xlane.xlu0 %6350
      %v6352 = vmax.f32 %v6278, %v6280
      %6353 = vmax.xlane.f32.xlu0 %v6352
      %v6354 = vpop.xlane.xlu0 %6353
      %v6355 = vmax.f32 %v6282, %v6284
      %6356 = vmax.xlane.f32.xlu0 %v6355
      %v6357 = vpop.xlane.xlu0 %6356
      %v6358 = vmax.f32 %v6288, %v6290
      %6359 = vmax.xlane.f32.xlu0 %v6358
      %v6360 = vpop.xlane.xlu0 %6359
      %v6361 = vmax.f32 %v6292, %v6294
      %6362 = vmax.xlane.f32.xlu0 %v6361
      %v6363 = vpop.xlane.xlu0 %6362
      %v6364 = vmax.f32 %v6298, %v6300
      %6365 = vmax.xlane.f32.xlu0 %v6364
      %v6366 = vpop.xlane.xlu0 %6365
      %v6367 = vmax.f32 %v6302, %v6304
      %6368 = vmax.xlane.f32.xlu0 %v6367
      %v6369 = vpop.xlane.xlu0 %6368
      %v6370 = vmax.f32 %v6308, %v6310
      %6371 = vmax.xlane.f32.xlu0 %v6370
      %v6372 = vpop.xlane.xlu0 %6371
      %v6373 = vmax.f32 %v6312, %v6314
      %6374 = vmax.xlane.f32.xlu0 %v6373
      %v6375 = vpop.xlane.xlu0 %6374
      %v6376 = vmax.f32 %v6318, %v6320
      %6377 = vmax.xlane.f32.xlu0 %v6376
      %v6378 = vpop.xlane.xlu0 %6377
      %v6379 = vmax.f32 %v6322, %v6324
      %6380 = vmax.xlane.f32.xlu0 %v6379
      %v6381 = vpop.xlane.xlu0 %6380
      %v6382 = vmax.f32 %v6328, %v6330
      %6383 = vmax.xlane.f32.xlu0 %v6382
      %v6384 = vpop.xlane.xlu0 %6383
      %v6385 = vmax.f32 %v6332, %v6334
      %6386 = vmax.xlane.f32.xlu0 %v6385
      %v6387 = vpop.xlane.xlu0 %6386
      %v6388 = vmax.f32 %v6338, %v6340
      %6389 = vmax.xlane.f32.xlu0 %v6388
      %v6390 = vpop.xlane.xlu0 %6389
      %v6391 = vmax.f32 %v6342, %v6344
      %6392 = vmax.xlane.f32.xlu0 %v6391
      %v6393 = vpop.xlane.xlu0 %6392
      %v6394 = vsub.f32 %v6268, %v6348
      %v6395 = vsub.f32 %v6270, %v6348
      %v6396 = vsub.f32 %v6272, %v6351
      %v6397 = vsub.f32 %v6274, %v6351
      %v6398 = vsub.f32 %v6278, %v6354
      %v6399 = vsub.f32 %v6280, %v6354
      %v6400 = vsub.f32 %v6282, %v6357
      %v6401 = vsub.f32 %v6284, %v6357
      %v6402 = vsub.f32 %v6288, %v6360
      %v6403 = vsub.f32 %v6290, %v6360
      %v6404 = vsub.f32 %v6292, %v6363
      %v6405 = vsub.f32 %v6294, %v6363
      %v6406 = vsub.f32 %v6298, %v6366
      %v6407 = vsub.f32 %v6300, %v6366
      %v6408 = vsub.f32 %v6302, %v6369
      %v6409 = vsub.f32 %v6304, %v6369
      %v6410 = vsub.f32 %v6308, %v6372
      %v6411 = vsub.f32 %v6310, %v6372
      %v6412 = vsub.f32 %v6312, %v6375
      %v6413 = vsub.f32 %v6314, %v6375
      %v6414 = vsub.f32 %v6318, %v6378
      %v6415 = vsub.f32 %v6320, %v6378
      %v6416 = vsub.f32 %v6322, %v6381
      %v6417 = vsub.f32 %v6324, %v6381
      %v6418 = vsub.f32 %v6328, %v6384
      %v6419 = vsub.f32 %v6330, %v6384
      %v6420 = vsub.f32 %v6332, %v6387
      %v6421 = vsub.f32 %v6334, %v6387
      %v6422 = vsub.f32 %v6338, %v6390
      %v6423 = vsub.f32 %v6340, %v6390
      %v6424 = vsub.f32 %v6342, %v6393
      %v6425 = vsub.f32 %v6344, %v6393
      %v6426 = vmul.f32 %v6394, 1.442695
      %v6427 = vpow.pop %v6426
      %v6428 = vmul.f32 %v6395, 1.442695
      %v6429 = vpow.pop %v6428
      %v6430 = vmul.f32 %v6396, 1.442695
      %v6431 = vpow.pop %v6430
      %v6432 = vmul.f32 %v6397, 1.442695
      %v6433 = vpow.pop %v6432
      %v6434 = vmul.f32 %v6398, 1.442695
      %v6435 = vpow.pop %v6434
      %v6436 = vmul.f32 %v6399, 1.442695
      %v6437 = vpow.pop %v6436
      %v6438 = vmul.f32 %v6400, 1.442695
      %v6439 = vpow.pop %v6438
      %v6440 = vmul.f32 %v6401, 1.442695
      %v6441 = vpow.pop %v6440
      %v6442 = vmul.f32 %v6402, 1.442695
      %v6443 = vpow.pop %v6442
      %v6444 = vmul.f32 %v6403, 1.442695
      %v6445 = vpow.pop %v6444
      %v6446 = vmul.f32 %v6404, 1.442695
      %v6447 = vpow.pop %v6446
      %v6448 = vmul.f32 %v6405, 1.442695
      %v6449 = vpow.pop %v6448
      %v6450 = vmul.f32 %v6406, 1.442695
      %v6451 = vpow.pop %v6450
      %v6452 = vmul.f32 %v6407, 1.442695
      %v6453 = vpow.pop %v6452
      %v6454 = vmul.f32 %v6408, 1.442695
      %v6455 = vpow.pop %v6454
      %v6456 = vmul.f32 %v6409, 1.442695
      %v6457 = vpow.pop %v6456
      %v6458 = vmul.f32 %v6410, 1.442695
      %v6459 = vpow.pop %v6458
      %v6460 = vmul.f32 %v6411, 1.442695
      %v6461 = vpow.pop %v6460
      %v6462 = vmul.f32 %v6412, 1.442695
      %v6463 = vpow.pop %v6462
      %v6464 = vmul.f32 %v6413, 1.442695
      %v6465 = vpow.pop %v6464
      %v6466 = vmul.f32 %v6414, 1.442695
      %v6467 = vpow.pop %v6466
      %v6468 = vmul.f32 %v6415, 1.442695
      %v6469 = vpow.pop %v6468
      %v6470 = vmul.f32 %v6416, 1.442695
      %v6471 = vpow.pop %v6470
      %v6472 = vmul.f32 %v6417, 1.442695
      %v6473 = vpow.pop %v6472
      %v6474 = vmul.f32 %v6418, 1.442695
      %v6475 = vpow.pop %v6474
      %v6476 = vmul.f32 %v6419, 1.442695
      %v6477 = vpow.pop %v6476
      %v6478 = vmul.f32 %v6420, 1.442695
      %v6479 = vpow.pop %v6478
      %v6480 = vmul.f32 %v6421, 1.442695
      %v6481 = vpow.pop %v6480
      %v6482 = vmul.f32 %v6422, 1.442695
      %v6483 = vpow.pop %v6482
      %v6484 = vmul.f32 %v6423, 1.442695
      %v6485 = vpow.pop %v6484
      %v6486 = vmul.f32 %v6424, 1.442695
      %v6487 = vpow.pop %v6486
      %v6488 = vmul.f32 %v6425, 1.442695
      %v6489 = vpow.pop %v6488
      %v6490 = vadd.f32 %v6427, %v6429
      %6491 = vadd.xlane.f32.xlu0 %v6490
      %v6492 = vpop.xlane.xlu0 %6491
      %v6493 = vadd.f32 %v6431, %v6433
      %6494 = vadd.xlane.f32.xlu0 %v6493
      %v6495 = vpop.xlane.xlu0 %6494
      %v6496 = vadd.f32 %v6435, %v6437
      %6497 = vadd.xlane.f32.xlu0 %v6496
      %v6498 = vpop.xlane.xlu0 %6497
      %v6499 = vadd.f32 %v6439, %v6441
      %6500 = vadd.xlane.f32.xlu0 %v6499
      %v6501 = vpop.xlane.xlu0 %6500
      %v6502 = vadd.f32 %v6443, %v6445
      %6503 = vadd.xlane.f32.xlu0 %v6502
      %v6504 = vpop.xlane.xlu0 %6503
      %v6505 = vadd.f32 %v6447, %v6449
      %6506 = vadd.xlane.f32.xlu0 %v6505
      %v6507 = vpop.xlane.xlu0 %6506
      %v6508 = vadd.f32 %v6451, %v6453
      %6509 = vadd.xlane.f32.xlu0 %v6508
      %v6510 = vpop.xlane.xlu0 %6509
      %v6511 = vadd.f32 %v6455, %v6457
      %6512 = vadd.xlane.f32.xlu0 %v6511
      %v6513 = vpop.xlane.xlu0 %6512
      %v6514 = vadd.f32 %v6459, %v6461
      %6515 = vadd.xlane.f32.xlu0 %v6514
      %v6516 = vpop.xlane.xlu0 %6515
      %v6517 = vadd.f32 %v6463, %v6465
      %6518 = vadd.xlane.f32.xlu0 %v6517
      %v6519 = vpop.xlane.xlu0 %6518
      %v6520 = vadd.f32 %v6467, %v6469
      %6521 = vadd.xlane.f32.xlu0 %v6520
      %v6522 = vpop.xlane.xlu0 %6521
      %v6523 = vadd.f32 %v6471, %v6473
      %6524 = vadd.xlane.f32.xlu0 %v6523
      %v6525 = vpop.xlane.xlu0 %6524
      %v6526 = vadd.f32 %v6475, %v6477
      %6527 = vadd.xlane.f32.xlu0 %v6526
      %v6528 = vpop.xlane.xlu0 %6527
      %v6529 = vadd.f32 %v6479, %v6481
      %6530 = vadd.xlane.f32.xlu0 %v6529
      %v6531 = vpop.xlane.xlu0 %6530
      %v6532 = vadd.f32 %v6483, %v6485
      %6533 = vadd.xlane.f32.xlu0 %v6532
      %v6534 = vpop.xlane.xlu0 %6533
      %v6535 = vadd.f32 %v6487, %v6489
      %6536 = vadd.xlane.f32.xlu0 %v6535
      %v6537 = vpop.xlane.xlu0 %6536
      %v6538 = vrcp.pop %v6492
      %v6539 = vrcp.pop %v6495
      %v6540 = vrcp.pop %v6498
      %v6541 = vrcp.pop %v6501
      %v6542 = vrcp.pop %v6504
      %v6543 = vrcp.pop %v6507
      %v6544 = vrcp.pop %v6510
      %v6545 = vrcp.pop %v6513
      %v6546 = vrcp.pop %v6516
      %v6547 = vrcp.pop %v6519
      %v6548 = vrcp.pop %v6522
      %v6549 = vrcp.pop %v6525
      %v6550 = vrcp.pop %v6528
      %v6551 = vrcp.pop %v6531
      %v6552 = vrcp.pop %v6534
      %v6553 = vrcp.pop %v6537
      %v6554 = vmul.f32 %v6427, %v6538
      %v6555 = vmul.f32 %v6429, %v6538
      %v6556 = vmul.f32 %v6431, %v6539
      %v6557 = vmul.f32 %v6433, %v6539
      %v6558 = vmul.f32 %v6435, %v6540
      %v6559 = vmul.f32 %v6437, %v6540
      %v6560 = vmul.f32 %v6439, %v6541
      %v6561 = vmul.f32 %v6441, %v6541
      %v6562 = vmul.f32 %v6443, %v6542
      %v6563 = vmul.f32 %v6445, %v6542
      %v6564 = vmul.f32 %v6447, %v6543
      %v6565 = vmul.f32 %v6449, %v6543
      %v6566 = vmul.f32 %v6451, %v6544
      %v6567 = vmul.f32 %v6453, %v6544
      %v6568 = vmul.f32 %v6455, %v6545
      %v6569 = vmul.f32 %v6457, %v6545
      %v6570 = vmul.f32 %v6459, %v6546
      %v6571 = vmul.f32 %v6461, %v6546
      %v6572 = vmul.f32 %v6463, %v6547
      %v6573 = vmul.f32 %v6465, %v6547
      %v6574 = vmul.f32 %v6467, %v6548
      %v6575 = vmul.f32 %v6469, %v6548
      %v6576 = vmul.f32 %v6471, %v6549
      %v6577 = vmul.f32 %v6473, %v6549
      %v6578 = vmul.f32 %v6475, %v6550
      %v6579 = vmul.f32 %v6477, %v6550
      %v6580 = vmul.f32 %v6479, %v6551
      %v6581 = vmul.f32 %v6481, %v6551
      %v6582 = vmul.f32 %v6483, %v6552
      %v6583 = vmul.f32 %v6485, %v6552
      %v6584 = vmul.f32 %v6487, %v6553
      %v6585 = vmul.f32 %v6489, %v6553
      %v6586 = vpack.c.bf16 %v6556, %v6554
      %v6587 = vpack.c.bf16 %v6557, %v6555
      %v6588 = vpack.c.bf16 %v6560, %v6558
      %v6589 = vpack.c.bf16 %v6561, %v6559
      %v6590 = vpack.c.bf16 %v6564, %v6562
      %v6591 = vpack.c.bf16 %v6565, %v6563
      %v6592 = vpack.c.bf16 %v6568, %v6566
      %v6593 = vpack.c.bf16 %v6569, %v6567
      %v6594 = vpack.c.bf16 %v6572, %v6570
      %v6595 = vpack.c.bf16 %v6573, %v6571
      %v6596 = vpack.c.bf16 %v6576, %v6574
      %v6597 = vpack.c.bf16 %v6577, %v6575
      %v6598 = vpack.c.bf16 %v6580, %v6578
      %v6599 = vpack.c.bf16 %v6581, %v6579
      %v6600 = vpack.c.bf16 %v6584, %v6582
      %v6601 = vpack.c.bf16 %v6585, %v6583
      %6602 = vmatprep.subr.bf16.mxu0 %v6587
      %6603 = vmatpush1.bf16.xpose.msra.mxu0 %v6586
      %6604 = vmatprep.subr.bf16.mxu0 %v6589
      %6605 = vmatpush1.bf16.xpose.msra.mxu0 %v6588
      %6606 = vmatprep.subr.bf16.mxu0 %v6591
      %6607 = vmatpush1.bf16.xpose.msra.mxu0 %v6590
      %6608 = vmatprep.subr.bf16.mxu0 %v6593
      %6609 = vmatpush1.bf16.xpose.msra.mxu0 %v6592
      %6610 = vmatprep.subr.bf16.mxu0 %v6595
      %6611 = vmatpush1.bf16.xpose.msra.mxu0 %v6594
      %6612 = vmatprep.subr.bf16.mxu0 %v6597
      %6613 = vmatpush1.bf16.xpose.msra.mxu0 %v6596
      %6614 = vmatprep.subr.bf16.mxu0 %v6599
      %6615 = vmatpush1.bf16.xpose.msra.mxu0 %v6598
      %6616 = vmatprep.subr.bf16.mxu0 %v6601
      %6617 = vmatpush1.bf16.xpose.msra.mxu0 %v6600
      %6618 = vmatprep.subr.bf16.mxu0 0
      %6619 = vmatpush1.bf16.xpose.msra.mxu0 0
      %6620 = vmatprep.subr.bf16.mxu0 0
      %6621 = vmatpush1.bf16.xpose.msra.mxu0 0
      %6622 = vmatprep.subr.bf16.mxu0 0
      %6623 = vmatpush1.bf16.xpose.msra.mxu0 0
      %6624 = vmatprep.subr.bf16.mxu0 0
      %6625 = vmatpush1.bf16.xpose.msra.mxu0 0
      %6626 = vmatprep.subr.bf16.mxu0 0
      %6627 = vmatpush1.bf16.xpose.msra.mxu0 0
      %6628 = vmatprep.subr.bf16.mxu0 0
      %6629 = vmatpush1.bf16.xpose.msra.mxu0 0
      %6630 = vmatprep.subr.bf16.mxu0 0
      %6631 = vmatpush1.bf16.xpose.msra.mxu0 0
      %6632 = vmatprep.subr.bf16.mxu0 0
      %6633 = vmatpush1.bf16.xpose.msra.mxu0 0
      %6634 = vmatprep.mubr.bf16.mxu0 %v5679
      %6635 = vmatmul.mubr.bf16.gmra.mrb[0].mxu0 %v5678
      %v6636 = vpop.f32.mrb[0].mxu0
      %v6637 = vadd.f32 0.0, %v6636
      %v6638 = vpop.f32.mrb[0].mxu0
      %v6639 = vpop.f32.mrb[0].mxu0
      %v6640 = vpop.f32.mrb[0].mxu0
      %6641 = vdwg.mxu0
      %v6642 = vpack.c.bf16 %v6637, %v6637
      %v6643 = vld [vmem:[%s22] sm:$0xff]
      %6645 = vset.pattern.permute.xlu0 0
      %6646 = vperm.xlu0 %6645, %v6643
      %v6647 = vpop.permute.xlu0 %6646
      %v6650 = vsel %vm750, %v6642, 0
      %6652 = vmatprep.subr.bf16.mxu0 0
      %6653 = vmatpush1.bf16.msra.mxu0 %v6650
      %6654 = vmatprep.subr.bf16.mxu0 0
      %6655 = vmatpush1.bf16.msra.mxu0 0
      %6656 = vmatprep.subr.bf16.mxu0 0
      %6657 = vmatpush1.bf16.msra.mxu0 0
      %6658 = vmatprep.subr.bf16.mxu0 0
      %6659 = vmatpush1.bf16.msra.mxu0 0
      %6660 = vmatprep.subr.bf16.mxu0 0
      %6661 = vmatpush1.bf16.msra.mxu0 0
      %6662 = vmatprep.subr.bf16.mxu0 0
      %6663 = vmatpush1.bf16.msra.mxu0 0
      %6664 = vmatprep.subr.bf16.mxu0 0
      %6665 = vmatpush1.bf16.msra.mxu0 0
      %6666 = vmatprep.subr.bf16.mxu0 0
      %6667 = vmatpush1.bf16.msra.mxu0 0
      %6668 = vmatprep.subr.bf16.mxu0 0
      %6669 = vmatpush1.bf16.msra.mxu0 0
      %6670 = vmatprep.subr.bf16.mxu0 0
      %6671 = vmatpush1.bf16.msra.mxu0 0
      %6672 = vmatprep.subr.bf16.mxu0 0
      %6673 = vmatpush1.bf16.msra.mxu0 0
      %6674 = vmatprep.subr.bf16.mxu0 0
      %6675 = vmatpush1.bf16.msra.mxu0 0
      %6676 = vmatprep.subr.bf16.mxu0 0
      %6677 = vmatpush1.bf16.msra.mxu0 0
      %6678 = vmatprep.subr.bf16.mxu0 0
      %6679 = vmatpush1.bf16.msra.mxu0 0
      %6680 = vmatprep.subr.bf16.mxu0 0
      %6681 = vmatpush1.bf16.msra.mxu0 0
      %6682 = vmatprep.subr.bf16.mxu0 0
      %6683 = vmatpush1.bf16.msra.mxu0 0
      %6684 = vmatprep.mubr.bf16.mxu0 0
      %6685 = vmatmul.mubr.bf16.gmra.mrb[0].mxu0 %v6146
      %v6686 = vpop.f32.mrb[0].mxu0
      %v6687 = vadd.f32 %v6647, %v6686
      %v6688 = vpop.f32.mrb[0].mxu0
      %v6689 = vpop.f32.mrb[0].mxu0
      %v6690 = vpop.f32.mrb[0].mxu0
      %6691 = vdwg.mxu0
      %v6692 = vadd.f32 %v4693, %v6687
      %6693 = vst [vmem:[%s734 + $0x8] sm:$0xff] %v6692
      %6694 = vxpose.xlu0.c.b16.start [1/8] %v5488, 128
      %6695 = vxpose.xlu0.c.b16.cont [2/8] 0, 128
      %6696 = vxpose.xlu0.c.b16.cont [3/8] 0, 128
      %6697 = vxpose.xlu0.c.b16.cont [4/8] 0, 128
      %6698 = vxpose.xlu0.c.b16.cont [5/8] 0, 128
      %6699 = vxpose.xlu0.c.b16.cont [6/8] 0, 128
      %6700 = vxpose.xlu0.c.b16.cont [7/8] 0, 128
      %6701 = vxpose.xlu0.c.b16.end [8/8] 0, 128
      %v6702 = vpop.trf.xlu0
      %v6703 = vpop.trf.xlu0
      %v6704 = vpop.trf.xlu0
      %v6705 = vpop.trf.xlu0
      %v6706 = vpop.trf.xlu0
      %v6707 = vpop.trf.xlu0
      %v6708 = vpop.trf.xlu0
      %v6709 = vpop.trf.xlu0
      %v6711 = vsel %vm3534, %v6702, 0
      %v6714 = vsel %vm3534, %v6703, 0
      %v6717 = vsel %vm3534, %v6704, 0
      %v6720 = vsel %vm3534, %v6705, 0
      %v6723 = vsel %vm3534, %v6706, 0
      %v6726 = vsel %vm3534, %v6707, 0
      %v6729 = vsel %vm3534, %v6708, 0
      %v6732 = vsel %vm3534, %v6709, 0
      %v6735 = vsel %vm750, %v5584, 0
      %v6738 = vsel %vm750, %v5585, 0
      %6740 = vmatprep.subr.bf16.mxu0 %v6738
      %6741 = vmatpush1.bf16.msra.mxu0 %v6735
      %6742 = vmatprep.subr.bf16.mxu0 0
      %6743 = vmatpush1.bf16.msra.mxu0 0
      %6744 = vmatprep.subr.bf16.mxu0 0
      %6745 = vmatpush1.bf16.msra.mxu0 0
      %6746 = vmatprep.subr.bf16.mxu0 0
      %6747 = vmatpush1.bf16.msra.mxu0 0
      %6748 = vmatprep.subr.bf16.mxu0 0
      %6749 = vmatpush1.bf16.msra.mxu0 0
      %6750 = vmatprep.subr.bf16.mxu0 0
      %6751 = vmatpush1.bf16.msra.mxu0 0
      %6752 = vmatprep.subr.bf16.mxu0 0
      %6753 = vmatpush1.bf16.msra.mxu0 0
      %6754 = vmatprep.subr.bf16.mxu0 0
      %6755 = vmatpush1.bf16.msra.mxu0 0
      %6756 = vmatprep.subr.bf16.mxu0 0
      %6757 = vmatpush1.bf16.msra.mxu0 0
      %6758 = vmatprep.subr.bf16.mxu0 0
      %6759 = vmatpush1.bf16.msra.mxu0 0
      %6760 = vmatprep.subr.bf16.mxu0 0
      %6761 = vmatpush1.bf16.msra.mxu0 0
      %6762 = vmatprep.subr.bf16.mxu0 0
      %6763 = vmatpush1.bf16.msra.mxu0 0
      %6764 = vmatprep.subr.bf16.mxu0 0
      %6765 = vmatpush1.bf16.msra.mxu0 0
      %6766 = vmatprep.subr.bf16.mxu0 0
      %6767 = vmatpush1.bf16.msra.mxu0 0
      %6768 = vmatprep.subr.bf16.mxu0 0
      %6769 = vmatpush1.bf16.msra.mxu0 0
      %6770 = vmatprep.subr.bf16.mxu0 0
      %6771 = vmatpush1.bf16.msra.mxu0 0
      %6772 = vmatprep.mubr.bf16.mxu0 0
      %6773 = vmatmul.mubr.bf16.gmra.mrb[0].mxu0 %v6711
      %v6774 = vpop.f32.mrb[0].mxu0
      %v6775 = vadd.f32 0.0, %v6774
      %v6776 = vpop.f32.mrb[0].mxu0
      %v6777 = vadd.f32 0.0, %v6776
      %v6778 = vpop.f32.mrb[0].mxu0
      %v6779 = vadd.f32 0.0, %v6778
      %v6780 = vpop.f32.mrb[0].mxu0
      %v6781 = vadd.f32 0.0, %v6780
      %6782 = vmatprep.mubr.bf16.mxu0 0
      %6783 = vmatmul.mubr.bf16.gmra.mrb[0].mxu0 %v6714
      %v6784 = vpop.f32.mrb[0].mxu0
      %v6785 = vadd.f32 0.0, %v6784
      %v6786 = vpop.f32.mrb[0].mxu0
      %v6787 = vadd.f32 0.0, %v6786
      %v6788 = vpop.f32.mrb[0].mxu0
      %v6789 = vadd.f32 0.0, %v6788
      %v6790 = vpop.f32.mrb[0].mxu0
      %v6791 = vadd.f32 0.0, %v6790
      %6792 = vmatprep.mubr.bf16.mxu0 0
      %6793 = vmatmul.mubr.bf16.gmra.mrb[0].mxu0 %v6717
      %v6794 = vpop.f32.mrb[0].mxu0
      %v6795 = vadd.f32 0.0, %v6794
      %v6796 = vpop.f32.mrb[0].mxu0
      %v6797 = vadd.f32 0.0, %v6796
      %v6798 = vpop.f32.mrb[0].mxu0
      %v6799 = vadd.f32 0.0, %v6798
      %v6800 = vpop.f32.mrb[0].mxu0
      %v6801 = vadd.f32 0.0, %v6800
      %6802 = vmatprep.mubr.bf16.mxu0 0
      %6803 = vmatmul.mubr.bf16.gmra.mrb[0].mxu0 %v6720
      %v6804 = vpop.f32.mrb[0].mxu0
      %v6805 = vadd.f32 0.0, %v6804
      %v6806 = vpop.f32.mrb[0].mxu0
      %v6807 = vadd.f32 0.0, %v6806
      %v6808 = vpop.f32.mrb[0].mxu0
      %v6809 = vadd.f32 0.0, %v6808
      %v6810 = vpop.f32.mrb[0].mxu0
      %v6811 = vadd.f32 0.0, %v6810
      %6812 = vmatprep.mubr.bf16.mxu0 0
      %6813 = vmatmul.mubr.bf16.gmra.mrb[0].mxu0 %v6723
      %v6814 = vpop.f32.mrb[0].mxu0
      %v6815 = vadd.f32 0.0, %v6814
      %v6816 = vpop.f32.mrb[0].mxu0
      %v6817 = vadd.f32 0.0, %v6816
      %v6818 = vpop.f32.mrb[0].mxu0
      %v6819 = vadd.f32 0.0, %v6818
      %v6820 = vpop.f32.mrb[0].mxu0
      %v6821 = vadd.f32 0.0, %v6820
      %6822 = vmatprep.mubr.bf16.mxu0 0
      %6823 = vmatmul.mubr.bf16.gmra.mrb[0].mxu0 %v6726
      %v6824 = vpop.f32.mrb[0].mxu0
      %v6825 = vadd.f32 0.0, %v6824
      %v6826 = vpop.f32.mrb[0].mxu0
      %v6827 = vadd.f32 0.0, %v6826
      %v6828 = vpop.f32.mrb[0].mxu0
      %v6829 = vadd.f32 0.0, %v6828
      %v6830 = vpop.f32.mrb[0].mxu0
      %v6831 = vadd.f32 0.0, %v6830
      %6832 = vmatprep.mubr.bf16.mxu0 0
      %6833 = vmatmul.mubr.bf16.gmra.mrb[0].mxu0 %v6729
      %v6834 = vpop.f32.mrb[0].mxu0
      %v6835 = vadd.f32 0.0, %v6834
      %v6836 = vpop.f32.mrb[0].mxu0
      %v6837 = vadd.f32 0.0, %v6836
      %v6838 = vpop.f32.mrb[0].mxu0
      %v6839 = vadd.f32 0.0, %v6838
      %v6840 = vpop.f32.mrb[0].mxu0
      %v6841 = vadd.f32 0.0, %v6840
      %6842 = vmatprep.mubr.bf16.mxu0 0
      %6843 = vmatmul.mubr.bf16.gmra.mrb[0].mxu0 %v6732
      %v6844 = vpop.f32.mrb[0].mxu0
      %v6845 = vadd.f32 0.0, %v6844
      %v6846 = vpop.f32.mrb[0].mxu0
      %v6847 = vadd.f32 0.0, %v6846
      %v6848 = vpop.f32.mrb[0].mxu0
      %v6849 = vadd.f32 0.0, %v6848
      %v6850 = vpop.f32.mrb[0].mxu0
      %v6851 = vadd.f32 0.0, %v6850
      %6852 = vdwg.mxu0
      %v6853 = vmax.f32 %v6775, %v6777
      %6854 = vmax.xlane.f32.xlu0 %v6853
      %v6855 = vpop.xlane.xlu0 %6854
      %v6856 = vmax.f32 %v6779, %v6781
      %6857 = vmax.xlane.f32.xlu0 %v6856
      %v6858 = vpop.xlane.xlu0 %6857
      %v6859 = vmax.f32 %v6785, %v6787
      %6860 = vmax.xlane.f32.xlu0 %v6859
      %v6861 = vpop.xlane.xlu0 %6860
      %v6862 = vmax.f32 %v6789, %v6791
      %6863 = vmax.xlane.f32.xlu0 %v6862
      %v6864 = vpop.xlane.xlu0 %6863
      %v6865 = vmax.f32 %v6795, %v6797
      %6866 = vmax.xlane.f32.xlu0 %v6865
      %v6867 = vpop.xlane.xlu0 %6866
      %v6868 = vmax.f32 %v6799, %v6801
      %6869 = vmax.xlane.f32.xlu0 %v6868
      %v6870 = vpop.xlane.xlu0 %6869
      %v6871 = vmax.f32 %v6805, %v6807
      %6872 = vmax.xlane.f32.xlu0 %v6871
      %v6873 = vpop.xlane.xlu0 %6872
      %v6874 = vmax.f32 %v6809, %v6811
      %6875 = vmax.xlane.f32.xlu0 %v6874
      %v6876 = vpop.xlane.xlu0 %6875
      %v6877 = vmax.f32 %v6815, %v6817
      %6878 = vmax.xlane.f32.xlu0 %v6877
      %v6879 = vpop.xlane.xlu0 %6878
      %v6880 = vmax.f32 %v6819, %v6821
      %6881 = vmax.xlane.f32.xlu0 %v6880
      %v6882 = vpop.xlane.xlu0 %6881
      %v6883 = vmax.f32 %v6825, %v6827
      %6884 = vmax.xlane.f32.xlu0 %v6883
      %v6885 = vpop.xlane.xlu0 %6884
      %v6886 = vmax.f32 %v6829, %v6831
      %6887 = vmax.xlane.f32.xlu0 %v6886
      %v6888 = vpop.xlane.xlu0 %6887
      %v6889 = vmax.f32 %v6835, %v6837
      %6890 = vmax.xlane.f32.xlu0 %v6889
      %v6891 = vpop.xlane.xlu0 %6890
      %v6892 = vmax.f32 %v6839, %v6841
      %6893 = vmax.xlane.f32.xlu0 %v6892
      %v6894 = vpop.xlane.xlu0 %6893
      %v6895 = vmax.f32 %v6845, %v6847
      %6896 = vmax.xlane.f32.xlu0 %v6895
      %v6897 = vpop.xlane.xlu0 %6896
      %v6898 = vmax.f32 %v6849, %v6851
      %6899 = vmax.xlane.f32.xlu0 %v6898
      %v6900 = vpop.xlane.xlu0 %6899
      %v6901 = vsub.f32 %v6775, %v6855
      %v6902 = vsub.f32 %v6777, %v6855
      %v6903 = vsub.f32 %v6779, %v6858
      %v6904 = vsub.f32 %v6781, %v6858
      %v6905 = vsub.f32 %v6785, %v6861
      %v6906 = vsub.f32 %v6787, %v6861
      %v6907 = vsub.f32 %v6789, %v6864
      %v6908 = vsub.f32 %v6791, %v6864
      %v6909 = vsub.f32 %v6795, %v6867
      %v6910 = vsub.f32 %v6797, %v6867
      %v6911 = vsub.f32 %v6799, %v6870
      %v6912 = vsub.f32 %v6801, %v6870
      %v6913 = vsub.f32 %v6805, %v6873
      %v6914 = vsub.f32 %v6807, %v6873
      %v6915 = vsub.f32 %v6809, %v6876
      %v6916 = vsub.f32 %v6811, %v6876
      %v6917 = vsub.f32 %v6815, %v6879
      %v6918 = vsub.f32 %v6817, %v6879
      %v6919 = vsub.f32 %v6819, %v6882
      %v6920 = vsub.f32 %v6821, %v6882
      %v6921 = vsub.f32 %v6825, %v6885
      %v6922 = vsub.f32 %v6827, %v6885
      %v6923 = vsub.f32 %v6829, %v6888
      %v6924 = vsub.f32 %v6831, %v6888
      %v6925 = vsub.f32 %v6835, %v6891
      %v6926 = vsub.f32 %v6837, %v6891
      %v6927 = vsub.f32 %v6839, %v6894
      %v6928 = vsub.f32 %v6841, %v6894
      %v6929 = vsub.f32 %v6845, %v6897
      %v6930 = vsub.f32 %v6847, %v6897
      %v6931 = vsub.f32 %v6849, %v6900
      %v6932 = vsub.f32 %v6851, %v6900
      %v6933 = vmul.f32 %v6901, 1.442695
      %v6934 = vpow.pop %v6933
      %v6935 = vmul.f32 %v6902, 1.442695
      %v6936 = vpow.pop %v6935
      %v6937 = vmul.f32 %v6903, 1.442695
      %v6938 = vpow.pop %v6937
      %v6939 = vmul.f32 %v6904, 1.442695
      %v6940 = vpow.pop %v6939
      %v6941 = vmul.f32 %v6905, 1.442695
      %v6942 = vpow.pop %v6941
      %v6943 = vmul.f32 %v6906, 1.442695
      %v6944 = vpow.pop %v6943
      %v6945 = vmul.f32 %v6907, 1.442695
      %v6946 = vpow.pop %v6945
      %v6947 = vmul.f32 %v6908, 1.442695
      %v6948 = vpow.pop %v6947
      %v6949 = vmul.f32 %v6909, 1.442695
      %v6950 = vpow.pop %v6949
      %v6951 = vmul.f32 %v6910, 1.442695
      %v6952 = vpow.pop %v6951
      %v6953 = vmul.f32 %v6911, 1.442695
      %v6954 = vpow.pop %v6953
      %v6955 = vmul.f32 %v6912, 1.442695
      %v6956 = vpow.pop %v6955
      %v6957 = vmul.f32 %v6913, 1.442695
      %v6958 = vpow.pop %v6957
      %v6959 = vmul.f32 %v6914, 1.442695
      %v6960 = vpow.pop %v6959
      %v6961 = vmul.f32 %v6915, 1.442695
      %v6962 = vpow.pop %v6961
      %v6963 = vmul.f32 %v6916, 1.442695
      %v6964 = vpow.pop %v6963
      %v6965 = vmul.f32 %v6917, 1.442695
      %v6966 = vpow.pop %v6965
      %v6967 = vmul.f32 %v6918, 1.442695
      %v6968 = vpow.pop %v6967
      %v6969 = vmul.f32 %v6919, 1.442695
      %v6970 = vpow.pop %v6969
      %v6971 = vmul.f32 %v6920, 1.442695
      %v6972 = vpow.pop %v6971
      %v6973 = vmul.f32 %v6921, 1.442695
      %v6974 = vpow.pop %v6973
      %v6975 = vmul.f32 %v6922, 1.442695
      %v6976 = vpow.pop %v6975
      %v6977 = vmul.f32 %v6923, 1.442695
      %v6978 = vpow.pop %v6977
      %v6979 = vmul.f32 %v6924, 1.442695
      %v6980 = vpow.pop %v6979
      %v6981 = vmul.f32 %v6925, 1.442695
      %v6982 = vpow.pop %v6981
      %v6983 = vmul.f32 %v6926, 1.442695
      %v6984 = vpow.pop %v6983
      %v6985 = vmul.f32 %v6927, 1.442695
      %v6986 = vpow.pop %v6985
      %v6987 = vmul.f32 %v6928, 1.442695
      %v6988 = vpow.pop %v6987
      %v6989 = vmul.f32 %v6929, 1.442695
      %v6990 = vpow.pop %v6989
      %v6991 = vmul.f32 %v6930, 1.442695
      %v6992 = vpow.pop %v6991
      %v6993 = vmul.f32 %v6931, 1.442695
      %v6994 = vpow.pop %v6993
      %v6995 = vmul.f32 %v6932, 1.442695
      %v6996 = vpow.pop %v6995
      %v6997 = vadd.f32 %v6934, %v6936
      %6998 = vadd.xlane.f32.xlu0 %v6997
      %v6999 = vpop.xlane.xlu0 %6998
      %v7000 = vadd.f32 %v6938, %v6940
      %7001 = vadd.xlane.f32.xlu0 %v7000
      %v7002 = vpop.xlane.xlu0 %7001
      %v7003 = vadd.f32 %v6942, %v6944
      %7004 = vadd.xlane.f32.xlu0 %v7003
      %v7005 = vpop.xlane.xlu0 %7004
      %v7006 = vadd.f32 %v6946, %v6948
      %7007 = vadd.xlane.f32.xlu0 %v7006
      %v7008 = vpop.xlane.xlu0 %7007
      %v7009 = vadd.f32 %v6950, %v6952
      %7010 = vadd.xlane.f32.xlu0 %v7009
      %v7011 = vpop.xlane.xlu0 %7010
      %v7012 = vadd.f32 %v6954, %v6956
      %7013 = vadd.xlane.f32.xlu0 %v7012
      %v7014 = vpop.xlane.xlu0 %7013
      %v7015 = vadd.f32 %v6958, %v6960
      %7016 = vadd.xlane.f32.xlu0 %v7015
      %v7017 = vpop.xlane.xlu0 %7016
      %v7018 = vadd.f32 %v6962, %v6964
      %7019 = vadd.xlane.f32.xlu0 %v7018
      %v7020 = vpop.xlane.xlu0 %7019
      %v7021 = vadd.f32 %v6966, %v6968
      %7022 = vadd.xlane.f32.xlu0 %v7021
      %v7023 = vpop.xlane.xlu0 %7022
      %v7024 = vadd.f32 %v6970, %v6972
      %7025 = vadd.xlane.f32.xlu0 %v7024
      %v7026 = vpop.xlane.xlu0 %7025
      %v7027 = vadd.f32 %v6974, %v6976
      %7028 = vadd.xlane.f32.xlu0 %v7027
      %v7029 = vpop.xlane.xlu0 %7028
      %v7030 = vadd.f32 %v6978, %v6980
      %7031 = vadd.xlane.f32.xlu0 %v7030
      %v7032 = vpop.xlane.xlu0 %7031
      %v7033 = vadd.f32 %v6982, %v6984
      %7034 = vadd.xlane.f32.xlu0 %v7033
      %v7035 = vpop.xlane.xlu0 %7034
      %v7036 = vadd.f32 %v6986, %v6988
      %7037 = vadd.xlane.f32.xlu0 %v7036
      %v7038 = vpop.xlane.xlu0 %7037
      %v7039 = vadd.f32 %v6990, %v6992
      %7040 = vadd.xlane.f32.xlu0 %v7039
      %v7041 = vpop.xlane.xlu0 %7040
      %v7042 = vadd.f32 %v6994, %v6996
      %7043 = vadd.xlane.f32.xlu0 %v7042
      %v7044 = vpop.xlane.xlu0 %7043
      %v7045 = vrcp.pop %v6999
      %v7046 = vrcp.pop %v7002
      %v7047 = vrcp.pop %v7005
      %v7048 = vrcp.pop %v7008
      %v7049 = vrcp.pop %v7011
      %v7050 = vrcp.pop %v7014
      %v7051 = vrcp.pop %v7017
      %v7052 = vrcp.pop %v7020
      %v7053 = vrcp.pop %v7023
      %v7054 = vrcp.pop %v7026
      %v7055 = vrcp.pop %v7029
      %v7056 = vrcp.pop %v7032
      %v7057 = vrcp.pop %v7035
      %v7058 = vrcp.pop %v7038
      %v7059 = vrcp.pop %v7041
      %v7060 = vrcp.pop %v7044
      %v7061 = vmul.f32 %v6934, %v7045
      %v7062 = vmul.f32 %v6936, %v7045
      %v7063 = vmul.f32 %v6938, %v7046
      %v7064 = vmul.f32 %v6940, %v7046
      %v7065 = vmul.f32 %v6942, %v7047
      %v7066 = vmul.f32 %v6944, %v7047
      %v7067 = vmul.f32 %v6946, %v7048
      %v7068 = vmul.f32 %v6948, %v7048
      %v7069 = vmul.f32 %v6950, %v7049
      %v7070 = vmul.f32 %v6952, %v7049
      %v7071 = vmul.f32 %v6954, %v7050
      %v7072 = vmul.f32 %v6956, %v7050
      %v7073 = vmul.f32 %v6958, %v7051
      %v7074 = vmul.f32 %v6960, %v7051
      %v7075 = vmul.f32 %v6962, %v7052
      %v7076 = vmul.f32 %v6964, %v7052
      %v7077 = vmul.f32 %v6966, %v7053
      %v7078 = vmul.f32 %v6968, %v7053
      %v7079 = vmul.f32 %v6970, %v7054
      %v7080 = vmul.f32 %v6972, %v7054
      %v7081 = vmul.f32 %v6974, %v7055
      %v7082 = vmul.f32 %v6976, %v7055
      %v7083 = vmul.f32 %v6978, %v7056
      %v7084 = vmul.f32 %v6980, %v7056
      %v7085 = vmul.f32 %v6982, %v7057
      %v7086 = vmul.f32 %v6984, %v7057
      %v7087 = vmul.f32 %v6986, %v7058
      %v7088 = vmul.f32 %v6988, %v7058
      %v7089 = vmul.f32 %v6990, %v7059
      %v7090 = vmul.f32 %v6992, %v7059
      %v7091 = vmul.f32 %v6994, %v7060
      %v7092 = vmul.f32 %v6996, %v7060
      %v7093 = vpack.c.bf16 %v7063, %v7061
      %v7094 = vpack.c.bf16 %v7064, %v7062
      %v7095 = vpack.c.bf16 %v7067, %v7065
      %v7096 = vpack.c.bf16 %v7068, %v7066
      %v7097 = vpack.c.bf16 %v7071, %v7069
      %v7098 = vpack.c.bf16 %v7072, %v7070
      %v7099 = vpack.c.bf16 %v7075, %v7073
      %v7100 = vpack.c.bf16 %v7076, %v7074
      %v7101 = vpack.c.bf16 %v7079, %v7077
      %v7102 = vpack.c.bf16 %v7080, %v7078
      %v7103 = vpack.c.bf16 %v7083, %v7081
      %v7104 = vpack.c.bf16 %v7084, %v7082
      %v7105 = vpack.c.bf16 %v7087, %v7085
      %v7106 = vpack.c.bf16 %v7088, %v7086
      %v7107 = vpack.c.bf16 %v7091, %v7089
      %v7108 = vpack.c.bf16 %v7092, %v7090
      %7109 = vmatprep.subr.bf16.mxu0 %v7094
      %7110 = vmatpush1.bf16.xpose.msra.mxu0 %v7093
      %7111 = vmatprep.subr.bf16.mxu0 %v7096
      %7112 = vmatpush1.bf16.xpose.msra.mxu0 %v7095
      %7113 = vmatprep.subr.bf16.mxu0 %v7098
      %7114 = vmatpush1.bf16.xpose.msra.mxu0 %v7097
      %7115 = vmatprep.subr.bf16.mxu0 %v7100
      %7116 = vmatpush1.bf16.xpose.msra.mxu0 %v7099
      %7117 = vmatprep.subr.bf16.mxu0 %v7102
      %7118 = vmatpush1.bf16.xpose.msra.mxu0 %v7101
      %7119 = vmatprep.subr.bf16.mxu0 %v7104
      %7120 = vmatpush1.bf16.xpose.msra.mxu0 %v7103
      %7121 = vmatprep.subr.bf16.mxu0 %v7106
      %7122 = vmatpush1.bf16.xpose.msra.mxu0 %v7105
      %7123 = vmatprep.subr.bf16.mxu0 %v7108
      %7124 = vmatpush1.bf16.xpose.msra.mxu0 %v7107
      %7125 = vmatprep.subr.bf16.mxu0 0
      %7126 = vmatpush1.bf16.xpose.msra.mxu0 0
      %7127 = vmatprep.subr.bf16.mxu0 0
      %7128 = vmatpush1.bf16.xpose.msra.mxu0 0
      %7129 = vmatprep.subr.bf16.mxu0 0
      %7130 = vmatpush1.bf16.xpose.msra.mxu0 0
      %7131 = vmatprep.subr.bf16.mxu0 0
      %7132 = vmatpush1.bf16.xpose.msra.mxu0 0
      %7133 = vmatprep.subr.bf16.mxu0 0
      %7134 = vmatpush1.bf16.xpose.msra.mxu0 0
      %7135 = vmatprep.subr.bf16.mxu0 0
      %7136 = vmatpush1.bf16.xpose.msra.mxu0 0
      %7137 = vmatprep.subr.bf16.mxu0 0
      %7138 = vmatpush1.bf16.xpose.msra.mxu0 0
      %7139 = vmatprep.subr.bf16.mxu0 0
      %7140 = vmatpush1.bf16.xpose.msra.mxu0 0
      %7141 = vmatprep.mubr.bf16.mxu0 %v5681
      %7142 = vmatmul.mubr.bf16.gmra.mrb[0].mxu0 %v5680
      %v7143 = vpop.f32.mrb[0].mxu0
      %v7144 = vadd.f32 0.0, %v7143
      %v7145 = vpop.f32.mrb[0].mxu0
      %v7146 = vpop.f32.mrb[0].mxu0
      %v7147 = vpop.f32.mrb[0].mxu0
      %7148 = vdwg.mxu0
      %v7149 = vpack.c.bf16 %v7144, %v7144
      %v7150 = vld [vmem:[%s22] sm:$0xff]
      %7152 = vset.pattern.permute.xlu0 0
      %7153 = vperm.xlu0 %7152, %v7150
      %v7154 = vpop.permute.xlu0 %7153
      %v7157 = vsel %vm750, %v7149, 0
      %7159 = vmatprep.subr.bf16.mxu0 0
      %7160 = vmatpush1.bf16.msra.mxu0 %v7157
      %7161 = vmatprep.subr.bf16.mxu0 0
      %7162 = vmatpush1.bf16.msra.mxu0 0
      %7163 = vmatprep.subr.bf16.mxu0 0
      %7164 = vmatpush1.bf16.msra.mxu0 0
      %7165 = vmatprep.subr.bf16.mxu0 0
      %7166 = vmatpush1.bf16.msra.mxu0 0
      %7167 = vmatprep.subr.bf16.mxu0 0
      %7168 = vmatpush1.bf16.msra.mxu0 0
      %7169 = vmatprep.subr.bf16.mxu0 0
      %7170 = vmatpush1.bf16.msra.mxu0 0
      %7171 = vmatprep.subr.bf16.mxu0 0
      %7172 = vmatpush1.bf16.msra.mxu0 0
      %7173 = vmatprep.subr.bf16.mxu0 0
      %7174 = vmatpush1.bf16.msra.mxu0 0
      %7175 = vmatprep.subr.bf16.mxu0 0
      %7176 = vmatpush1.bf16.msra.mxu0 0
      %7177 = vmatprep.subr.bf16.mxu0 0
      %7178 = vmatpush1.bf16.msra.mxu0 0
      %7179 = vmatprep.subr.bf16.mxu0 0
      %7180 = vmatpush1.bf16.msra.mxu0 0
      %7181 = vmatprep.subr.bf16.mxu0 0
      %7182 = vmatpush1.bf16.msra.mxu0 0
      %7183 = vmatprep.subr.bf16.mxu0 0
      %7184 = vmatpush1.bf16.msra.mxu0 0
      %7185 = vmatprep.subr.bf16.mxu0 0
      %7186 = vmatpush1.bf16.msra.mxu0 0
      %7187 = vmatprep.subr.bf16.mxu0 0
      %7188 = vmatpush1.bf16.msra.mxu0 0
      %7189 = vmatprep.subr.bf16.mxu0 0
      %7190 = vmatpush1.bf16.msra.mxu0 0
      %7191 = vmatprep.mubr.bf16.mxu0 0
      %7192 = vmatmul.mubr.bf16.gmra.mrb[0].mxu0 %v6146
      %v7193 = vpop.f32.mrb[0].mxu0
      %v7194 = vadd.f32 %v7154, %v7193
      %v7195 = vpop.f32.mrb[0].mxu0
      %v7196 = vpop.f32.mrb[0].mxu0
      %v7197 = vpop.f32.mrb[0].mxu0
      %7198 = vdwg.mxu0
      %v7199 = vadd.f32 %v4694, %v7194
      %7200 = vst [vmem:[%s734 + $0x10] sm:$0xff] %v7199
      %7201 = vxpose.xlu0.c.b16.start [1/8] %v5489, 128
      %7202 = vxpose.xlu0.c.b16.cont [2/8] 0, 128
      %7203 = vxpose.xlu0.c.b16.cont [3/8] 0, 128
      %7204 = vxpose.xlu0.c.b16.cont [4/8] 0, 128
      %7205 = vxpose.xlu0.c.b16.cont [5/8] 0, 128
      %7206 = vxpose.xlu0.c.b16.cont [6/8] 0, 128
      %7207 = vxpose.xlu0.c.b16.cont [7/8] 0, 128
      %7208 = vxpose.xlu0.c.b16.end [8/8] 0, 128
      %v7209 = vpop.trf.xlu0
      %v7210 = vpop.trf.xlu0
      %v7211 = vpop.trf.xlu0
      %v7212 = vpop.trf.xlu0
      %v7213 = vpop.trf.xlu0
      %v7214 = vpop.trf.xlu0
      %v7215 = vpop.trf.xlu0
      %v7216 = vpop.trf.xlu0
      %v7218 = vsel %vm3534, %v7209, 0
      %v7221 = vsel %vm3534, %v7210, 0
      %v7224 = vsel %vm3534, %v7211, 0
      %v7227 = vsel %vm3534, %v7212, 0
      %v7230 = vsel %vm3534, %v7213, 0
      %v7233 = vsel %vm3534, %v7214, 0
      %v7236 = vsel %vm3534, %v7215, 0
      %v7239 = vsel %vm3534, %v7216, 0
      %7241 = vmatprep.subr.bf16.mxu0 %v6738
      %7242 = vmatpush1.bf16.msra.mxu0 %v6735
      %7243 = vmatprep.subr.bf16.mxu0 0
      %7244 = vmatpush1.bf16.msra.mxu0 0
      %7245 = vmatprep.subr.bf16.mxu0 0
      %7246 = vmatpush1.bf16.msra.mxu0 0
      %7247 = vmatprep.subr.bf16.mxu0 0
      %7248 = vmatpush1.bf16.msra.mxu0 0
      %7249 = vmatprep.subr.bf16.mxu0 0
      %7250 = vmatpush1.bf16.msra.mxu0 0
      %7251 = vmatprep.subr.bf16.mxu0 0
      %7252 = vmatpush1.bf16.msra.mxu0 0
      %7253 = vmatprep.subr.bf16.mxu0 0
      %7254 = vmatpush1.bf16.msra.mxu0 0
      %7255 = vmatprep.subr.bf16.mxu0 0
      %7256 = vmatpush1.bf16.msra.mxu0 0
      %7257 = vmatprep.subr.bf16.mxu0 0
      %7258 = vmatpush1.bf16.msra.mxu0 0
      %7259 = vmatprep.subr.bf16.mxu0 0
      %7260 = vmatpush1.bf16.msra.mxu0 0
      %7261 = vmatprep.subr.bf16.mxu0 0
      %7262 = vmatpush1.bf16.msra.mxu0 0
      %7263 = vmatprep.subr.bf16.mxu0 0
      %7264 = vmatpush1.bf16.msra.mxu0 0
      %7265 = vmatprep.subr.bf16.mxu0 0
      %7266 = vmatpush1.bf16.msra.mxu0 0
      %7267 = vmatprep.subr.bf16.mxu0 0
      %7268 = vmatpush1.bf16.msra.mxu0 0
      %7269 = vmatprep.subr.bf16.mxu0 0
      %7270 = vmatpush1.bf16.msra.mxu0 0
      %7271 = vmatprep.subr.bf16.mxu0 0
      %7272 = vmatpush1.bf16.msra.mxu0 0
      %7273 = vmatprep.mubr.bf16.mxu0 0
      %7274 = vmatmul.mubr.bf16.gmra.mrb[0].mxu0 %v7218
      %v7275 = vpop.f32.mrb[0].mxu0
      %v7276 = vadd.f32 0.0, %v7275
      %v7277 = vpop.f32.mrb[0].mxu0
      %v7278 = vadd.f32 0.0, %v7277
      %v7279 = vpop.f32.mrb[0].mxu0
      %v7280 = vadd.f32 0.0, %v7279
      %v7281 = vpop.f32.mrb[0].mxu0
      %v7282 = vadd.f32 0.0, %v7281
      %7283 = vmatprep.mubr.bf16.mxu0 0
      %7284 = vmatmul.mubr.bf16.gmra.mrb[0].mxu0 %v7221
      %v7285 = vpop.f32.mrb[0].mxu0
      %v7286 = vadd.f32 0.0, %v7285
      %v7287 = vpop.f32.mrb[0].mxu0
      %v7288 = vadd.f32 0.0, %v7287
      %v7289 = vpop.f32.mrb[0].mxu0
      %v7290 = vadd.f32 0.0, %v7289
      %v7291 = vpop.f32.mrb[0].mxu0
      %v7292 = vadd.f32 0.0, %v7291
      %7293 = vmatprep.mubr.bf16.mxu0 0
      %7294 = vmatmul.mubr.bf16.gmra.mrb[0].mxu0 %v7224
      %v7295 = vpop.f32.mrb[0].mxu0
      %v7296 = vadd.f32 0.0, %v7295
      %v7297 = vpop.f32.mrb[0].mxu0
      %v7298 = vadd.f32 0.0, %v7297
      %v7299 = vpop.f32.mrb[0].mxu0
      %v7300 = vadd.f32 0.0, %v7299
      %v7301 = vpop.f32.mrb[0].mxu0
      %v7302 = vadd.f32 0.0, %v7301
      %7303 = vmatprep.mubr.bf16.mxu0 0
      %7304 = vmatmul.mubr.bf16.gmra.mrb[0].mxu0 %v7227
      %v7305 = vpop.f32.mrb[0].mxu0
      %v7306 = vadd.f32 0.0, %v7305
      %v7307 = vpop.f32.mrb[0].mxu0
      %v7308 = vadd.f32 0.0, %v7307
      %v7309 = vpop.f32.mrb[0].mxu0
      %v7310 = vadd.f32 0.0, %v7309
      %v7311 = vpop.f32.mrb[0].mxu0
      %v7312 = vadd.f32 0.0, %v7311
      %7313 = vmatprep.mubr.bf16.mxu0 0
      %7314 = vmatmul.mubr.bf16.gmra.mrb[0].mxu0 %v7230
      %v7315 = vpop.f32.mrb[0].mxu0
      %v7316 = vadd.f32 0.0, %v7315
      %v7317 = vpop.f32.mrb[0].mxu0
      %v7318 = vadd.f32 0.0, %v7317
      %v7319 = vpop.f32.mrb[0].mxu0
      %v7320 = vadd.f32 0.0, %v7319
      %v7321 = vpop.f32.mrb[0].mxu0
      %v7322 = vadd.f32 0.0, %v7321
      %7323 = vmatprep.mubr.bf16.mxu0 0
      %7324 = vmatmul.mubr.bf16.gmra.mrb[0].mxu0 %v7233
      %v7325 = vpop.f32.mrb[0].mxu0
      %v7326 = vadd.f32 0.0, %v7325
      %v7327 = vpop.f32.mrb[0].mxu0
      %v7328 = vadd.f32 0.0, %v7327
      %v7329 = vpop.f32.mrb[0].mxu0
      %v7330 = vadd.f32 0.0, %v7329
      %v7331 = vpop.f32.mrb[0].mxu0
      %v7332 = vadd.f32 0.0, %v7331
      %7333 = vmatprep.mubr.bf16.mxu0 0
      %7334 = vmatmul.mubr.bf16.gmra.mrb[0].mxu0 %v7236
      %v7335 = vpop.f32.mrb[0].mxu0
      %v7336 = vadd.f32 0.0, %v7335
      %v7337 = vpop.f32.mrb[0].mxu0
      %v7338 = vadd.f32 0.0, %v7337
      %v7339 = vpop.f32.mrb[0].mxu0
      %v7340 = vadd.f32 0.0, %v7339
      %v7341 = vpop.f32.mrb[0].mxu0
      %v7342 = vadd.f32 0.0, %v7341
      %7343 = vmatprep.mubr.bf16.mxu0 0
      %7344 = vmatmul.mubr.bf16.gmra.mrb[0].mxu0 %v7239
      %v7345 = vpop.f32.mrb[0].mxu0
      %v7346 = vadd.f32 0.0, %v7345
      %v7347 = vpop.f32.mrb[0].mxu0
      %v7348 = vadd.f32 0.0, %v7347
      %v7349 = vpop.f32.mrb[0].mxu0
      %v7350 = vadd.f32 0.0, %v7349
      %v7351 = vpop.f32.mrb[0].mxu0
      %v7352 = vadd.f32 0.0, %v7351
      %7353 = vdwg.mxu0
      %v7354 = vmax.f32 %v7276, %v7278
      %7355 = vmax.xlane.f32.xlu0 %v7354
      %v7356 = vpop.xlane.xlu0 %7355
      %v7357 = vmax.f32 %v7280, %v7282
      %7358 = vmax.xlane.f32.xlu0 %v7357
      %v7359 = vpop.xlane.xlu0 %7358
      %v7360 = vmax.f32 %v7286, %v7288
      %7361 = vmax.xlane.f32.xlu0 %v7360
      %v7362 = vpop.xlane.xlu0 %7361
      %v7363 = vmax.f32 %v7290, %v7292
      %7364 = vmax.xlane.f32.xlu0 %v7363
      %v7365 = vpop.xlane.xlu0 %7364
      %v7366 = vmax.f32 %v7296, %v7298
      %7367 = vmax.xlane.f32.xlu0 %v7366
      %v7368 = vpop.xlane.xlu0 %7367
      %v7369 = vmax.f32 %v7300, %v7302
      %7370 = vmax.xlane.f32.xlu0 %v7369
      %v7371 = vpop.xlane.xlu0 %7370
      %v7372 = vmax.f32 %v7306, %v7308
      %7373 = vmax.xlane.f32.xlu0 %v7372
      %v7374 = vpop.xlane.xlu0 %7373
      %v7375 = vmax.f32 %v7310, %v7312
      %7376 = vmax.xlane.f32.xlu0 %v7375
      %v7377 = vpop.xlane.xlu0 %7376
      %v7378 = vmax.f32 %v7316, %v7318
      %7379 = vmax.xlane.f32.xlu0 %v7378
      %v7380 = vpop.xlane.xlu0 %7379
      %v7381 = vmax.f32 %v7320, %v7322
      %7382 = vmax.xlane.f32.xlu0 %v7381
      %v7383 = vpop.xlane.xlu0 %7382
      %v7384 = vmax.f32 %v7326, %v7328
      %7385 = vmax.xlane.f32.xlu0 %v7384
      %v7386 = vpop.xlane.xlu0 %7385
      %v7387 = vmax.f32 %v7330, %v7332
      %7388 = vmax.xlane.f32.xlu0 %v7387
      %v7389 = vpop.xlane.xlu0 %7388
      %v7390 = vmax.f32 %v7336, %v7338
      %7391 = vmax.xlane.f32.xlu0 %v7390
      %v7392 = vpop.xlane.xlu0 %7391
      %v7393 = vmax.f32 %v7340, %v7342
      %7394 = vmax.xlane.f32.xlu0 %v7393
      %v7395 = vpop.xlane.xlu0 %7394
      %v7396 = vmax.f32 %v7346, %v7348
      %7397 = vmax.xlane.f32.xlu0 %v7396
      %v7398 = vpop.xlane.xlu0 %7397
      %v7399 = vmax.f32 %v7350, %v7352
      %7400 = vmax.xlane.f32.xlu0 %v7399
      %v7401 = vpop.xlane.xlu0 %7400
      %v7402 = vsub.f32 %v7276, %v7356
      %v7403 = vsub.f32 %v7278, %v7356
      %v7404 = vsub.f32 %v7280, %v7359
      %v7405 = vsub.f32 %v7282, %v7359
      %v7406 = vsub.f32 %v7286, %v7362
      %v7407 = vsub.f32 %v7288, %v7362
      %v7408 = vsub.f32 %v7290, %v7365
      %v7409 = vsub.f32 %v7292, %v7365
      %v7410 = vsub.f32 %v7296, %v7368
      %v7411 = vsub.f32 %v7298, %v7368
      %v7412 = vsub.f32 %v7300, %v7371
      %v7413 = vsub.f32 %v7302, %v7371
      %v7414 = vsub.f32 %v7306, %v7374
      %v7415 = vsub.f32 %v7308, %v7374
      %v7416 = vsub.f32 %v7310, %v7377
      %v7417 = vsub.f32 %v7312, %v7377
      %v7418 = vsub.f32 %v7316, %v7380
      %v7419 = vsub.f32 %v7318, %v7380
      %v7420 = vsub.f32 %v7320, %v7383
      %v7421 = vsub.f32 %v7322, %v7383
      %v7422 = vsub.f32 %v7326, %v7386
      %v7423 = vsub.f32 %v7328, %v7386
      %v7424 = vsub.f32 %v7330, %v7389
      %v7425 = vsub.f32 %v7332, %v7389
      %v7426 = vsub.f32 %v7336, %v7392
      %v7427 = vsub.f32 %v7338, %v7392
      %v7428 = vsub.f32 %v7340, %v7395
      %v7429 = vsub.f32 %v7342, %v7395
      %v7430 = vsub.f32 %v7346, %v7398
      %v7431 = vsub.f32 %v7348, %v7398
      %v7432 = vsub.f32 %v7350, %v7401
      %v7433 = vsub.f32 %v7352, %v7401
      %v7434 = vmul.f32 %v7402, 1.442695
      %v7435 = vpow.pop %v7434
      %v7436 = vmul.f32 %v7403, 1.442695
      %v7437 = vpow.pop %v7436
      %v7438 = vmul.f32 %v7404, 1.442695
      %v7439 = vpow.pop %v7438
      %v7440 = vmul.f32 %v7405, 1.442695
      %v7441 = vpow.pop %v7440
      %v7442 = vmul.f32 %v7406, 1.442695
      %v7443 = vpow.pop %v7442
      %v7444 = vmul.f32 %v7407, 1.442695
      %v7445 = vpow.pop %v7444
      %v7446 = vmul.f32 %v7408, 1.442695
      %v7447 = vpow.pop %v7446
      %v7448 = vmul.f32 %v7409, 1.442695
      %v7449 = vpow.pop %v7448
      %v7450 = vmul.f32 %v7410, 1.442695
      %v7451 = vpow.pop %v7450
      %v7452 = vmul.f32 %v7411, 1.442695
      %v7453 = vpow.pop %v7452
      %v7454 = vmul.f32 %v7412, 1.442695
      %v7455 = vpow.pop %v7454
      %v7456 = vmul.f32 %v7413, 1.442695
      %v7457 = vpow.pop %v7456
      %v7458 = vmul.f32 %v7414, 1.442695
      %v7459 = vpow.pop %v7458
      %v7460 = vmul.f32 %v7415, 1.442695
      %v7461 = vpow.pop %v7460
      %v7462 = vmul.f32 %v7416, 1.442695
      %v7463 = vpow.pop %v7462
      %v7464 = vmul.f32 %v7417, 1.442695
      %v7465 = vpow.pop %v7464
      %v7466 = vmul.f32 %v7418, 1.442695
      %v7467 = vpow.pop %v7466
      %v7468 = vmul.f32 %v7419, 1.442695
      %v7469 = vpow.pop %v7468
      %v7470 = vmul.f32 %v7420, 1.442695
      %v7471 = vpow.pop %v7470
      %v7472 = vmul.f32 %v7421, 1.442695
      %v7473 = vpow.pop %v7472
      %v7474 = vmul.f32 %v7422, 1.442695
      %v7475 = vpow.pop %v7474
      %v7476 = vmul.f32 %v7423, 1.442695
      %v7477 = vpow.pop %v7476
      %v7478 = vmul.f32 %v7424, 1.442695
      %v7479 = vpow.pop %v7478
      %v7480 = vmul.f32 %v7425, 1.442695
      %v7481 = vpow.pop %v7480
      %v7482 = vmul.f32 %v7426, 1.442695
      %v7483 = vpow.pop %v7482
      %v7484 = vmul.f32 %v7427, 1.442695
      %v7485 = vpow.pop %v7484
      %v7486 = vmul.f32 %v7428, 1.442695
      %v7487 = vpow.pop %v7486
      %v7488 = vmul.f32 %v7429, 1.442695
      %v7489 = vpow.pop %v7488
      %v7490 = vmul.f32 %v7430, 1.442695
      %v7491 = vpow.pop %v7490
      %v7492 = vmul.f32 %v7431, 1.442695
      %v7493 = vpow.pop %v7492
      %v7494 = vmul.f32 %v7432, 1.442695
      %v7495 = vpow.pop %v7494
      %v7496 = vmul.f32 %v7433, 1.442695
      %v7497 = vpow.pop %v7496
      %v7498 = vadd.f32 %v7435, %v7437
      %7499 = vadd.xlane.f32.xlu0 %v7498
      %v7500 = vpop.xlane.xlu0 %7499
      %v7501 = vadd.f32 %v7439, %v7441
      %7502 = vadd.xlane.f32.xlu0 %v7501
      %v7503 = vpop.xlane.xlu0 %7502
      %v7504 = vadd.f32 %v7443, %v7445
      %7505 = vadd.xlane.f32.xlu0 %v7504
      %v7506 = vpop.xlane.xlu0 %7505
      %v7507 = vadd.f32 %v7447, %v7449
      %7508 = vadd.xlane.f32.xlu0 %v7507
      %v7509 = vpop.xlane.xlu0 %7508
      %v7510 = vadd.f32 %v7451, %v7453
      %7511 = vadd.xlane.f32.xlu0 %v7510
      %v7512 = vpop.xlane.xlu0 %7511
      %v7513 = vadd.f32 %v7455, %v7457
      %7514 = vadd.xlane.f32.xlu0 %v7513
      %v7515 = vpop.xlane.xlu0 %7514
      %v7516 = vadd.f32 %v7459, %v7461
      %7517 = vadd.xlane.f32.xlu0 %v7516
      %v7518 = vpop.xlane.xlu0 %7517
      %v7519 = vadd.f32 %v7463, %v7465
      %7520 = vadd.xlane.f32.xlu0 %v7519
      %v7521 = vpop.xlane.xlu0 %7520
      %v7522 = vadd.f32 %v7467, %v7469
      %7523 = vadd.xlane.f32.xlu0 %v7522
      %v7524 = vpop.xlane.xlu0 %7523
      %v7525 = vadd.f32 %v7471, %v7473
      %7526 = vadd.xlane.f32.xlu0 %v7525
      %v7527 = vpop.xlane.xlu0 %7526
      %v7528 = vadd.f32 %v7475, %v7477
      %7529 = vadd.xlane.f32.xlu0 %v7528
      %v7530 = vpop.xlane.xlu0 %7529
      %v7531 = vadd.f32 %v7479, %v7481
      %7532 = vadd.xlane.f32.xlu0 %v7531
      %v7533 = vpop.xlane.xlu0 %7532
      %v7534 = vadd.f32 %v7483, %v7485
      %7535 = vadd.xlane.f32.xlu0 %v7534
      %v7536 = vpop.xlane.xlu0 %7535
      %v7537 = vadd.f32 %v7487, %v7489
      %7538 = vadd.xlane.f32.xlu0 %v7537
      %v7539 = vpop.xlane.xlu0 %7538
      %v7540 = vadd.f32 %v7491, %v7493
      %7541 = vadd.xlane.f32.xlu0 %v7540
      %v7542 = vpop.xlane.xlu0 %7541
      %v7543 = vadd.f32 %v7495, %v7497
      %7544 = vadd.xlane.f32.xlu0 %v7543
      %v7545 = vpop.xlane.xlu0 %7544
      %v7546 = vrcp.pop %v7500
      %v7547 = vrcp.pop %v7503
      %v7548 = vrcp.pop %v7506
      %v7549 = vrcp.pop %v7509
      %v7550 = vrcp.pop %v7512
      %v7551 = vrcp.pop %v7515
      %v7552 = vrcp.pop %v7518
      %v7553 = vrcp.pop %v7521
      %v7554 = vrcp.pop %v7524
      %v7555 = vrcp.pop %v7527
      %v7556 = vrcp.pop %v7530
      %v7557 = vrcp.pop %v7533
      %v7558 = vrcp.pop %v7536
      %v7559 = vrcp.pop %v7539
      %v7560 = vrcp.pop %v7542
      %v7561 = vrcp.pop %v7545
      %v7562 = vmul.f32 %v7435, %v7546
      %v7563 = vmul.f32 %v7437, %v7546
      %v7564 = vmul.f32 %v7439, %v7547
      %v7565 = vmul.f32 %v7441, %v7547
      %v7566 = vmul.f32 %v7443, %v7548
      %v7567 = vmul.f32 %v7445, %v7548
      %v7568 = vmul.f32 %v7447, %v7549
      %v7569 = vmul.f32 %v7449, %v7549
      %v7570 = vmul.f32 %v7451, %v7550
      %v7571 = vmul.f32 %v7453, %v7550
      %v7572 = vmul.f32 %v7455, %v7551
      %v7573 = vmul.f32 %v7457, %v7551
      %v7574 = vmul.f32 %v7459, %v7552
      %v7575 = vmul.f32 %v7461, %v7552
      %v7576 = vmul.f32 %v7463, %v7553
      %v7577 = vmul.f32 %v7465, %v7553
      %v7578 = vmul.f32 %v7467, %v7554
      %v7579 = vmul.f32 %v7469, %v7554
      %v7580 = vmul.f32 %v7471, %v7555
      %v7581 = vmul.f32 %v7473, %v7555
      %v7582 = vmul.f32 %v7475, %v7556
      %v7583 = vmul.f32 %v7477, %v7556
      %v7584 = vmul.f32 %v7479, %v7557
      %v7585 = vmul.f32 %v7481, %v7557
      %v7586 = vmul.f32 %v7483, %v7558
      %v7587 = vmul.f32 %v7485, %v7558
      %v7588 = vmul.f32 %v7487, %v7559
      %v7589 = vmul.f32 %v7489, %v7559
      %v7590 = vmul.f32 %v7491, %v7560
      %v7591 = vmul.f32 %v7493, %v7560
      %v7592 = vmul.f32 %v7495, %v7561
      %v7593 = vmul.f32 %v7497, %v7561
      %v7594 = vpack.c.bf16 %v7564, %v7562
      %v7595 = vpack.c.bf16 %v7565, %v7563
      %v7596 = vpack.c.bf16 %v7568, %v7566
      %v7597 = vpack.c.bf16 %v7569, %v7567
      %v7598 = vpack.c.bf16 %v7572, %v7570
      %v7599 = vpack.c.bf16 %v7573, %v7571
      %v7600 = vpack.c.bf16 %v7576, %v7574
      %v7601 = vpack.c.bf16 %v7577, %v7575
      %v7602 = vpack.c.bf16 %v7580, %v7578
      %v7603 = vpack.c.bf16 %v7581, %v7579
      %v7604 = vpack.c.bf16 %v7584, %v7582
      %v7605 = vpack.c.bf16 %v7585, %v7583
      %v7606 = vpack.c.bf16 %v7588, %v7586
      %v7607 = vpack.c.bf16 %v7589, %v7587
      %v7608 = vpack.c.bf16 %v7592, %v7590
      %v7609 = vpack.c.bf16 %v7593, %v7591
      %7610 = vmatprep.subr.bf16.mxu0 %v7595
      %7611 = vmatpush1.bf16.xpose.msra.mxu0 %v7594
      %7612 = vmatprep.subr.bf16.mxu0 %v7597
      %7613 = vmatpush1.bf16.xpose.msra.mxu0 %v7596
      %7614 = vmatprep.subr.bf16.mxu0 %v7599
      %7615 = vmatpush1.bf16.xpose.msra.mxu0 %v7598
      %7616 = vmatprep.subr.bf16.mxu0 %v7601
      %7617 = vmatpush1.bf16.xpose.msra.mxu0 %v7600
      %7618 = vmatprep.subr.bf16.mxu0 %v7603
      %7619 = vmatpush1.bf16.xpose.msra.mxu0 %v7602
      %7620 = vmatprep.subr.bf16.mxu0 %v7605
      %7621 = vmatpush1.bf16.xpose.msra.mxu0 %v7604
      %7622 = vmatprep.subr.bf16.mxu0 %v7607
      %7623 = vmatpush1.bf16.xpose.msra.mxu0 %v7606
      %7624 = vmatprep.subr.bf16.mxu0 %v7609
      %7625 = vmatpush1.bf16.xpose.msra.mxu0 %v7608
      %7626 = vmatprep.subr.bf16.mxu0 0
      %7627 = vmatpush1.bf16.xpose.msra.mxu0 0
      %7628 = vmatprep.subr.bf16.mxu0 0
      %7629 = vmatpush1.bf16.xpose.msra.mxu0 0
      %7630 = vmatprep.subr.bf16.mxu0 0
      %7631 = vmatpush1.bf16.xpose.msra.mxu0 0
      %7632 = vmatprep.subr.bf16.mxu0 0
      %7633 = vmatpush1.bf16.xpose.msra.mxu0 0
      %7634 = vmatprep.subr.bf16.mxu0 0
      %7635 = vmatpush1.bf16.xpose.msra.mxu0 0
      %7636 = vmatprep.subr.bf16.mxu0 0
      %7637 = vmatpush1.bf16.xpose.msra.mxu0 0
      %7638 = vmatprep.subr.bf16.mxu0 0
      %7639 = vmatpush1.bf16.xpose.msra.mxu0 0
      %7640 = vmatprep.subr.bf16.mxu0 0
      %7641 = vmatpush1.bf16.xpose.msra.mxu0 0
      %7642 = vmatprep.mubr.bf16.mxu0 %v5681
      %7643 = vmatmul.mubr.bf16.gmra.mrb[0].mxu0 %v5680
      %v7644 = vpop.f32.mrb[0].mxu0
      %v7645 = vadd.f32 0.0, %v7644
      %v7646 = vpop.f32.mrb[0].mxu0
      %v7647 = vpop.f32.mrb[0].mxu0
      %v7648 = vpop.f32.mrb[0].mxu0
      %7649 = vdwg.mxu0
      %v7650 = vpack.c.bf16 %v7645, %v7645
      %v7651 = vld [vmem:[%s22] sm:$0xff]
      %7653 = vset.pattern.permute.xlu0 0
      %7654 = vperm.xlu0 %7653, %v7651
      %v7655 = vpop.permute.xlu0 %7654
      %v7658 = vsel %vm750, %v7650, 0
      %7660 = vmatprep.subr.bf16.mxu0 0
      %7661 = vmatpush1.bf16.msra.mxu0 %v7658
      %7662 = vmatprep.subr.bf16.mxu0 0
      %7663 = vmatpush1.bf16.msra.mxu0 0
      %7664 = vmatprep.subr.bf16.mxu0 0
      %7665 = vmatpush1.bf16.msra.mxu0 0
      %7666 = vmatprep.subr.bf16.mxu0 0
      %7667 = vmatpush1.bf16.msra.mxu0 0
      %7668 = vmatprep.subr.bf16.mxu0 0
      %7669 = vmatpush1.bf16.msra.mxu0 0
      %7670 = vmatprep.subr.bf16.mxu0 0
      %7671 = vmatpush1.bf16.msra.mxu0 0
      %7672 = vmatprep.subr.bf16.mxu0 0
      %7673 = vmatpush1.bf16.msra.mxu0 0
      %7674 = vmatprep.subr.bf16.mxu0 0
      %7675 = vmatpush1.bf16.msra.mxu0 0
      %7676 = vmatprep.subr.bf16.mxu0 0
      %7677 = vmatpush1.bf16.msra.mxu0 0
      %7678 = vmatprep.subr.bf16.mxu0 0
      %7679 = vmatpush1.bf16.msra.mxu0 0
      %7680 = vmatprep.subr.bf16.mxu0 0
      %7681 = vmatpush1.bf16.msra.mxu0 0
      %7682 = vmatprep.subr.bf16.mxu0 0
      %7683 = vmatpush1.bf16.msra.mxu0 0
      %7684 = vmatprep.subr.bf16.mxu0 0
      %7685 = vmatpush1.bf16.msra.mxu0 0
      %7686 = vmatprep.subr.bf16.mxu0 0
      %7687 = vmatpush1.bf16.msra.mxu0 0
      %7688 = vmatprep.subr.bf16.mxu0 0
      %7689 = vmatpush1.bf16.msra.mxu0 0
      %7690 = vmatprep.subr.bf16.mxu0 0
      %7691 = vmatpush1.bf16.msra.mxu0 0
      %7692 = vmatprep.mubr.bf16.mxu0 0
      %7693 = vmatmul.mubr.bf16.gmra.mrb[0].mxu0 %v6146
      %v7694 = vpop.f32.mrb[0].mxu0
      %v7695 = vadd.f32 %v7655, %v7694
      %v7696 = vpop.f32.mrb[0].mxu0
      %v7697 = vpop.f32.mrb[0].mxu0
      %v7698 = vpop.f32.mrb[0].mxu0
      %7699 = vdwg.mxu0
      %v7700 = vadd.f32 %v4695, %v7695
      %7701 = vst [vmem:[%s734 + $0x18] sm:$0xff] %v7700
      %s7702 = smul.u32 4, %s34
      %p7703 = scmp.lt.s32.totalorder %s7702, 7
      %s7704 = scalar_select %p7703, %s7702, 7
      %s7705 = smul.addr %s7704, 8
      %s7706 = scalar_lea.vmem %s23, %s7705
      // Predicated region
      $region113: #{res_attn_block_pallas.1} parent=111 // pred_check
        %p7707 = pneg %p545
      $region114: #{res_attn_block_pallas.1} parent=111 // pred_check_branch
        %7709 = sbr.rel (%p7707) target = $region116
      $region115: #{res_attn_block_pallas.1} parent=111 // pred_region
        %s7710 = smul.u32 4, %s34
      $region116: #{res_attn_block_pallas.1} parent=111 // pred_fallthru
        _
    $region112: #{res_attn_block_pallas.1} parent=5 // pred_fallthru
      _
    %p7711 = scmp.le.s32.totalorder 2, %s29
    // Predicated region
    $region117: #{res_attn_block_pallas.1} parent=5 // pred_check
      %p7712 = pneg %p7711
    $region118: #{res_attn_block_pallas.1} parent=5 // pred_check_branch
      %7714 = sbr.rel (%p7712) target = $region120
    $region119: #{res_attn_block_pallas.1} parent=5 // pred_region
      %s7715 = ssub.s32 %s29, 2
      // Predicated region
      $region121: #{res_attn_block_pallas.1} parent=119 // pred_check
        %p7716 = pneg %p551
      $region122: #{res_attn_block_pallas.1} parent=119 // pred_check_branch
        %7718 = sbr.rel (%p7716) target = $region124
      $region123: #{res_attn_block_pallas.1} parent=119 // pred_region
        %s7719 = smul.u32 4, %s35
        %p7720 = scmp.lt.s32.totalorder %s7719, 7
        %s7721 = scalar_select %p7720, %s7719, 7
        %s7722 = smul.addr %s7721, 8
        %s7723 = scalar_lea.vmem %s23, %s7722
      $region124: #{res_attn_block_pallas.1} parent=119 // pred_fallthru
        _
    $region120: #{res_attn_block_pallas.1} parent=5 // pred_fallthru
      _
  $region6: #{res_attn_block_pallas.1} parent=0 // loop_footer
    %s33 = sadd.s32 1, %s29
  $region7: #{res_attn_block_pallas.1} parent=0 // loop_footer_branch
    %28 = sbr.rel target = $region3
  $region8: #{res_attn_block_pallas.1} parent=0 // loop_exit
    _

</llo_original>
